<compile_context>
chip_gen: v7x
topology: tpu7x:2x2x1
jax: 0.10.0
libtpu: 0.0.40
codegen_flags: <defaults>
</compile_context>

<pallas_src>
import functools

import jax
import jax.numpy as jnp
from jax.experimental import pallas as pl
from jax.experimental.pallas import tpu as pltpu

B = 8              # batch
D_IN = 4096
D_H1 = 2028        # logical hidden-1 size (PyTorch)
D_H1_PAD = 2048    # padded to a multiple of 128 lanes
D_H2 = 256
D_OUT = 40
DROP_P = 0.5


def _pick_tile():
    # TN=1024 -> 2 grid steps; W1 double buffer = 16 MiB bf16 (+ ~1 MiB W2),
    # fits v6e/v7x's 32 MiB default scoped VMEM.  v5e default is 16 MiB, so
    # stay at TN=512 (~9 MiB footprint) there and on unknown devices.
    try:
        kind = jax.devices()[0].device_kind.lower()
    except Exception:  # pragma: no cover - defensive
        return 512
    if "v6" in kind or "v7" in kind:
        return 1024
    return 512


TN = _pick_tile()


def dropout_net_kernel(x_ref, w1_ref, b1_ref, m1_ref,
                       w2_ref, b2_ref, m2_ref, w3_ref, b3_ref,
                       out_ref,
                       h2_acc_ref):
    j = pl.program_id(0)

    @pl.when(j == 0)
    def _():
        h2_acc_ref[...] = jnp.zeros_like(h2_acc_ref)

    # ---- layer 1, one column tile: h1 = x @ W1[j*TN:(j+1)*TN, :].T + b1 ----
    h1 = jax.lax.dot_general(
        x_ref[...], w1_ref[...],                      # (B, D_IN) x (TN, D_IN) bf16
        dimension_numbers=(((1,), (1,)), ((), ())),
        preferred_element_type=jnp.float32)           # -> (B, TN) f32
    h1 = h1 + b1_ref[...]
    h1 = h1 * m1_ref[...]                             # dropout: bf16 mask, 0 or 1/(1-p)
    h1 = jnp.maximum(h1, 0.0)                         # relu

    # ---- partial layer 2: accumulate h1_tile @ W2[:, j*TN:(j+1)*TN].T ----
    h2_acc_ref[...] += jax.lax.dot_general(
        h1.astype(jnp.bfloat16), w2_ref[...],         # (B, TN) x (D_H2, TN) bf16
        dimension_numbers=(((1,), (1,)), ((), ())),
        preferred_element_type=jnp.float32)           # -> (B, D_H2) f32

    # ---- epilogue on the last tile: bias/dropout/relu + layer 3 ----
    @pl.when(j == pl.num_programs(0) - 1)
    def _():
        h2 = h2_acc_ref[...] + b2_ref[...]
        h2 = h2 * m2_ref[...]
        h2 = jnp.maximum(h2, 0.0)
        out = jax.lax.dot_general(
            h2, w3_ref[...],                          # (B, D_H2) x (D_OUT, D_H2)
            dimension_numbers=(((1,), (1,)), ((), ())),
            preferred_element_type=jnp.float32) + b3_ref[...]
        out_ref[...] = out.astype(out_ref.dtype)


@functools.partial(jax.jit, static_argnames=("training",))
def dropout_net(x, w1p, b1p, w2p, b2p, w3, b3p, key, *, training=True):
    batch = x.shape[0]
    n_tiles = D_H1_PAD // TN
    inv_keep = 1.0 / (1.0 - DROP_P)

    if training:
        k1, k2 = jax.random.split(key)
        m1 = jax.random.bernoulli(k1, 1.0 - DROP_P, (batch, D_H1_PAD))
        m1 = m1.astype(jnp.bfloat16) * jnp.bfloat16(inv_keep)
        m2 = jax.random.bernoulli(k2, 1.0 - DROP_P, (batch, D_H2))
        m2 = m2.astype(jnp.bfloat16) * jnp.bfloat16(inv_keep)
    else:
        m1 = jnp.ones((batch, D_H1_PAD), jnp.bfloat16)
        m2 = jnp.ones((batch, D_H2), jnp.bfloat16)

    x_bf = x.astype(jnp.bfloat16)   # bf16 MXU inputs, f32 accumulation

    vmem_limit = 48 * 1024 * 1024 if TN >= 1024 else None

    return pl.pallas_call(
        dropout_net_kernel,
        out_shape=jax.ShapeDtypeStruct((batch, D_OUT), jnp.float32),
        grid_spec=pltpu.PrefetchScalarGridSpec(
            num_scalar_prefetch=0,
            grid=(n_tiles,),
            in_specs=[
                pl.BlockSpec((batch, D_IN), lambda j: (0, 0)),   # x (resident)
                pl.BlockSpec((TN, D_IN), lambda j: (j, 0)),      # W1 row slab (bf16)
                pl.BlockSpec((1, TN), lambda j: (0, j)),         # b1 tile
                pl.BlockSpec((batch, TN), lambda j: (0, j)),     # dropout mask 1 tile
                pl.BlockSpec((D_H2, TN), lambda j: (0, j)),      # W2 column tile (bf16)
                pl.BlockSpec((1, D_H2), lambda j: (0, 0)),       # b2 (resident)
                pl.BlockSpec((batch, D_H2), lambda j: (0, 0)),   # dropout mask 2
                pl.BlockSpec((D_OUT, D_H2), lambda j: (0, 0)),   # W3 (resident)
                pl.BlockSpec((1, D_OUT), lambda j: (0, 0)),      # b3 (resident)
            ],
            out_specs=pl.BlockSpec((batch, D_OUT), lambda j: (0, 0)),
            scratch_shapes=[pltpu.VMEM((batch, D_H2), jnp.float32)],
        ),
        compiler_params=pltpu.CompilerParams(
            dimension_semantics=("arbitrary",),      # reduction over column tiles
            vmem_limit_bytes=vmem_limit,
        ),
    )(x_bf, w1p, b1p, m1, w2p, b2p, m2, w3, b3p)


def init_params(key):
    # PyTorch nn.Linear layout: W[out_features, in_features], b[out_features].
    k1, k2, k3, k4, k5, k6 = jax.random.split(key, 6)
    w1 = jax.random.normal(k1, (D_H1, D_IN), jnp.float32) / jnp.sqrt(D_IN)
    b1 = jax.random.normal(k4, (D_H1,), jnp.float32) * 0.01
    w2 = jax.random.normal(k2, (D_H2, D_H1), jnp.float32) / jnp.sqrt(D_H1)
    b2 = jax.random.normal(k5, (D_H2,), jnp.float32) * 0.01
    w3 = jax.random.normal(k3, (D_OUT, D_H2), jnp.float32) / jnp.sqrt(D_H2)
    b3 = jax.random.normal(k6, (D_OUT,), jnp.float32) * 0.01
    return w1, b1, w2, b2, w3, b3


def prepare_params(w1, b1, w2, b2, w3, b3):
    # One-time (outside the hot path): pad hidden-1 2028 -> 2048 and cast the
    # streamed weights to bf16.  Zero-padded W1 rows / b1 entries / W2 columns
    # leave the math unchanged.
    pad = D_H1_PAD - D_H1
    w1p = jnp.pad(w1, ((0, pad), (0, 0))).astype(jnp.bfloat16)   # (2048, 4096)
    b1p = jnp.pad(b1, (0, pad)).reshape(1, D_H1_PAD)             # (1, 2048) f32
    w2p = jnp.pad(w2, ((0, 0), (0, pad))).astype(jnp.bfloat16)   # (256, 2048) bf16
    b2p = b2.reshape(1, D_H2)
    b3p = b3.reshape(1, D_OUT)
    return w1p, b1p, w2p, b2p, w3, b3p


def reference_forward_eval(x, w1p, b1p, w2p, b2p, w3, b3p):
    # Pure-JAX reference (dropout disabled), mirroring the kernel's bf16 casts.
    h1 = jnp.dot(x.astype(jnp.bfloat16), w1p.T,
                 preferred_element_type=jnp.float32) + b1p
    h1 = jnp.maximum(h1, 0.0)
    h2 = jnp.dot(h1.astype(jnp.bfloat16), w2p.T,
                 preferred_element_type=jnp.float32) + b2p
    h2 = jnp.maximum(h2, 0.0)
    return jnp.dot(h2, w3.T, preferred_element_type=jnp.float32) + b3p


if __name__ == "__main__":
    root = jax.random.PRNGKey(0)
    kx, kp, kd = jax.random.split(root, 3)

    x = jax.random.normal(kx, (B, D_IN), jnp.float32)
    params = prepare_params(*init_params(kp))

    # Training-mode forward (dropout active), as in the PyTorch module's forward.
    out = dropout_net(x, *params, kd, training=True)
    jax.block_until_ready(out)
    assert out.shape == (B, D_OUT) and out.dtype == jnp.float32
    assert bool(jnp.all(jnp.isfinite(out)))

    # Eval-mode (deterministic) sanity check against a pure-JAX reference.
    out_eval = dropout_net(x, *params, kd, training=False)
    ref = reference_forward_eval(x, *params)
    jax.block_until_ready((out_eval, ref))
    max_err = float(jnp.max(jnp.abs(out_eval - ref)))
    assert max_err < 5e-2, f"mismatch vs reference: {max_err}"

    print("KERNEL_OK")
</pallas_src>

<mosaic_0001>
module attributes {stable_mosaic.version = 11 : i64} {
  func.func @dropout_net_kernel(%arg0: i32, %arg1: memref<8x4096xbf16, #tpu.memory_space<vmem>>, %arg2: memref<512x4096xbf16, #tpu.memory_space<vmem>>, %arg3: memref<1x512xf32, #tpu.memory_space<vmem>>, %arg4: memref<8x512xbf16, #tpu.memory_space<vmem>>, %arg5: memref<256x512xbf16, #tpu.memory_space<vmem>>, %arg6: memref<1x256xf32, #tpu.memory_space<vmem>>, %arg7: memref<8x256xbf16, #tpu.memory_space<vmem>>, %arg8: memref<40x256xf32, #tpu.memory_space<vmem>>, %arg9: memref<1x40xf32, #tpu.memory_space<vmem>>, %arg10: memref<8x40xf32, #tpu.memory_space<vmem>>, %arg11: memref<8x256xf32, #tpu.memory_space<vmem>>) attributes {dimension_semantics = [#tpu.dimension_semantics<arbitrary>], iteration_bounds = array<i64: 4>, scalar_prefetch = 0 : i64, scratch_operands = 1 : i64, tpu.core_type = #tpu.core_type<tc>, window_params = [{pipeline_mode = #tpu.pipeline_mode<synchronous>, transform_indices = @transform_0, window_bounds = array<i64: 8, 4096>}, {transform_indices = @transform_1, window_bounds = array<i64: 512, 4096>}, {transform_indices = @transform_2, window_bounds = array<i64: 1, 512>}, {transform_indices = @transform_3, window_bounds = array<i64: 8, 512>}, {transform_indices = @transform_4, window_bounds = array<i64: 256, 512>}, {pipeline_mode = #tpu.pipeline_mode<synchronous>, transform_indices = @transform_5, window_bounds = array<i64: 1, 256>}, {pipeline_mode = #tpu.pipeline_mode<synchronous>, transform_indices = @transform_6, window_bounds = array<i64: 8, 256>}, {pipeline_mode = #tpu.pipeline_mode<synchronous>, transform_indices = @transform_7, window_bounds = array<i64: 40, 256>}, {pipeline_mode = #tpu.pipeline_mode<synchronous>, transform_indices = @transform_8, window_bounds = array<i64: 1, 40>}, {pipeline_mode = #tpu.pipeline_mode<synchronous>, transform_indices = @transform_9, window_bounds = array<i64: 8, 40>}]} {
    %c0_i32 = arith.constant 0 : i32
    %0 = arith.cmpi eq, %arg0, %c0_i32 : i32
    %1 = arith.extui %0 : i1 to i32
    %c0_i32_0 = arith.constant 0 : i32
    %2 = arith.cmpi ne, %1, %c0_i32_0 : i32
    scf.if %2 {
      %cst_17 = arith.constant 0.000000e+00 : f32
      %23 = vector.broadcast %cst_17 : f32 to vector<8x256xf32>
      %c0_18 = arith.constant 0 : index
      %c0_19 = arith.constant 0 : index
      %24 = vector.load %arg11[%c0_18, %c0_19] : memref<8x256xf32, #tpu.memory_space<vmem>>, vector<8x256xf32>
      tpu.vector_store %arg11[%c0_18, %c0_19], %23 {strides = array<i32>} : memref<8x256xf32, #tpu.memory_space<vmem>>, vector<8x256xf32>,
    } else {
    }
    %c0 = arith.constant 0 : index
    %c0_1 = arith.constant 0 : index
    %3 = vector.load %arg1[%c0, %c0_1] : memref<8x4096xbf16, #tpu.memory_space<vmem>>, vector<8x4096xbf16>
    %c0_2 = arith.constant 0 : index
    %c0_3 = arith.constant 0 : index
    %4 = vector.load %arg2[%c0_2, %c0_3] : memref<512x4096xbf16, #tpu.memory_space<vmem>>, vector<512x4096xbf16>
    %cst = arith.constant dense<0.000000e+00> : vector<8x512xf32>
    %5 = tpu.matmul %3, %4, %cst {dimension_numbers = #tpu.dot_dimension_numbers<[1], [1], [0], [0], [0, 0, 1, 0], [], []>} : vector<8x4096xbf16>, vector<512x4096xbf16>, vector<8x512xf32> -> vector<8x512xf32>
    %c0_4 = arith.constant 0 : index
    %c0_5 = arith.constant 0 : index
    %6 = vector.load %arg3[%c0_4, %c0_5] : memref<1x512xf32, #tpu.memory_space<vmem>>, vector<1x512xf32>
    %7 = vector.broadcast %6 : vector<1x512xf32> to vector<8x512xf32>
    %8 = arith.addf %5, %7 : vector<8x512xf32>
    %c0_6 = arith.constant 0 : index
    %c0_7 = arith.constant 0 : index
    %9 = vector.load %arg4[%c0_6, %c0_7] : memref<8x512xbf16, #tpu.memory_space<vmem>>, vector<8x512xbf16>
    %10 = arith.extf %9 : vector<8x512xbf16> to vector<8x512xf32>
    %11 = arith.mulf %8, %10 : vector<8x512xf32>
    %cst_8 = arith.constant 0.000000e+00 : f32
    %12 = vector.broadcast %cst_8 : f32 to vector<8x512xf32>
    %13 = arith.maximumf %11, %12 : vector<8x512xf32>
    %c0_9 = arith.constant 0 : index
    %c0_10 = arith.constant 0 : index
    %14 = vector.load %arg11[%c0_9, %c0_10] : memref<8x256xf32, #tpu.memory_space<vmem>>, vector<8x256xf32>
    %15 = arith.truncf %13 : vector<8x512xf32> to vector<8x512xbf16>
    %c0_11 = arith.constant 0 : index
    %c0_12 = arith.constant 0 : index
    %16 = vector.load %arg5[%c0_11, %c0_12] : memref<256x512xbf16, #tpu.memory_space<vmem>>, vector<256x512xbf16>
    %cst_13 = arith.constant dense<0.000000e+00> : vector<8x256xf32>
    %17 = tpu.matmul %15, %16, %cst_13 {dimension_numbers = #tpu.dot_dimension_numbers<[1], [1], [0], [0], [0, 0, 1, 0], [], []>} : vector<8x512xbf16>, vector<256x512xbf16>, vector<8x256xf32> -> vector<8x256xf32>
    %18 = arith.addf %14, %17 : vector<8x256xf32>
    %c0_14 = arith.constant 0 : index
    %c0_15 = arith.constant 0 : index
    %19 = vector.load %arg11[%c0_14, %c0_15] : memref<8x256xf32, #tpu.memory_space<vmem>>, vector<8x256xf32>
    tpu.vector_store %arg11[%c0_14, %c0_15], %18 {strides = array<i32>} : memref<8x256xf32, #tpu.memory_space<vmem>>, vector<8x256xf32>,
    %c3_i32 = arith.constant 3 : i32
    %20 = arith.cmpi eq, %arg0, %c3_i32 : i32
    %21 = arith.extui %20 : i1 to i32
    %c0_i32_16 = arith.constant 0 : i32
    %22 = arith.cmpi ne, %21, %c0_i32_16 : i32
    scf.if %22 {
      %c0_17 = arith.constant 0 : index
      %c0_18 = arith.constant 0 : index
      %23 = vector.load %arg11[%c0_17, %c0_18] : memref<8x256xf32, #tpu.memory_space<vmem>>, vector<8x256xf32>
      %c0_19 = arith.constant 0 : index
      %c0_20 = arith.constant 0 : index
      %24 = vector.load %arg6[%c0_19, %c0_20] : memref<1x256xf32, #tpu.memory_space<vmem>>, vector<1x256xf32>
      %25 = vector.broadcast %24 : vector<1x256xf32> to vector<8x256xf32>
      %26 = arith.addf %23, %25 : vector<8x256xf32>
      %c0_21 = arith.constant 0 : index
      %c0_22 = arith.constant 0 : index
      %27 = vector.load %arg7[%c0_21, %c0_22] : memref<8x256xbf16, #tpu.memory_space<vmem>>, vector<8x256xbf16>
      %28 = arith.extf %27 : vector<8x256xbf16> to vector<8x256xf32>
      %29 = arith.mulf %26, %28 : vector<8x256xf32>
      %cst_23 = arith.constant 0.000000e+00 : f32
      %30 = vector.broadcast %cst_23 : f32 to vector<8x256xf32>
      %31 = arith.maximumf %29, %30 : vector<8x256xf32>
      %c0_24 = arith.constant 0 : index
      %c0_25 = arith.constant 0 : index
      %32 = vector.load %arg8[%c0_24, %c0_25] : memref<40x256xf32, #tpu.memory_space<vmem>>, vector<40x256xf32>
      %cst_26 = arith.constant dense<0.000000e+00> : vector<8x40xf32>
      %33 = tpu.matmul %31, %32, %cst_26 {dimension_numbers = #tpu.dot_dimension_numbers<[1], [1], [0], [0], [0, 0, 1, 0], [], []>} : vector<8x256xf32>, vector<40x256xf32>, vector<8x40xf32> -> vector<8x40xf32>
      %c0_27 = arith.constant 0 : index
      %c0_28 = arith.constant 0 : index
      %34 = vector.load %arg9[%c0_27, %c0_28] : memref<1x40xf32, #tpu.memory_space<vmem>>, vector<1x40xf32>
      %35 = vector.broadcast %34 : vector<1x40xf32> to vector<8x40xf32>
      %36 = arith.addf %33, %35 : vector<8x40xf32>
      %c0_29 = arith.constant 0 : index
      %c0_30 = arith.constant 0 : index
      %37 = vector.load %arg10[%c0_29, %c0_30] : memref<8x40xf32, #tpu.memory_space<vmem>>, vector<8x40xf32>
      tpu.vector_store %arg10[%c0_29, %c0_30], %36 {strides = array<i32>} : memref<8x40xf32, #tpu.memory_space<vmem>>, vector<8x40xf32>,
    } else {
    }
    return
  }
  func.func @transform_0(%arg0: i32) -> (i32, i32) {
    %c0_i32 = arith.constant 0 : i32
    %c0_i32_0 = arith.constant 0 : i32
    %c0_i32_1 = arith.constant 0 : i32
    return %c0_i32, %c0_i32_0 : i32, i32
  }
  func.func @transform_1(%arg0: i32) -> (i32, i32) {
    %c0_i32 = arith.constant 0 : i32
    %c0_i32_0 = arith.constant 0 : i32
    return %arg0, %c0_i32 : i32, i32
  }
  func.func @transform_2(%arg0: i32) -> (i32, i32) {
    %c0_i32 = arith.constant 0 : i32
    %c0_i32_0 = arith.constant 0 : i32
    return %c0_i32, %arg0 : i32, i32
  }
  func.func @transform_3(%arg0: i32) -> (i32, i32) {
    %c0_i32 = arith.constant 0 : i32
    %c0_i32_0 = arith.constant 0 : i32
    return %c0_i32, %arg0 : i32, i32
  }
  func.func @transform_4(%arg0: i32) -> (i32, i32) {
    %c0_i32 = arith.constant 0 : i32
    %c0_i32_0 = arith.constant 0 : i32
    return %c0_i32, %arg0 : i32, i32
  }
  func.func @transform_5(%arg0: i32) -> (i32, i32) {
    %c0_i32 = arith.constant 0 : i32
    %c0_i32_0 = arith.constant 0 : i32
    %c0_i32_1 = arith.constant 0 : i32
    return %c0_i32, %c0_i32_0 : i32, i32
  }
  func.func @transform_6(%arg0: i32) -> (i32, i32) {
    %c0_i32 = arith.constant 0 : i32
    %c0_i32_0 = arith.constant 0 : i32
    %c0_i32_1 = arith.constant 0 : i32
    return %c0_i32, %c0_i32_0 : i32, i32
  }
  func.func @transform_7(%arg0: i32) -> (i32, i32) {
    %c0_i32 = arith.constant 0 : i32
    %c0_i32_0 = arith.constant 0 : i32
    %c0_i32_1 = arith.constant 0 : i32
    return %c0_i32, %c0_i32_0 : i32, i32
  }
  func.func @transform_8(%arg0: i32) -> (i32, i32) {
    %c0_i32 = arith.constant 0 : i32
    %c0_i32_0 = arith.constant 0 : i32
    %c0_i32_1 = arith.constant 0 : i32
    return %c0_i32, %c0_i32_0 : i32, i32
  }
  func.func @transform_9(%arg0: i32) -> (i32, i32) {
    %c0_i32 = arith.constant 0 : i32
    %c0_i32_0 = arith.constant 0 : i32
    %c0_i32_1 = arith.constant 0 : i32
    return %c0_i32, %c0_i32_0 : i32, i32
  }
}

</mosaic_0001>

<llo_original>
// kernel: dropout_net.3
$region0: #{dropout_net.3}
  #allocation0 [shape = 'u32[]', space=smem, size = 0x4, offset = 0x4, fixed_abs, tag = 'smem constant byte address 0x4 - core index']
  #allocation1 [shape = 'u32[144,128]{1,0:T(1,128)}', space=vmem, size = 0x12000, scoped, tag = 'internal scratch']
  #allocation2 [shape = 'f32[8,256]{1,0:T(8,128)}', space=vmem, size = 0x2000, scoped, tag = 'scratch operand']
  %s0 = inlined_call_operand.vmem [shape: bf16[8,4096], index: 0, kind: input, shape index: {}]
  %s1 = inlined_call_operand.hbm [shape: bf16[2048,4096], index: 1, kind: input, shape index: {}]
  %s2 = inlined_call_operand.hbm [shape: f32[1,2048], index: 2, kind: input, shape index: {}]
  %s3 = inlined_call_operand.vmem [shape: bf16[8,2048], index: 3, kind: input, shape index: {}]
  %s4 = inlined_call_operand.hbm [shape: bf16[256,2048], index: 4, kind: input, shape index: {}]
  %s5 = inlined_call_operand.hbm [shape: f32[1,256], index: 5, kind: input, shape index: {}]
  %s6 = inlined_call_operand.vmem [shape: bf16[8,256], index: 6, kind: input, shape index: {}]
  %s7 = inlined_call_operand.hbm [shape: f32[40,256], index: 7, kind: input, shape index: {}]
  %s8 = inlined_call_operand.hbm [shape: f32[1,40], index: 8, kind: input, shape index: {}]
  %s9 = inlined_call_operand.hbm [shape: f32[8,40], index: 9, kind: output, shape index: {}]
  %s10 = sld [smem:[#allocation0]]
  $region101: #{dropout_net.3} parent=0
    _
  %s12 = ssub.s32 1, %s10
  %s13 = scalar_select 0, %s12, %s10
  $region1: #{dropout_net.3} parent=0
    #allocation3 [shape = 'u8[8388608]{0}', space=vmem, size = 0x800000, scoped, tag = 'input window, operand 1']
    #allocation4 [shape = 's32[2]{0}', space=sflag, size = 0x8, scoped, tag = 'scoped memory for dropout_net.3']
    #allocation5 [shape = 's32[2]{0}', space=sflag, size = 0x8, scoped, tag = 'scoped memory for dropout_net.3']
    #allocation6 [shape = 'u8[4096]{0}', space=vmem, size = 0x1000, scoped, tag = 'input window, operand 2']
    #allocation7 [shape = 's32[2]{0}', space=sflag, size = 0x8, scoped, tag = 'scoped memory for dropout_net.3']
    #allocation8 [shape = 'u8[524288]{0}', space=vmem, size = 0x80000, scoped, tag = 'input window, operand 4']
    #allocation9 [shape = 'u8[1024]{0}', space=vmem, size = 0x400, scoped, tag = 'input window, operand 5, single buffered']
    #allocation10 [shape = 's32[1]{0}', space=sflag, size = 0x4, scoped, tag = 'scoped memory for dropout_net.3']
    #allocation11 [shape = 'u8[40960]{0}', space=vmem, size = 0xa000, scoped, tag = 'input window, operand 7, single buffered']
    #allocation12 [shape = 'u8[512]{0}', space=vmem, size = 0x400, scoped, tag = 'input window, operand 8, single buffered']
    #allocation13 [shape = 's32[1]{0}', space=sflag, size = 0x4, scoped, tag = 'scoped memory for dropout_net.3']
    #allocation14 [shape = 'u8[4096]{0}', space=vmem, size = 0x1000, scoped, tag = 'output window, operand 0, single buffered']
    %14 = vsyncpa [#allocation4], 0
    %s15 = scalar_lea.sflag [#allocation4], 1
    %16 = vsyncpa %s15, 0
    %17 = vsyncpa [#allocation7], 0
    %s18 = scalar_lea.sflag [#allocation7], 1
    %19 = vsyncpa %s18, 0
    %20 = vsyncpa [#allocation10], 0
    %21 = vsyncpa [#allocation13], 0
    %22 = vsyncpa [#allocation5], 0
    loop: start=0, step=1, limit=6
    $region2: #{dropout_net.3} parent=1 // loop_pre_header
      _
    $region3: #{dropout_net.3} parent=1 // loop_header
      %s24 = sphi 0, %s28
      %p25 = scmp.ge.s32.totalorder %s24, 6
      %s32 = sphi 0, %s32
      %s34 = sphi 0, %s32
      %s35 = sphi 0, %s34
      %s49 = sphi 0, %s35
      %s55 = sphi 0, %s57
      %s58 = sphi 0, %s55
      %s59 = sphi 0, %s58
      %s75 = sphi 0, %s59
      %s81 = sphi 0, %s83
      %s84 = sphi 0, %s81
      %s85 = sphi 0, %s84
      %s101 = sphi 0, %s85
      %s107 = sphi 0, %s109
      %s110 = sphi 0, %s107
      %s111 = sphi 0, %s110
      %s127 = sphi 0, %s111
      %s133 = sphi 0, %s135
      %s136 = sphi 0, %s133
      %s137 = sphi 0, %s136
      %s153 = sphi 0, %s137
      %s157 = sphi 0, %s157
      %s159 = sphi 0, %s157
      %s160 = sphi 0, %s159
      %s174 = sphi 0, %s160
      %s178 = sphi 0, %s178
      %s180 = sphi 0, %s178
      %s181 = sphi 0, %s180
      %s195 = sphi 0, %s181
      %s199 = sphi 0, %s199
      %s201 = sphi 0, %s199
      %s202 = sphi 0, %s201
      %s216 = sphi 0, %s202
      %s220 = sphi 0, %s220
      %s222 = sphi 0, %s220
      %s223 = sphi 0, %s222
      %s237 = sphi 0, %s223
      %s241 = sphi 0, %s241
      %s243 = sphi 0, %s241
      %s244 = sphi 0, %s243
      %s258 = sphi 0, %s244
    $region4: #{dropout_net.3} parent=1 // loop_header_branch
      %27 = sbr.rel (%p25) target = $region8
    $region5: #{dropout_net.3} parent=1 // loop_body
      %s29 = ssub.s32 %s24, 1
      %s30 = ssub.s32 %s24, 2
      %s31 = sadd.s32 %s24, 1
      %s33 = sadd.s32 %s32, 1
      %p36 = scmp.eq.s32.totalorder %s24, 3
      %p37 = scmp.ne.s32.totalorder %s32, %s34
      %p38 = scmp.eq.s32.totalorder %s24, 0
      %p39 = por %p37, %p38
      %p40 = scmp.ne.s32.totalorder %s32, %s34
      %p41 = scmp.eq.s32.totalorder %s29, 3
      %p42 = por %p40, %p41
      %p43 = scmp.ne.s32.totalorder %s34, %s35
      %p44 = scmp.eq.s32.totalorder %s29, 0
      %p45 = por %p43, %p44
      %p46 = scmp.ne.s32.totalorder %s34, %s35
      %p47 = scmp.eq.s32.totalorder %s30, 3
      %p48 = por %p46, %p47
      %p50 = scmp.ne.s32.totalorder %s35, %s49
      %p51 = scmp.eq.s32.totalorder %s30, 0
      %p52 = por %p50, %p51
      %s53 = ssub.s32 %s24, %s31
      %p54 = scmp.eq.s32.totalorder %s53, 0
      %s56 = sadd.s32 %s55, 1
      %s57 = scalar_select %p54, %s55, %s56
      %p60 = pneg %p54
      %p61 = scmp.eq.s32.totalorder %s24, 3
      %p62 = por %p60, %p61
      %p63 = scmp.ne.s32.totalorder %s55, %s58
      %p64 = scmp.eq.s32.totalorder %s24, 0
      %p65 = por %p63, %p64
      %p66 = scmp.ne.s32.totalorder %s55, %s58
      %p67 = scmp.eq.s32.totalorder %s29, 3
      %p68 = por %p66, %p67
      %p69 = scmp.ne.s32.totalorder %s58, %s59
      %p70 = scmp.eq.s32.totalorder %s29, 0
      %p71 = por %p69, %p70
      %p72 = scmp.ne.s32.totalorder %s58, %s59
      %p73 = scmp.eq.s32.totalorder %s30, 3
      %p74 = por %p72, %p73
      %p76 = scmp.ne.s32.totalorder %s59, %s75
      %p77 = scmp.eq.s32.totalorder %s30, 0
      %p78 = por %p76, %p77
      %s79 = ssub.s32 %s24, %s31
      %p80 = scmp.eq.s32.totalorder %s79, 0
      %s82 = sadd.s32 %s81, 1
      %s83 = scalar_select %p80, %s81, %s82
      %p86 = pneg %p80
      %p87 = scmp.eq.s32.totalorder %s24, 3
      %p88 = por %p86, %p87
      %p89 = scmp.ne.s32.totalorder %s81, %s84
      %p90 = scmp.eq.s32.totalorder %s24, 0
      %p91 = por %p89, %p90
      %p92 = scmp.ne.s32.totalorder %s81, %s84
      %p93 = scmp.eq.s32.totalorder %s29, 3
      %p94 = por %p92, %p93
      %p95 = scmp.ne.s32.totalorder %s84, %s85
      %p96 = scmp.eq.s32.totalorder %s29, 0
      %p97 = por %p95, %p96
      %p98 = scmp.ne.s32.totalorder %s84, %s85
      %p99 = scmp.eq.s32.totalorder %s30, 3
      %p100 = por %p98, %p99
      %p102 = scmp.ne.s32.totalorder %s85, %s101
      %p103 = scmp.eq.s32.totalorder %s30, 0
      %p104 = por %p102, %p103
      %s105 = ssub.s32 %s24, %s31
      %p106 = scmp.eq.s32.totalorder %s105, 0
      %s108 = sadd.s32 %s107, 1
      %s109 = scalar_select %p106, %s107, %s108
      %p112 = pneg %p106
      %p113 = scmp.eq.s32.totalorder %s24, 3
      %p114 = por %p112, %p113
      %p115 = scmp.ne.s32.totalorder %s107, %s110
      %p116 = scmp.eq.s32.totalorder %s24, 0
      %p117 = por %p115, %p116
      %p118 = scmp.ne.s32.totalorder %s107, %s110
      %p119 = scmp.eq.s32.totalorder %s29, 3
      %p120 = por %p118, %p119
      %p121 = scmp.ne.s32.totalorder %s110, %s111
      %p122 = scmp.eq.s32.totalorder %s29, 0
      %p123 = por %p121, %p122
      %p124 = scmp.ne.s32.totalorder %s110, %s111
      %p125 = scmp.eq.s32.totalorder %s30, 3
      %p126 = por %p124, %p125
      %p128 = scmp.ne.s32.totalorder %s111, %s127
      %p129 = scmp.eq.s32.totalorder %s30, 0
      %p130 = por %p128, %p129
      %s131 = ssub.s32 %s24, %s31
      %p132 = scmp.eq.s32.totalorder %s131, 0
      %s134 = sadd.s32 %s133, 1
      %s135 = scalar_select %p132, %s133, %s134
      %p138 = pneg %p132
      %p139 = scmp.eq.s32.totalorder %s24, 3
      %p140 = por %p138, %p139
      %p141 = scmp.ne.s32.totalorder %s133, %s136
      %p142 = scmp.eq.s32.totalorder %s24, 0
      %p143 = por %p141, %p142
      %p144 = scmp.ne.s32.totalorder %s133, %s136
      %p145 = scmp.eq.s32.totalorder %s29, 3
      %p146 = por %p144, %p145
      %p147 = scmp.ne.s32.totalorder %s136, %s137
      %p148 = scmp.eq.s32.totalorder %s29, 0
      %p149 = por %p147, %p148
      %p150 = scmp.ne.s32.totalorder %s136, %s137
      %p151 = scmp.eq.s32.totalorder %s30, 3
      %p152 = por %p150, %p151
      %p154 = scmp.ne.s32.totalorder %s137, %s153
      %p155 = scmp.eq.s32.totalorder %s30, 0
      %p156 = por %p154, %p155
      %s158 = sadd.s32 %s157, 1
      %p161 = scmp.eq.s32.totalorder %s24, 3
      %p162 = scmp.ne.s32.totalorder %s157, %s159
      %p163 = scmp.eq.s32.totalorder %s24, 0
      %p164 = por %p162, %p163
      %p165 = scmp.ne.s32.totalorder %s157, %s159
      %p166 = scmp.eq.s32.totalorder %s29, 3
      %p167 = por %p165, %p166
      %p168 = scmp.ne.s32.totalorder %s159, %s160
      %p169 = scmp.eq.s32.totalorder %s29, 0
      %p170 = por %p168, %p169
      %p171 = scmp.ne.s32.totalorder %s159, %s160
      %p172 = scmp.eq.s32.totalorder %s30, 3
      %p173 = por %p171, %p172
      %p175 = scmp.ne.s32.totalorder %s160, %s174
      %p176 = scmp.eq.s32.totalorder %s30, 0
      %p177 = por %p175, %p176
      %s179 = sadd.s32 %s178, 1
      %p182 = scmp.eq.s32.totalorder %s24, 3
      %p183 = scmp.ne.s32.totalorder %s178, %s180
      %p184 = scmp.eq.s32.totalorder %s24, 0
      %p185 = por %p183, %p184
      %p186 = scmp.ne.s32.totalorder %s178, %s180
      %p187 = scmp.eq.s32.totalorder %s29, 3
      %p188 = por %p186, %p187
      %p189 = scmp.ne.s32.totalorder %s180, %s181
      %p190 = scmp.eq.s32.totalorder %s29, 0
      %p191 = por %p189, %p190
      %p192 = scmp.ne.s32.totalorder %s180, %s181
      %p193 = scmp.eq.s32.totalorder %s30, 3
      %p194 = por %p192, %p193
      %p196 = scmp.ne.s32.totalorder %s181, %s195
      %p197 = scmp.eq.s32.totalorder %s30, 0
      %p198 = por %p196, %p197
      %s200 = sadd.s32 %s199, 1
      %p203 = scmp.eq.s32.totalorder %s24, 3
      %p204 = scmp.ne.s32.totalorder %s199, %s201
      %p205 = scmp.eq.s32.totalorder %s24, 0
      %p206 = por %p204, %p205
      %p207 = scmp.ne.s32.totalorder %s199, %s201
      %p208 = scmp.eq.s32.totalorder %s29, 3
      %p209 = por %p207, %p208
      %p210 = scmp.ne.s32.totalorder %s201, %s202
      %p211 = scmp.eq.s32.totalorder %s29, 0
      %p212 = por %p210, %p211
      %p213 = scmp.ne.s32.totalorder %s201, %s202
      %p214 = scmp.eq.s32.totalorder %s30, 3
      %p215 = por %p213, %p214
      %p217 = scmp.ne.s32.totalorder %s202, %s216
      %p218 = scmp.eq.s32.totalorder %s30, 0
      %p219 = por %p217, %p218
      %s221 = sadd.s32 %s220, 1
      %p224 = scmp.eq.s32.totalorder %s24, 3
      %p225 = scmp.ne.s32.totalorder %s220, %s222
      %p226 = scmp.eq.s32.totalorder %s24, 0
      %p227 = por %p225, %p226
      %p228 = scmp.ne.s32.totalorder %s220, %s222
      %p229 = scmp.eq.s32.totalorder %s29, 3
      %p230 = por %p228, %p229
      %p231 = scmp.ne.s32.totalorder %s222, %s223
      %p232 = scmp.eq.s32.totalorder %s29, 0
      %p233 = por %p231, %p232
      %p234 = scmp.ne.s32.totalorder %s222, %s223
      %p235 = scmp.eq.s32.totalorder %s30, 3
      %p236 = por %p234, %p235
      %p238 = scmp.ne.s32.totalorder %s223, %s237
      %p239 = scmp.eq.s32.totalorder %s30, 0
      %p240 = por %p238, %p239
      %s242 = sadd.s32 %s241, 1
      %p245 = scmp.eq.s32.totalorder %s24, 3
      %p246 = scmp.ne.s32.totalorder %s241, %s243
      %p247 = scmp.eq.s32.totalorder %s24, 0
      %p248 = por %p246, %p247
      %p249 = scmp.ne.s32.totalorder %s241, %s243
      %p250 = scmp.eq.s32.totalorder %s29, 3
      %p251 = por %p249, %p250
      %p252 = scmp.ne.s32.totalorder %s243, %s244
      %p253 = scmp.eq.s32.totalorder %s29, 0
      %p254 = por %p252, %p253
      %p255 = scmp.ne.s32.totalorder %s243, %s244
      %p256 = scmp.eq.s32.totalorder %s30, 3
      %p257 = por %p255, %p256
      %p259 = scmp.ne.s32.totalorder %s244, %s258
      %p260 = scmp.eq.s32.totalorder %s30, 0
      %p261 = por %p259, %p260
      %p262 = scmp.le.s32.totalorder 1, %s24
      %p263 = scmp.lt.s32.totalorder %s24, 5
      %p264 = pnand %p262, %p263
      %p265 = pneg %p264
      // Predicated region
      $region9: #{dropout_net.3} parent=5 // pred_check
        _
      $region10: #{dropout_net.3} parent=5 // pred_check_branch
        %267 = sbr.rel (%p264) target = $region12
      $region11: #{dropout_net.3} parent=5 // pred_region
        %s268 = ssub.s32 %s24, 1
        // Predicated region
        $region13: #{dropout_net.3} parent=11 // pred_check
          %p269 = pneg %p45
        $region14: #{dropout_net.3} parent=11 // pred_check_branch
          %271 = sbr.rel (%p269) target = $region16
        $region15: #{dropout_net.3} parent=11 // pred_region
          _
        $region16: #{dropout_net.3} parent=11 // pred_fallthru
          _
        // Predicated region
        $region17: #{dropout_net.3} parent=11 // pred_check
          %p272 = pneg %p170
        $region18: #{dropout_net.3} parent=11 // pred_check_branch
          %274 = sbr.rel (%p272) target = $region20
        $region19: #{dropout_net.3} parent=11 // pred_region
          %s276 = ssub.s32 32, 32
          %277 = vsyncadd [#allocation10], %s276
          %s279 = sshll.u32 [#allocation9], 4
          %s280 = int_to_ptr.vmem [resolvable:$true] %s279
          %282 = dma.hbm_to_vmem [thread:$0]  %s5, 32, %s280, [#allocation10]
        $region20: #{dropout_net.3} parent=11 // pred_fallthru
          _
        // Predicated region
        $region21: #{dropout_net.3} parent=11 // pred_check
          %p283 = pneg %p191
        $region22: #{dropout_net.3} parent=11 // pred_check_branch
          %285 = sbr.rel (%p283) target = $region24
        $region23: #{dropout_net.3} parent=11 // pred_region
          _
        $region24: #{dropout_net.3} parent=11 // pred_fallthru
          _
        // Predicated region
        $region25: #{dropout_net.3} parent=11 // pred_check
          %p286 = pneg %p212
        $region26: #{dropout_net.3} parent=11 // pred_check_branch
          %288 = sbr.rel (%p286) target = $region28
        $region27: #{dropout_net.3} parent=11 // pred_region
          %s290 = ssub.s32 1280, 1280
          %291 = vsyncadd [#allocation10], %s290
          %s292 = sshll.u32 [#allocation11], 4
          %s293 = int_to_ptr.vmem [resolvable:$true] %s292
          %298 = dma.hbm_to_vmem [thread:$0]  %s7, 1280, %s293, [#allocation10], 256, 256, 16
        $region28: #{dropout_net.3} parent=11 // pred_fallthru
          _
        // Predicated region
        $region29: #{dropout_net.3} parent=11 // pred_check
          %p299 = pneg %p233
        $region30: #{dropout_net.3} parent=11 // pred_check_branch
          %301 = sbr.rel (%p299) target = $region32
        $region31: #{dropout_net.3} parent=11 // pred_region
          %s303 = ssub.s32 16, 16
          %304 = vsyncadd [#allocation13], %s303
          %s306 = sshll.u32 [#allocation12], 4
          %s307 = int_to_ptr.vmem [resolvable:$true] %s306
          %309 = dma.hbm_to_vmem [thread:$0]  %s8, 16, %s307, [#allocation13]
        $region32: #{dropout_net.3} parent=11 // pred_fallthru
          _
      $region12: #{dropout_net.3} parent=5 // pred_fallthru
        _
      %p310 = scmp.lt.s32.totalorder %s24, 4
      // Predicated region
      $region33: #{dropout_net.3} parent=5 // pred_check
        %p311 = pneg %p310
      $region34: #{dropout_net.3} parent=5 // pred_check_branch
        %313 = sbr.rel (%p311) target = $region36
      $region35: #{dropout_net.3} parent=5 // pred_region
        // Predicated region
        $region37: #{dropout_net.3} parent=35 // pred_check
          %p314 = pneg %p65
        $region38: #{dropout_net.3} parent=35 // pred_check_branch
          %316 = sbr.rel (%p314) target = $region40
        $region39: #{dropout_net.3} parent=35 // pred_region
          %s317 = sand.u32 %s55, 1
          %s318 = scalar_lea.sflag [#allocation4], %s317
          %s319 = sand.u32 %s55, 1
          %s320 = smul.addr %s319, 8192
          %s321 = scalar_lea.vmem [#allocation3], %s320
          %s322 = smul.u32 64, %s24
          %s324 = ssub.s32 131072, 131072
          %325 = vsyncadd %s318, %s324
          %s326 = smul.addr %s322, 32
          %s327 = smul.addr %s326, 64
          %s328 = scalar_lea.hbm %s1, %s327
          %s329 = sshll.u32 %s321, 4
          %s330 = int_to_ptr.vmem [resolvable:$true] %s329
          %335 = dma.hbm_to_vmem [thread:$0]  %s328, 131072, %s330, %s318, 2048, 2048, 128
        $region40: #{dropout_net.3} parent=35 // pred_fallthru
          _
        // Predicated region
        $region41: #{dropout_net.3} parent=35 // pred_check
          %p336 = pneg %p91
        $region42: #{dropout_net.3} parent=35 // pred_check_branch
          %338 = sbr.rel (%p336) target = $region44
        $region43: #{dropout_net.3} parent=35 // pred_region
          %s339 = sand.u32 %s24, 1
          %s340 = scalar_lea.sflag [#allocation7], %s339
          %s341 = sand.u32 %s81, 1
          %s342 = smul.addr %s341, 4
          %s343 = scalar_lea.vmem [#allocation6], %s342
          %s344 = smul.u32 4, %s24
          %s346 = ssub.s32 64, 64
          %347 = vsyncadd %s340, %s346
          %s348 = smul.addr %s344, 16
          %s349 = scalar_lea.hbm %s2, %s348
          %s351 = sshll.u32 %s343, 4
          %s352 = int_to_ptr.vmem [resolvable:$true] %s351
          %354 = dma.hbm_to_vmem [thread:$0]  %s349, 64, %s352, %s340
        $region44: #{dropout_net.3} parent=35 // pred_fallthru
          _
        // Predicated region
        $region45: #{dropout_net.3} parent=35 // pred_check
          %p355 = pneg %p117
        $region46: #{dropout_net.3} parent=35 // pred_check_branch
          %357 = sbr.rel (%p355) target = $region48
        $region47: #{dropout_net.3} parent=35 // pred_region
          %s358 = smul.u32 4, %s24
          %p359 = scmp.lt.s32.totalorder %s358, 15
          %s360 = scalar_select %p359, %s358, 15
          %s361 = smul.addr %s360, 4
          %s362 = scalar_lea.vmem %s3, %s361
          %s363 = smul.u32 4, %s24
        $region48: #{dropout_net.3} parent=35 // pred_fallthru
          _
        // Predicated region
        $region49: #{dropout_net.3} parent=35 // pred_check
          %p364 = pneg %p143
        $region50: #{dropout_net.3} parent=35 // pred_check_branch
          %366 = sbr.rel (%p364) target = $region52
        $region51: #{dropout_net.3} parent=35 // pred_region
          %s367 = sand.u32 %s24, 1
          %s368 = scalar_lea.sflag [#allocation7], %s367
          %s369 = sand.u32 %s133, 1
          %s370 = smul.addr %s369, 512
          %s371 = scalar_lea.vmem [#allocation8], %s370
          %s372 = smul.u32 4, %s24
          %s374 = ssub.s32 8192, 8192
          %375 = vsyncadd %s368, %s374
          %s376 = smul.addr %s372, 64
          %s377 = scalar_lea.hbm %s4, %s376
          %s378 = sshll.u32 %s371, 4
          %s379 = int_to_ptr.vmem [resolvable:$true] %s378
          %384 = dma.hbm_to_vmem [thread:$0]  %s377, 8192, %s379, %s368, 1024, 256, 16
        $region52: #{dropout_net.3} parent=35 // pred_fallthru
          _
      $region36: #{dropout_net.3} parent=5 // pred_fallthru
        _
      %p385 = scmp.le.s32.totalorder 1, %s24
      %p386 = scmp.lt.s32.totalorder %s24, 5
      %p387 = pnand %p385, %p386
      %p388 = pneg %p387
      // Predicated region
      $region53: #{dropout_net.3} parent=5 // pred_check
        _
      $region54: #{dropout_net.3} parent=5 // pred_check_branch
        %390 = sbr.rel (%p387) target = $region56
      $region55: #{dropout_net.3} parent=5 // pred_region
        %s391 = ssub.s32 %s24, 1
        %s392 = sand.u32 %s58, 1
        %s393 = scalar_lea.sflag [#allocation4], %s392
        %s394 = sand.u32 %s58, 1
        %s395 = smul.addr %s394, 8192
        %s396 = scalar_lea.vmem [#allocation3], %s395
        // Predicated region
        $region57: #{dropout_net.3} parent=55 // pred_check
          %p397 = pneg %p71
        $region58: #{dropout_net.3} parent=55 // pred_check_branch
          %399 = sbr.rel (%p397) target = $region60
        $region59: #{dropout_net.3} parent=55 // pred_region
          %400 = dma.done %s393, 131072
        $region60: #{dropout_net.3} parent=55 // pred_fallthru
          _
        %s401 = sand.u32 %s29, 1
        %s402 = scalar_lea.sflag [#allocation7], %s401
        %s403 = sand.u32 %s84, 1
        %s404 = smul.addr %s403, 4
        %s405 = scalar_lea.vmem [#allocation6], %s404
        // Predicated region
        $region61: #{dropout_net.3} parent=55 // pred_check
          %p406 = pneg %p97
        $region62: #{dropout_net.3} parent=55 // pred_check_branch
          %408 = sbr.rel (%p406) target = $region64
        $region63: #{dropout_net.3} parent=55 // pred_region
          %409 = dma.done %s402, 64
        $region64: #{dropout_net.3} parent=55 // pred_fallthru
          _
        %s410 = sand.u32 %s29, 1
        %s411 = scalar_lea.sflag [#allocation7], %s410
        %s412 = sand.u32 %s136, 1
        %s413 = smul.addr %s412, 512
        %s414 = scalar_lea.vmem [#allocation8], %s413
        // Predicated region
        $region65: #{dropout_net.3} parent=55 // pred_check
          %p415 = pneg %p149
        $region66: #{dropout_net.3} parent=55 // pred_check_branch
          %417 = sbr.rel (%p415) target = $region68
        $region67: #{dropout_net.3} parent=55 // pred_region
          %418 = dma.done %s411, 8192
        $region68: #{dropout_net.3} parent=55 // pred_fallthru
          _
        // Predicated region
        $region69: #{dropout_net.3} parent=55 // pred_check
          %p419 = pneg %p170
        $region70: #{dropout_net.3} parent=55 // pred_check_branch
          %421 = sbr.rel (%p419) target = $region72
        $region71: #{dropout_net.3} parent=55 // pred_region
          %422 = dma.done [#allocation10], 32
        $region72: #{dropout_net.3} parent=55 // pred_fallthru
          _
        // Predicated region
        $region73: #{dropout_net.3} parent=55 // pred_check
          %p423 = pneg %p212
        $region74: #{dropout_net.3} parent=55 // pred_check_branch
          %425 = sbr.rel (%p423) target = $region76
        $region75: #{dropout_net.3} parent=55 // pred_region
          %426 = dma.done [#allocation10], 1280
        $region76: #{dropout_net.3} parent=55 // pred_fallthru
          _
        // Predicated region
        $region77: #{dropout_net.3} parent=55 // pred_check
          %p427 = pneg %p233
        $region78: #{dropout_net.3} parent=55 // pred_check_branch
          %429 = sbr.rel (%p427) target = $region80
        $region79: #{dropout_net.3} parent=55 // pred_region
          %430 = dma.done [#allocation13], 16
        $region80: #{dropout_net.3} parent=55 // pred_fallthru
          _
        %p431 = pneg %p45
        %p432 = pneg %p42
        %s433 = sand.u32 %s58, 1
        %s434 = scalar_lea.sflag [#allocation4], %s433
        %s435 = sand.u32 %s58, 1
        %s436 = smul.addr %s435, 8192
        %s437 = scalar_lea.vmem [#allocation3], %s436
        %p438 = pneg %p71
        %p439 = pneg %p68
        %s440 = sand.u32 %s29, 1
        %s441 = scalar_lea.sflag [#allocation7], %s440
        %s442 = sand.u32 %s84, 1
        %s443 = smul.addr %s442, 4
        %s444 = scalar_lea.vmem [#allocation6], %s443
        %p445 = pneg %p97
        %p446 = pneg %p94
        %s447 = smul.u32 4, %s29
        %p448 = scmp.lt.s32.totalorder %s447, 15
        %s449 = scalar_select %p448, %s447, 15
        %s450 = smul.addr %s449, 4
        %s451 = scalar_lea.vmem %s3, %s450
        %p452 = pneg %p123
        %p453 = pneg %p120
        %s454 = sand.u32 %s29, 1
        %s455 = scalar_lea.sflag [#allocation7], %s454
        %s456 = sand.u32 %s136, 1
        %s457 = smul.addr %s456, 512
        %s458 = scalar_lea.vmem [#allocation8], %s457
        %p459 = pneg %p149
        %p460 = pneg %p146
        %p461 = pneg %p170
        %p462 = pneg %p167
        %p463 = pneg %p191
        %p464 = pneg %p188
        %p465 = pneg %p212
        %p466 = pneg %p209
        %p467 = pneg %p233
        %p468 = pneg %p230
        %p469 = pneg %p254
        %p470 = pneg %p251
        %s471 = smul.u32 64, %s29
        %s472 = smul.u32 4, %s29
        %s473 = smul.u32 4, %s29
        %p474 = scmp.lt.s32.totalorder %s473, 15
        %s475 = scalar_select %p474, %s473, 15
        %s476 = smul.addr %s475, 4
        %s477 = scalar_lea.vmem %s3, %s476
        %s478 = smul.u32 4, %s29
        %s479 = smul.u32 4, %s29
        %p480 = scmp.eq.s32.totalorder %s29, 0
        // Predicated region
        $region81: #{dropout_net.3} parent=55 // pred_check
          %p481 = pneg %p480
        $region82: #{dropout_net.3} parent=55 // pred_check_branch
          %483 = sbr.rel (%p481) target = $region84
        $region83: #{dropout_net.3} parent=55 // pred_region
          %484 = vst [vmem:[#allocation2] sm:$0xff] 0.0
          %485 = vst [vmem:[#allocation2 + $0x8] sm:$0xff] 0.0
        $region84: #{dropout_net.3} parent=55 // pred_fallthru
          _
        %v486 = vld [vmem:[%s0] sm:$0xff]
        %v487 = vld [vmem:[%s0 + $0x8] sm:$0xff]
        %v488 = vld [vmem:[%s0 + $0x10] sm:$0xff]
        %v489 = vld [vmem:[%s0 + $0x18] sm:$0xff]
        %v490 = vld [vmem:[%s0 + $0x20] sm:$0xff]
        %v491 = vld [vmem:[%s0 + $0x28] sm:$0xff]
        %v492 = vld [vmem:[%s0 + $0x30] sm:$0xff]
        %v493 = vld [vmem:[%s0 + $0x38] sm:$0xff]
        %v494 = vld [vmem:[%s0 + $0x40] sm:$0xff]
        %v495 = vld [vmem:[%s0 + $0x48] sm:$0xff]
        %v496 = vld [vmem:[%s0 + $0x50] sm:$0xff]
        %v497 = vld [vmem:[%s0 + $0x58] sm:$0xff]
        %v498 = vld [vmem:[%s0 + $0x60] sm:$0xff]
        %v499 = vld [vmem:[%s0 + $0x68] sm:$0xff]
        %v500 = vld [vmem:[%s0 + $0x70] sm:$0xff]
        %v501 = vld [vmem:[%s0 + $0x78] sm:$0xff]
        %v502 = vld [vmem:[%s396] sm:$0xff]
        %v503 = vld [vmem:[%s396 + $0x8] sm:$0xff]
        %v504 = vld [vmem:[%s396 + $0x10] sm:$0xff]
        %v505 = vld [vmem:[%s396 + $0x18] sm:$0xff]
        %v506 = vld [vmem:[%s396 + $0x20] sm:$0xff]
        %v507 = vld [vmem:[%s396 + $0x28] sm:$0xff]
        %v508 = vld [vmem:[%s396 + $0x30] sm:$0xff]
        %v509 = vld [vmem:[%s396 + $0x38] sm:$0xff]
        %v510 = vld [vmem:[%s396 + $0x40] sm:$0xff]
        %v511 = vld [vmem:[%s396 + $0x48] sm:$0xff]
        %v512 = vld [vmem:[%s396 + $0x50] sm:$0xff]
        %v513 = vld [vmem:[%s396 + $0x58] sm:$0xff]
        %v514 = vld [vmem:[%s396 + $0x60] sm:$0xff]
        %v515 = vld [vmem:[%s396 + $0x68] sm:$0xff]
        %v516 = vld [vmem:[%s396 + $0x70] sm:$0xff]
        %v517 = vld [vmem:[%s396 + $0x78] sm:$0xff]
        %v518 = vld [vmem:[%s396 + $0x80] sm:$0xff]
        %v519 = vld [vmem:[%s396 + $0x88] sm:$0xff]
        %v520 = vld [vmem:[%s396 + $0x90] sm:$0xff]
        %v521 = vld [vmem:[%s396 + $0x98] sm:$0xff]
        %v522 = vld [vmem:[%s396 + $0xa0] sm:$0xff]
        %v523 = vld [vmem:[%s396 + $0xa8] sm:$0xff]
        %v524 = vld [vmem:[%s396 + $0xb0] sm:$0xff]
        %v525 = vld [vmem:[%s396 + $0xb8] sm:$0xff]
        %v526 = vld [vmem:[%s396 + $0xc0] sm:$0xff]
        %v527 = vld [vmem:[%s396 + $0xc8] sm:$0xff]
        %v528 = vld [vmem:[%s396 + $0xd0] sm:$0xff]
        %v529 = vld [vmem:[%s396 + $0xd8] sm:$0xff]
        %v530 = vld [vmem:[%s396 + $0xe0] sm:$0xff]
        %v531 = vld [vmem:[%s396 + $0xe8] sm:$0xff]
        %v532 = vld [vmem:[%s396 + $0xf0] sm:$0xff]
        %v533 = vld [vmem:[%s396 + $0xf8] sm:$0xff]
        %v534 = vld [vmem:[%s396 + $0x100] sm:$0xff]
        %v535 = vld [vmem:[%s396 + $0x108] sm:$0xff]
        %v536 = vld [vmem:[%s396 + $0x110] sm:$0xff]
        %v537 = vld [vmem:[%s396 + $0x118] sm:$0xff]
        %v538 = vld [vmem:[%s396 + $0x120] sm:$0xff]
        %v539 = vld [vmem:[%s396 + $0x128] sm:$0xff]
        %v540 = vld [vmem:[%s396 + $0x130] sm:$0xff]
        %v541 = vld [vmem:[%s396 + $0x138] sm:$0xff]
        %v542 = vld [vmem:[%s396 + $0x140] sm:$0xff]
        %v543 = vld [vmem:[%s396 + $0x148] sm:$0xff]
        %v544 = vld [vmem:[%s396 + $0x150] sm:$0xff]
        %v545 = vld [vmem:[%s396 + $0x158] sm:$0xff]
        %v546 = vld [vmem:[%s396 + $0x160] sm:$0xff]
        %v547 = vld [vmem:[%s396 + $0x168] sm:$0xff]
        %v548 = vld [vmem:[%s396 + $0x170] sm:$0xff]
        %v549 = vld [vmem:[%s396 + $0x178] sm:$0xff]
        %v550 = vld [vmem:[%s396 + $0x180] sm:$0xff]
        %v551 = vld [vmem:[%s396 + $0x188] sm:$0xff]
        %v552 = vld [vmem:[%s396 + $0x190] sm:$0xff]
        %v553 = vld [vmem:[%s396 + $0x198] sm:$0xff]
        %v554 = vld [vmem:[%s396 + $0x1a0] sm:$0xff]
        %v555 = vld [vmem:[%s396 + $0x1a8] sm:$0xff]
        %v556 = vld [vmem:[%s396 + $0x1b0] sm:$0xff]
        %v557 = vld [vmem:[%s396 + $0x1b8] sm:$0xff]
        %v558 = vld [vmem:[%s396 + $0x1c0] sm:$0xff]
        %v559 = vld [vmem:[%s396 + $0x1c8] sm:$0xff]
        %v560 = vld [vmem:[%s396 + $0x1d0] sm:$0xff]
        %v561 = vld [vmem:[%s396 + $0x1d8] sm:$0xff]
        %v562 = vld [vmem:[%s396 + $0x1e0] sm:$0xff]
        %v563 = vld [vmem:[%s396 + $0x1e8] sm:$0xff]
        %v564 = vld [vmem:[%s396 + $0x1f0] sm:$0xff]
        %v565 = vld [vmem:[%s396 + $0x1f8] sm:$0xff]
        %v566 = vld [vmem:[%s396 + $0x200] sm:$0xff]
        %v567 = vld [vmem:[%s396 + $0x208] sm:$0xff]
        %v568 = vld [vmem:[%s396 + $0x210] sm:$0xff]
        %v569 = vld [vmem:[%s396 + $0x218] sm:$0xff]
        %v570 = vld [vmem:[%s396 + $0x220] sm:$0xff]
        %v571 = vld [vmem:[%s396 + $0x228] sm:$0xff]
        %v572 = vld [vmem:[%s396 + $0x230] sm:$0xff]
        %v573 = vld [vmem:[%s396 + $0x238] sm:$0xff]
        %v574 = vld [vmem:[%s396 + $0x240] sm:$0xff]
        %v575 = vld [vmem:[%s396 + $0x248] sm:$0xff]
        %v576 = vld [vmem:[%s396 + $0x250] sm:$0xff]
        %v577 = vld [vmem:[%s396 + $0x258] sm:$0xff]
        %v578 = vld [vmem:[%s396 + $0x260] sm:$0xff]
        %v579 = vld [vmem:[%s396 + $0x268] sm:$0xff]
        %v580 = vld [vmem:[%s396 + $0x270] sm:$0xff]
        %v581 = vld [vmem:[%s396 + $0x278] sm:$0xff]
        %v582 = vld [vmem:[%s396 + $0x280] sm:$0xff]
        %v583 = vld [vmem:[%s396 + $0x288] sm:$0xff]
        %v584 = vld [vmem:[%s396 + $0x290] sm:$0xff]
        %v585 = vld [vmem:[%s396 + $0x298] sm:$0xff]
        %v586 = vld [vmem:[%s396 + $0x2a0] sm:$0xff]
        %v587 = vld [vmem:[%s396 + $0x2a8] sm:$0xff]
        %v588 = vld [vmem:[%s396 + $0x2b0] sm:$0xff]
        %v589 = vld [vmem:[%s396 + $0x2b8] sm:$0xff]
        %v590 = vld [vmem:[%s396 + $0x2c0] sm:$0xff]
        %v591 = vld [vmem:[%s396 + $0x2c8] sm:$0xff]
        %v592 = vld [vmem:[%s396 + $0x2d0] sm:$0xff]
        %v593 = vld [vmem:[%s396 + $0x2d8] sm:$0xff]
        %v594 = vld [vmem:[%s396 + $0x2e0] sm:$0xff]
        %v595 = vld [vmem:[%s396 + $0x2e8] sm:$0xff]
        %v596 = vld [vmem:[%s396 + $0x2f0] sm:$0xff]
        %v597 = vld [vmem:[%s396 + $0x2f8] sm:$0xff]
        %v598 = vld [vmem:[%s396 + $0x300] sm:$0xff]
        %v599 = vld [vmem:[%s396 + $0x308] sm:$0xff]
        %v600 = vld [vmem:[%s396 + $0x310] sm:$0xff]
        %v601 = vld [vmem:[%s396 + $0x318] sm:$0xff]
        %v602 = vld [vmem:[%s396 + $0x320] sm:$0xff]
        %v603 = vld [vmem:[%s396 + $0x328] sm:$0xff]
        %v604 = vld [vmem:[%s396 + $0x330] sm:$0xff]
        %v605 = vld [vmem:[%s396 + $0x338] sm:$0xff]
        %v606 = vld [vmem:[%s396 + $0x340] sm:$0xff]
        %v607 = vld [vmem:[%s396 + $0x348] sm:$0xff]
        %v608 = vld [vmem:[%s396 + $0x350] sm:$0xff]
        %v609 = vld [vmem:[%s396 + $0x358] sm:$0xff]
        %v610 = vld [vmem:[%s396 + $0x360] sm:$0xff]
        %v611 = vld [vmem:[%s396 + $0x368] sm:$0xff]
        %v612 = vld [vmem:[%s396 + $0x370] sm:$0xff]
        %v613 = vld [vmem:[%s396 + $0x378] sm:$0xff]
        %v614 = vld [vmem:[%s396 + $0x380] sm:$0xff]
        %v615 = vld [vmem:[%s396 + $0x388] sm:$0xff]
        %v616 = vld [vmem:[%s396 + $0x390] sm:$0xff]
        %v617 = vld [vmem:[%s396 + $0x398] sm:$0xff]
        %v618 = vld [vmem:[%s396 + $0x3a0] sm:$0xff]
        %v619 = vld [vmem:[%s396 + $0x3a8] sm:$0xff]
        %v620 = vld [vmem:[%s396 + $0x3b0] sm:$0xff]
        %v621 = vld [vmem:[%s396 + $0x3b8] sm:$0xff]
        %v622 = vld [vmem:[%s396 + $0x3c0] sm:$0xff]
        %v623 = vld [vmem:[%s396 + $0x3c8] sm:$0xff]
        %v624 = vld [vmem:[%s396 + $0x3d0] sm:$0xff]
        %v625 = vld [vmem:[%s396 + $0x3d8] sm:$0xff]
        %v626 = vld [vmem:[%s396 + $0x3e0] sm:$0xff]
        %v627 = vld [vmem:[%s396 + $0x3e8] sm:$0xff]
        %v628 = vld [vmem:[%s396 + $0x3f0] sm:$0xff]
        %v629 = vld [vmem:[%s396 + $0x3f8] sm:$0xff]
        %v630 = vld [vmem:[%s396 + $0x400] sm:$0xff]
        %v631 = vld [vmem:[%s396 + $0x408] sm:$0xff]
        %v632 = vld [vmem:[%s396 + $0x410] sm:$0xff]
        %v633 = vld [vmem:[%s396 + $0x418] sm:$0xff]
        %v634 = vld [vmem:[%s396 + $0x420] sm:$0xff]
        %v635 = vld [vmem:[%s396 + $0x428] sm:$0xff]
        %v636 = vld [vmem:[%s396 + $0x430] sm:$0xff]
        %v637 = vld [vmem:[%s396 + $0x438] sm:$0xff]
        %v638 = vld [vmem:[%s396 + $0x440] sm:$0xff]
        %v639 = vld [vmem:[%s396 + $0x448] sm:$0xff]
        %v640 = vld [vmem:[%s396 + $0x450] sm:$0xff]
        %v641 = vld [vmem:[%s396 + $0x458] sm:$0xff]
        %v642 = vld [vmem:[%s396 + $0x460] sm:$0xff]
        %v643 = vld [vmem:[%s396 + $0x468] sm:$0xff]
        %v644 = vld [vmem:[%s396 + $0x470] sm:$0xff]
        %v645 = vld [vmem:[%s396 + $0x478] sm:$0xff]
        %v646 = vld [vmem:[%s396 + $0x480] sm:$0xff]
        %v647 = vld [vmem:[%s396 + $0x488] sm:$0xff]
        %v648 = vld [vmem:[%s396 + $0x490] sm:$0xff]
        %v649 = vld [vmem:[%s396 + $0x498] sm:$0xff]
        %v650 = vld [vmem:[%s396 + $0x4a0] sm:$0xff]
        %v651 = vld [vmem:[%s396 + $0x4a8] sm:$0xff]
        %v652 = vld [vmem:[%s396 + $0x4b0] sm:$0xff]
        %v653 = vld [vmem:[%s396 + $0x4b8] sm:$0xff]
        %v654 = vld [vmem:[%s396 + $0x4c0] sm:$0xff]
        %v655 = vld [vmem:[%s396 + $0x4c8] sm:$0xff]
        %v656 = vld [vmem:[%s396 + $0x4d0] sm:$0xff]
        %v657 = vld [vmem:[%s396 + $0x4d8] sm:$0xff]
        %v658 = vld [vmem:[%s396 + $0x4e0] sm:$0xff]
        %v659 = vld [vmem:[%s396 + $0x4e8] sm:$0xff]
        %v660 = vld [vmem:[%s396 + $0x4f0] sm:$0xff]
        %v661 = vld [vmem:[%s396 + $0x4f8] sm:$0xff]
        %v662 = vld [vmem:[%s396 + $0x500] sm:$0xff]
        %v663 = vld [vmem:[%s396 + $0x508] sm:$0xff]
        %v664 = vld [vmem:[%s396 + $0x510] sm:$0xff]
        %v665 = vld [vmem:[%s396 + $0x518] sm:$0xff]
        %v666 = vld [vmem:[%s396 + $0x520] sm:$0xff]
        %v667 = vld [vmem:[%s396 + $0x528] sm:$0xff]
        %v668 = vld [vmem:[%s396 + $0x530] sm:$0xff]
        %v669 = vld [vmem:[%s396 + $0x538] sm:$0xff]
        %v670 = vld [vmem:[%s396 + $0x540] sm:$0xff]
        %v671 = vld [vmem:[%s396 + $0x548] sm:$0xff]
        %v672 = vld [vmem:[%s396 + $0x550] sm:$0xff]
        %v673 = vld [vmem:[%s396 + $0x558] sm:$0xff]
        %v674 = vld [vmem:[%s396 + $0x560] sm:$0xff]
        %v675 = vld [vmem:[%s396 + $0x568] sm:$0xff]
        %v676 = vld [vmem:[%s396 + $0x570] sm:$0xff]
        %v677 = vld [vmem:[%s396 + $0x578] sm:$0xff]
        %v678 = vld [vmem:[%s396 + $0x580] sm:$0xff]
        %v679 = vld [vmem:[%s396 + $0x588] sm:$0xff]
        %v680 = vld [vmem:[%s396 + $0x590] sm:$0xff]
        %v681 = vld [vmem:[%s396 + $0x598] sm:$0xff]
        %v682 = vld [vmem:[%s396 + $0x5a0] sm:$0xff]
        %v683 = vld [vmem:[%s396 + $0x5a8] sm:$0xff]
        %v684 = vld [vmem:[%s396 + $0x5b0] sm:$0xff]
        %v685 = vld [vmem:[%s396 + $0x5b8] sm:$0xff]
        %v686 = vld [vmem:[%s396 + $0x5c0] sm:$0xff]
        %v687 = vld [vmem:[%s396 + $0x5c8] sm:$0xff]
        %v688 = vld [vmem:[%s396 + $0x5d0] sm:$0xff]
        %v689 = vld [vmem:[%s396 + $0x5d8] sm:$0xff]
        %v690 = vld [vmem:[%s396 + $0x5e0] sm:$0xff]
        %v691 = vld [vmem:[%s396 + $0x5e8] sm:$0xff]
        %v692 = vld [vmem:[%s396 + $0x5f0] sm:$0xff]
        %v693 = vld [vmem:[%s396 + $0x5f8] sm:$0xff]
        %v694 = vld [vmem:[%s396 + $0x600] sm:$0xff]
        %v695 = vld [vmem:[%s396 + $0x608] sm:$0xff]
        %v696 = vld [vmem:[%s396 + $0x610] sm:$0xff]
        %v697 = vld [vmem:[%s396 + $0x618] sm:$0xff]
        %v698 = vld [vmem:[%s396 + $0x620] sm:$0xff]
        %v699 = vld [vmem:[%s396 + $0x628] sm:$0xff]
        %v700 = vld [vmem:[%s396 + $0x630] sm:$0xff]
        %v701 = vld [vmem:[%s396 + $0x638] sm:$0xff]
        %v702 = vld [vmem:[%s396 + $0x640] sm:$0xff]
        %v703 = vld [vmem:[%s396 + $0x648] sm:$0xff]
        %v704 = vld [vmem:[%s396 + $0x650] sm:$0xff]
        %v705 = vld [vmem:[%s396 + $0x658] sm:$0xff]
        %v706 = vld [vmem:[%s396 + $0x660] sm:$0xff]
        %v707 = vld [vmem:[%s396 + $0x668] sm:$0xff]
        %v708 = vld [vmem:[%s396 + $0x670] sm:$0xff]
        %v709 = vld [vmem:[%s396 + $0x678] sm:$0xff]
        %v710 = vld [vmem:[%s396 + $0x680] sm:$0xff]
        %v711 = vld [vmem:[%s396 + $0x688] sm:$0xff]
        %v712 = vld [vmem:[%s396 + $0x690] sm:$0xff]
        %v713 = vld [vmem:[%s396 + $0x698] sm:$0xff]
        %v714 = vld [vmem:[%s396 + $0x6a0] sm:$0xff]
        %v715 = vld [vmem:[%s396 + $0x6a8] sm:$0xff]
        %v716 = vld [vmem:[%s396 + $0x6b0] sm:$0xff]
        %v717 = vld [vmem:[%s396 + $0x6b8] sm:$0xff]
        %v718 = vld [vmem:[%s396 + $0x6c0] sm:$0xff]
        %v719 = vld [vmem:[%s396 + $0x6c8] sm:$0xff]
        %v720 = vld [vmem:[%s396 + $0x6d0] sm:$0xff]
        %v721 = vld [vmem:[%s396 + $0x6d8] sm:$0xff]
        %v722 = vld [vmem:[%s396 + $0x6e0] sm:$0xff]
        %v723 = vld [vmem:[%s396 + $0x6e8] sm:$0xff]
        %v724 = vld [vmem:[%s396 + $0x6f0] sm:$0xff]
        %v725 = vld [vmem:[%s396 + $0x6f8] sm:$0xff]
        %v726 = vld [vmem:[%s396 + $0x700] sm:$0xff]
        %v727 = vld [vmem:[%s396 + $0x708] sm:$0xff]
        %v728 = vld [vmem:[%s396 + $0x710] sm:$0xff]
        %v729 = vld [vmem:[%s396 + $0x718] sm:$0xff]
        %v730 = vld [vmem:[%s396 + $0x720] sm:$0xff]
        %v731 = vld [vmem:[%s396 + $0x728] sm:$0xff]
        %v732 = vld [vmem:[%s396 + $0x730] sm:$0xff]
        %v733 = vld [vmem:[%s396 + $0x738] sm:$0xff]
        %v734 = vld [vmem:[%s396 + $0x740] sm:$0xff]
        %v735 = vld [vmem:[%s396 + $0x748] sm:$0xff]
        %v736 = vld [vmem:[%s396 + $0x750] sm:$0xff]
        %v737 = vld [vmem:[%s396 + $0x758] sm:$0xff]
        %v738 = vld [vmem:[%s396 + $0x760] sm:$0xff]
        %v739 = vld [vmem:[%s396 + $0x768] sm:$0xff]
        %v740 = vld [vmem:[%s396 + $0x770] sm:$0xff]
        %v741 = vld [vmem:[%s396 + $0x778] sm:$0xff]
        %v742 = vld [vmem:[%s396 + $0x780] sm:$0xff]
        %v743 = vld [vmem:[%s396 + $0x788] sm:$0xff]
        %v744 = vld [vmem:[%s396 + $0x790] sm:$0xff]
        %v745 = vld [vmem:[%s396 + $0x798] sm:$0xff]
        %v746 = vld [vmem:[%s396 + $0x7a0] sm:$0xff]
        %v747 = vld [vmem:[%s396 + $0x7a8] sm:$0xff]
        %v748 = vld [vmem:[%s396 + $0x7b0] sm:$0xff]
        %v749 = vld [vmem:[%s396 + $0x7b8] sm:$0xff]
        %v750 = vld [vmem:[%s396 + $0x7c0] sm:$0xff]
        %v751 = vld [vmem:[%s396 + $0x7c8] sm:$0xff]
        %v752 = vld [vmem:[%s396 + $0x7d0] sm:$0xff]
        %v753 = vld [vmem:[%s396 + $0x7d8] sm:$0xff]
        %v754 = vld [vmem:[%s396 + $0x7e0] sm:$0xff]
        %v755 = vld [vmem:[%s396 + $0x7e8] sm:$0xff]
        %v756 = vld [vmem:[%s396 + $0x7f0] sm:$0xff]
        %v757 = vld [vmem:[%s396 + $0x7f8] sm:$0xff]
        %v758 = vld [vmem:[%s396 + $0x800] sm:$0xff]
        %v759 = vld [vmem:[%s396 + $0x808] sm:$0xff]
        %v760 = vld [vmem:[%s396 + $0x810] sm:$0xff]
        %v761 = vld [vmem:[%s396 + $0x818] sm:$0xff]
        %v762 = vld [vmem:[%s396 + $0x820] sm:$0xff]
        %v763 = vld [vmem:[%s396 + $0x828] sm:$0xff]
        %v764 = vld [vmem:[%s396 + $0x830] sm:$0xff]
        %v765 = vld [vmem:[%s396 + $0x838] sm:$0xff]
        %v766 = vld [vmem:[%s396 + $0x840] sm:$0xff]
        %v767 = vld [vmem:[%s396 + $0x848] sm:$0xff]
        %v768 = vld [vmem:[%s396 + $0x850] sm:$0xff]
        %v769 = vld [vmem:[%s396 + $0x858] sm:$0xff]
        %v770 = vld [vmem:[%s396 + $0x860] sm:$0xff]
        %v771 = vld [vmem:[%s396 + $0x868] sm:$0xff]
        %v772 = vld [vmem:[%s396 + $0x870] sm:$0xff]
        %v773 = vld [vmem:[%s396 + $0x878] sm:$0xff]
        %v774 = vld [vmem:[%s396 + $0x880] sm:$0xff]
        %v775 = vld [vmem:[%s396 + $0x888] sm:$0xff]
        %v776 = vld [vmem:[%s396 + $0x890] sm:$0xff]
        %v777 = vld [vmem:[%s396 + $0x898] sm:$0xff]
        %v778 = vld [vmem:[%s396 + $0x8a0] sm:$0xff]
        %v779 = vld [vmem:[%s396 + $0x8a8] sm:$0xff]
        %v780 = vld [vmem:[%s396 + $0x8b0] sm:$0xff]
        %v781 = vld [vmem:[%s396 + $0x8b8] sm:$0xff]
        %v782 = vld [vmem:[%s396 + $0x8c0] sm:$0xff]
        %v783 = vld [vmem:[%s396 + $0x8c8] sm:$0xff]
        %v784 = vld [vmem:[%s396 + $0x8d0] sm:$0xff]
        %v785 = vld [vmem:[%s396 + $0x8d8] sm:$0xff]
        %v786 = vld [vmem:[%s396 + $0x8e0] sm:$0xff]
        %v787 = vld [vmem:[%s396 + $0x8e8] sm:$0xff]
        %v788 = vld [vmem:[%s396 + $0x8f0] sm:$0xff]
        %v789 = vld [vmem:[%s396 + $0x8f8] sm:$0xff]
        %v790 = vld [vmem:[%s396 + $0x900] sm:$0xff]
        %v791 = vld [vmem:[%s396 + $0x908] sm:$0xff]
        %v792 = vld [vmem:[%s396 + $0x910] sm:$0xff]
        %v793 = vld [vmem:[%s396 + $0x918] sm:$0xff]
        %v794 = vld [vmem:[%s396 + $0x920] sm:$0xff]
        %v795 = vld [vmem:[%s396 + $0x928] sm:$0xff]
        %v796 = vld [vmem:[%s396 + $0x930] sm:$0xff]
        %v797 = vld [vmem:[%s396 + $0x938] sm:$0xff]
        %v798 = vld [vmem:[%s396 + $0x940] sm:$0xff]
        %v799 = vld [vmem:[%s396 + $0x948] sm:$0xff]
        %v800 = vld [vmem:[%s396 + $0x950] sm:$0xff]
        %v801 = vld [vmem:[%s396 + $0x958] sm:$0xff]
        %v802 = vld [vmem:[%s396 + $0x960] sm:$0xff]
        %v803 = vld [vmem:[%s396 + $0x968] sm:$0xff]
        %v804 = vld [vmem:[%s396 + $0x970] sm:$0xff]
        %v805 = vld [vmem:[%s396 + $0x978] sm:$0xff]
        %v806 = vld [vmem:[%s396 + $0x980] sm:$0xff]
        %v807 = vld [vmem:[%s396 + $0x988] sm:$0xff]
        %v808 = vld [vmem:[%s396 + $0x990] sm:$0xff]
        %v809 = vld [vmem:[%s396 + $0x998] sm:$0xff]
        %v810 = vld [vmem:[%s396 + $0x9a0] sm:$0xff]
        %v811 = vld [vmem:[%s396 + $0x9a8] sm:$0xff]
        %v812 = vld [vmem:[%s396 + $0x9b0] sm:$0xff]
        %v813 = vld [vmem:[%s396 + $0x9b8] sm:$0xff]
        %v814 = vld [vmem:[%s396 + $0x9c0] sm:$0xff]
        %v815 = vld [vmem:[%s396 + $0x9c8] sm:$0xff]
        %v816 = vld [vmem:[%s396 + $0x9d0] sm:$0xff]
        %v817 = vld [vmem:[%s396 + $0x9d8] sm:$0xff]
        %v818 = vld [vmem:[%s396 + $0x9e0] sm:$0xff]
        %v819 = vld [vmem:[%s396 + $0x9e8] sm:$0xff]
        %v820 = vld [vmem:[%s396 + $0x9f0] sm:$0xff]
        %v821 = vld [vmem:[%s396 + $0x9f8] sm:$0xff]
        %v822 = vld [vmem:[%s396 + $0xa00] sm:$0xff]
        %v823 = vld [vmem:[%s396 + $0xa08] sm:$0xff]
        %v824 = vld [vmem:[%s396 + $0xa10] sm:$0xff]
        %v825 = vld [vmem:[%s396 + $0xa18] sm:$0xff]
        %v826 = vld [vmem:[%s396 + $0xa20] sm:$0xff]
        %v827 = vld [vmem:[%s396 + $0xa28] sm:$0xff]
        %v828 = vld [vmem:[%s396 + $0xa30] sm:$0xff]
        %v829 = vld [vmem:[%s396 + $0xa38] sm:$0xff]
        %v830 = vld [vmem:[%s396 + $0xa40] sm:$0xff]
        %v831 = vld [vmem:[%s396 + $0xa48] sm:$0xff]
        %v832 = vld [vmem:[%s396 + $0xa50] sm:$0xff]
        %v833 = vld [vmem:[%s396 + $0xa58] sm:$0xff]
        %v834 = vld [vmem:[%s396 + $0xa60] sm:$0xff]
        %v835 = vld [vmem:[%s396 + $0xa68] sm:$0xff]
        %v836 = vld [vmem:[%s396 + $0xa70] sm:$0xff]
        %v837 = vld [vmem:[%s396 + $0xa78] sm:$0xff]
        %v838 = vld [vmem:[%s396 + $0xa80] sm:$0xff]
        %v839 = vld [vmem:[%s396 + $0xa88] sm:$0xff]
        %v840 = vld [vmem:[%s396 + $0xa90] sm:$0xff]
        %v841 = vld [vmem:[%s396 + $0xa98] sm:$0xff]
        %v842 = vld [vmem:[%s396 + $0xaa0] sm:$0xff]
        %v843 = vld [vmem:[%s396 + $0xaa8] sm:$0xff]
        %v844 = vld [vmem:[%s396 + $0xab0] sm:$0xff]
        %v845 = vld [vmem:[%s396 + $0xab8] sm:$0xff]
        %v846 = vld [vmem:[%s396 + $0xac0] sm:$0xff]
        %v847 = vld [vmem:[%s396 + $0xac8] sm:$0xff]
        %v848 = vld [vmem:[%s396 + $0xad0] sm:$0xff]
        %v849 = vld [vmem:[%s396 + $0xad8] sm:$0xff]
        %v850 = vld [vmem:[%s396 + $0xae0] sm:$0xff]
        %v851 = vld [vmem:[%s396 + $0xae8] sm:$0xff]
        %v852 = vld [vmem:[%s396 + $0xaf0] sm:$0xff]
        %v853 = vld [vmem:[%s396 + $0xaf8] sm:$0xff]
        %v854 = vld [vmem:[%s396 + $0xb00] sm:$0xff]
        %v855 = vld [vmem:[%s396 + $0xb08] sm:$0xff]
        %v856 = vld [vmem:[%s396 + $0xb10] sm:$0xff]
        %v857 = vld [vmem:[%s396 + $0xb18] sm:$0xff]
        %v858 = vld [vmem:[%s396 + $0xb20] sm:$0xff]
        %v859 = vld [vmem:[%s396 + $0xb28] sm:$0xff]
        %v860 = vld [vmem:[%s396 + $0xb30] sm:$0xff]
        %v861 = vld [vmem:[%s396 + $0xb38] sm:$0xff]
        %v862 = vld [vmem:[%s396 + $0xb40] sm:$0xff]
        %v863 = vld [vmem:[%s396 + $0xb48] sm:$0xff]
        %v864 = vld [vmem:[%s396 + $0xb50] sm:$0xff]
        %v865 = vld [vmem:[%s396 + $0xb58] sm:$0xff]
        %v866 = vld [vmem:[%s396 + $0xb60] sm:$0xff]
        %v867 = vld [vmem:[%s396 + $0xb68] sm:$0xff]
        %v868 = vld [vmem:[%s396 + $0xb70] sm:$0xff]
        %v869 = vld [vmem:[%s396 + $0xb78] sm:$0xff]
        %v870 = vld [vmem:[%s396 + $0xb80] sm:$0xff]
        %v871 = vld [vmem:[%s396 + $0xb88] sm:$0xff]
        %v872 = vld [vmem:[%s396 + $0xb90] sm:$0xff]
        %v873 = vld [vmem:[%s396 + $0xb98] sm:$0xff]
        %v874 = vld [vmem:[%s396 + $0xba0] sm:$0xff]
        %v875 = vld [vmem:[%s396 + $0xba8] sm:$0xff]
        %v876 = vld [vmem:[%s396 + $0xbb0] sm:$0xff]
        %v877 = vld [vmem:[%s396 + $0xbb8] sm:$0xff]
        %v878 = vld [vmem:[%s396 + $0xbc0] sm:$0xff]
        %v879 = vld [vmem:[%s396 + $0xbc8] sm:$0xff]
        %v880 = vld [vmem:[%s396 + $0xbd0] sm:$0xff]
        %v881 = vld [vmem:[%s396 + $0xbd8] sm:$0xff]
        %v882 = vld [vmem:[%s396 + $0xbe0] sm:$0xff]
        %v883 = vld [vmem:[%s396 + $0xbe8] sm:$0xff]
        %v884 = vld [vmem:[%s396 + $0xbf0] sm:$0xff]
        %v885 = vld [vmem:[%s396 + $0xbf8] sm:$0xff]
        %v886 = vld [vmem:[%s396 + $0xc00] sm:$0xff]
        %v887 = vld [vmem:[%s396 + $0xc08] sm:$0xff]
        %v888 = vld [vmem:[%s396 + $0xc10] sm:$0xff]
        %v889 = vld [vmem:[%s396 + $0xc18] sm:$0xff]
        %v890 = vld [vmem:[%s396 + $0xc20] sm:$0xff]
        %v891 = vld [vmem:[%s396 + $0xc28] sm:$0xff]
        %v892 = vld [vmem:[%s396 + $0xc30] sm:$0xff]
        %v893 = vld [vmem:[%s396 + $0xc38] sm:$0xff]
        %v894 = vld [vmem:[%s396 + $0xc40] sm:$0xff]
        %v895 = vld [vmem:[%s396 + $0xc48] sm:$0xff]
        %v896 = vld [vmem:[%s396 + $0xc50] sm:$0xff]
        %v897 = vld [vmem:[%s396 + $0xc58] sm:$0xff]
        %v898 = vld [vmem:[%s396 + $0xc60] sm:$0xff]
        %v899 = vld [vmem:[%s396 + $0xc68] sm:$0xff]
        %v900 = vld [vmem:[%s396 + $0xc70] sm:$0xff]
        %v901 = vld [vmem:[%s396 + $0xc78] sm:$0xff]
        %v902 = vld [vmem:[%s396 + $0xc80] sm:$0xff]
        %v903 = vld [vmem:[%s396 + $0xc88] sm:$0xff]
        %v904 = vld [vmem:[%s396 + $0xc90] sm:$0xff]
        %v905 = vld [vmem:[%s396 + $0xc98] sm:$0xff]
        %v906 = vld [vmem:[%s396 + $0xca0] sm:$0xff]
        %v907 = vld [vmem:[%s396 + $0xca8] sm:$0xff]
        %v908 = vld [vmem:[%s396 + $0xcb0] sm:$0xff]
        %v909 = vld [vmem:[%s396 + $0xcb8] sm:$0xff]
        %v910 = vld [vmem:[%s396 + $0xcc0] sm:$0xff]
        %v911 = vld [vmem:[%s396 + $0xcc8] sm:$0xff]
        %v912 = vld [vmem:[%s396 + $0xcd0] sm:$0xff]
        %v913 = vld [vmem:[%s396 + $0xcd8] sm:$0xff]
        %v914 = vld [vmem:[%s396 + $0xce0] sm:$0xff]
        %v915 = vld [vmem:[%s396 + $0xce8] sm:$0xff]
        %v916 = vld [vmem:[%s396 + $0xcf0] sm:$0xff]
        %v917 = vld [vmem:[%s396 + $0xcf8] sm:$0xff]
        %v918 = vld [vmem:[%s396 + $0xd00] sm:$0xff]
        %v919 = vld [vmem:[%s396 + $0xd08] sm:$0xff]
        %v920 = vld [vmem:[%s396 + $0xd10] sm:$0xff]
        %v921 = vld [vmem:[%s396 + $0xd18] sm:$0xff]
        %v922 = vld [vmem:[%s396 + $0xd20] sm:$0xff]
        %v923 = vld [vmem:[%s396 + $0xd28] sm:$0xff]
        %v924 = vld [vmem:[%s396 + $0xd30] sm:$0xff]
        %v925 = vld [vmem:[%s396 + $0xd38] sm:$0xff]
        %v926 = vld [vmem:[%s396 + $0xd40] sm:$0xff]
        %v927 = vld [vmem:[%s396 + $0xd48] sm:$0xff]
        %v928 = vld [vmem:[%s396 + $0xd50] sm:$0xff]
        %v929 = vld [vmem:[%s396 + $0xd58] sm:$0xff]
        %v930 = vld [vmem:[%s396 + $0xd60] sm:$0xff]
        %v931 = vld [vmem:[%s396 + $0xd68] sm:$0xff]
        %v932 = vld [vmem:[%s396 + $0xd70] sm:$0xff]
        %v933 = vld [vmem:[%s396 + $0xd78] sm:$0xff]
        %v934 = vld [vmem:[%s396 + $0xd80] sm:$0xff]
        %v935 = vld [vmem:[%s396 + $0xd88] sm:$0xff]
        %v936 = vld [vmem:[%s396 + $0xd90] sm:$0xff]
        %v937 = vld [vmem:[%s396 + $0xd98] sm:$0xff]
        %v938 = vld [vmem:[%s396 + $0xda0] sm:$0xff]
        %v939 = vld [vmem:[%s396 + $0xda8] sm:$0xff]
        %v940 = vld [vmem:[%s396 + $0xdb0] sm:$0xff]
        %v941 = vld [vmem:[%s396 + $0xdb8] sm:$0xff]
        %v942 = vld [vmem:[%s396 + $0xdc0] sm:$0xff]
        %v943 = vld [vmem:[%s396 + $0xdc8] sm:$0xff]
        %v944 = vld [vmem:[%s396 + $0xdd0] sm:$0xff]
        %v945 = vld [vmem:[%s396 + $0xdd8] sm:$0xff]
        %v946 = vld [vmem:[%s396 + $0xde0] sm:$0xff]
        %v947 = vld [vmem:[%s396 + $0xde8] sm:$0xff]
        %v948 = vld [vmem:[%s396 + $0xdf0] sm:$0xff]
        %v949 = vld [vmem:[%s396 + $0xdf8] sm:$0xff]
        %v950 = vld [vmem:[%s396 + $0xe00] sm:$0xff]
        %v951 = vld [vmem:[%s396 + $0xe08] sm:$0xff]
        %v952 = vld [vmem:[%s396 + $0xe10] sm:$0xff]
        %v953 = vld [vmem:[%s396 + $0xe18] sm:$0xff]
        %v954 = vld [vmem:[%s396 + $0xe20] sm:$0xff]
        %v955 = vld [vmem:[%s396 + $0xe28] sm:$0xff]
        %v956 = vld [vmem:[%s396 + $0xe30] sm:$0xff]
        %v957 = vld [vmem:[%s396 + $0xe38] sm:$0xff]
        %v958 = vld [vmem:[%s396 + $0xe40] sm:$0xff]
        %v959 = vld [vmem:[%s396 + $0xe48] sm:$0xff]
        %v960 = vld [vmem:[%s396 + $0xe50] sm:$0xff]
        %v961 = vld [vmem:[%s396 + $0xe58] sm:$0xff]
        %v962 = vld [vmem:[%s396 + $0xe60] sm:$0xff]
        %v963 = vld [vmem:[%s396 + $0xe68] sm:$0xff]
        %v964 = vld [vmem:[%s396 + $0xe70] sm:$0xff]
        %v965 = vld [vmem:[%s396 + $0xe78] sm:$0xff]
        %v966 = vld [vmem:[%s396 + $0xe80] sm:$0xff]
        %v967 = vld [vmem:[%s396 + $0xe88] sm:$0xff]
        %v968 = vld [vmem:[%s396 + $0xe90] sm:$0xff]
        %v969 = vld [vmem:[%s396 + $0xe98] sm:$0xff]
        %v970 = vld [vmem:[%s396 + $0xea0] sm:$0xff]
        %v971 = vld [vmem:[%s396 + $0xea8] sm:$0xff]
        %v972 = vld [vmem:[%s396 + $0xeb0] sm:$0xff]
        %v973 = vld [vmem:[%s396 + $0xeb8] sm:$0xff]
        %v974 = vld [vmem:[%s396 + $0xec0] sm:$0xff]
        %v975 = vld [vmem:[%s396 + $0xec8] sm:$0xff]
        %v976 = vld [vmem:[%s396 + $0xed0] sm:$0xff]
        %v977 = vld [vmem:[%s396 + $0xed8] sm:$0xff]
        %v978 = vld [vmem:[%s396 + $0xee0] sm:$0xff]
        %v979 = vld [vmem:[%s396 + $0xee8] sm:$0xff]
        %v980 = vld [vmem:[%s396 + $0xef0] sm:$0xff]
        %v981 = vld [vmem:[%s396 + $0xef8] sm:$0xff]
        %v982 = vld [vmem:[%s396 + $0xf00] sm:$0xff]
        %v983 = vld [vmem:[%s396 + $0xf08] sm:$0xff]
        %v984 = vld [vmem:[%s396 + $0xf10] sm:$0xff]
        %v985 = vld [vmem:[%s396 + $0xf18] sm:$0xff]
        %v986 = vld [vmem:[%s396 + $0xf20] sm:$0xff]
        %v987 = vld [vmem:[%s396 + $0xf28] sm:$0xff]
        %v988 = vld [vmem:[%s396 + $0xf30] sm:$0xff]
        %v989 = vld [vmem:[%s396 + $0xf38] sm:$0xff]
        %v990 = vld [vmem:[%s396 + $0xf40] sm:$0xff]
        %v991 = vld [vmem:[%s396 + $0xf48] sm:$0xff]
        %v992 = vld [vmem:[%s396 + $0xf50] sm:$0xff]
        %v993 = vld [vmem:[%s396 + $0xf58] sm:$0xff]
        %v994 = vld [vmem:[%s396 + $0xf60] sm:$0xff]
        %v995 = vld [vmem:[%s396 + $0xf68] sm:$0xff]
        %v996 = vld [vmem:[%s396 + $0xf70] sm:$0xff]
        %v997 = vld [vmem:[%s396 + $0xf78] sm:$0xff]
        %v998 = vld [vmem:[%s396 + $0xf80] sm:$0xff]
        %v999 = vld [vmem:[%s396 + $0xf88] sm:$0xff]
        %v1000 = vld [vmem:[%s396 + $0xf90] sm:$0xff]
        %v1001 = vld [vmem:[%s396 + $0xf98] sm:$0xff]
        %v1002 = vld [vmem:[%s396 + $0xfa0] sm:$0xff]
        %v1003 = vld [vmem:[%s396 + $0xfa8] sm:$0xff]
        %v1004 = vld [vmem:[%s396 + $0xfb0] sm:$0xff]
        %v1005 = vld [vmem:[%s396 + $0xfb8] sm:$0xff]
        %v1006 = vld [vmem:[%s396 + $0xfc0] sm:$0xff]
        %v1007 = vld [vmem:[%s396 + $0xfc8] sm:$0xff]
        %v1008 = vld [vmem:[%s396 + $0xfd0] sm:$0xff]
        %v1009 = vld [vmem:[%s396 + $0xfd8] sm:$0xff]
        %v1010 = vld [vmem:[%s396 + $0xfe0] sm:$0xff]
        %v1011 = vld [vmem:[%s396 + $0xfe8] sm:$0xff]
        %v1012 = vld [vmem:[%s396 + $0xff0] sm:$0xff]
        %v1013 = vld [vmem:[%s396 + $0xff8] sm:$0xff]
        %v1014 = vld [vmem:[%s396 + $0x1000] sm:$0xff]
        %v1015 = vld [vmem:[%s396 + $0x1008] sm:$0xff]
        %v1016 = vld [vmem:[%s396 + $0x1010] sm:$0xff]
        %v1017 = vld [vmem:[%s396 + $0x1018] sm:$0xff]
        %v1018 = vld [vmem:[%s396 + $0x1020] sm:$0xff]
        %v1019 = vld [vmem:[%s396 + $0x1028] sm:$0xff]
        %v1020 = vld [vmem:[%s396 + $0x1030] sm:$0xff]
        %v1021 = vld [vmem:[%s396 + $0x1038] sm:$0xff]
        %v1022 = vld [vmem:[%s396 + $0x1040] sm:$0xff]
        %v1023 = vld [vmem:[%s396 + $0x1048] sm:$0xff]
        %v1024 = vld [vmem:[%s396 + $0x1050] sm:$0xff]
        %v1025 = vld [vmem:[%s396 + $0x1058] sm:$0xff]
        %v1026 = vld [vmem:[%s396 + $0x1060] sm:$0xff]
        %v1027 = vld [vmem:[%s396 + $0x1068] sm:$0xff]
        %v1028 = vld [vmem:[%s396 + $0x1070] sm:$0xff]
        %v1029 = vld [vmem:[%s396 + $0x1078] sm:$0xff]
        %v1030 = vld [vmem:[%s396 + $0x1080] sm:$0xff]
        %v1031 = vld [vmem:[%s396 + $0x1088] sm:$0xff]
        %v1032 = vld [vmem:[%s396 + $0x1090] sm:$0xff]
        %v1033 = vld [vmem:[%s396 + $0x1098] sm:$0xff]
        %v1034 = vld [vmem:[%s396 + $0x10a0] sm:$0xff]
        %v1035 = vld [vmem:[%s396 + $0x10a8] sm:$0xff]
        %v1036 = vld [vmem:[%s396 + $0x10b0] sm:$0xff]
        %v1037 = vld [vmem:[%s396 + $0x10b8] sm:$0xff]
        %v1038 = vld [vmem:[%s396 + $0x10c0] sm:$0xff]
        %v1039 = vld [vmem:[%s396 + $0x10c8] sm:$0xff]
        %v1040 = vld [vmem:[%s396 + $0x10d0] sm:$0xff]
        %v1041 = vld [vmem:[%s396 + $0x10d8] sm:$0xff]
        %v1042 = vld [vmem:[%s396 + $0x10e0] sm:$0xff]
        %v1043 = vld [vmem:[%s396 + $0x10e8] sm:$0xff]
        %v1044 = vld [vmem:[%s396 + $0x10f0] sm:$0xff]
        %v1045 = vld [vmem:[%s396 + $0x10f8] sm:$0xff]
        %v1046 = vld [vmem:[%s396 + $0x1100] sm:$0xff]
        %v1047 = vld [vmem:[%s396 + $0x1108] sm:$0xff]
        %v1048 = vld [vmem:[%s396 + $0x1110] sm:$0xff]
        %v1049 = vld [vmem:[%s396 + $0x1118] sm:$0xff]
        %v1050 = vld [vmem:[%s396 + $0x1120] sm:$0xff]
        %v1051 = vld [vmem:[%s396 + $0x1128] sm:$0xff]
        %v1052 = vld [vmem:[%s396 + $0x1130] sm:$0xff]
        %v1053 = vld [vmem:[%s396 + $0x1138] sm:$0xff]
        %v1054 = vld [vmem:[%s396 + $0x1140] sm:$0xff]
        %v1055 = vld [vmem:[%s396 + $0x1148] sm:$0xff]
        %v1056 = vld [vmem:[%s396 + $0x1150] sm:$0xff]
        %v1057 = vld [vmem:[%s396 + $0x1158] sm:$0xff]
        %v1058 = vld [vmem:[%s396 + $0x1160] sm:$0xff]
        %v1059 = vld [vmem:[%s396 + $0x1168] sm:$0xff]
        %v1060 = vld [vmem:[%s396 + $0x1170] sm:$0xff]
        %v1061 = vld [vmem:[%s396 + $0x1178] sm:$0xff]
        %v1062 = vld [vmem:[%s396 + $0x1180] sm:$0xff]
        %v1063 = vld [vmem:[%s396 + $0x1188] sm:$0xff]
        %v1064 = vld [vmem:[%s396 + $0x1190] sm:$0xff]
        %v1065 = vld [vmem:[%s396 + $0x1198] sm:$0xff]
        %v1066 = vld [vmem:[%s396 + $0x11a0] sm:$0xff]
        %v1067 = vld [vmem:[%s396 + $0x11a8] sm:$0xff]
        %v1068 = vld [vmem:[%s396 + $0x11b0] sm:$0xff]
        %v1069 = vld [vmem:[%s396 + $0x11b8] sm:$0xff]
        %v1070 = vld [vmem:[%s396 + $0x11c0] sm:$0xff]
        %v1071 = vld [vmem:[%s396 + $0x11c8] sm:$0xff]
        %v1072 = vld [vmem:[%s396 + $0x11d0] sm:$0xff]
        %v1073 = vld [vmem:[%s396 + $0x11d8] sm:$0xff]
        %v1074 = vld [vmem:[%s396 + $0x11e0] sm:$0xff]
        %v1075 = vld [vmem:[%s396 + $0x11e8] sm:$0xff]
        %v1076 = vld [vmem:[%s396 + $0x11f0] sm:$0xff]
        %v1077 = vld [vmem:[%s396 + $0x11f8] sm:$0xff]
        %v1078 = vld [vmem:[%s396 + $0x1200] sm:$0xff]
        %v1079 = vld [vmem:[%s396 + $0x1208] sm:$0xff]
        %v1080 = vld [vmem:[%s396 + $0x1210] sm:$0xff]
        %v1081 = vld [vmem:[%s396 + $0x1218] sm:$0xff]
        %v1082 = vld [vmem:[%s396 + $0x1220] sm:$0xff]
        %v1083 = vld [vmem:[%s396 + $0x1228] sm:$0xff]
        %v1084 = vld [vmem:[%s396 + $0x1230] sm:$0xff]
        %v1085 = vld [vmem:[%s396 + $0x1238] sm:$0xff]
        %v1086 = vld [vmem:[%s396 + $0x1240] sm:$0xff]
        %v1087 = vld [vmem:[%s396 + $0x1248] sm:$0xff]
        %v1088 = vld [vmem:[%s396 + $0x1250] sm:$0xff]
        %v1089 = vld [vmem:[%s396 + $0x1258] sm:$0xff]
        %v1090 = vld [vmem:[%s396 + $0x1260] sm:$0xff]
        %v1091 = vld [vmem:[%s396 + $0x1268] sm:$0xff]
        %v1092 = vld [vmem:[%s396 + $0x1270] sm:$0xff]
        %v1093 = vld [vmem:[%s396 + $0x1278] sm:$0xff]
        %v1094 = vld [vmem:[%s396 + $0x1280] sm:$0xff]
        %v1095 = vld [vmem:[%s396 + $0x1288] sm:$0xff]
        %v1096 = vld [vmem:[%s396 + $0x1290] sm:$0xff]
        %v1097 = vld [vmem:[%s396 + $0x1298] sm:$0xff]
        %v1098 = vld [vmem:[%s396 + $0x12a0] sm:$0xff]
        %v1099 = vld [vmem:[%s396 + $0x12a8] sm:$0xff]
        %v1100 = vld [vmem:[%s396 + $0x12b0] sm:$0xff]
        %v1101 = vld [vmem:[%s396 + $0x12b8] sm:$0xff]
        %v1102 = vld [vmem:[%s396 + $0x12c0] sm:$0xff]
        %v1103 = vld [vmem:[%s396 + $0x12c8] sm:$0xff]
        %v1104 = vld [vmem:[%s396 + $0x12d0] sm:$0xff]
        %v1105 = vld [vmem:[%s396 + $0x12d8] sm:$0xff]
        %v1106 = vld [vmem:[%s396 + $0x12e0] sm:$0xff]
        %v1107 = vld [vmem:[%s396 + $0x12e8] sm:$0xff]
        %v1108 = vld [vmem:[%s396 + $0x12f0] sm:$0xff]
        %v1109 = vld [vmem:[%s396 + $0x12f8] sm:$0xff]
        %v1110 = vld [vmem:[%s396 + $0x1300] sm:$0xff]
        %v1111 = vld [vmem:[%s396 + $0x1308] sm:$0xff]
        %v1112 = vld [vmem:[%s396 + $0x1310] sm:$0xff]
        %v1113 = vld [vmem:[%s396 + $0x1318] sm:$0xff]
        %v1114 = vld [vmem:[%s396 + $0x1320] sm:$0xff]
        %v1115 = vld [vmem:[%s396 + $0x1328] sm:$0xff]
        %v1116 = vld [vmem:[%s396 + $0x1330] sm:$0xff]
        %v1117 = vld [vmem:[%s396 + $0x1338] sm:$0xff]
        %v1118 = vld [vmem:[%s396 + $0x1340] sm:$0xff]
        %v1119 = vld [vmem:[%s396 + $0x1348] sm:$0xff]
        %v1120 = vld [vmem:[%s396 + $0x1350] sm:$0xff]
        %v1121 = vld [vmem:[%s396 + $0x1358] sm:$0xff]
        %v1122 = vld [vmem:[%s396 + $0x1360] sm:$0xff]
        %v1123 = vld [vmem:[%s396 + $0x1368] sm:$0xff]
        %v1124 = vld [vmem:[%s396 + $0x1370] sm:$0xff]
        %v1125 = vld [vmem:[%s396 + $0x1378] sm:$0xff]
        %v1126 = vld [vmem:[%s396 + $0x1380] sm:$0xff]
        %v1127 = vld [vmem:[%s396 + $0x1388] sm:$0xff]
        %v1128 = vld [vmem:[%s396 + $0x1390] sm:$0xff]
        %v1129 = vld [vmem:[%s396 + $0x1398] sm:$0xff]
        %v1130 = vld [vmem:[%s396 + $0x13a0] sm:$0xff]
        %v1131 = vld [vmem:[%s396 + $0x13a8] sm:$0xff]
        %v1132 = vld [vmem:[%s396 + $0x13b0] sm:$0xff]
        %v1133 = vld [vmem:[%s396 + $0x13b8] sm:$0xff]
        %v1134 = vld [vmem:[%s396 + $0x13c0] sm:$0xff]
        %v1135 = vld [vmem:[%s396 + $0x13c8] sm:$0xff]
        %v1136 = vld [vmem:[%s396 + $0x13d0] sm:$0xff]
        %v1137 = vld [vmem:[%s396 + $0x13d8] sm:$0xff]
        %v1138 = vld [vmem:[%s396 + $0x13e0] sm:$0xff]
        %v1139 = vld [vmem:[%s396 + $0x13e8] sm:$0xff]
        %v1140 = vld [vmem:[%s396 + $0x13f0] sm:$0xff]
        %v1141 = vld [vmem:[%s396 + $0x13f8] sm:$0xff]
        %v1142 = vld [vmem:[%s396 + $0x1400] sm:$0xff]
        %v1143 = vld [vmem:[%s396 + $0x1408] sm:$0xff]
        %v1144 = vld [vmem:[%s396 + $0x1410] sm:$0xff]
        %v1145 = vld [vmem:[%s396 + $0x1418] sm:$0xff]
        %v1146 = vld [vmem:[%s396 + $0x1420] sm:$0xff]
        %v1147 = vld [vmem:[%s396 + $0x1428] sm:$0xff]
        %v1148 = vld [vmem:[%s396 + $0x1430] sm:$0xff]
        %v1149 = vld [vmem:[%s396 + $0x1438] sm:$0xff]
        %v1150 = vld [vmem:[%s396 + $0x1440] sm:$0xff]
        %v1151 = vld [vmem:[%s396 + $0x1448] sm:$0xff]
        %v1152 = vld [vmem:[%s396 + $0x1450] sm:$0xff]
        %v1153 = vld [vmem:[%s396 + $0x1458] sm:$0xff]
        %v1154 = vld [vmem:[%s396 + $0x1460] sm:$0xff]
        %v1155 = vld [vmem:[%s396 + $0x1468] sm:$0xff]
        %v1156 = vld [vmem:[%s396 + $0x1470] sm:$0xff]
        %v1157 = vld [vmem:[%s396 + $0x1478] sm:$0xff]
        %v1158 = vld [vmem:[%s396 + $0x1480] sm:$0xff]
        %v1159 = vld [vmem:[%s396 + $0x1488] sm:$0xff]
        %v1160 = vld [vmem:[%s396 + $0x1490] sm:$0xff]
        %v1161 = vld [vmem:[%s396 + $0x1498] sm:$0xff]
        %v1162 = vld [vmem:[%s396 + $0x14a0] sm:$0xff]
        %v1163 = vld [vmem:[%s396 + $0x14a8] sm:$0xff]
        %v1164 = vld [vmem:[%s396 + $0x14b0] sm:$0xff]
        %v1165 = vld [vmem:[%s396 + $0x14b8] sm:$0xff]
        %v1166 = vld [vmem:[%s396 + $0x14c0] sm:$0xff]
        %v1167 = vld [vmem:[%s396 + $0x14c8] sm:$0xff]
        %v1168 = vld [vmem:[%s396 + $0x14d0] sm:$0xff]
        %v1169 = vld [vmem:[%s396 + $0x14d8] sm:$0xff]
        %v1170 = vld [vmem:[%s396 + $0x14e0] sm:$0xff]
        %v1171 = vld [vmem:[%s396 + $0x14e8] sm:$0xff]
        %v1172 = vld [vmem:[%s396 + $0x14f0] sm:$0xff]
        %v1173 = vld [vmem:[%s396 + $0x14f8] sm:$0xff]
        %v1174 = vld [vmem:[%s396 + $0x1500] sm:$0xff]
        %v1175 = vld [vmem:[%s396 + $0x1508] sm:$0xff]
        %v1176 = vld [vmem:[%s396 + $0x1510] sm:$0xff]
        %v1177 = vld [vmem:[%s396 + $0x1518] sm:$0xff]
        %v1178 = vld [vmem:[%s396 + $0x1520] sm:$0xff]
        %v1179 = vld [vmem:[%s396 + $0x1528] sm:$0xff]
        %v1180 = vld [vmem:[%s396 + $0x1530] sm:$0xff]
        %v1181 = vld [vmem:[%s396 + $0x1538] sm:$0xff]
        %v1182 = vld [vmem:[%s396 + $0x1540] sm:$0xff]
        %v1183 = vld [vmem:[%s396 + $0x1548] sm:$0xff]
        %v1184 = vld [vmem:[%s396 + $0x1550] sm:$0xff]
        %v1185 = vld [vmem:[%s396 + $0x1558] sm:$0xff]
        %v1186 = vld [vmem:[%s396 + $0x1560] sm:$0xff]
        %v1187 = vld [vmem:[%s396 + $0x1568] sm:$0xff]
        %v1188 = vld [vmem:[%s396 + $0x1570] sm:$0xff]
        %v1189 = vld [vmem:[%s396 + $0x1578] sm:$0xff]
        %v1190 = vld [vmem:[%s396 + $0x1580] sm:$0xff]
        %v1191 = vld [vmem:[%s396 + $0x1588] sm:$0xff]
        %v1192 = vld [vmem:[%s396 + $0x1590] sm:$0xff]
        %v1193 = vld [vmem:[%s396 + $0x1598] sm:$0xff]
        %v1194 = vld [vmem:[%s396 + $0x15a0] sm:$0xff]
        %v1195 = vld [vmem:[%s396 + $0x15a8] sm:$0xff]
        %v1196 = vld [vmem:[%s396 + $0x15b0] sm:$0xff]
        %v1197 = vld [vmem:[%s396 + $0x15b8] sm:$0xff]
        %v1198 = vld [vmem:[%s396 + $0x15c0] sm:$0xff]
        %v1199 = vld [vmem:[%s396 + $0x15c8] sm:$0xff]
        %v1200 = vld [vmem:[%s396 + $0x15d0] sm:$0xff]
        %v1201 = vld [vmem:[%s396 + $0x15d8] sm:$0xff]
        %v1202 = vld [vmem:[%s396 + $0x15e0] sm:$0xff]
        %v1203 = vld [vmem:[%s396 + $0x15e8] sm:$0xff]
        %v1204 = vld [vmem:[%s396 + $0x15f0] sm:$0xff]
        %v1205 = vld [vmem:[%s396 + $0x15f8] sm:$0xff]
        %v1206 = vld [vmem:[%s396 + $0x1600] sm:$0xff]
        %v1207 = vld [vmem:[%s396 + $0x1608] sm:$0xff]
        %v1208 = vld [vmem:[%s396 + $0x1610] sm:$0xff]
        %v1209 = vld [vmem:[%s396 + $0x1618] sm:$0xff]
        %v1210 = vld [vmem:[%s396 + $0x1620] sm:$0xff]
        %v1211 = vld [vmem:[%s396 + $0x1628] sm:$0xff]
        %v1212 = vld [vmem:[%s396 + $0x1630] sm:$0xff]
        %v1213 = vld [vmem:[%s396 + $0x1638] sm:$0xff]
        %v1214 = vld [vmem:[%s396 + $0x1640] sm:$0xff]
        %v1215 = vld [vmem:[%s396 + $0x1648] sm:$0xff]
        %v1216 = vld [vmem:[%s396 + $0x1650] sm:$0xff]
        %v1217 = vld [vmem:[%s396 + $0x1658] sm:$0xff]
        %v1218 = vld [vmem:[%s396 + $0x1660] sm:$0xff]
        %v1219 = vld [vmem:[%s396 + $0x1668] sm:$0xff]
        %v1220 = vld [vmem:[%s396 + $0x1670] sm:$0xff]
        %v1221 = vld [vmem:[%s396 + $0x1678] sm:$0xff]
        %v1222 = vld [vmem:[%s396 + $0x1680] sm:$0xff]
        %v1223 = vld [vmem:[%s396 + $0x1688] sm:$0xff]
        %v1224 = vld [vmem:[%s396 + $0x1690] sm:$0xff]
        %v1225 = vld [vmem:[%s396 + $0x1698] sm:$0xff]
        %v1226 = vld [vmem:[%s396 + $0x16a0] sm:$0xff]
        %v1227 = vld [vmem:[%s396 + $0x16a8] sm:$0xff]
        %v1228 = vld [vmem:[%s396 + $0x16b0] sm:$0xff]
        %v1229 = vld [vmem:[%s396 + $0x16b8] sm:$0xff]
        %v1230 = vld [vmem:[%s396 + $0x16c0] sm:$0xff]
        %v1231 = vld [vmem:[%s396 + $0x16c8] sm:$0xff]
        %v1232 = vld [vmem:[%s396 + $0x16d0] sm:$0xff]
        %v1233 = vld [vmem:[%s396 + $0x16d8] sm:$0xff]
        %v1234 = vld [vmem:[%s396 + $0x16e0] sm:$0xff]
        %v1235 = vld [vmem:[%s396 + $0x16e8] sm:$0xff]
        %v1236 = vld [vmem:[%s396 + $0x16f0] sm:$0xff]
        %v1237 = vld [vmem:[%s396 + $0x16f8] sm:$0xff]
        %v1238 = vld [vmem:[%s396 + $0x1700] sm:$0xff]
        %v1239 = vld [vmem:[%s396 + $0x1708] sm:$0xff]
        %v1240 = vld [vmem:[%s396 + $0x1710] sm:$0xff]
        %v1241 = vld [vmem:[%s396 + $0x1718] sm:$0xff]
        %v1242 = vld [vmem:[%s396 + $0x1720] sm:$0xff]
        %v1243 = vld [vmem:[%s396 + $0x1728] sm:$0xff]
        %v1244 = vld [vmem:[%s396 + $0x1730] sm:$0xff]
        %v1245 = vld [vmem:[%s396 + $0x1738] sm:$0xff]
        %v1246 = vld [vmem:[%s396 + $0x1740] sm:$0xff]
        %v1247 = vld [vmem:[%s396 + $0x1748] sm:$0xff]
        %v1248 = vld [vmem:[%s396 + $0x1750] sm:$0xff]
        %v1249 = vld [vmem:[%s396 + $0x1758] sm:$0xff]
        %v1250 = vld [vmem:[%s396 + $0x1760] sm:$0xff]
        %v1251 = vld [vmem:[%s396 + $0x1768] sm:$0xff]
        %v1252 = vld [vmem:[%s396 + $0x1770] sm:$0xff]
        %v1253 = vld [vmem:[%s396 + $0x1778] sm:$0xff]
        %v1254 = vld [vmem:[%s396 + $0x1780] sm:$0xff]
        %v1255 = vld [vmem:[%s396 + $0x1788] sm:$0xff]
        %v1256 = vld [vmem:[%s396 + $0x1790] sm:$0xff]
        %v1257 = vld [vmem:[%s396 + $0x1798] sm:$0xff]
        %v1258 = vld [vmem:[%s396 + $0x17a0] sm:$0xff]
        %v1259 = vld [vmem:[%s396 + $0x17a8] sm:$0xff]
        %v1260 = vld [vmem:[%s396 + $0x17b0] sm:$0xff]
        %v1261 = vld [vmem:[%s396 + $0x17b8] sm:$0xff]
        %v1262 = vld [vmem:[%s396 + $0x17c0] sm:$0xff]
        %v1263 = vld [vmem:[%s396 + $0x17c8] sm:$0xff]
        %v1264 = vld [vmem:[%s396 + $0x17d0] sm:$0xff]
        %v1265 = vld [vmem:[%s396 + $0x17d8] sm:$0xff]
        %v1266 = vld [vmem:[%s396 + $0x17e0] sm:$0xff]
        %v1267 = vld [vmem:[%s396 + $0x17e8] sm:$0xff]
        %v1268 = vld [vmem:[%s396 + $0x17f0] sm:$0xff]
        %v1269 = vld [vmem:[%s396 + $0x17f8] sm:$0xff]
        %v1270 = vld [vmem:[%s396 + $0x1800] sm:$0xff]
        %v1271 = vld [vmem:[%s396 + $0x1808] sm:$0xff]
        %v1272 = vld [vmem:[%s396 + $0x1810] sm:$0xff]
        %v1273 = vld [vmem:[%s396 + $0x1818] sm:$0xff]
        %v1274 = vld [vmem:[%s396 + $0x1820] sm:$0xff]
        %v1275 = vld [vmem:[%s396 + $0x1828] sm:$0xff]
        %v1276 = vld [vmem:[%s396 + $0x1830] sm:$0xff]
        %v1277 = vld [vmem:[%s396 + $0x1838] sm:$0xff]
        %v1278 = vld [vmem:[%s396 + $0x1840] sm:$0xff]
        %v1279 = vld [vmem:[%s396 + $0x1848] sm:$0xff]
        %v1280 = vld [vmem:[%s396 + $0x1850] sm:$0xff]
        %v1281 = vld [vmem:[%s396 + $0x1858] sm:$0xff]
        %v1282 = vld [vmem:[%s396 + $0x1860] sm:$0xff]
        %v1283 = vld [vmem:[%s396 + $0x1868] sm:$0xff]
        %v1284 = vld [vmem:[%s396 + $0x1870] sm:$0xff]
        %v1285 = vld [vmem:[%s396 + $0x1878] sm:$0xff]
        %v1286 = vld [vmem:[%s396 + $0x1880] sm:$0xff]
        %v1287 = vld [vmem:[%s396 + $0x1888] sm:$0xff]
        %v1288 = vld [vmem:[%s396 + $0x1890] sm:$0xff]
        %v1289 = vld [vmem:[%s396 + $0x1898] sm:$0xff]
        %v1290 = vld [vmem:[%s396 + $0x18a0] sm:$0xff]
        %v1291 = vld [vmem:[%s396 + $0x18a8] sm:$0xff]
        %v1292 = vld [vmem:[%s396 + $0x18b0] sm:$0xff]
        %v1293 = vld [vmem:[%s396 + $0x18b8] sm:$0xff]
        %v1294 = vld [vmem:[%s396 + $0x18c0] sm:$0xff]
        %v1295 = vld [vmem:[%s396 + $0x18c8] sm:$0xff]
        %v1296 = vld [vmem:[%s396 + $0x18d0] sm:$0xff]
        %v1297 = vld [vmem:[%s396 + $0x18d8] sm:$0xff]
        %v1298 = vld [vmem:[%s396 + $0x18e0] sm:$0xff]
        %v1299 = vld [vmem:[%s396 + $0x18e8] sm:$0xff]
        %v1300 = vld [vmem:[%s396 + $0x18f0] sm:$0xff]
        %v1301 = vld [vmem:[%s396 + $0x18f8] sm:$0xff]
        %v1302 = vld [vmem:[%s396 + $0x1900] sm:$0xff]
        %v1303 = vld [vmem:[%s396 + $0x1908] sm:$0xff]
        %v1304 = vld [vmem:[%s396 + $0x1910] sm:$0xff]
        %v1305 = vld [vmem:[%s396 + $0x1918] sm:$0xff]
        %v1306 = vld [vmem:[%s396 + $0x1920] sm:$0xff]
        %v1307 = vld [vmem:[%s396 + $0x1928] sm:$0xff]
        %v1308 = vld [vmem:[%s396 + $0x1930] sm:$0xff]
        %v1309 = vld [vmem:[%s396 + $0x1938] sm:$0xff]
        %v1310 = vld [vmem:[%s396 + $0x1940] sm:$0xff]
        %v1311 = vld [vmem:[%s396 + $0x1948] sm:$0xff]
        %v1312 = vld [vmem:[%s396 + $0x1950] sm:$0xff]
        %v1313 = vld [vmem:[%s396 + $0x1958] sm:$0xff]
        %v1314 = vld [vmem:[%s396 + $0x1960] sm:$0xff]
        %v1315 = vld [vmem:[%s396 + $0x1968] sm:$0xff]
        %v1316 = vld [vmem:[%s396 + $0x1970] sm:$0xff]
        %v1317 = vld [vmem:[%s396 + $0x1978] sm:$0xff]
        %v1318 = vld [vmem:[%s396 + $0x1980] sm:$0xff]
        %v1319 = vld [vmem:[%s396 + $0x1988] sm:$0xff]
        %v1320 = vld [vmem:[%s396 + $0x1990] sm:$0xff]
        %v1321 = vld [vmem:[%s396 + $0x1998] sm:$0xff]
        %v1322 = vld [vmem:[%s396 + $0x19a0] sm:$0xff]
        %v1323 = vld [vmem:[%s396 + $0x19a8] sm:$0xff]
        %v1324 = vld [vmem:[%s396 + $0x19b0] sm:$0xff]
        %v1325 = vld [vmem:[%s396 + $0x19b8] sm:$0xff]
        %v1326 = vld [vmem:[%s396 + $0x19c0] sm:$0xff]
        %v1327 = vld [vmem:[%s396 + $0x19c8] sm:$0xff]
        %v1328 = vld [vmem:[%s396 + $0x19d0] sm:$0xff]
        %v1329 = vld [vmem:[%s396 + $0x19d8] sm:$0xff]
        %v1330 = vld [vmem:[%s396 + $0x19e0] sm:$0xff]
        %v1331 = vld [vmem:[%s396 + $0x19e8] sm:$0xff]
        %v1332 = vld [vmem:[%s396 + $0x19f0] sm:$0xff]
        %v1333 = vld [vmem:[%s396 + $0x19f8] sm:$0xff]
        %v1334 = vld [vmem:[%s396 + $0x1a00] sm:$0xff]
        %v1335 = vld [vmem:[%s396 + $0x1a08] sm:$0xff]
        %v1336 = vld [vmem:[%s396 + $0x1a10] sm:$0xff]
        %v1337 = vld [vmem:[%s396 + $0x1a18] sm:$0xff]
        %v1338 = vld [vmem:[%s396 + $0x1a20] sm:$0xff]
        %v1339 = vld [vmem:[%s396 + $0x1a28] sm:$0xff]
        %v1340 = vld [vmem:[%s396 + $0x1a30] sm:$0xff]
        %v1341 = vld [vmem:[%s396 + $0x1a38] sm:$0xff]
        %v1342 = vld [vmem:[%s396 + $0x1a40] sm:$0xff]
        %v1343 = vld [vmem:[%s396 + $0x1a48] sm:$0xff]
        %v1344 = vld [vmem:[%s396 + $0x1a50] sm:$0xff]
        %v1345 = vld [vmem:[%s396 + $0x1a58] sm:$0xff]
        %v1346 = vld [vmem:[%s396 + $0x1a60] sm:$0xff]
        %v1347 = vld [vmem:[%s396 + $0x1a68] sm:$0xff]
        %v1348 = vld [vmem:[%s396 + $0x1a70] sm:$0xff]
        %v1349 = vld [vmem:[%s396 + $0x1a78] sm:$0xff]
        %v1350 = vld [vmem:[%s396 + $0x1a80] sm:$0xff]
        %v1351 = vld [vmem:[%s396 + $0x1a88] sm:$0xff]
        %v1352 = vld [vmem:[%s396 + $0x1a90] sm:$0xff]
        %v1353 = vld [vmem:[%s396 + $0x1a98] sm:$0xff]
        %v1354 = vld [vmem:[%s396 + $0x1aa0] sm:$0xff]
        %v1355 = vld [vmem:[%s396 + $0x1aa8] sm:$0xff]
        %v1356 = vld [vmem:[%s396 + $0x1ab0] sm:$0xff]
        %v1357 = vld [vmem:[%s396 + $0x1ab8] sm:$0xff]
        %v1358 = vld [vmem:[%s396 + $0x1ac0] sm:$0xff]
        %v1359 = vld [vmem:[%s396 + $0x1ac8] sm:$0xff]
        %v1360 = vld [vmem:[%s396 + $0x1ad0] sm:$0xff]
        %v1361 = vld [vmem:[%s396 + $0x1ad8] sm:$0xff]
        %v1362 = vld [vmem:[%s396 + $0x1ae0] sm:$0xff]
        %v1363 = vld [vmem:[%s396 + $0x1ae8] sm:$0xff]
        %v1364 = vld [vmem:[%s396 + $0x1af0] sm:$0xff]
        %v1365 = vld [vmem:[%s396 + $0x1af8] sm:$0xff]
        %v1366 = vld [vmem:[%s396 + $0x1b00] sm:$0xff]
        %v1367 = vld [vmem:[%s396 + $0x1b08] sm:$0xff]
        %v1368 = vld [vmem:[%s396 + $0x1b10] sm:$0xff]
        %v1369 = vld [vmem:[%s396 + $0x1b18] sm:$0xff]
        %v1370 = vld [vmem:[%s396 + $0x1b20] sm:$0xff]
        %v1371 = vld [vmem:[%s396 + $0x1b28] sm:$0xff]
        %v1372 = vld [vmem:[%s396 + $0x1b30] sm:$0xff]
        %v1373 = vld [vmem:[%s396 + $0x1b38] sm:$0xff]
        %v1374 = vld [vmem:[%s396 + $0x1b40] sm:$0xff]
        %v1375 = vld [vmem:[%s396 + $0x1b48] sm:$0xff]
        %v1376 = vld [vmem:[%s396 + $0x1b50] sm:$0xff]
        %v1377 = vld [vmem:[%s396 + $0x1b58] sm:$0xff]
        %v1378 = vld [vmem:[%s396 + $0x1b60] sm:$0xff]
        %v1379 = vld [vmem:[%s396 + $0x1b68] sm:$0xff]
        %v1380 = vld [vmem:[%s396 + $0x1b70] sm:$0xff]
        %v1381 = vld [vmem:[%s396 + $0x1b78] sm:$0xff]
        %v1382 = vld [vmem:[%s396 + $0x1b80] sm:$0xff]
        %v1383 = vld [vmem:[%s396 + $0x1b88] sm:$0xff]
        %v1384 = vld [vmem:[%s396 + $0x1b90] sm:$0xff]
        %v1385 = vld [vmem:[%s396 + $0x1b98] sm:$0xff]
        %v1386 = vld [vmem:[%s396 + $0x1ba0] sm:$0xff]
        %v1387 = vld [vmem:[%s396 + $0x1ba8] sm:$0xff]
        %v1388 = vld [vmem:[%s396 + $0x1bb0] sm:$0xff]
        %v1389 = vld [vmem:[%s396 + $0x1bb8] sm:$0xff]
        %v1390 = vld [vmem:[%s396 + $0x1bc0] sm:$0xff]
        %v1391 = vld [vmem:[%s396 + $0x1bc8] sm:$0xff]
        %v1392 = vld [vmem:[%s396 + $0x1bd0] sm:$0xff]
        %v1393 = vld [vmem:[%s396 + $0x1bd8] sm:$0xff]
        %v1394 = vld [vmem:[%s396 + $0x1be0] sm:$0xff]
        %v1395 = vld [vmem:[%s396 + $0x1be8] sm:$0xff]
        %v1396 = vld [vmem:[%s396 + $0x1bf0] sm:$0xff]
        %v1397 = vld [vmem:[%s396 + $0x1bf8] sm:$0xff]
        %v1398 = vld [vmem:[%s396 + $0x1c00] sm:$0xff]
        %v1399 = vld [vmem:[%s396 + $0x1c08] sm:$0xff]
        %v1400 = vld [vmem:[%s396 + $0x1c10] sm:$0xff]
        %v1401 = vld [vmem:[%s396 + $0x1c18] sm:$0xff]
        %v1402 = vld [vmem:[%s396 + $0x1c20] sm:$0xff]
        %v1403 = vld [vmem:[%s396 + $0x1c28] sm:$0xff]
        %v1404 = vld [vmem:[%s396 + $0x1c30] sm:$0xff]
        %v1405 = vld [vmem:[%s396 + $0x1c38] sm:$0xff]
        %v1406 = vld [vmem:[%s396 + $0x1c40] sm:$0xff]
        %v1407 = vld [vmem:[%s396 + $0x1c48] sm:$0xff]
        %v1408 = vld [vmem:[%s396 + $0x1c50] sm:$0xff]
        %v1409 = vld [vmem:[%s396 + $0x1c58] sm:$0xff]
        %v1410 = vld [vmem:[%s396 + $0x1c60] sm:$0xff]
        %v1411 = vld [vmem:[%s396 + $0x1c68] sm:$0xff]
        %v1412 = vld [vmem:[%s396 + $0x1c70] sm:$0xff]
        %v1413 = vld [vmem:[%s396 + $0x1c78] sm:$0xff]
        %v1414 = vld [vmem:[%s396 + $0x1c80] sm:$0xff]
        %v1415 = vld [vmem:[%s396 + $0x1c88] sm:$0xff]
        %v1416 = vld [vmem:[%s396 + $0x1c90] sm:$0xff]
        %v1417 = vld [vmem:[%s396 + $0x1c98] sm:$0xff]
        %v1418 = vld [vmem:[%s396 + $0x1ca0] sm:$0xff]
        %v1419 = vld [vmem:[%s396 + $0x1ca8] sm:$0xff]
        %v1420 = vld [vmem:[%s396 + $0x1cb0] sm:$0xff]
        %v1421 = vld [vmem:[%s396 + $0x1cb8] sm:$0xff]
        %v1422 = vld [vmem:[%s396 + $0x1cc0] sm:$0xff]
        %v1423 = vld [vmem:[%s396 + $0x1cc8] sm:$0xff]
        %v1424 = vld [vmem:[%s396 + $0x1cd0] sm:$0xff]
        %v1425 = vld [vmem:[%s396 + $0x1cd8] sm:$0xff]
        %v1426 = vld [vmem:[%s396 + $0x1ce0] sm:$0xff]
        %v1427 = vld [vmem:[%s396 + $0x1ce8] sm:$0xff]
        %v1428 = vld [vmem:[%s396 + $0x1cf0] sm:$0xff]
        %v1429 = vld [vmem:[%s396 + $0x1cf8] sm:$0xff]
        %v1430 = vld [vmem:[%s396 + $0x1d00] sm:$0xff]
        %v1431 = vld [vmem:[%s396 + $0x1d08] sm:$0xff]
        %v1432 = vld [vmem:[%s396 + $0x1d10] sm:$0xff]
        %v1433 = vld [vmem:[%s396 + $0x1d18] sm:$0xff]
        %v1434 = vld [vmem:[%s396 + $0x1d20] sm:$0xff]
        %v1435 = vld [vmem:[%s396 + $0x1d28] sm:$0xff]
        %v1436 = vld [vmem:[%s396 + $0x1d30] sm:$0xff]
        %v1437 = vld [vmem:[%s396 + $0x1d38] sm:$0xff]
        %v1438 = vld [vmem:[%s396 + $0x1d40] sm:$0xff]
        %v1439 = vld [vmem:[%s396 + $0x1d48] sm:$0xff]
        %v1440 = vld [vmem:[%s396 + $0x1d50] sm:$0xff]
        %v1441 = vld [vmem:[%s396 + $0x1d58] sm:$0xff]
        %v1442 = vld [vmem:[%s396 + $0x1d60] sm:$0xff]
        %v1443 = vld [vmem:[%s396 + $0x1d68] sm:$0xff]
        %v1444 = vld [vmem:[%s396 + $0x1d70] sm:$0xff]
        %v1445 = vld [vmem:[%s396 + $0x1d78] sm:$0xff]
        %v1446 = vld [vmem:[%s396 + $0x1d80] sm:$0xff]
        %v1447 = vld [vmem:[%s396 + $0x1d88] sm:$0xff]
        %v1448 = vld [vmem:[%s396 + $0x1d90] sm:$0xff]
        %v1449 = vld [vmem:[%s396 + $0x1d98] sm:$0xff]
        %v1450 = vld [vmem:[%s396 + $0x1da0] sm:$0xff]
        %v1451 = vld [vmem:[%s396 + $0x1da8] sm:$0xff]
        %v1452 = vld [vmem:[%s396 + $0x1db0] sm:$0xff]
        %v1453 = vld [vmem:[%s396 + $0x1db8] sm:$0xff]
        %v1454 = vld [vmem:[%s396 + $0x1dc0] sm:$0xff]
        %v1455 = vld [vmem:[%s396 + $0x1dc8] sm:$0xff]
        %v1456 = vld [vmem:[%s396 + $0x1dd0] sm:$0xff]
        %v1457 = vld [vmem:[%s396 + $0x1dd8] sm:$0xff]
        %v1458 = vld [vmem:[%s396 + $0x1de0] sm:$0xff]
        %v1459 = vld [vmem:[%s396 + $0x1de8] sm:$0xff]
        %v1460 = vld [vmem:[%s396 + $0x1df0] sm:$0xff]
        %v1461 = vld [vmem:[%s396 + $0x1df8] sm:$0xff]
        %v1462 = vld [vmem:[%s396 + $0x1e00] sm:$0xff]
        %v1463 = vld [vmem:[%s396 + $0x1e08] sm:$0xff]
        %v1464 = vld [vmem:[%s396 + $0x1e10] sm:$0xff]
        %v1465 = vld [vmem:[%s396 + $0x1e18] sm:$0xff]
        %v1466 = vld [vmem:[%s396 + $0x1e20] sm:$0xff]
        %v1467 = vld [vmem:[%s396 + $0x1e28] sm:$0xff]
        %v1468 = vld [vmem:[%s396 + $0x1e30] sm:$0xff]
        %v1469 = vld [vmem:[%s396 + $0x1e38] sm:$0xff]
        %v1470 = vld [vmem:[%s396 + $0x1e40] sm:$0xff]
        %v1471 = vld [vmem:[%s396 + $0x1e48] sm:$0xff]
        %v1472 = vld [vmem:[%s396 + $0x1e50] sm:$0xff]
        %v1473 = vld [vmem:[%s396 + $0x1e58] sm:$0xff]
        %v1474 = vld [vmem:[%s396 + $0x1e60] sm:$0xff]
        %v1475 = vld [vmem:[%s396 + $0x1e68] sm:$0xff]
        %v1476 = vld [vmem:[%s396 + $0x1e70] sm:$0xff]
        %v1477 = vld [vmem:[%s396 + $0x1e78] sm:$0xff]
        %v1478 = vld [vmem:[%s396 + $0x1e80] sm:$0xff]
        %v1479 = vld [vmem:[%s396 + $0x1e88] sm:$0xff]
        %v1480 = vld [vmem:[%s396 + $0x1e90] sm:$0xff]
        %v1481 = vld [vmem:[%s396 + $0x1e98] sm:$0xff]
        %v1482 = vld [vmem:[%s396 + $0x1ea0] sm:$0xff]
        %v1483 = vld [vmem:[%s396 + $0x1ea8] sm:$0xff]
        %v1484 = vld [vmem:[%s396 + $0x1eb0] sm:$0xff]
        %v1485 = vld [vmem:[%s396 + $0x1eb8] sm:$0xff]
        %v1486 = vld [vmem:[%s396 + $0x1ec0] sm:$0xff]
        %v1487 = vld [vmem:[%s396 + $0x1ec8] sm:$0xff]
        %v1488 = vld [vmem:[%s396 + $0x1ed0] sm:$0xff]
        %v1489 = vld [vmem:[%s396 + $0x1ed8] sm:$0xff]
        %v1490 = vld [vmem:[%s396 + $0x1ee0] sm:$0xff]
        %v1491 = vld [vmem:[%s396 + $0x1ee8] sm:$0xff]
        %v1492 = vld [vmem:[%s396 + $0x1ef0] sm:$0xff]
        %v1493 = vld [vmem:[%s396 + $0x1ef8] sm:$0xff]
        %v1494 = vld [vmem:[%s396 + $0x1f00] sm:$0xff]
        %v1495 = vld [vmem:[%s396 + $0x1f08] sm:$0xff]
        %v1496 = vld [vmem:[%s396 + $0x1f10] sm:$0xff]
        %v1497 = vld [vmem:[%s396 + $0x1f18] sm:$0xff]
        %v1498 = vld [vmem:[%s396 + $0x1f20] sm:$0xff]
        %v1499 = vld [vmem:[%s396 + $0x1f28] sm:$0xff]
        %v1500 = vld [vmem:[%s396 + $0x1f30] sm:$0xff]
        %v1501 = vld [vmem:[%s396 + $0x1f38] sm:$0xff]
        %v1502 = vld [vmem:[%s396 + $0x1f40] sm:$0xff]
        %v1503 = vld [vmem:[%s396 + $0x1f48] sm:$0xff]
        %v1504 = vld [vmem:[%s396 + $0x1f50] sm:$0xff]
        %v1505 = vld [vmem:[%s396 + $0x1f58] sm:$0xff]
        %v1506 = vld [vmem:[%s396 + $0x1f60] sm:$0xff]
        %v1507 = vld [vmem:[%s396 + $0x1f68] sm:$0xff]
        %v1508 = vld [vmem:[%s396 + $0x1f70] sm:$0xff]
        %v1509 = vld [vmem:[%s396 + $0x1f78] sm:$0xff]
        %v1510 = vld [vmem:[%s396 + $0x1f80] sm:$0xff]
        %v1511 = vld [vmem:[%s396 + $0x1f88] sm:$0xff]
        %v1512 = vld [vmem:[%s396 + $0x1f90] sm:$0xff]
        %v1513 = vld [vmem:[%s396 + $0x1f98] sm:$0xff]
        %v1514 = vld [vmem:[%s396 + $0x1fa0] sm:$0xff]
        %v1515 = vld [vmem:[%s396 + $0x1fa8] sm:$0xff]
        %v1516 = vld [vmem:[%s396 + $0x1fb0] sm:$0xff]
        %v1517 = vld [vmem:[%s396 + $0x1fb8] sm:$0xff]
        %v1518 = vld [vmem:[%s396 + $0x1fc0] sm:$0xff]
        %v1519 = vld [vmem:[%s396 + $0x1fc8] sm:$0xff]
        %v1520 = vld [vmem:[%s396 + $0x1fd0] sm:$0xff]
        %v1521 = vld [vmem:[%s396 + $0x1fd8] sm:$0xff]
        %v1522 = vld [vmem:[%s396 + $0x1fe0] sm:$0xff]
        %v1523 = vld [vmem:[%s396 + $0x1fe8] sm:$0xff]
        %v1524 = vld [vmem:[%s396 + $0x1ff0] sm:$0xff]
        %v1525 = vld [vmem:[%s396 + $0x1ff8] sm:$0xff]
        %v1526 = vld [vmem:[%s405] sm:$0xf]
        %v1528 = vlaneseq
        %v1529 = vshrl.u32 %v1528, 7
        %v1530 = vsub.s32 0, %v1529
        %v1531 = vrot.slane %v1526, %v1530
        %v1532 = vlaneseq
        %v1533 = vshrl.u32 %v1532, 7
        %v1534 = vsub.s32 1, %v1533
        %v1535 = vrot.slane %v1526, %v1534
        %v1536 = vlaneseq
        %v1537 = vshrl.u32 %v1536, 7
        %v1538 = vsub.s32 2, %v1537
        %v1539 = vrot.slane %v1526, %v1538
        %v1540 = vlaneseq
        %v1541 = vshrl.u32 %v1540, 7
        %v1542 = vsub.s32 3, %v1541
        %v1543 = vrot.slane %v1526, %v1542
        %v1564 = vunpack.c.l.b16 %v486
        %v1565 = vunpack.c.h.b16 %v486
        %v1566 = vunpack.c.l.b16 %v487
        %v1567 = vunpack.c.h.b16 %v487
        %v1568 = vunpack.c.l.b16 %v488
        %v1569 = vunpack.c.h.b16 %v488
        %v1570 = vunpack.c.l.b16 %v489
        %v1571 = vunpack.c.h.b16 %v489
        %v1572 = vunpack.c.l.b16 %v490
        %v1573 = vunpack.c.h.b16 %v490
        %v1574 = vunpack.c.l.b16 %v491
        %v1575 = vunpack.c.h.b16 %v491
        %v1576 = vunpack.c.l.b16 %v492
        %v1577 = vunpack.c.h.b16 %v492
        %v1578 = vunpack.c.l.b16 %v493
        %v1579 = vunpack.c.h.b16 %v493
        %v1580 = vunpack.c.l.b16 %v494
        %v1581 = vunpack.c.h.b16 %v494
        %v1582 = vunpack.c.l.b16 %v495
        %v1583 = vunpack.c.h.b16 %v495
        %v1584 = vunpack.c.l.b16 %v496
        %v1585 = vunpack.c.h.b16 %v496
        %v1586 = vunpack.c.l.b16 %v497
        %v1587 = vunpack.c.h.b16 %v497
        %v1588 = vunpack.c.l.b16 %v498
        %v1589 = vunpack.c.h.b16 %v498
        %v1590 = vunpack.c.l.b16 %v499
        %v1591 = vunpack.c.h.b16 %v499
        %v1592 = vunpack.c.l.b16 %v500
        %v1593 = vunpack.c.h.b16 %v500
        %v1594 = vunpack.c.l.b16 %v501
        %v1595 = vunpack.c.h.b16 %v501
        %v1596 = vpack.c.b16 %v1564, %v1564
        %v1597 = vpack.c.b16 %v1565, %v1565
        %v1598 = vpack.c.b16 %v1566, %v1566
        %v1599 = vpack.c.b16 %v1567, %v1567
        %v1600 = vpack.c.b16 %v1568, %v1568
        %v1601 = vpack.c.b16 %v1569, %v1569
        %v1602 = vpack.c.b16 %v1570, %v1570
        %v1603 = vpack.c.b16 %v1571, %v1571
        %v1604 = vpack.c.b16 %v1572, %v1572
        %v1605 = vpack.c.b16 %v1573, %v1573
        %v1606 = vpack.c.b16 %v1574, %v1574
        %v1607 = vpack.c.b16 %v1575, %v1575
        %v1608 = vpack.c.b16 %v1576, %v1576
        %v1609 = vpack.c.b16 %v1577, %v1577
        %v1610 = vpack.c.b16 %v1578, %v1578
        %v1611 = vpack.c.b16 %v1579, %v1579
        %v1612 = vpack.c.b16 %v1580, %v1580
        %v1613 = vpack.c.b16 %v1581, %v1581
        %v1614 = vpack.c.b16 %v1582, %v1582
        %v1615 = vpack.c.b16 %v1583, %v1583
        %v1616 = vpack.c.b16 %v1584, %v1584
        %v1617 = vpack.c.b16 %v1585, %v1585
        %v1618 = vpack.c.b16 %v1586, %v1586
        %v1619 = vpack.c.b16 %v1587, %v1587
        %v1620 = vpack.c.b16 %v1588, %v1588
        %v1621 = vpack.c.b16 %v1589, %v1589
        %v1622 = vpack.c.b16 %v1590, %v1590
        %v1623 = vpack.c.b16 %v1591, %v1591
        %v1624 = vpack.c.b16 %v1592, %v1592
        %v1625 = vpack.c.b16 %v1593, %v1593
        %v1626 = vpack.c.b16 %v1594, %v1594
        %v1627 = vpack.c.b16 %v1595, %v1595
        %v2684 = vunpack.c.l.b16 %v502
        %v2685 = vunpack.c.h.b16 %v502
        %v2686 = vunpack.c.l.b16 %v503
        %v2687 = vunpack.c.h.b16 %v503
        %v2688 = vunpack.c.l.b16 %v504
        %v2689 = vunpack.c.h.b16 %v504
        %v2690 = vunpack.c.l.b16 %v505
        %v2691 = vunpack.c.h.b16 %v505
        %v2692 = vunpack.c.l.b16 %v506
        %v2693 = vunpack.c.h.b16 %v506
        %v2694 = vunpack.c.l.b16 %v507
        %v2695 = vunpack.c.h.b16 %v507
        %v2696 = vunpack.c.l.b16 %v508
        %v2697 = vunpack.c.h.b16 %v508
        %v2698 = vunpack.c.l.b16 %v509
        %v2699 = vunpack.c.h.b16 %v509
        %v2700 = vunpack.c.l.b16 %v510
        %v2701 = vunpack.c.h.b16 %v510
        %v2702 = vunpack.c.l.b16 %v511
        %v2703 = vunpack.c.h.b16 %v511
        %v2704 = vunpack.c.l.b16 %v512
        %v2705 = vunpack.c.h.b16 %v512
        %v2706 = vunpack.c.l.b16 %v513
        %v2707 = vunpack.c.h.b16 %v513
        %v2708 = vunpack.c.l.b16 %v514
        %v2709 = vunpack.c.h.b16 %v514
        %v2710 = vunpack.c.l.b16 %v515
        %v2711 = vunpack.c.h.b16 %v515
        %v2712 = vunpack.c.l.b16 %v516
        %v2713 = vunpack.c.h.b16 %v516
        %v2714 = vunpack.c.l.b16 %v517
        %v2715 = vunpack.c.h.b16 %v517
        %v2716 = vunpack.c.l.b16 %v518
        %v2717 = vunpack.c.h.b16 %v518
        %v2718 = vunpack.c.l.b16 %v519
        %v2719 = vunpack.c.h.b16 %v519
        %v2720 = vunpack.c.l.b16 %v520
        %v2721 = vunpack.c.h.b16 %v520
        %v2722 = vunpack.c.l.b16 %v521
        %v2723 = vunpack.c.h.b16 %v521
        %v2724 = vunpack.c.l.b16 %v522
        %v2725 = vunpack.c.h.b16 %v522
        %v2726 = vunpack.c.l.b16 %v523
        %v2727 = vunpack.c.h.b16 %v523
        %v2728 = vunpack.c.l.b16 %v524
        %v2729 = vunpack.c.h.b16 %v524
        %v2730 = vunpack.c.l.b16 %v525
        %v2731 = vunpack.c.h.b16 %v525
        %v2732 = vunpack.c.l.b16 %v526
        %v2733 = vunpack.c.h.b16 %v526
        %v2734 = vunpack.c.l.b16 %v527
        %v2735 = vunpack.c.h.b16 %v527
        %v2736 = vunpack.c.l.b16 %v528
        %v2737 = vunpack.c.h.b16 %v528
        %v2738 = vunpack.c.l.b16 %v529
        %v2739 = vunpack.c.h.b16 %v529
        %v2740 = vunpack.c.l.b16 %v530
        %v2741 = vunpack.c.h.b16 %v530
        %v2742 = vunpack.c.l.b16 %v531
        %v2743 = vunpack.c.h.b16 %v531
        %v2744 = vunpack.c.l.b16 %v532
        %v2745 = vunpack.c.h.b16 %v532
        %v2746 = vunpack.c.l.b16 %v533
        %v2747 = vunpack.c.h.b16 %v533
        %v2748 = vunpack.c.l.b16 %v534
        %v2749 = vunpack.c.h.b16 %v534
        %v2750 = vunpack.c.l.b16 %v535
        %v2751 = vunpack.c.h.b16 %v535
        %v2752 = vunpack.c.l.b16 %v536
        %v2753 = vunpack.c.h.b16 %v536
        %v2754 = vunpack.c.l.b16 %v537
        %v2755 = vunpack.c.h.b16 %v537
        %v2756 = vunpack.c.l.b16 %v538
        %v2757 = vunpack.c.h.b16 %v538
        %v2758 = vunpack.c.l.b16 %v539
        %v2759 = vunpack.c.h.b16 %v539
        %v2760 = vunpack.c.l.b16 %v540
        %v2761 = vunpack.c.h.b16 %v540
        %v2762 = vunpack.c.l.b16 %v541
        %v2763 = vunpack.c.h.b16 %v541
        %v2764 = vunpack.c.l.b16 %v542
        %v2765 = vunpack.c.h.b16 %v542
        %v2766 = vunpack.c.l.b16 %v543
        %v2767 = vunpack.c.h.b16 %v543
        %v2768 = vunpack.c.l.b16 %v544
        %v2769 = vunpack.c.h.b16 %v544
        %v2770 = vunpack.c.l.b16 %v545
        %v2771 = vunpack.c.h.b16 %v545
        %v2772 = vunpack.c.l.b16 %v546
        %v2773 = vunpack.c.h.b16 %v546
        %v2774 = vunpack.c.l.b16 %v547
        %v2775 = vunpack.c.h.b16 %v547
        %v2776 = vunpack.c.l.b16 %v548
        %v2777 = vunpack.c.h.b16 %v548
        %v2778 = vunpack.c.l.b16 %v549
        %v2779 = vunpack.c.h.b16 %v549
        %v2780 = vunpack.c.l.b16 %v550
        %v2781 = vunpack.c.h.b16 %v550
        %v2782 = vunpack.c.l.b16 %v551
        %v2783 = vunpack.c.h.b16 %v551
        %v2784 = vunpack.c.l.b16 %v552
        %v2785 = vunpack.c.h.b16 %v552
        %v2786 = vunpack.c.l.b16 %v553
        %v2787 = vunpack.c.h.b16 %v553
        %v2788 = vunpack.c.l.b16 %v554
        %v2789 = vunpack.c.h.b16 %v554
        %v2790 = vunpack.c.l.b16 %v555
        %v2791 = vunpack.c.h.b16 %v555
        %v2792 = vunpack.c.l.b16 %v556
        %v2793 = vunpack.c.h.b16 %v556
        %v2794 = vunpack.c.l.b16 %v557
        %v2795 = vunpack.c.h.b16 %v557
        %v2796 = vunpack.c.l.b16 %v558
        %v2797 = vunpack.c.h.b16 %v558
        %v2798 = vunpack.c.l.b16 %v559
        %v2799 = vunpack.c.h.b16 %v559
        %v2800 = vunpack.c.l.b16 %v560
        %v2801 = vunpack.c.h.b16 %v560
        %v2802 = vunpack.c.l.b16 %v561
        %v2803 = vunpack.c.h.b16 %v561
        %v2804 = vunpack.c.l.b16 %v562
        %v2805 = vunpack.c.h.b16 %v562
        %v2806 = vunpack.c.l.b16 %v563
        %v2807 = vunpack.c.h.b16 %v563
        %v2808 = vunpack.c.l.b16 %v564
        %v2809 = vunpack.c.h.b16 %v564
        %v2810 = vunpack.c.l.b16 %v565
        %v2811 = vunpack.c.h.b16 %v565
        %v2812 = vunpack.c.l.b16 %v566
        %v2813 = vunpack.c.h.b16 %v566
        %v2814 = vunpack.c.l.b16 %v567
        %v2815 = vunpack.c.h.b16 %v567
        %v2816 = vunpack.c.l.b16 %v568
        %v2817 = vunpack.c.h.b16 %v568
        %v2818 = vunpack.c.l.b16 %v569
        %v2819 = vunpack.c.h.b16 %v569
        %v2820 = vunpack.c.l.b16 %v570
        %v2821 = vunpack.c.h.b16 %v570
        %v2822 = vunpack.c.l.b16 %v571
        %v2823 = vunpack.c.h.b16 %v571
        %v2824 = vunpack.c.l.b16 %v572
        %v2825 = vunpack.c.h.b16 %v572
        %v2826 = vunpack.c.l.b16 %v573
        %v2827 = vunpack.c.h.b16 %v573
        %v2828 = vunpack.c.l.b16 %v574
        %v2829 = vunpack.c.h.b16 %v574
        %v2830 = vunpack.c.l.b16 %v575
        %v2831 = vunpack.c.h.b16 %v575
        %v2832 = vunpack.c.l.b16 %v576
        %v2833 = vunpack.c.h.b16 %v576
        %v2834 = vunpack.c.l.b16 %v577
        %v2835 = vunpack.c.h.b16 %v577
        %v2836 = vunpack.c.l.b16 %v578
        %v2837 = vunpack.c.h.b16 %v578
        %v2838 = vunpack.c.l.b16 %v579
        %v2839 = vunpack.c.h.b16 %v579
        %v2840 = vunpack.c.l.b16 %v580
        %v2841 = vunpack.c.h.b16 %v580
        %v2842 = vunpack.c.l.b16 %v581
        %v2843 = vunpack.c.h.b16 %v581
        %v2844 = vunpack.c.l.b16 %v582
        %v2845 = vunpack.c.h.b16 %v582
        %v2846 = vunpack.c.l.b16 %v583
        %v2847 = vunpack.c.h.b16 %v583
        %v2848 = vunpack.c.l.b16 %v584
        %v2849 = vunpack.c.h.b16 %v584
        %v2850 = vunpack.c.l.b16 %v585
        %v2851 = vunpack.c.h.b16 %v585
        %v2852 = vunpack.c.l.b16 %v586
        %v2853 = vunpack.c.h.b16 %v586
        %v2854 = vunpack.c.l.b16 %v587
        %v2855 = vunpack.c.h.b16 %v587
        %v2856 = vunpack.c.l.b16 %v588
        %v2857 = vunpack.c.h.b16 %v588
        %v2858 = vunpack.c.l.b16 %v589
        %v2859 = vunpack.c.h.b16 %v589
        %v2860 = vunpack.c.l.b16 %v590
        %v2861 = vunpack.c.h.b16 %v590
        %v2862 = vunpack.c.l.b16 %v591
        %v2863 = vunpack.c.h.b16 %v591
        %v2864 = vunpack.c.l.b16 %v592
        %v2865 = vunpack.c.h.b16 %v592
        %v2866 = vunpack.c.l.b16 %v593
        %v2867 = vunpack.c.h.b16 %v593
        %v2868 = vunpack.c.l.b16 %v594
        %v2869 = vunpack.c.h.b16 %v594
        %v2870 = vunpack.c.l.b16 %v595
        %v2871 = vunpack.c.h.b16 %v595
        %v2872 = vunpack.c.l.b16 %v596
        %v2873 = vunpack.c.h.b16 %v596
        %v2874 = vunpack.c.l.b16 %v597
        %v2875 = vunpack.c.h.b16 %v597
        %v2876 = vunpack.c.l.b16 %v598
        %v2877 = vunpack.c.h.b16 %v598
        %v2878 = vunpack.c.l.b16 %v599
        %v2879 = vunpack.c.h.b16 %v599
        %v2880 = vunpack.c.l.b16 %v600
        %v2881 = vunpack.c.h.b16 %v600
        %v2882 = vunpack.c.l.b16 %v601
        %v2883 = vunpack.c.h.b16 %v601
        %v2884 = vunpack.c.l.b16 %v602
        %v2885 = vunpack.c.h.b16 %v602
        %v2886 = vunpack.c.l.b16 %v603
        %v2887 = vunpack.c.h.b16 %v603
        %v2888 = vunpack.c.l.b16 %v604
        %v2889 = vunpack.c.h.b16 %v604
        %v2890 = vunpack.c.l.b16 %v605
        %v2891 = vunpack.c.h.b16 %v605
        %v2892 = vunpack.c.l.b16 %v606
        %v2893 = vunpack.c.h.b16 %v606
        %v2894 = vunpack.c.l.b16 %v607
        %v2895 = vunpack.c.h.b16 %v607
        %v2896 = vunpack.c.l.b16 %v608
        %v2897 = vunpack.c.h.b16 %v608
        %v2898 = vunpack.c.l.b16 %v609
        %v2899 = vunpack.c.h.b16 %v609
        %v2900 = vunpack.c.l.b16 %v610
        %v2901 = vunpack.c.h.b16 %v610
        %v2902 = vunpack.c.l.b16 %v611
        %v2903 = vunpack.c.h.b16 %v611
        %v2904 = vunpack.c.l.b16 %v612
        %v2905 = vunpack.c.h.b16 %v612
        %v2906 = vunpack.c.l.b16 %v613
        %v2907 = vunpack.c.h.b16 %v613
        %v2908 = vunpack.c.l.b16 %v614
        %v2909 = vunpack.c.h.b16 %v614
        %v2910 = vunpack.c.l.b16 %v615
        %v2911 = vunpack.c.h.b16 %v615
        %v2912 = vunpack.c.l.b16 %v616
        %v2913 = vunpack.c.h.b16 %v616
        %v2914 = vunpack.c.l.b16 %v617
        %v2915 = vunpack.c.h.b16 %v617
        %v2916 = vunpack.c.l.b16 %v618
        %v2917 = vunpack.c.h.b16 %v618
        %v2918 = vunpack.c.l.b16 %v619
        %v2919 = vunpack.c.h.b16 %v619
        %v2920 = vunpack.c.l.b16 %v620
        %v2921 = vunpack.c.h.b16 %v620
        %v2922 = vunpack.c.l.b16 %v621
        %v2923 = vunpack.c.h.b16 %v621
        %v2924 = vunpack.c.l.b16 %v622
        %v2925 = vunpack.c.h.b16 %v622
        %v2926 = vunpack.c.l.b16 %v623
        %v2927 = vunpack.c.h.b16 %v623
        %v2928 = vunpack.c.l.b16 %v624
        %v2929 = vunpack.c.h.b16 %v624
        %v2930 = vunpack.c.l.b16 %v625
        %v2931 = vunpack.c.h.b16 %v625
        %v2932 = vunpack.c.l.b16 %v626
        %v2933 = vunpack.c.h.b16 %v626
        %v2934 = vunpack.c.l.b16 %v627
        %v2935 = vunpack.c.h.b16 %v627
        %v2936 = vunpack.c.l.b16 %v628
        %v2937 = vunpack.c.h.b16 %v628
        %v2938 = vunpack.c.l.b16 %v629
        %v2939 = vunpack.c.h.b16 %v629
        %v2940 = vunpack.c.l.b16 %v630
        %v2941 = vunpack.c.h.b16 %v630
        %v2942 = vunpack.c.l.b16 %v631
        %v2943 = vunpack.c.h.b16 %v631
        %v2944 = vunpack.c.l.b16 %v632
        %v2945 = vunpack.c.h.b16 %v632
        %v2946 = vunpack.c.l.b16 %v633
        %v2947 = vunpack.c.h.b16 %v633
        %v2948 = vunpack.c.l.b16 %v634
        %v2949 = vunpack.c.h.b16 %v634
        %v2950 = vunpack.c.l.b16 %v635
        %v2951 = vunpack.c.h.b16 %v635
        %v2952 = vunpack.c.l.b16 %v636
        %v2953 = vunpack.c.h.b16 %v636
        %v2954 = vunpack.c.l.b16 %v637
        %v2955 = vunpack.c.h.b16 %v637
        %v2956 = vunpack.c.l.b16 %v638
        %v2957 = vunpack.c.h.b16 %v638
        %v2958 = vunpack.c.l.b16 %v639
        %v2959 = vunpack.c.h.b16 %v639
        %v2960 = vunpack.c.l.b16 %v640
        %v2961 = vunpack.c.h.b16 %v640
        %v2962 = vunpack.c.l.b16 %v641
        %v2963 = vunpack.c.h.b16 %v641
        %v2964 = vunpack.c.l.b16 %v642
        %v2965 = vunpack.c.h.b16 %v642
        %v2966 = vunpack.c.l.b16 %v643
        %v2967 = vunpack.c.h.b16 %v643
        %v2968 = vunpack.c.l.b16 %v644
        %v2969 = vunpack.c.h.b16 %v644
        %v2970 = vunpack.c.l.b16 %v645
        %v2971 = vunpack.c.h.b16 %v645
        %v2972 = vunpack.c.l.b16 %v646
        %v2973 = vunpack.c.h.b16 %v646
        %v2974 = vunpack.c.l.b16 %v647
        %v2975 = vunpack.c.h.b16 %v647
        %v2976 = vunpack.c.l.b16 %v648
        %v2977 = vunpack.c.h.b16 %v648
        %v2978 = vunpack.c.l.b16 %v649
        %v2979 = vunpack.c.h.b16 %v649
        %v2980 = vunpack.c.l.b16 %v650
        %v2981 = vunpack.c.h.b16 %v650
        %v2982 = vunpack.c.l.b16 %v651
        %v2983 = vunpack.c.h.b16 %v651
        %v2984 = vunpack.c.l.b16 %v652
        %v2985 = vunpack.c.h.b16 %v652
        %v2986 = vunpack.c.l.b16 %v653
        %v2987 = vunpack.c.h.b16 %v653
        %v2988 = vunpack.c.l.b16 %v654
        %v2989 = vunpack.c.h.b16 %v654
        %v2990 = vunpack.c.l.b16 %v655
        %v2991 = vunpack.c.h.b16 %v655
        %v2992 = vunpack.c.l.b16 %v656
        %v2993 = vunpack.c.h.b16 %v656
        %v2994 = vunpack.c.l.b16 %v657
        %v2995 = vunpack.c.h.b16 %v657
        %v2996 = vunpack.c.l.b16 %v658
        %v2997 = vunpack.c.h.b16 %v658
        %v2998 = vunpack.c.l.b16 %v659
        %v2999 = vunpack.c.h.b16 %v659
        %v3000 = vunpack.c.l.b16 %v660
        %v3001 = vunpack.c.h.b16 %v660
        %v3002 = vunpack.c.l.b16 %v661
        %v3003 = vunpack.c.h.b16 %v661
        %v3004 = vunpack.c.l.b16 %v662
        %v3005 = vunpack.c.h.b16 %v662
        %v3006 = vunpack.c.l.b16 %v663
        %v3007 = vunpack.c.h.b16 %v663
        %v3008 = vunpack.c.l.b16 %v664
        %v3009 = vunpack.c.h.b16 %v664
        %v3010 = vunpack.c.l.b16 %v665
        %v3011 = vunpack.c.h.b16 %v665
        %v3012 = vunpack.c.l.b16 %v666
        %v3013 = vunpack.c.h.b16 %v666
        %v3014 = vunpack.c.l.b16 %v667
        %v3015 = vunpack.c.h.b16 %v667
        %v3016 = vunpack.c.l.b16 %v668
        %v3017 = vunpack.c.h.b16 %v668
        %v3018 = vunpack.c.l.b16 %v669
        %v3019 = vunpack.c.h.b16 %v669
        %v3020 = vunpack.c.l.b16 %v670
        %v3021 = vunpack.c.h.b16 %v670
        %v3022 = vunpack.c.l.b16 %v671
        %v3023 = vunpack.c.h.b16 %v671
        %v3024 = vunpack.c.l.b16 %v672
        %v3025 = vunpack.c.h.b16 %v672
        %v3026 = vunpack.c.l.b16 %v673
        %v3027 = vunpack.c.h.b16 %v673
        %v3028 = vunpack.c.l.b16 %v674
        %v3029 = vunpack.c.h.b16 %v674
        %v3030 = vunpack.c.l.b16 %v675
        %v3031 = vunpack.c.h.b16 %v675
        %v3032 = vunpack.c.l.b16 %v676
        %v3033 = vunpack.c.h.b16 %v676
        %v3034 = vunpack.c.l.b16 %v677
        %v3035 = vunpack.c.h.b16 %v677
        %v3036 = vunpack.c.l.b16 %v678
        %v3037 = vunpack.c.h.b16 %v678
        %v3038 = vunpack.c.l.b16 %v679
        %v3039 = vunpack.c.h.b16 %v679
        %v3040 = vunpack.c.l.b16 %v680
        %v3041 = vunpack.c.h.b16 %v680
        %v3042 = vunpack.c.l.b16 %v681
        %v3043 = vunpack.c.h.b16 %v681
        %v3044 = vunpack.c.l.b16 %v682
        %v3045 = vunpack.c.h.b16 %v682
        %v3046 = vunpack.c.l.b16 %v683
        %v3047 = vunpack.c.h.b16 %v683
        %v3048 = vunpack.c.l.b16 %v684
        %v3049 = vunpack.c.h.b16 %v684
        %v3050 = vunpack.c.l.b16 %v685
        %v3051 = vunpack.c.h.b16 %v685
        %v3052 = vunpack.c.l.b16 %v686
        %v3053 = vunpack.c.h.b16 %v686
        %v3054 = vunpack.c.l.b16 %v687
        %v3055 = vunpack.c.h.b16 %v687
        %v3056 = vunpack.c.l.b16 %v688
        %v3057 = vunpack.c.h.b16 %v688
        %v3058 = vunpack.c.l.b16 %v689
        %v3059 = vunpack.c.h.b16 %v689
        %v3060 = vunpack.c.l.b16 %v690
        %v3061 = vunpack.c.h.b16 %v690
        %v3062 = vunpack.c.l.b16 %v691
        %v3063 = vunpack.c.h.b16 %v691
        %v3064 = vunpack.c.l.b16 %v692
        %v3065 = vunpack.c.h.b16 %v692
        %v3066 = vunpack.c.l.b16 %v693
        %v3067 = vunpack.c.h.b16 %v693
        %v3068 = vunpack.c.l.b16 %v694
        %v3069 = vunpack.c.h.b16 %v694
        %v3070 = vunpack.c.l.b16 %v695
        %v3071 = vunpack.c.h.b16 %v695
        %v3072 = vunpack.c.l.b16 %v696
        %v3073 = vunpack.c.h.b16 %v696
        %v3074 = vunpack.c.l.b16 %v697
        %v3075 = vunpack.c.h.b16 %v697
        %v3076 = vunpack.c.l.b16 %v698
        %v3077 = vunpack.c.h.b16 %v698
        %v3078 = vunpack.c.l.b16 %v699
        %v3079 = vunpack.c.h.b16 %v699
        %v3080 = vunpack.c.l.b16 %v700
        %v3081 = vunpack.c.h.b16 %v700
        %v3082 = vunpack.c.l.b16 %v701
        %v3083 = vunpack.c.h.b16 %v701
        %v3084 = vunpack.c.l.b16 %v702
        %v3085 = vunpack.c.h.b16 %v702
        %v3086 = vunpack.c.l.b16 %v703
        %v3087 = vunpack.c.h.b16 %v703
        %v3088 = vunpack.c.l.b16 %v704
        %v3089 = vunpack.c.h.b16 %v704
        %v3090 = vunpack.c.l.b16 %v705
        %v3091 = vunpack.c.h.b16 %v705
        %v3092 = vunpack.c.l.b16 %v706
        %v3093 = vunpack.c.h.b16 %v706
        %v3094 = vunpack.c.l.b16 %v707
        %v3095 = vunpack.c.h.b16 %v707
        %v3096 = vunpack.c.l.b16 %v708
        %v3097 = vunpack.c.h.b16 %v708
        %v3098 = vunpack.c.l.b16 %v709
        %v3099 = vunpack.c.h.b16 %v709
        %v3100 = vunpack.c.l.b16 %v710
        %v3101 = vunpack.c.h.b16 %v710
        %v3102 = vunpack.c.l.b16 %v711
        %v3103 = vunpack.c.h.b16 %v711
        %v3104 = vunpack.c.l.b16 %v712
        %v3105 = vunpack.c.h.b16 %v712
        %v3106 = vunpack.c.l.b16 %v713
        %v3107 = vunpack.c.h.b16 %v713
        %v3108 = vunpack.c.l.b16 %v714
        %v3109 = vunpack.c.h.b16 %v714
        %v3110 = vunpack.c.l.b16 %v715
        %v3111 = vunpack.c.h.b16 %v715
        %v3112 = vunpack.c.l.b16 %v716
        %v3113 = vunpack.c.h.b16 %v716
        %v3114 = vunpack.c.l.b16 %v717
        %v3115 = vunpack.c.h.b16 %v717
        %v3116 = vunpack.c.l.b16 %v718
        %v3117 = vunpack.c.h.b16 %v718
        %v3118 = vunpack.c.l.b16 %v719
        %v3119 = vunpack.c.h.b16 %v719
        %v3120 = vunpack.c.l.b16 %v720
        %v3121 = vunpack.c.h.b16 %v720
        %v3122 = vunpack.c.l.b16 %v721
        %v3123 = vunpack.c.h.b16 %v721
        %v3124 = vunpack.c.l.b16 %v722
        %v3125 = vunpack.c.h.b16 %v722
        %v3126 = vunpack.c.l.b16 %v723
        %v3127 = vunpack.c.h.b16 %v723
        %v3128 = vunpack.c.l.b16 %v724
        %v3129 = vunpack.c.h.b16 %v724
        %v3130 = vunpack.c.l.b16 %v725
        %v3131 = vunpack.c.h.b16 %v725
        %v3132 = vunpack.c.l.b16 %v726
        %v3133 = vunpack.c.h.b16 %v726
        %v3134 = vunpack.c.l.b16 %v727
        %v3135 = vunpack.c.h.b16 %v727
        %v3136 = vunpack.c.l.b16 %v728
        %v3137 = vunpack.c.h.b16 %v728
        %v3138 = vunpack.c.l.b16 %v729
        %v3139 = vunpack.c.h.b16 %v729
        %v3140 = vunpack.c.l.b16 %v730
        %v3141 = vunpack.c.h.b16 %v730
        %v3142 = vunpack.c.l.b16 %v731
        %v3143 = vunpack.c.h.b16 %v731
        %v3144 = vunpack.c.l.b16 %v732
        %v3145 = vunpack.c.h.b16 %v732
        %v3146 = vunpack.c.l.b16 %v733
        %v3147 = vunpack.c.h.b16 %v733
        %v3148 = vunpack.c.l.b16 %v734
        %v3149 = vunpack.c.h.b16 %v734
        %v3150 = vunpack.c.l.b16 %v735
        %v3151 = vunpack.c.h.b16 %v735
        %v3152 = vunpack.c.l.b16 %v736
        %v3153 = vunpack.c.h.b16 %v736
        %v3154 = vunpack.c.l.b16 %v737
        %v3155 = vunpack.c.h.b16 %v737
        %v3156 = vunpack.c.l.b16 %v738
        %v3157 = vunpack.c.h.b16 %v738
        %v3158 = vunpack.c.l.b16 %v739
        %v3159 = vunpack.c.h.b16 %v739
        %v3160 = vunpack.c.l.b16 %v740
        %v3161 = vunpack.c.h.b16 %v740
        %v3162 = vunpack.c.l.b16 %v741
        %v3163 = vunpack.c.h.b16 %v741
        %v3164 = vunpack.c.l.b16 %v742
        %v3165 = vunpack.c.h.b16 %v742
        %v3166 = vunpack.c.l.b16 %v743
        %v3167 = vunpack.c.h.b16 %v743
        %v3168 = vunpack.c.l.b16 %v744
        %v3169 = vunpack.c.h.b16 %v744
        %v3170 = vunpack.c.l.b16 %v745
        %v3171 = vunpack.c.h.b16 %v745
        %v3172 = vunpack.c.l.b16 %v746
        %v3173 = vunpack.c.h.b16 %v746
        %v3174 = vunpack.c.l.b16 %v747
        %v3175 = vunpack.c.h.b16 %v747
        %v3176 = vunpack.c.l.b16 %v748
        %v3177 = vunpack.c.h.b16 %v748
        %v3178 = vunpack.c.l.b16 %v749
        %v3179 = vunpack.c.h.b16 %v749
        %v3180 = vunpack.c.l.b16 %v750
        %v3181 = vunpack.c.h.b16 %v750
        %v3182 = vunpack.c.l.b16 %v751
        %v3183 = vunpack.c.h.b16 %v751
        %v3184 = vunpack.c.l.b16 %v752
        %v3185 = vunpack.c.h.b16 %v752
        %v3186 = vunpack.c.l.b16 %v753
        %v3187 = vunpack.c.h.b16 %v753
        %v3188 = vunpack.c.l.b16 %v754
        %v3189 = vunpack.c.h.b16 %v754
        %v3190 = vunpack.c.l.b16 %v755
        %v3191 = vunpack.c.h.b16 %v755
        %v3192 = vunpack.c.l.b16 %v756
        %v3193 = vunpack.c.h.b16 %v756
        %v3194 = vunpack.c.l.b16 %v757
        %v3195 = vunpack.c.h.b16 %v757
        %v3196 = vunpack.c.l.b16 %v758
        %v3197 = vunpack.c.h.b16 %v758
        %v3198 = vunpack.c.l.b16 %v759
        %v3199 = vunpack.c.h.b16 %v759
        %v3200 = vunpack.c.l.b16 %v760
        %v3201 = vunpack.c.h.b16 %v760
        %v3202 = vunpack.c.l.b16 %v761
        %v3203 = vunpack.c.h.b16 %v761
        %v3204 = vunpack.c.l.b16 %v762
        %v3205 = vunpack.c.h.b16 %v762
        %v3206 = vunpack.c.l.b16 %v763
        %v3207 = vunpack.c.h.b16 %v763
        %v3208 = vunpack.c.l.b16 %v764
        %v3209 = vunpack.c.h.b16 %v764
        %v3210 = vunpack.c.l.b16 %v765
        %v3211 = vunpack.c.h.b16 %v765
        %v3212 = vunpack.c.l.b16 %v766
        %v3213 = vunpack.c.h.b16 %v766
        %v3214 = vunpack.c.l.b16 %v767
        %v3215 = vunpack.c.h.b16 %v767
        %v3216 = vunpack.c.l.b16 %v768
        %v3217 = vunpack.c.h.b16 %v768
        %v3218 = vunpack.c.l.b16 %v769
        %v3219 = vunpack.c.h.b16 %v769
        %v3220 = vunpack.c.l.b16 %v770
        %v3221 = vunpack.c.h.b16 %v770
        %v3222 = vunpack.c.l.b16 %v771
        %v3223 = vunpack.c.h.b16 %v771
        %v3224 = vunpack.c.l.b16 %v772
        %v3225 = vunpack.c.h.b16 %v772
        %v3226 = vunpack.c.l.b16 %v773
        %v3227 = vunpack.c.h.b16 %v773
        %v3228 = vunpack.c.l.b16 %v774
        %v3229 = vunpack.c.h.b16 %v774
        %v3230 = vunpack.c.l.b16 %v775
        %v3231 = vunpack.c.h.b16 %v775
        %v3232 = vunpack.c.l.b16 %v776
        %v3233 = vunpack.c.h.b16 %v776
        %v3234 = vunpack.c.l.b16 %v777
        %v3235 = vunpack.c.h.b16 %v777
        %v3236 = vunpack.c.l.b16 %v778
        %v3237 = vunpack.c.h.b16 %v778
        %v3238 = vunpack.c.l.b16 %v779
        %v3239 = vunpack.c.h.b16 %v779
        %v3240 = vunpack.c.l.b16 %v780
        %v3241 = vunpack.c.h.b16 %v780
        %v3242 = vunpack.c.l.b16 %v781
        %v3243 = vunpack.c.h.b16 %v781
        %v3244 = vunpack.c.l.b16 %v782
        %v3245 = vunpack.c.h.b16 %v782
        %v3246 = vunpack.c.l.b16 %v783
        %v3247 = vunpack.c.h.b16 %v783
        %v3248 = vunpack.c.l.b16 %v784
        %v3249 = vunpack.c.h.b16 %v784
        %v3250 = vunpack.c.l.b16 %v785
        %v3251 = vunpack.c.h.b16 %v785
        %v3252 = vunpack.c.l.b16 %v786
        %v3253 = vunpack.c.h.b16 %v786
        %v3254 = vunpack.c.l.b16 %v787
        %v3255 = vunpack.c.h.b16 %v787
        %v3256 = vunpack.c.l.b16 %v788
        %v3257 = vunpack.c.h.b16 %v788
        %v3258 = vunpack.c.l.b16 %v789
        %v3259 = vunpack.c.h.b16 %v789
        %v3260 = vunpack.c.l.b16 %v790
        %v3261 = vunpack.c.h.b16 %v790
        %v3262 = vunpack.c.l.b16 %v791
        %v3263 = vunpack.c.h.b16 %v791
        %v3264 = vunpack.c.l.b16 %v792
        %v3265 = vunpack.c.h.b16 %v792
        %v3266 = vunpack.c.l.b16 %v793
        %v3267 = vunpack.c.h.b16 %v793
        %v3268 = vunpack.c.l.b16 %v794
        %v3269 = vunpack.c.h.b16 %v794
        %v3270 = vunpack.c.l.b16 %v795
        %v3271 = vunpack.c.h.b16 %v795
        %v3272 = vunpack.c.l.b16 %v796
        %v3273 = vunpack.c.h.b16 %v796
        %v3274 = vunpack.c.l.b16 %v797
        %v3275 = vunpack.c.h.b16 %v797
        %v3276 = vunpack.c.l.b16 %v798
        %v3277 = vunpack.c.h.b16 %v798
        %v3278 = vunpack.c.l.b16 %v799
        %v3279 = vunpack.c.h.b16 %v799
        %v3280 = vunpack.c.l.b16 %v800
        %v3281 = vunpack.c.h.b16 %v800
        %v3282 = vunpack.c.l.b16 %v801
        %v3283 = vunpack.c.h.b16 %v801
        %v3284 = vunpack.c.l.b16 %v802
        %v3285 = vunpack.c.h.b16 %v802
        %v3286 = vunpack.c.l.b16 %v803
        %v3287 = vunpack.c.h.b16 %v803
        %v3288 = vunpack.c.l.b16 %v804
        %v3289 = vunpack.c.h.b16 %v804
        %v3290 = vunpack.c.l.b16 %v805
        %v3291 = vunpack.c.h.b16 %v805
        %v3292 = vunpack.c.l.b16 %v806
        %v3293 = vunpack.c.h.b16 %v806
        %v3294 = vunpack.c.l.b16 %v807
        %v3295 = vunpack.c.h.b16 %v807
        %v3296 = vunpack.c.l.b16 %v808
        %v3297 = vunpack.c.h.b16 %v808
        %v3298 = vunpack.c.l.b16 %v809
        %v3299 = vunpack.c.h.b16 %v809
        %v3300 = vunpack.c.l.b16 %v810
        %v3301 = vunpack.c.h.b16 %v810
        %v3302 = vunpack.c.l.b16 %v811
        %v3303 = vunpack.c.h.b16 %v811
        %v3304 = vunpack.c.l.b16 %v812
        %v3305 = vunpack.c.h.b16 %v812
        %v3306 = vunpack.c.l.b16 %v813
        %v3307 = vunpack.c.h.b16 %v813
        %v3308 = vunpack.c.l.b16 %v814
        %v3309 = vunpack.c.h.b16 %v814
        %v3310 = vunpack.c.l.b16 %v815
        %v3311 = vunpack.c.h.b16 %v815
        %v3312 = vunpack.c.l.b16 %v816
        %v3313 = vunpack.c.h.b16 %v816
        %v3314 = vunpack.c.l.b16 %v817
        %v3315 = vunpack.c.h.b16 %v817
        %v3316 = vunpack.c.l.b16 %v818
        %v3317 = vunpack.c.h.b16 %v818
        %v3318 = vunpack.c.l.b16 %v819
        %v3319 = vunpack.c.h.b16 %v819
        %v3320 = vunpack.c.l.b16 %v820
        %v3321 = vunpack.c.h.b16 %v820
        %v3322 = vunpack.c.l.b16 %v821
        %v3323 = vunpack.c.h.b16 %v821
        %v3324 = vunpack.c.l.b16 %v822
        %v3325 = vunpack.c.h.b16 %v822
        %v3326 = vunpack.c.l.b16 %v823
        %v3327 = vunpack.c.h.b16 %v823
        %v3328 = vunpack.c.l.b16 %v824
        %v3329 = vunpack.c.h.b16 %v824
        %v3330 = vunpack.c.l.b16 %v825
        %v3331 = vunpack.c.h.b16 %v825
        %v3332 = vunpack.c.l.b16 %v826
        %v3333 = vunpack.c.h.b16 %v826
        %v3334 = vunpack.c.l.b16 %v827
        %v3335 = vunpack.c.h.b16 %v827
        %v3336 = vunpack.c.l.b16 %v828
        %v3337 = vunpack.c.h.b16 %v828
        %v3338 = vunpack.c.l.b16 %v829
        %v3339 = vunpack.c.h.b16 %v829
        %v3340 = vunpack.c.l.b16 %v830
        %v3341 = vunpack.c.h.b16 %v830
        %v3342 = vunpack.c.l.b16 %v831
        %v3343 = vunpack.c.h.b16 %v831
        %v3344 = vunpack.c.l.b16 %v832
        %v3345 = vunpack.c.h.b16 %v832
        %v3346 = vunpack.c.l.b16 %v833
        %v3347 = vunpack.c.h.b16 %v833
        %v3348 = vunpack.c.l.b16 %v834
        %v3349 = vunpack.c.h.b16 %v834
        %v3350 = vunpack.c.l.b16 %v835
        %v3351 = vunpack.c.h.b16 %v835
        %v3352 = vunpack.c.l.b16 %v836
        %v3353 = vunpack.c.h.b16 %v836
        %v3354 = vunpack.c.l.b16 %v837
        %v3355 = vunpack.c.h.b16 %v837
        %v3356 = vunpack.c.l.b16 %v838
        %v3357 = vunpack.c.h.b16 %v838
        %v3358 = vunpack.c.l.b16 %v839
        %v3359 = vunpack.c.h.b16 %v839
        %v3360 = vunpack.c.l.b16 %v840
        %v3361 = vunpack.c.h.b16 %v840
        %v3362 = vunpack.c.l.b16 %v841
        %v3363 = vunpack.c.h.b16 %v841
        %v3364 = vunpack.c.l.b16 %v842
        %v3365 = vunpack.c.h.b16 %v842
        %v3366 = vunpack.c.l.b16 %v843
        %v3367 = vunpack.c.h.b16 %v843
        %v3368 = vunpack.c.l.b16 %v844
        %v3369 = vunpack.c.h.b16 %v844
        %v3370 = vunpack.c.l.b16 %v845
        %v3371 = vunpack.c.h.b16 %v845
        %v3372 = vunpack.c.l.b16 %v846
        %v3373 = vunpack.c.h.b16 %v846
        %v3374 = vunpack.c.l.b16 %v847
        %v3375 = vunpack.c.h.b16 %v847
        %v3376 = vunpack.c.l.b16 %v848
        %v3377 = vunpack.c.h.b16 %v848
        %v3378 = vunpack.c.l.b16 %v849
        %v3379 = vunpack.c.h.b16 %v849
        %v3380 = vunpack.c.l.b16 %v850
        %v3381 = vunpack.c.h.b16 %v850
        %v3382 = vunpack.c.l.b16 %v851
        %v3383 = vunpack.c.h.b16 %v851
        %v3384 = vunpack.c.l.b16 %v852
        %v3385 = vunpack.c.h.b16 %v852
        %v3386 = vunpack.c.l.b16 %v853
        %v3387 = vunpack.c.h.b16 %v853
        %v3388 = vunpack.c.l.b16 %v854
        %v3389 = vunpack.c.h.b16 %v854
        %v3390 = vunpack.c.l.b16 %v855
        %v3391 = vunpack.c.h.b16 %v855
        %v3392 = vunpack.c.l.b16 %v856
        %v3393 = vunpack.c.h.b16 %v856
        %v3394 = vunpack.c.l.b16 %v857
        %v3395 = vunpack.c.h.b16 %v857
        %v3396 = vunpack.c.l.b16 %v858
        %v3397 = vunpack.c.h.b16 %v858
        %v3398 = vunpack.c.l.b16 %v859
        %v3399 = vunpack.c.h.b16 %v859
        %v3400 = vunpack.c.l.b16 %v860
        %v3401 = vunpack.c.h.b16 %v860
        %v3402 = vunpack.c.l.b16 %v861
        %v3403 = vunpack.c.h.b16 %v861
        %v3404 = vunpack.c.l.b16 %v862
        %v3405 = vunpack.c.h.b16 %v862
        %v3406 = vunpack.c.l.b16 %v863
        %v3407 = vunpack.c.h.b16 %v863
        %v3408 = vunpack.c.l.b16 %v864
        %v3409 = vunpack.c.h.b16 %v864
        %v3410 = vunpack.c.l.b16 %v865
        %v3411 = vunpack.c.h.b16 %v865
        %v3412 = vunpack.c.l.b16 %v866
        %v3413 = vunpack.c.h.b16 %v866
        %v3414 = vunpack.c.l.b16 %v867
        %v3415 = vunpack.c.h.b16 %v867
        %v3416 = vunpack.c.l.b16 %v868
        %v3417 = vunpack.c.h.b16 %v868
        %v3418 = vunpack.c.l.b16 %v869
        %v3419 = vunpack.c.h.b16 %v869
        %v3420 = vunpack.c.l.b16 %v870
        %v3421 = vunpack.c.h.b16 %v870
        %v3422 = vunpack.c.l.b16 %v871
        %v3423 = vunpack.c.h.b16 %v871
        %v3424 = vunpack.c.l.b16 %v872
        %v3425 = vunpack.c.h.b16 %v872
        %v3426 = vunpack.c.l.b16 %v873
        %v3427 = vunpack.c.h.b16 %v873
        %v3428 = vunpack.c.l.b16 %v874
        %v3429 = vunpack.c.h.b16 %v874
        %v3430 = vunpack.c.l.b16 %v875
        %v3431 = vunpack.c.h.b16 %v875
        %v3432 = vunpack.c.l.b16 %v876
        %v3433 = vunpack.c.h.b16 %v876
        %v3434 = vunpack.c.l.b16 %v877
        %v3435 = vunpack.c.h.b16 %v877
        %v3436 = vunpack.c.l.b16 %v878
        %v3437 = vunpack.c.h.b16 %v878
        %v3438 = vunpack.c.l.b16 %v879
        %v3439 = vunpack.c.h.b16 %v879
        %v3440 = vunpack.c.l.b16 %v880
        %v3441 = vunpack.c.h.b16 %v880
        %v3442 = vunpack.c.l.b16 %v881
        %v3443 = vunpack.c.h.b16 %v881
        %v3444 = vunpack.c.l.b16 %v882
        %v3445 = vunpack.c.h.b16 %v882
        %v3446 = vunpack.c.l.b16 %v883
        %v3447 = vunpack.c.h.b16 %v883
        %v3448 = vunpack.c.l.b16 %v884
        %v3449 = vunpack.c.h.b16 %v884
        %v3450 = vunpack.c.l.b16 %v885
        %v3451 = vunpack.c.h.b16 %v885
        %v3452 = vunpack.c.l.b16 %v886
        %v3453 = vunpack.c.h.b16 %v886
        %v3454 = vunpack.c.l.b16 %v887
        %v3455 = vunpack.c.h.b16 %v887
        %v3456 = vunpack.c.l.b16 %v888
        %v3457 = vunpack.c.h.b16 %v888
        %v3458 = vunpack.c.l.b16 %v889
        %v3459 = vunpack.c.h.b16 %v889
        %v3460 = vunpack.c.l.b16 %v890
        %v3461 = vunpack.c.h.b16 %v890
        %v3462 = vunpack.c.l.b16 %v891
        %v3463 = vunpack.c.h.b16 %v891
        %v3464 = vunpack.c.l.b16 %v892
        %v3465 = vunpack.c.h.b16 %v892
        %v3466 = vunpack.c.l.b16 %v893
        %v3467 = vunpack.c.h.b16 %v893
        %v3468 = vunpack.c.l.b16 %v894
        %v3469 = vunpack.c.h.b16 %v894
        %v3470 = vunpack.c.l.b16 %v895
        %v3471 = vunpack.c.h.b16 %v895
        %v3472 = vunpack.c.l.b16 %v896
        %v3473 = vunpack.c.h.b16 %v896
        %v3474 = vunpack.c.l.b16 %v897
        %v3475 = vunpack.c.h.b16 %v897
        %v3476 = vunpack.c.l.b16 %v898
        %v3477 = vunpack.c.h.b16 %v898
        %v3478 = vunpack.c.l.b16 %v899
        %v3479 = vunpack.c.h.b16 %v899
        %v3480 = vunpack.c.l.b16 %v900
        %v3481 = vunpack.c.h.b16 %v900
        %v3482 = vunpack.c.l.b16 %v901
        %v3483 = vunpack.c.h.b16 %v901
        %v3484 = vunpack.c.l.b16 %v902
        %v3485 = vunpack.c.h.b16 %v902
        %v3486 = vunpack.c.l.b16 %v903
        %v3487 = vunpack.c.h.b16 %v903
        %v3488 = vunpack.c.l.b16 %v904
        %v3489 = vunpack.c.h.b16 %v904
        %v3490 = vunpack.c.l.b16 %v905
        %v3491 = vunpack.c.h.b16 %v905
        %v3492 = vunpack.c.l.b16 %v906
        %v3493 = vunpack.c.h.b16 %v906
        %v3494 = vunpack.c.l.b16 %v907
        %v3495 = vunpack.c.h.b16 %v907
        %v3496 = vunpack.c.l.b16 %v908
        %v3497 = vunpack.c.h.b16 %v908
        %v3498 = vunpack.c.l.b16 %v909
        %v3499 = vunpack.c.h.b16 %v909
        %v3500 = vunpack.c.l.b16 %v910
        %v3501 = vunpack.c.h.b16 %v910
        %v3502 = vunpack.c.l.b16 %v911
        %v3503 = vunpack.c.h.b16 %v911
        %v3504 = vunpack.c.l.b16 %v912
        %v3505 = vunpack.c.h.b16 %v912
        %v3506 = vunpack.c.l.b16 %v913
        %v3507 = vunpack.c.h.b16 %v913
        %v3508 = vunpack.c.l.b16 %v914
        %v3509 = vunpack.c.h.b16 %v914
        %v3510 = vunpack.c.l.b16 %v915
        %v3511 = vunpack.c.h.b16 %v915
        %v3512 = vunpack.c.l.b16 %v916
        %v3513 = vunpack.c.h.b16 %v916
        %v3514 = vunpack.c.l.b16 %v917
        %v3515 = vunpack.c.h.b16 %v917
        %v3516 = vunpack.c.l.b16 %v918
        %v3517 = vunpack.c.h.b16 %v918
        %v3518 = vunpack.c.l.b16 %v919
        %v3519 = vunpack.c.h.b16 %v919
        %v3520 = vunpack.c.l.b16 %v920
        %v3521 = vunpack.c.h.b16 %v920
        %v3522 = vunpack.c.l.b16 %v921
        %v3523 = vunpack.c.h.b16 %v921
        %v3524 = vunpack.c.l.b16 %v922
        %v3525 = vunpack.c.h.b16 %v922
        %v3526 = vunpack.c.l.b16 %v923
        %v3527 = vunpack.c.h.b16 %v923
        %v3528 = vunpack.c.l.b16 %v924
        %v3529 = vunpack.c.h.b16 %v924
        %v3530 = vunpack.c.l.b16 %v925
        %v3531 = vunpack.c.h.b16 %v925
        %v3532 = vunpack.c.l.b16 %v926
        %v3533 = vunpack.c.h.b16 %v926
        %v3534 = vunpack.c.l.b16 %v927
        %v3535 = vunpack.c.h.b16 %v927
        %v3536 = vunpack.c.l.b16 %v928
        %v3537 = vunpack.c.h.b16 %v928
        %v3538 = vunpack.c.l.b16 %v929
        %v3539 = vunpack.c.h.b16 %v929
        %v3540 = vunpack.c.l.b16 %v930
        %v3541 = vunpack.c.h.b16 %v930
        %v3542 = vunpack.c.l.b16 %v931
        %v3543 = vunpack.c.h.b16 %v931
        %v3544 = vunpack.c.l.b16 %v932
        %v3545 = vunpack.c.h.b16 %v932
        %v3546 = vunpack.c.l.b16 %v933
        %v3547 = vunpack.c.h.b16 %v933
        %v3548 = vunpack.c.l.b16 %v934
        %v3549 = vunpack.c.h.b16 %v934
        %v3550 = vunpack.c.l.b16 %v935
        %v3551 = vunpack.c.h.b16 %v935
        %v3552 = vunpack.c.l.b16 %v936
        %v3553 = vunpack.c.h.b16 %v936
        %v3554 = vunpack.c.l.b16 %v937
        %v3555 = vunpack.c.h.b16 %v937
        %v3556 = vunpack.c.l.b16 %v938
        %v3557 = vunpack.c.h.b16 %v938
        %v3558 = vunpack.c.l.b16 %v939
        %v3559 = vunpack.c.h.b16 %v939
        %v3560 = vunpack.c.l.b16 %v940
        %v3561 = vunpack.c.h.b16 %v940
        %v3562 = vunpack.c.l.b16 %v941
        %v3563 = vunpack.c.h.b16 %v941
        %v3564 = vunpack.c.l.b16 %v942
        %v3565 = vunpack.c.h.b16 %v942
        %v3566 = vunpack.c.l.b16 %v943
        %v3567 = vunpack.c.h.b16 %v943
        %v3568 = vunpack.c.l.b16 %v944
        %v3569 = vunpack.c.h.b16 %v944
        %v3570 = vunpack.c.l.b16 %v945
        %v3571 = vunpack.c.h.b16 %v945
        %v3572 = vunpack.c.l.b16 %v946
        %v3573 = vunpack.c.h.b16 %v946
        %v3574 = vunpack.c.l.b16 %v947
        %v3575 = vunpack.c.h.b16 %v947
        %v3576 = vunpack.c.l.b16 %v948
        %v3577 = vunpack.c.h.b16 %v948
        %v3578 = vunpack.c.l.b16 %v949
        %v3579 = vunpack.c.h.b16 %v949
        %v3580 = vunpack.c.l.b16 %v950
        %v3581 = vunpack.c.h.b16 %v950
        %v3582 = vunpack.c.l.b16 %v951
        %v3583 = vunpack.c.h.b16 %v951
        %v3584 = vunpack.c.l.b16 %v952
        %v3585 = vunpack.c.h.b16 %v952
        %v3586 = vunpack.c.l.b16 %v953
        %v3587 = vunpack.c.h.b16 %v953
        %v3588 = vunpack.c.l.b16 %v954
        %v3589 = vunpack.c.h.b16 %v954
        %v3590 = vunpack.c.l.b16 %v955
        %v3591 = vunpack.c.h.b16 %v955
        %v3592 = vunpack.c.l.b16 %v956
        %v3593 = vunpack.c.h.b16 %v956
        %v3594 = vunpack.c.l.b16 %v957
        %v3595 = vunpack.c.h.b16 %v957
        %v3596 = vunpack.c.l.b16 %v958
        %v3597 = vunpack.c.h.b16 %v958
        %v3598 = vunpack.c.l.b16 %v959
        %v3599 = vunpack.c.h.b16 %v959
        %v3600 = vunpack.c.l.b16 %v960
        %v3601 = vunpack.c.h.b16 %v960
        %v3602 = vunpack.c.l.b16 %v961
        %v3603 = vunpack.c.h.b16 %v961
        %v3604 = vunpack.c.l.b16 %v962
        %v3605 = vunpack.c.h.b16 %v962
        %v3606 = vunpack.c.l.b16 %v963
        %v3607 = vunpack.c.h.b16 %v963
        %v3608 = vunpack.c.l.b16 %v964
        %v3609 = vunpack.c.h.b16 %v964
        %v3610 = vunpack.c.l.b16 %v965
        %v3611 = vunpack.c.h.b16 %v965
        %v3612 = vunpack.c.l.b16 %v966
        %v3613 = vunpack.c.h.b16 %v966
        %v3614 = vunpack.c.l.b16 %v967
        %v3615 = vunpack.c.h.b16 %v967
        %v3616 = vunpack.c.l.b16 %v968
        %v3617 = vunpack.c.h.b16 %v968
        %v3618 = vunpack.c.l.b16 %v969
        %v3619 = vunpack.c.h.b16 %v969
        %v3620 = vunpack.c.l.b16 %v970
        %v3621 = vunpack.c.h.b16 %v970
        %v3622 = vunpack.c.l.b16 %v971
        %v3623 = vunpack.c.h.b16 %v971
        %v3624 = vunpack.c.l.b16 %v972
        %v3625 = vunpack.c.h.b16 %v972
        %v3626 = vunpack.c.l.b16 %v973
        %v3627 = vunpack.c.h.b16 %v973
        %v3628 = vunpack.c.l.b16 %v974
        %v3629 = vunpack.c.h.b16 %v974
        %v3630 = vunpack.c.l.b16 %v975
        %v3631 = vunpack.c.h.b16 %v975
        %v3632 = vunpack.c.l.b16 %v976
        %v3633 = vunpack.c.h.b16 %v976
        %v3634 = vunpack.c.l.b16 %v977
        %v3635 = vunpack.c.h.b16 %v977
        %v3636 = vunpack.c.l.b16 %v978
        %v3637 = vunpack.c.h.b16 %v978
        %v3638 = vunpack.c.l.b16 %v979
        %v3639 = vunpack.c.h.b16 %v979
        %v3640 = vunpack.c.l.b16 %v980
        %v3641 = vunpack.c.h.b16 %v980
        %v3642 = vunpack.c.l.b16 %v981
        %v3643 = vunpack.c.h.b16 %v981
        %v3644 = vunpack.c.l.b16 %v982
        %v3645 = vunpack.c.h.b16 %v982
        %v3646 = vunpack.c.l.b16 %v983
        %v3647 = vunpack.c.h.b16 %v983
        %v3648 = vunpack.c.l.b16 %v984
        %v3649 = vunpack.c.h.b16 %v984
        %v3650 = vunpack.c.l.b16 %v985
        %v3651 = vunpack.c.h.b16 %v985
        %v3652 = vunpack.c.l.b16 %v986
        %v3653 = vunpack.c.h.b16 %v986
        %v3654 = vunpack.c.l.b16 %v987
        %v3655 = vunpack.c.h.b16 %v987
        %v3656 = vunpack.c.l.b16 %v988
        %v3657 = vunpack.c.h.b16 %v988
        %v3658 = vunpack.c.l.b16 %v989
        %v3659 = vunpack.c.h.b16 %v989
        %v3660 = vunpack.c.l.b16 %v990
        %v3661 = vunpack.c.h.b16 %v990
        %v3662 = vunpack.c.l.b16 %v991
        %v3663 = vunpack.c.h.b16 %v991
        %v3664 = vunpack.c.l.b16 %v992
        %v3665 = vunpack.c.h.b16 %v992
        %v3666 = vunpack.c.l.b16 %v993
        %v3667 = vunpack.c.h.b16 %v993
        %v3668 = vunpack.c.l.b16 %v994
        %v3669 = vunpack.c.h.b16 %v994
        %v3670 = vunpack.c.l.b16 %v995
        %v3671 = vunpack.c.h.b16 %v995
        %v3672 = vunpack.c.l.b16 %v996
        %v3673 = vunpack.c.h.b16 %v996
        %v3674 = vunpack.c.l.b16 %v997
        %v3675 = vunpack.c.h.b16 %v997
        %v3676 = vunpack.c.l.b16 %v998
        %v3677 = vunpack.c.h.b16 %v998
        %v3678 = vunpack.c.l.b16 %v999
        %v3679 = vunpack.c.h.b16 %v999
        %v3680 = vunpack.c.l.b16 %v1000
        %v3681 = vunpack.c.h.b16 %v1000
        %v3682 = vunpack.c.l.b16 %v1001
        %v3683 = vunpack.c.h.b16 %v1001
        %v3684 = vunpack.c.l.b16 %v1002
        %v3685 = vunpack.c.h.b16 %v1002
        %v3686 = vunpack.c.l.b16 %v1003
        %v3687 = vunpack.c.h.b16 %v1003
        %v3688 = vunpack.c.l.b16 %v1004
        %v3689 = vunpack.c.h.b16 %v1004
        %v3690 = vunpack.c.l.b16 %v1005
        %v3691 = vunpack.c.h.b16 %v1005
        %v3692 = vunpack.c.l.b16 %v1006
        %v3693 = vunpack.c.h.b16 %v1006
        %v3694 = vunpack.c.l.b16 %v1007
        %v3695 = vunpack.c.h.b16 %v1007
        %v3696 = vunpack.c.l.b16 %v1008
        %v3697 = vunpack.c.h.b16 %v1008
        %v3698 = vunpack.c.l.b16 %v1009
        %v3699 = vunpack.c.h.b16 %v1009
        %v3700 = vunpack.c.l.b16 %v1010
        %v3701 = vunpack.c.h.b16 %v1010
        %v3702 = vunpack.c.l.b16 %v1011
        %v3703 = vunpack.c.h.b16 %v1011
        %v3704 = vunpack.c.l.b16 %v1012
        %v3705 = vunpack.c.h.b16 %v1012
        %v3706 = vunpack.c.l.b16 %v1013
        %v3707 = vunpack.c.h.b16 %v1013
        %v3708 = vunpack.c.l.b16 %v1014
        %v3709 = vunpack.c.h.b16 %v1014
        %v3710 = vunpack.c.l.b16 %v1015
        %v3711 = vunpack.c.h.b16 %v1015
        %v3712 = vunpack.c.l.b16 %v1016
        %v3713 = vunpack.c.h.b16 %v1016
        %v3714 = vunpack.c.l.b16 %v1017
        %v3715 = vunpack.c.h.b16 %v1017
        %v3716 = vunpack.c.l.b16 %v1018
        %v3717 = vunpack.c.h.b16 %v1018
        %v3718 = vunpack.c.l.b16 %v1019
        %v3719 = vunpack.c.h.b16 %v1019
        %v3720 = vunpack.c.l.b16 %v1020
        %v3721 = vunpack.c.h.b16 %v1020
        %v3722 = vunpack.c.l.b16 %v1021
        %v3723 = vunpack.c.h.b16 %v1021
        %v3724 = vunpack.c.l.b16 %v1022
        %v3725 = vunpack.c.h.b16 %v1022
        %v3726 = vunpack.c.l.b16 %v1023
        %v3727 = vunpack.c.h.b16 %v1023
        %v3728 = vunpack.c.l.b16 %v1024
        %v3729 = vunpack.c.h.b16 %v1024
        %v3730 = vunpack.c.l.b16 %v1025
        %v3731 = vunpack.c.h.b16 %v1025
        %v3732 = vunpack.c.l.b16 %v1026
        %v3733 = vunpack.c.h.b16 %v1026
        %v3734 = vunpack.c.l.b16 %v1027
        %v3735 = vunpack.c.h.b16 %v1027
        %v3736 = vunpack.c.l.b16 %v1028
        %v3737 = vunpack.c.h.b16 %v1028
        %v3738 = vunpack.c.l.b16 %v1029
        %v3739 = vunpack.c.h.b16 %v1029
        %v3740 = vunpack.c.l.b16 %v1030
        %v3741 = vunpack.c.h.b16 %v1030
        %v3742 = vunpack.c.l.b16 %v1031
        %v3743 = vunpack.c.h.b16 %v1031
        %v3744 = vunpack.c.l.b16 %v1032
        %v3745 = vunpack.c.h.b16 %v1032
        %v3746 = vunpack.c.l.b16 %v1033
        %v3747 = vunpack.c.h.b16 %v1033
        %v3748 = vunpack.c.l.b16 %v1034
        %v3749 = vunpack.c.h.b16 %v1034
        %v3750 = vunpack.c.l.b16 %v1035
        %v3751 = vunpack.c.h.b16 %v1035
        %v3752 = vunpack.c.l.b16 %v1036
        %v3753 = vunpack.c.h.b16 %v1036
        %v3754 = vunpack.c.l.b16 %v1037
        %v3755 = vunpack.c.h.b16 %v1037
        %v3756 = vunpack.c.l.b16 %v1038
        %v3757 = vunpack.c.h.b16 %v1038
        %v3758 = vunpack.c.l.b16 %v1039
        %v3759 = vunpack.c.h.b16 %v1039
        %v3760 = vunpack.c.l.b16 %v1040
        %v3761 = vunpack.c.h.b16 %v1040
        %v3762 = vunpack.c.l.b16 %v1041
        %v3763 = vunpack.c.h.b16 %v1041
        %v3764 = vunpack.c.l.b16 %v1042
        %v3765 = vunpack.c.h.b16 %v1042
        %v3766 = vunpack.c.l.b16 %v1043
        %v3767 = vunpack.c.h.b16 %v1043
        %v3768 = vunpack.c.l.b16 %v1044
        %v3769 = vunpack.c.h.b16 %v1044
        %v3770 = vunpack.c.l.b16 %v1045
        %v3771 = vunpack.c.h.b16 %v1045
        %v3772 = vunpack.c.l.b16 %v1046
        %v3773 = vunpack.c.h.b16 %v1046
        %v3774 = vunpack.c.l.b16 %v1047
        %v3775 = vunpack.c.h.b16 %v1047
        %v3776 = vunpack.c.l.b16 %v1048
        %v3777 = vunpack.c.h.b16 %v1048
        %v3778 = vunpack.c.l.b16 %v1049
        %v3779 = vunpack.c.h.b16 %v1049
        %v3780 = vunpack.c.l.b16 %v1050
        %v3781 = vunpack.c.h.b16 %v1050
        %v3782 = vunpack.c.l.b16 %v1051
        %v3783 = vunpack.c.h.b16 %v1051
        %v3784 = vunpack.c.l.b16 %v1052
        %v3785 = vunpack.c.h.b16 %v1052
        %v3786 = vunpack.c.l.b16 %v1053
        %v3787 = vunpack.c.h.b16 %v1053
        %v3788 = vunpack.c.l.b16 %v1054
        %v3789 = vunpack.c.h.b16 %v1054
        %v3790 = vunpack.c.l.b16 %v1055
        %v3791 = vunpack.c.h.b16 %v1055
        %v3792 = vunpack.c.l.b16 %v1056
        %v3793 = vunpack.c.h.b16 %v1056
        %v3794 = vunpack.c.l.b16 %v1057
        %v3795 = vunpack.c.h.b16 %v1057
        %v3796 = vunpack.c.l.b16 %v1058
        %v3797 = vunpack.c.h.b16 %v1058
        %v3798 = vunpack.c.l.b16 %v1059
        %v3799 = vunpack.c.h.b16 %v1059
        %v3800 = vunpack.c.l.b16 %v1060
        %v3801 = vunpack.c.h.b16 %v1060
        %v3802 = vunpack.c.l.b16 %v1061
        %v3803 = vunpack.c.h.b16 %v1061
        %v3804 = vunpack.c.l.b16 %v1062
        %v3805 = vunpack.c.h.b16 %v1062
        %v3806 = vunpack.c.l.b16 %v1063
        %v3807 = vunpack.c.h.b16 %v1063
        %v3808 = vunpack.c.l.b16 %v1064
        %v3809 = vunpack.c.h.b16 %v1064
        %v3810 = vunpack.c.l.b16 %v1065
        %v3811 = vunpack.c.h.b16 %v1065
        %v3812 = vunpack.c.l.b16 %v1066
        %v3813 = vunpack.c.h.b16 %v1066
        %v3814 = vunpack.c.l.b16 %v1067
        %v3815 = vunpack.c.h.b16 %v1067
        %v3816 = vunpack.c.l.b16 %v1068
        %v3817 = vunpack.c.h.b16 %v1068
        %v3818 = vunpack.c.l.b16 %v1069
        %v3819 = vunpack.c.h.b16 %v1069
        %v3820 = vunpack.c.l.b16 %v1070
        %v3821 = vunpack.c.h.b16 %v1070
        %v3822 = vunpack.c.l.b16 %v1071
        %v3823 = vunpack.c.h.b16 %v1071
        %v3824 = vunpack.c.l.b16 %v1072
        %v3825 = vunpack.c.h.b16 %v1072
        %v3826 = vunpack.c.l.b16 %v1073
        %v3827 = vunpack.c.h.b16 %v1073
        %v3828 = vunpack.c.l.b16 %v1074
        %v3829 = vunpack.c.h.b16 %v1074
        %v3830 = vunpack.c.l.b16 %v1075
        %v3831 = vunpack.c.h.b16 %v1075
        %v3832 = vunpack.c.l.b16 %v1076
        %v3833 = vunpack.c.h.b16 %v1076
        %v3834 = vunpack.c.l.b16 %v1077
        %v3835 = vunpack.c.h.b16 %v1077
        %v3836 = vunpack.c.l.b16 %v1078
        %v3837 = vunpack.c.h.b16 %v1078
        %v3838 = vunpack.c.l.b16 %v1079
        %v3839 = vunpack.c.h.b16 %v1079
        %v3840 = vunpack.c.l.b16 %v1080
        %v3841 = vunpack.c.h.b16 %v1080
        %v3842 = vunpack.c.l.b16 %v1081
        %v3843 = vunpack.c.h.b16 %v1081
        %v3844 = vunpack.c.l.b16 %v1082
        %v3845 = vunpack.c.h.b16 %v1082
        %v3846 = vunpack.c.l.b16 %v1083
        %v3847 = vunpack.c.h.b16 %v1083
        %v3848 = vunpack.c.l.b16 %v1084
        %v3849 = vunpack.c.h.b16 %v1084
        %v3850 = vunpack.c.l.b16 %v1085
        %v3851 = vunpack.c.h.b16 %v1085
        %v3852 = vunpack.c.l.b16 %v1086
        %v3853 = vunpack.c.h.b16 %v1086
        %v3854 = vunpack.c.l.b16 %v1087
        %v3855 = vunpack.c.h.b16 %v1087
        %v3856 = vunpack.c.l.b16 %v1088
        %v3857 = vunpack.c.h.b16 %v1088
        %v3858 = vunpack.c.l.b16 %v1089
        %v3859 = vunpack.c.h.b16 %v1089
        %v3860 = vunpack.c.l.b16 %v1090
        %v3861 = vunpack.c.h.b16 %v1090
        %v3862 = vunpack.c.l.b16 %v1091
        %v3863 = vunpack.c.h.b16 %v1091
        %v3864 = vunpack.c.l.b16 %v1092
        %v3865 = vunpack.c.h.b16 %v1092
        %v3866 = vunpack.c.l.b16 %v1093
        %v3867 = vunpack.c.h.b16 %v1093
        %v3868 = vunpack.c.l.b16 %v1094
        %v3869 = vunpack.c.h.b16 %v1094
        %v3870 = vunpack.c.l.b16 %v1095
        %v3871 = vunpack.c.h.b16 %v1095
        %v3872 = vunpack.c.l.b16 %v1096
        %v3873 = vunpack.c.h.b16 %v1096
        %v3874 = vunpack.c.l.b16 %v1097
        %v3875 = vunpack.c.h.b16 %v1097
        %v3876 = vunpack.c.l.b16 %v1098
        %v3877 = vunpack.c.h.b16 %v1098
        %v3878 = vunpack.c.l.b16 %v1099
        %v3879 = vunpack.c.h.b16 %v1099
        %v3880 = vunpack.c.l.b16 %v1100
        %v3881 = vunpack.c.h.b16 %v1100
        %v3882 = vunpack.c.l.b16 %v1101
        %v3883 = vunpack.c.h.b16 %v1101
        %v3884 = vunpack.c.l.b16 %v1102
        %v3885 = vunpack.c.h.b16 %v1102
        %v3886 = vunpack.c.l.b16 %v1103
        %v3887 = vunpack.c.h.b16 %v1103
        %v3888 = vunpack.c.l.b16 %v1104
        %v3889 = vunpack.c.h.b16 %v1104
        %v3890 = vunpack.c.l.b16 %v1105
        %v3891 = vunpack.c.h.b16 %v1105
        %v3892 = vunpack.c.l.b16 %v1106
        %v3893 = vunpack.c.h.b16 %v1106
        %v3894 = vunpack.c.l.b16 %v1107
        %v3895 = vunpack.c.h.b16 %v1107
        %v3896 = vunpack.c.l.b16 %v1108
        %v3897 = vunpack.c.h.b16 %v1108
        %v3898 = vunpack.c.l.b16 %v1109
        %v3899 = vunpack.c.h.b16 %v1109
        %v3900 = vunpack.c.l.b16 %v1110
        %v3901 = vunpack.c.h.b16 %v1110
        %v3902 = vunpack.c.l.b16 %v1111
        %v3903 = vunpack.c.h.b16 %v1111
        %v3904 = vunpack.c.l.b16 %v1112
        %v3905 = vunpack.c.h.b16 %v1112
        %v3906 = vunpack.c.l.b16 %v1113
        %v3907 = vunpack.c.h.b16 %v1113
        %v3908 = vunpack.c.l.b16 %v1114
        %v3909 = vunpack.c.h.b16 %v1114
        %v3910 = vunpack.c.l.b16 %v1115
        %v3911 = vunpack.c.h.b16 %v1115
        %v3912 = vunpack.c.l.b16 %v1116
        %v3913 = vunpack.c.h.b16 %v1116
        %v3914 = vunpack.c.l.b16 %v1117
        %v3915 = vunpack.c.h.b16 %v1117
        %v3916 = vunpack.c.l.b16 %v1118
        %v3917 = vunpack.c.h.b16 %v1118
        %v3918 = vunpack.c.l.b16 %v1119
        %v3919 = vunpack.c.h.b16 %v1119
        %v3920 = vunpack.c.l.b16 %v1120
        %v3921 = vunpack.c.h.b16 %v1120
        %v3922 = vunpack.c.l.b16 %v1121
        %v3923 = vunpack.c.h.b16 %v1121
        %v3924 = vunpack.c.l.b16 %v1122
        %v3925 = vunpack.c.h.b16 %v1122
        %v3926 = vunpack.c.l.b16 %v1123
        %v3927 = vunpack.c.h.b16 %v1123
        %v3928 = vunpack.c.l.b16 %v1124
        %v3929 = vunpack.c.h.b16 %v1124
        %v3930 = vunpack.c.l.b16 %v1125
        %v3931 = vunpack.c.h.b16 %v1125
        %v3932 = vunpack.c.l.b16 %v1126
        %v3933 = vunpack.c.h.b16 %v1126
        %v3934 = vunpack.c.l.b16 %v1127
        %v3935 = vunpack.c.h.b16 %v1127
        %v3936 = vunpack.c.l.b16 %v1128
        %v3937 = vunpack.c.h.b16 %v1128
        %v3938 = vunpack.c.l.b16 %v1129
        %v3939 = vunpack.c.h.b16 %v1129
        %v3940 = vunpack.c.l.b16 %v1130
        %v3941 = vunpack.c.h.b16 %v1130
        %v3942 = vunpack.c.l.b16 %v1131
        %v3943 = vunpack.c.h.b16 %v1131
        %v3944 = vunpack.c.l.b16 %v1132
        %v3945 = vunpack.c.h.b16 %v1132
        %v3946 = vunpack.c.l.b16 %v1133
        %v3947 = vunpack.c.h.b16 %v1133
        %v3948 = vunpack.c.l.b16 %v1134
        %v3949 = vunpack.c.h.b16 %v1134
        %v3950 = vunpack.c.l.b16 %v1135
        %v3951 = vunpack.c.h.b16 %v1135
        %v3952 = vunpack.c.l.b16 %v1136
        %v3953 = vunpack.c.h.b16 %v1136
        %v3954 = vunpack.c.l.b16 %v1137
        %v3955 = vunpack.c.h.b16 %v1137
        %v3956 = vunpack.c.l.b16 %v1138
        %v3957 = vunpack.c.h.b16 %v1138
        %v3958 = vunpack.c.l.b16 %v1139
        %v3959 = vunpack.c.h.b16 %v1139
        %v3960 = vunpack.c.l.b16 %v1140
        %v3961 = vunpack.c.h.b16 %v1140
        %v3962 = vunpack.c.l.b16 %v1141
        %v3963 = vunpack.c.h.b16 %v1141
        %v3964 = vunpack.c.l.b16 %v1142
        %v3965 = vunpack.c.h.b16 %v1142
        %v3966 = vunpack.c.l.b16 %v1143
        %v3967 = vunpack.c.h.b16 %v1143
        %v3968 = vunpack.c.l.b16 %v1144
        %v3969 = vunpack.c.h.b16 %v1144
        %v3970 = vunpack.c.l.b16 %v1145
        %v3971 = vunpack.c.h.b16 %v1145
        %v3972 = vunpack.c.l.b16 %v1146
        %v3973 = vunpack.c.h.b16 %v1146
        %v3974 = vunpack.c.l.b16 %v1147
        %v3975 = vunpack.c.h.b16 %v1147
        %v3976 = vunpack.c.l.b16 %v1148
        %v3977 = vunpack.c.h.b16 %v1148
        %v3978 = vunpack.c.l.b16 %v1149
        %v3979 = vunpack.c.h.b16 %v1149
        %v3980 = vunpack.c.l.b16 %v1150
        %v3981 = vunpack.c.h.b16 %v1150
        %v3982 = vunpack.c.l.b16 %v1151
        %v3983 = vunpack.c.h.b16 %v1151
        %v3984 = vunpack.c.l.b16 %v1152
        %v3985 = vunpack.c.h.b16 %v1152
        %v3986 = vunpack.c.l.b16 %v1153
        %v3987 = vunpack.c.h.b16 %v1153
        %v3988 = vunpack.c.l.b16 %v1154
        %v3989 = vunpack.c.h.b16 %v1154
        %v3990 = vunpack.c.l.b16 %v1155
        %v3991 = vunpack.c.h.b16 %v1155
        %v3992 = vunpack.c.l.b16 %v1156
        %v3993 = vunpack.c.h.b16 %v1156
        %v3994 = vunpack.c.l.b16 %v1157
        %v3995 = vunpack.c.h.b16 %v1157
        %v3996 = vunpack.c.l.b16 %v1158
        %v3997 = vunpack.c.h.b16 %v1158
        %v3998 = vunpack.c.l.b16 %v1159
        %v3999 = vunpack.c.h.b16 %v1159
        %v4000 = vunpack.c.l.b16 %v1160
        %v4001 = vunpack.c.h.b16 %v1160
        %v4002 = vunpack.c.l.b16 %v1161
        %v4003 = vunpack.c.h.b16 %v1161
        %v4004 = vunpack.c.l.b16 %v1162
        %v4005 = vunpack.c.h.b16 %v1162
        %v4006 = vunpack.c.l.b16 %v1163
        %v4007 = vunpack.c.h.b16 %v1163
        %v4008 = vunpack.c.l.b16 %v1164
        %v4009 = vunpack.c.h.b16 %v1164
        %v4010 = vunpack.c.l.b16 %v1165
        %v4011 = vunpack.c.h.b16 %v1165
        %v4012 = vunpack.c.l.b16 %v1166
        %v4013 = vunpack.c.h.b16 %v1166
        %v4014 = vunpack.c.l.b16 %v1167
        %v4015 = vunpack.c.h.b16 %v1167
        %v4016 = vunpack.c.l.b16 %v1168
        %v4017 = vunpack.c.h.b16 %v1168
        %v4018 = vunpack.c.l.b16 %v1169
        %v4019 = vunpack.c.h.b16 %v1169
        %v4020 = vunpack.c.l.b16 %v1170
        %v4021 = vunpack.c.h.b16 %v1170
        %v4022 = vunpack.c.l.b16 %v1171
        %v4023 = vunpack.c.h.b16 %v1171
        %v4024 = vunpack.c.l.b16 %v1172
        %v4025 = vunpack.c.h.b16 %v1172
        %v4026 = vunpack.c.l.b16 %v1173
        %v4027 = vunpack.c.h.b16 %v1173
        %v4028 = vunpack.c.l.b16 %v1174
        %v4029 = vunpack.c.h.b16 %v1174
        %v4030 = vunpack.c.l.b16 %v1175
        %v4031 = vunpack.c.h.b16 %v1175
        %v4032 = vunpack.c.l.b16 %v1176
        %v4033 = vunpack.c.h.b16 %v1176
        %v4034 = vunpack.c.l.b16 %v1177
        %v4035 = vunpack.c.h.b16 %v1177
        %v4036 = vunpack.c.l.b16 %v1178
        %v4037 = vunpack.c.h.b16 %v1178
        %v4038 = vunpack.c.l.b16 %v1179
        %v4039 = vunpack.c.h.b16 %v1179
        %v4040 = vunpack.c.l.b16 %v1180
        %v4041 = vunpack.c.h.b16 %v1180
        %v4042 = vunpack.c.l.b16 %v1181
        %v4043 = vunpack.c.h.b16 %v1181
        %v4044 = vunpack.c.l.b16 %v1182
        %v4045 = vunpack.c.h.b16 %v1182
        %v4046 = vunpack.c.l.b16 %v1183
        %v4047 = vunpack.c.h.b16 %v1183
        %v4048 = vunpack.c.l.b16 %v1184
        %v4049 = vunpack.c.h.b16 %v1184
        %v4050 = vunpack.c.l.b16 %v1185
        %v4051 = vunpack.c.h.b16 %v1185
        %v4052 = vunpack.c.l.b16 %v1186
        %v4053 = vunpack.c.h.b16 %v1186
        %v4054 = vunpack.c.l.b16 %v1187
        %v4055 = vunpack.c.h.b16 %v1187
        %v4056 = vunpack.c.l.b16 %v1188
        %v4057 = vunpack.c.h.b16 %v1188
        %v4058 = vunpack.c.l.b16 %v1189
        %v4059 = vunpack.c.h.b16 %v1189
        %v4060 = vunpack.c.l.b16 %v1190
        %v4061 = vunpack.c.h.b16 %v1190
        %v4062 = vunpack.c.l.b16 %v1191
        %v4063 = vunpack.c.h.b16 %v1191
        %v4064 = vunpack.c.l.b16 %v1192
        %v4065 = vunpack.c.h.b16 %v1192
        %v4066 = vunpack.c.l.b16 %v1193
        %v4067 = vunpack.c.h.b16 %v1193
        %v4068 = vunpack.c.l.b16 %v1194
        %v4069 = vunpack.c.h.b16 %v1194
        %v4070 = vunpack.c.l.b16 %v1195
        %v4071 = vunpack.c.h.b16 %v1195
        %v4072 = vunpack.c.l.b16 %v1196
        %v4073 = vunpack.c.h.b16 %v1196
        %v4074 = vunpack.c.l.b16 %v1197
        %v4075 = vunpack.c.h.b16 %v1197
        %v4076 = vunpack.c.l.b16 %v1198
        %v4077 = vunpack.c.h.b16 %v1198
        %v4078 = vunpack.c.l.b16 %v1199
        %v4079 = vunpack.c.h.b16 %v1199
        %v4080 = vunpack.c.l.b16 %v1200
        %v4081 = vunpack.c.h.b16 %v1200
        %v4082 = vunpack.c.l.b16 %v1201
        %v4083 = vunpack.c.h.b16 %v1201
        %v4084 = vunpack.c.l.b16 %v1202
        %v4085 = vunpack.c.h.b16 %v1202
        %v4086 = vunpack.c.l.b16 %v1203
        %v4087 = vunpack.c.h.b16 %v1203
        %v4088 = vunpack.c.l.b16 %v1204
        %v4089 = vunpack.c.h.b16 %v1204
        %v4090 = vunpack.c.l.b16 %v1205
        %v4091 = vunpack.c.h.b16 %v1205
        %v4092 = vunpack.c.l.b16 %v1206
        %v4093 = vunpack.c.h.b16 %v1206
        %v4094 = vunpack.c.l.b16 %v1207
        %v4095 = vunpack.c.h.b16 %v1207
        %v4096 = vunpack.c.l.b16 %v1208
        %v4097 = vunpack.c.h.b16 %v1208
        %v4098 = vunpack.c.l.b16 %v1209
        %v4099 = vunpack.c.h.b16 %v1209
        %v4100 = vunpack.c.l.b16 %v1210
        %v4101 = vunpack.c.h.b16 %v1210
        %v4102 = vunpack.c.l.b16 %v1211
        %v4103 = vunpack.c.h.b16 %v1211
        %v4104 = vunpack.c.l.b16 %v1212
        %v4105 = vunpack.c.h.b16 %v1212
        %v4106 = vunpack.c.l.b16 %v1213
        %v4107 = vunpack.c.h.b16 %v1213
        %v4108 = vunpack.c.l.b16 %v1214
        %v4109 = vunpack.c.h.b16 %v1214
        %v4110 = vunpack.c.l.b16 %v1215
        %v4111 = vunpack.c.h.b16 %v1215
        %v4112 = vunpack.c.l.b16 %v1216
        %v4113 = vunpack.c.h.b16 %v1216
        %v4114 = vunpack.c.l.b16 %v1217
        %v4115 = vunpack.c.h.b16 %v1217
        %v4116 = vunpack.c.l.b16 %v1218
        %v4117 = vunpack.c.h.b16 %v1218
        %v4118 = vunpack.c.l.b16 %v1219
        %v4119 = vunpack.c.h.b16 %v1219
        %v4120 = vunpack.c.l.b16 %v1220
        %v4121 = vunpack.c.h.b16 %v1220
        %v4122 = vunpack.c.l.b16 %v1221
        %v4123 = vunpack.c.h.b16 %v1221
        %v4124 = vunpack.c.l.b16 %v1222
        %v4125 = vunpack.c.h.b16 %v1222
        %v4126 = vunpack.c.l.b16 %v1223
        %v4127 = vunpack.c.h.b16 %v1223
        %v4128 = vunpack.c.l.b16 %v1224
        %v4129 = vunpack.c.h.b16 %v1224
        %v4130 = vunpack.c.l.b16 %v1225
        %v4131 = vunpack.c.h.b16 %v1225
        %v4132 = vunpack.c.l.b16 %v1226
        %v4133 = vunpack.c.h.b16 %v1226
        %v4134 = vunpack.c.l.b16 %v1227
        %v4135 = vunpack.c.h.b16 %v1227
        %v4136 = vunpack.c.l.b16 %v1228
        %v4137 = vunpack.c.h.b16 %v1228
        %v4138 = vunpack.c.l.b16 %v1229
        %v4139 = vunpack.c.h.b16 %v1229
        %v4140 = vunpack.c.l.b16 %v1230
        %v4141 = vunpack.c.h.b16 %v1230
        %v4142 = vunpack.c.l.b16 %v1231
        %v4143 = vunpack.c.h.b16 %v1231
        %v4144 = vunpack.c.l.b16 %v1232
        %v4145 = vunpack.c.h.b16 %v1232
        %v4146 = vunpack.c.l.b16 %v1233
        %v4147 = vunpack.c.h.b16 %v1233
        %v4148 = vunpack.c.l.b16 %v1234
        %v4149 = vunpack.c.h.b16 %v1234
        %v4150 = vunpack.c.l.b16 %v1235
        %v4151 = vunpack.c.h.b16 %v1235
        %v4152 = vunpack.c.l.b16 %v1236
        %v4153 = vunpack.c.h.b16 %v1236
        %v4154 = vunpack.c.l.b16 %v1237
        %v4155 = vunpack.c.h.b16 %v1237
        %v4156 = vunpack.c.l.b16 %v1238
        %v4157 = vunpack.c.h.b16 %v1238
        %v4158 = vunpack.c.l.b16 %v1239
        %v4159 = vunpack.c.h.b16 %v1239
        %v4160 = vunpack.c.l.b16 %v1240
        %v4161 = vunpack.c.h.b16 %v1240
        %v4162 = vunpack.c.l.b16 %v1241
        %v4163 = vunpack.c.h.b16 %v1241
        %v4164 = vunpack.c.l.b16 %v1242
        %v4165 = vunpack.c.h.b16 %v1242
        %v4166 = vunpack.c.l.b16 %v1243
        %v4167 = vunpack.c.h.b16 %v1243
        %v4168 = vunpack.c.l.b16 %v1244
        %v4169 = vunpack.c.h.b16 %v1244
        %v4170 = vunpack.c.l.b16 %v1245
        %v4171 = vunpack.c.h.b16 %v1245
        %v4172 = vunpack.c.l.b16 %v1246
        %v4173 = vunpack.c.h.b16 %v1246
        %v4174 = vunpack.c.l.b16 %v1247
        %v4175 = vunpack.c.h.b16 %v1247
        %v4176 = vunpack.c.l.b16 %v1248
        %v4177 = vunpack.c.h.b16 %v1248
        %v4178 = vunpack.c.l.b16 %v1249
        %v4179 = vunpack.c.h.b16 %v1249
        %v4180 = vunpack.c.l.b16 %v1250
        %v4181 = vunpack.c.h.b16 %v1250
        %v4182 = vunpack.c.l.b16 %v1251
        %v4183 = vunpack.c.h.b16 %v1251
        %v4184 = vunpack.c.l.b16 %v1252
        %v4185 = vunpack.c.h.b16 %v1252
        %v4186 = vunpack.c.l.b16 %v1253
        %v4187 = vunpack.c.h.b16 %v1253
        %v4188 = vunpack.c.l.b16 %v1254
        %v4189 = vunpack.c.h.b16 %v1254
        %v4190 = vunpack.c.l.b16 %v1255
        %v4191 = vunpack.c.h.b16 %v1255
        %v4192 = vunpack.c.l.b16 %v1256
        %v4193 = vunpack.c.h.b16 %v1256
        %v4194 = vunpack.c.l.b16 %v1257
        %v4195 = vunpack.c.h.b16 %v1257
        %v4196 = vunpack.c.l.b16 %v1258
        %v4197 = vunpack.c.h.b16 %v1258
        %v4198 = vunpack.c.l.b16 %v1259
        %v4199 = vunpack.c.h.b16 %v1259
        %v4200 = vunpack.c.l.b16 %v1260
        %v4201 = vunpack.c.h.b16 %v1260
        %v4202 = vunpack.c.l.b16 %v1261
        %v4203 = vunpack.c.h.b16 %v1261
        %v4204 = vunpack.c.l.b16 %v1262
        %v4205 = vunpack.c.h.b16 %v1262
        %v4206 = vunpack.c.l.b16 %v1263
        %v4207 = vunpack.c.h.b16 %v1263
        %v4208 = vunpack.c.l.b16 %v1264
        %v4209 = vunpack.c.h.b16 %v1264
        %v4210 = vunpack.c.l.b16 %v1265
        %v4211 = vunpack.c.h.b16 %v1265
        %v4212 = vunpack.c.l.b16 %v1266
        %v4213 = vunpack.c.h.b16 %v1266
        %v4214 = vunpack.c.l.b16 %v1267
        %v4215 = vunpack.c.h.b16 %v1267
        %v4216 = vunpack.c.l.b16 %v1268
        %v4217 = vunpack.c.h.b16 %v1268
        %v4218 = vunpack.c.l.b16 %v1269
        %v4219 = vunpack.c.h.b16 %v1269
        %v4220 = vunpack.c.l.b16 %v1270
        %v4221 = vunpack.c.h.b16 %v1270
        %v4222 = vunpack.c.l.b16 %v1271
        %v4223 = vunpack.c.h.b16 %v1271
        %v4224 = vunpack.c.l.b16 %v1272
        %v4225 = vunpack.c.h.b16 %v1272
        %v4226 = vunpack.c.l.b16 %v1273
        %v4227 = vunpack.c.h.b16 %v1273
        %v4228 = vunpack.c.l.b16 %v1274
        %v4229 = vunpack.c.h.b16 %v1274
        %v4230 = vunpack.c.l.b16 %v1275
        %v4231 = vunpack.c.h.b16 %v1275
        %v4232 = vunpack.c.l.b16 %v1276
        %v4233 = vunpack.c.h.b16 %v1276
        %v4234 = vunpack.c.l.b16 %v1277
        %v4235 = vunpack.c.h.b16 %v1277
        %v4236 = vunpack.c.l.b16 %v1278
        %v4237 = vunpack.c.h.b16 %v1278
        %v4238 = vunpack.c.l.b16 %v1279
        %v4239 = vunpack.c.h.b16 %v1279
        %v4240 = vunpack.c.l.b16 %v1280
        %v4241 = vunpack.c.h.b16 %v1280
        %v4242 = vunpack.c.l.b16 %v1281
        %v4243 = vunpack.c.h.b16 %v1281
        %v4244 = vunpack.c.l.b16 %v1282
        %v4245 = vunpack.c.h.b16 %v1282
        %v4246 = vunpack.c.l.b16 %v1283
        %v4247 = vunpack.c.h.b16 %v1283
        %v4248 = vunpack.c.l.b16 %v1284
        %v4249 = vunpack.c.h.b16 %v1284
        %v4250 = vunpack.c.l.b16 %v1285
        %v4251 = vunpack.c.h.b16 %v1285
        %v4252 = vunpack.c.l.b16 %v1286
        %v4253 = vunpack.c.h.b16 %v1286
        %v4254 = vunpack.c.l.b16 %v1287
        %v4255 = vunpack.c.h.b16 %v1287
        %v4256 = vunpack.c.l.b16 %v1288
        %v4257 = vunpack.c.h.b16 %v1288
        %v4258 = vunpack.c.l.b16 %v1289
        %v4259 = vunpack.c.h.b16 %v1289
        %v4260 = vunpack.c.l.b16 %v1290
        %v4261 = vunpack.c.h.b16 %v1290
        %v4262 = vunpack.c.l.b16 %v1291
        %v4263 = vunpack.c.h.b16 %v1291
        %v4264 = vunpack.c.l.b16 %v1292
        %v4265 = vunpack.c.h.b16 %v1292
        %v4266 = vunpack.c.l.b16 %v1293
        %v4267 = vunpack.c.h.b16 %v1293
        %v4268 = vunpack.c.l.b16 %v1294
        %v4269 = vunpack.c.h.b16 %v1294
        %v4270 = vunpack.c.l.b16 %v1295
        %v4271 = vunpack.c.h.b16 %v1295
        %v4272 = vunpack.c.l.b16 %v1296
        %v4273 = vunpack.c.h.b16 %v1296
        %v4274 = vunpack.c.l.b16 %v1297
        %v4275 = vunpack.c.h.b16 %v1297
        %v4276 = vunpack.c.l.b16 %v1298
        %v4277 = vunpack.c.h.b16 %v1298
        %v4278 = vunpack.c.l.b16 %v1299
        %v4279 = vunpack.c.h.b16 %v1299
        %v4280 = vunpack.c.l.b16 %v1300
        %v4281 = vunpack.c.h.b16 %v1300
        %v4282 = vunpack.c.l.b16 %v1301
        %v4283 = vunpack.c.h.b16 %v1301
        %v4284 = vunpack.c.l.b16 %v1302
        %v4285 = vunpack.c.h.b16 %v1302
        %v4286 = vunpack.c.l.b16 %v1303
        %v4287 = vunpack.c.h.b16 %v1303
        %v4288 = vunpack.c.l.b16 %v1304
        %v4289 = vunpack.c.h.b16 %v1304
        %v4290 = vunpack.c.l.b16 %v1305
        %v4291 = vunpack.c.h.b16 %v1305
        %v4292 = vunpack.c.l.b16 %v1306
        %v4293 = vunpack.c.h.b16 %v1306
        %v4294 = vunpack.c.l.b16 %v1307
        %v4295 = vunpack.c.h.b16 %v1307
        %v4296 = vunpack.c.l.b16 %v1308
        %v4297 = vunpack.c.h.b16 %v1308
        %v4298 = vunpack.c.l.b16 %v1309
        %v4299 = vunpack.c.h.b16 %v1309
        %v4300 = vunpack.c.l.b16 %v1310
        %v4301 = vunpack.c.h.b16 %v1310
        %v4302 = vunpack.c.l.b16 %v1311
        %v4303 = vunpack.c.h.b16 %v1311
        %v4304 = vunpack.c.l.b16 %v1312
        %v4305 = vunpack.c.h.b16 %v1312
        %v4306 = vunpack.c.l.b16 %v1313
        %v4307 = vunpack.c.h.b16 %v1313
        %v4308 = vunpack.c.l.b16 %v1314
        %v4309 = vunpack.c.h.b16 %v1314
        %v4310 = vunpack.c.l.b16 %v1315
        %v4311 = vunpack.c.h.b16 %v1315
        %v4312 = vunpack.c.l.b16 %v1316
        %v4313 = vunpack.c.h.b16 %v1316
        %v4314 = vunpack.c.l.b16 %v1317
        %v4315 = vunpack.c.h.b16 %v1317
        %v4316 = vunpack.c.l.b16 %v1318
        %v4317 = vunpack.c.h.b16 %v1318
        %v4318 = vunpack.c.l.b16 %v1319
        %v4319 = vunpack.c.h.b16 %v1319
        %v4320 = vunpack.c.l.b16 %v1320
        %v4321 = vunpack.c.h.b16 %v1320
        %v4322 = vunpack.c.l.b16 %v1321
        %v4323 = vunpack.c.h.b16 %v1321
        %v4324 = vunpack.c.l.b16 %v1322
        %v4325 = vunpack.c.h.b16 %v1322
        %v4326 = vunpack.c.l.b16 %v1323
        %v4327 = vunpack.c.h.b16 %v1323
        %v4328 = vunpack.c.l.b16 %v1324
        %v4329 = vunpack.c.h.b16 %v1324
        %v4330 = vunpack.c.l.b16 %v1325
        %v4331 = vunpack.c.h.b16 %v1325
        %v4332 = vunpack.c.l.b16 %v1326
        %v4333 = vunpack.c.h.b16 %v1326
        %v4334 = vunpack.c.l.b16 %v1327
        %v4335 = vunpack.c.h.b16 %v1327
        %v4336 = vunpack.c.l.b16 %v1328
        %v4337 = vunpack.c.h.b16 %v1328
        %v4338 = vunpack.c.l.b16 %v1329
        %v4339 = vunpack.c.h.b16 %v1329
        %v4340 = vunpack.c.l.b16 %v1330
        %v4341 = vunpack.c.h.b16 %v1330
        %v4342 = vunpack.c.l.b16 %v1331
        %v4343 = vunpack.c.h.b16 %v1331
        %v4344 = vunpack.c.l.b16 %v1332
        %v4345 = vunpack.c.h.b16 %v1332
        %v4346 = vunpack.c.l.b16 %v1333
        %v4347 = vunpack.c.h.b16 %v1333
        %v4348 = vunpack.c.l.b16 %v1334
        %v4349 = vunpack.c.h.b16 %v1334
        %v4350 = vunpack.c.l.b16 %v1335
        %v4351 = vunpack.c.h.b16 %v1335
        %v4352 = vunpack.c.l.b16 %v1336
        %v4353 = vunpack.c.h.b16 %v1336
        %v4354 = vunpack.c.l.b16 %v1337
        %v4355 = vunpack.c.h.b16 %v1337
        %v4356 = vunpack.c.l.b16 %v1338
        %v4357 = vunpack.c.h.b16 %v1338
        %v4358 = vunpack.c.l.b16 %v1339
        %v4359 = vunpack.c.h.b16 %v1339
        %v4360 = vunpack.c.l.b16 %v1340
        %v4361 = vunpack.c.h.b16 %v1340
        %v4362 = vunpack.c.l.b16 %v1341
        %v4363 = vunpack.c.h.b16 %v1341
        %v4364 = vunpack.c.l.b16 %v1342
        %v4365 = vunpack.c.h.b16 %v1342
        %v4366 = vunpack.c.l.b16 %v1343
        %v4367 = vunpack.c.h.b16 %v1343
        %v4368 = vunpack.c.l.b16 %v1344
        %v4369 = vunpack.c.h.b16 %v1344
        %v4370 = vunpack.c.l.b16 %v1345
        %v4371 = vunpack.c.h.b16 %v1345
        %v4372 = vunpack.c.l.b16 %v1346
        %v4373 = vunpack.c.h.b16 %v1346
        %v4374 = vunpack.c.l.b16 %v1347
        %v4375 = vunpack.c.h.b16 %v1347
        %v4376 = vunpack.c.l.b16 %v1348
        %v4377 = vunpack.c.h.b16 %v1348
        %v4378 = vunpack.c.l.b16 %v1349
        %v4379 = vunpack.c.h.b16 %v1349
        %v4380 = vunpack.c.l.b16 %v1350
        %v4381 = vunpack.c.h.b16 %v1350
        %v4382 = vunpack.c.l.b16 %v1351
        %v4383 = vunpack.c.h.b16 %v1351
        %v4384 = vunpack.c.l.b16 %v1352
        %v4385 = vunpack.c.h.b16 %v1352
        %v4386 = vunpack.c.l.b16 %v1353
        %v4387 = vunpack.c.h.b16 %v1353
        %v4388 = vunpack.c.l.b16 %v1354
        %v4389 = vunpack.c.h.b16 %v1354
        %v4390 = vunpack.c.l.b16 %v1355
        %v4391 = vunpack.c.h.b16 %v1355
        %v4392 = vunpack.c.l.b16 %v1356
        %v4393 = vunpack.c.h.b16 %v1356
        %v4394 = vunpack.c.l.b16 %v1357
        %v4395 = vunpack.c.h.b16 %v1357
        %v4396 = vunpack.c.l.b16 %v1358
        %v4397 = vunpack.c.h.b16 %v1358
        %v4398 = vunpack.c.l.b16 %v1359
        %v4399 = vunpack.c.h.b16 %v1359
        %v4400 = vunpack.c.l.b16 %v1360
        %v4401 = vunpack.c.h.b16 %v1360
        %v4402 = vunpack.c.l.b16 %v1361
        %v4403 = vunpack.c.h.b16 %v1361
        %v4404 = vunpack.c.l.b16 %v1362
        %v4405 = vunpack.c.h.b16 %v1362
        %v4406 = vunpack.c.l.b16 %v1363
        %v4407 = vunpack.c.h.b16 %v1363
        %v4408 = vunpack.c.l.b16 %v1364
        %v4409 = vunpack.c.h.b16 %v1364
        %v4410 = vunpack.c.l.b16 %v1365
        %v4411 = vunpack.c.h.b16 %v1365
        %v4412 = vunpack.c.l.b16 %v1366
        %v4413 = vunpack.c.h.b16 %v1366
        %v4414 = vunpack.c.l.b16 %v1367
        %v4415 = vunpack.c.h.b16 %v1367
        %v4416 = vunpack.c.l.b16 %v1368
        %v4417 = vunpack.c.h.b16 %v1368
        %v4418 = vunpack.c.l.b16 %v1369
        %v4419 = vunpack.c.h.b16 %v1369
        %v4420 = vunpack.c.l.b16 %v1370
        %v4421 = vunpack.c.h.b16 %v1370
        %v4422 = vunpack.c.l.b16 %v1371
        %v4423 = vunpack.c.h.b16 %v1371
        %v4424 = vunpack.c.l.b16 %v1372
        %v4425 = vunpack.c.h.b16 %v1372
        %v4426 = vunpack.c.l.b16 %v1373
        %v4427 = vunpack.c.h.b16 %v1373
        %v4428 = vunpack.c.l.b16 %v1374
        %v4429 = vunpack.c.h.b16 %v1374
        %v4430 = vunpack.c.l.b16 %v1375
        %v4431 = vunpack.c.h.b16 %v1375
        %v4432 = vunpack.c.l.b16 %v1376
        %v4433 = vunpack.c.h.b16 %v1376
        %v4434 = vunpack.c.l.b16 %v1377
        %v4435 = vunpack.c.h.b16 %v1377
        %v4436 = vunpack.c.l.b16 %v1378
        %v4437 = vunpack.c.h.b16 %v1378
        %v4438 = vunpack.c.l.b16 %v1379
        %v4439 = vunpack.c.h.b16 %v1379
        %v4440 = vunpack.c.l.b16 %v1380
        %v4441 = vunpack.c.h.b16 %v1380
        %v4442 = vunpack.c.l.b16 %v1381
        %v4443 = vunpack.c.h.b16 %v1381
        %v4444 = vunpack.c.l.b16 %v1382
        %v4445 = vunpack.c.h.b16 %v1382
        %v4446 = vunpack.c.l.b16 %v1383
        %v4447 = vunpack.c.h.b16 %v1383
        %v4448 = vunpack.c.l.b16 %v1384
        %v4449 = vunpack.c.h.b16 %v1384
        %v4450 = vunpack.c.l.b16 %v1385
        %v4451 = vunpack.c.h.b16 %v1385
        %v4452 = vunpack.c.l.b16 %v1386
        %v4453 = vunpack.c.h.b16 %v1386
        %v4454 = vunpack.c.l.b16 %v1387
        %v4455 = vunpack.c.h.b16 %v1387
        %v4456 = vunpack.c.l.b16 %v1388
        %v4457 = vunpack.c.h.b16 %v1388
        %v4458 = vunpack.c.l.b16 %v1389
        %v4459 = vunpack.c.h.b16 %v1389
        %v4460 = vunpack.c.l.b16 %v1390
        %v4461 = vunpack.c.h.b16 %v1390
        %v4462 = vunpack.c.l.b16 %v1391
        %v4463 = vunpack.c.h.b16 %v1391
        %v4464 = vunpack.c.l.b16 %v1392
        %v4465 = vunpack.c.h.b16 %v1392
        %v4466 = vunpack.c.l.b16 %v1393
        %v4467 = vunpack.c.h.b16 %v1393
        %v4468 = vunpack.c.l.b16 %v1394
        %v4469 = vunpack.c.h.b16 %v1394
        %v4470 = vunpack.c.l.b16 %v1395
        %v4471 = vunpack.c.h.b16 %v1395
        %v4472 = vunpack.c.l.b16 %v1396
        %v4473 = vunpack.c.h.b16 %v1396
        %v4474 = vunpack.c.l.b16 %v1397
        %v4475 = vunpack.c.h.b16 %v1397
        %v4476 = vunpack.c.l.b16 %v1398
        %v4477 = vunpack.c.h.b16 %v1398
        %v4478 = vunpack.c.l.b16 %v1399
        %v4479 = vunpack.c.h.b16 %v1399
        %v4480 = vunpack.c.l.b16 %v1400
        %v4481 = vunpack.c.h.b16 %v1400
        %v4482 = vunpack.c.l.b16 %v1401
        %v4483 = vunpack.c.h.b16 %v1401
        %v4484 = vunpack.c.l.b16 %v1402
        %v4485 = vunpack.c.h.b16 %v1402
        %v4486 = vunpack.c.l.b16 %v1403
        %v4487 = vunpack.c.h.b16 %v1403
        %v4488 = vunpack.c.l.b16 %v1404
        %v4489 = vunpack.c.h.b16 %v1404
        %v4490 = vunpack.c.l.b16 %v1405
        %v4491 = vunpack.c.h.b16 %v1405
        %v4492 = vunpack.c.l.b16 %v1406
        %v4493 = vunpack.c.h.b16 %v1406
        %v4494 = vunpack.c.l.b16 %v1407
        %v4495 = vunpack.c.h.b16 %v1407
        %v4496 = vunpack.c.l.b16 %v1408
        %v4497 = vunpack.c.h.b16 %v1408
        %v4498 = vunpack.c.l.b16 %v1409
        %v4499 = vunpack.c.h.b16 %v1409
        %v4500 = vunpack.c.l.b16 %v1410
        %v4501 = vunpack.c.h.b16 %v1410
        %v4502 = vunpack.c.l.b16 %v1411
        %v4503 = vunpack.c.h.b16 %v1411
        %v4504 = vunpack.c.l.b16 %v1412
        %v4505 = vunpack.c.h.b16 %v1412
        %v4506 = vunpack.c.l.b16 %v1413
        %v4507 = vunpack.c.h.b16 %v1413
        %v4508 = vunpack.c.l.b16 %v1414
        %v4509 = vunpack.c.h.b16 %v1414
        %v4510 = vunpack.c.l.b16 %v1415
        %v4511 = vunpack.c.h.b16 %v1415
        %v4512 = vunpack.c.l.b16 %v1416
        %v4513 = vunpack.c.h.b16 %v1416
        %v4514 = vunpack.c.l.b16 %v1417
        %v4515 = vunpack.c.h.b16 %v1417
        %v4516 = vunpack.c.l.b16 %v1418
        %v4517 = vunpack.c.h.b16 %v1418
        %v4518 = vunpack.c.l.b16 %v1419
        %v4519 = vunpack.c.h.b16 %v1419
        %v4520 = vunpack.c.l.b16 %v1420
        %v4521 = vunpack.c.h.b16 %v1420
        %v4522 = vunpack.c.l.b16 %v1421
        %v4523 = vunpack.c.h.b16 %v1421
        %v4524 = vunpack.c.l.b16 %v1422
        %v4525 = vunpack.c.h.b16 %v1422
        %v4526 = vunpack.c.l.b16 %v1423
        %v4527 = vunpack.c.h.b16 %v1423
        %v4528 = vunpack.c.l.b16 %v1424
        %v4529 = vunpack.c.h.b16 %v1424
        %v4530 = vunpack.c.l.b16 %v1425
        %v4531 = vunpack.c.h.b16 %v1425
        %v4532 = vunpack.c.l.b16 %v1426
        %v4533 = vunpack.c.h.b16 %v1426
        %v4534 = vunpack.c.l.b16 %v1427
        %v4535 = vunpack.c.h.b16 %v1427
        %v4536 = vunpack.c.l.b16 %v1428
        %v4537 = vunpack.c.h.b16 %v1428
        %v4538 = vunpack.c.l.b16 %v1429
        %v4539 = vunpack.c.h.b16 %v1429
        %v4540 = vunpack.c.l.b16 %v1430
        %v4541 = vunpack.c.h.b16 %v1430
        %v4542 = vunpack.c.l.b16 %v1431
        %v4543 = vunpack.c.h.b16 %v1431
        %v4544 = vunpack.c.l.b16 %v1432
        %v4545 = vunpack.c.h.b16 %v1432
        %v4546 = vunpack.c.l.b16 %v1433
        %v4547 = vunpack.c.h.b16 %v1433
        %v4548 = vunpack.c.l.b16 %v1434
        %v4549 = vunpack.c.h.b16 %v1434
        %v4550 = vunpack.c.l.b16 %v1435
        %v4551 = vunpack.c.h.b16 %v1435
        %v4552 = vunpack.c.l.b16 %v1436
        %v4553 = vunpack.c.h.b16 %v1436
        %v4554 = vunpack.c.l.b16 %v1437
        %v4555 = vunpack.c.h.b16 %v1437
        %v4556 = vunpack.c.l.b16 %v1438
        %v4557 = vunpack.c.h.b16 %v1438
        %v4558 = vunpack.c.l.b16 %v1439
        %v4559 = vunpack.c.h.b16 %v1439
        %v4560 = vunpack.c.l.b16 %v1440
        %v4561 = vunpack.c.h.b16 %v1440
        %v4562 = vunpack.c.l.b16 %v1441
        %v4563 = vunpack.c.h.b16 %v1441
        %v4564 = vunpack.c.l.b16 %v1442
        %v4565 = vunpack.c.h.b16 %v1442
        %v4566 = vunpack.c.l.b16 %v1443
        %v4567 = vunpack.c.h.b16 %v1443
        %v4568 = vunpack.c.l.b16 %v1444
        %v4569 = vunpack.c.h.b16 %v1444
        %v4570 = vunpack.c.l.b16 %v1445
        %v4571 = vunpack.c.h.b16 %v1445
        %v4572 = vunpack.c.l.b16 %v1446
        %v4573 = vunpack.c.h.b16 %v1446
        %v4574 = vunpack.c.l.b16 %v1447
        %v4575 = vunpack.c.h.b16 %v1447
        %v4576 = vunpack.c.l.b16 %v1448
        %v4577 = vunpack.c.h.b16 %v1448
        %v4578 = vunpack.c.l.b16 %v1449
        %v4579 = vunpack.c.h.b16 %v1449
        %v4580 = vunpack.c.l.b16 %v1450
        %v4581 = vunpack.c.h.b16 %v1450
        %v4582 = vunpack.c.l.b16 %v1451
        %v4583 = vunpack.c.h.b16 %v1451
        %v4584 = vunpack.c.l.b16 %v1452
        %v4585 = vunpack.c.h.b16 %v1452
        %v4586 = vunpack.c.l.b16 %v1453
        %v4587 = vunpack.c.h.b16 %v1453
        %v4588 = vunpack.c.l.b16 %v1454
        %v4589 = vunpack.c.h.b16 %v1454
        %v4590 = vunpack.c.l.b16 %v1455
        %v4591 = vunpack.c.h.b16 %v1455
        %v4592 = vunpack.c.l.b16 %v1456
        %v4593 = vunpack.c.h.b16 %v1456
        %v4594 = vunpack.c.l.b16 %v1457
        %v4595 = vunpack.c.h.b16 %v1457
        %v4596 = vunpack.c.l.b16 %v1458
        %v4597 = vunpack.c.h.b16 %v1458
        %v4598 = vunpack.c.l.b16 %v1459
        %v4599 = vunpack.c.h.b16 %v1459
        %v4600 = vunpack.c.l.b16 %v1460
        %v4601 = vunpack.c.h.b16 %v1460
        %v4602 = vunpack.c.l.b16 %v1461
        %v4603 = vunpack.c.h.b16 %v1461
        %v4604 = vunpack.c.l.b16 %v1462
        %v4605 = vunpack.c.h.b16 %v1462
        %v4606 = vunpack.c.l.b16 %v1463
        %v4607 = vunpack.c.h.b16 %v1463
        %v4608 = vunpack.c.l.b16 %v1464
        %v4609 = vunpack.c.h.b16 %v1464
        %v4610 = vunpack.c.l.b16 %v1465
        %v4611 = vunpack.c.h.b16 %v1465
        %v4612 = vunpack.c.l.b16 %v1466
        %v4613 = vunpack.c.h.b16 %v1466
        %v4614 = vunpack.c.l.b16 %v1467
        %v4615 = vunpack.c.h.b16 %v1467
        %v4616 = vunpack.c.l.b16 %v1468
        %v4617 = vunpack.c.h.b16 %v1468
        %v4618 = vunpack.c.l.b16 %v1469
        %v4619 = vunpack.c.h.b16 %v1469
        %v4620 = vunpack.c.l.b16 %v1470
        %v4621 = vunpack.c.h.b16 %v1470
        %v4622 = vunpack.c.l.b16 %v1471
        %v4623 = vunpack.c.h.b16 %v1471
        %v4624 = vunpack.c.l.b16 %v1472
        %v4625 = vunpack.c.h.b16 %v1472
        %v4626 = vunpack.c.l.b16 %v1473
        %v4627 = vunpack.c.h.b16 %v1473
        %v4628 = vunpack.c.l.b16 %v1474
        %v4629 = vunpack.c.h.b16 %v1474
        %v4630 = vunpack.c.l.b16 %v1475
        %v4631 = vunpack.c.h.b16 %v1475
        %v4632 = vunpack.c.l.b16 %v1476
        %v4633 = vunpack.c.h.b16 %v1476
        %v4634 = vunpack.c.l.b16 %v1477
        %v4635 = vunpack.c.h.b16 %v1477
        %v4636 = vunpack.c.l.b16 %v1478
        %v4637 = vunpack.c.h.b16 %v1478
        %v4638 = vunpack.c.l.b16 %v1479
        %v4639 = vunpack.c.h.b16 %v1479
        %v4640 = vunpack.c.l.b16 %v1480
        %v4641 = vunpack.c.h.b16 %v1480
        %v4642 = vunpack.c.l.b16 %v1481
        %v4643 = vunpack.c.h.b16 %v1481
        %v4644 = vunpack.c.l.b16 %v1482
        %v4645 = vunpack.c.h.b16 %v1482
        %v4646 = vunpack.c.l.b16 %v1483
        %v4647 = vunpack.c.h.b16 %v1483
        %v4648 = vunpack.c.l.b16 %v1484
        %v4649 = vunpack.c.h.b16 %v1484
        %v4650 = vunpack.c.l.b16 %v1485
        %v4651 = vunpack.c.h.b16 %v1485
        %v4652 = vunpack.c.l.b16 %v1486
        %v4653 = vunpack.c.h.b16 %v1486
        %v4654 = vunpack.c.l.b16 %v1487
        %v4655 = vunpack.c.h.b16 %v1487
        %v4656 = vunpack.c.l.b16 %v1488
        %v4657 = vunpack.c.h.b16 %v1488
        %v4658 = vunpack.c.l.b16 %v1489
        %v4659 = vunpack.c.h.b16 %v1489
        %v4660 = vunpack.c.l.b16 %v1490
        %v4661 = vunpack.c.h.b16 %v1490
        %v4662 = vunpack.c.l.b16 %v1491
        %v4663 = vunpack.c.h.b16 %v1491
        %v4664 = vunpack.c.l.b16 %v1492
        %v4665 = vunpack.c.h.b16 %v1492
        %v4666 = vunpack.c.l.b16 %v1493
        %v4667 = vunpack.c.h.b16 %v1493
        %v4668 = vunpack.c.l.b16 %v1494
        %v4669 = vunpack.c.h.b16 %v1494
        %v4670 = vunpack.c.l.b16 %v1495
        %v4671 = vunpack.c.h.b16 %v1495
        %v4672 = vunpack.c.l.b16 %v1496
        %v4673 = vunpack.c.h.b16 %v1496
        %v4674 = vunpack.c.l.b16 %v1497
        %v4675 = vunpack.c.h.b16 %v1497
        %v4676 = vunpack.c.l.b16 %v1498
        %v4677 = vunpack.c.h.b16 %v1498
        %v4678 = vunpack.c.l.b16 %v1499
        %v4679 = vunpack.c.h.b16 %v1499
        %v4680 = vunpack.c.l.b16 %v1500
        %v4681 = vunpack.c.h.b16 %v1500
        %v4682 = vunpack.c.l.b16 %v1501
        %v4683 = vunpack.c.h.b16 %v1501
        %v4684 = vunpack.c.l.b16 %v1502
        %v4685 = vunpack.c.h.b16 %v1502
        %v4686 = vunpack.c.l.b16 %v1503
        %v4687 = vunpack.c.h.b16 %v1503
        %v4688 = vunpack.c.l.b16 %v1504
        %v4689 = vunpack.c.h.b16 %v1504
        %v4690 = vunpack.c.l.b16 %v1505
        %v4691 = vunpack.c.h.b16 %v1505
        %v4692 = vunpack.c.l.b16 %v1506
        %v4693 = vunpack.c.h.b16 %v1506
        %v4694 = vunpack.c.l.b16 %v1507
        %v4695 = vunpack.c.h.b16 %v1507
        %v4696 = vunpack.c.l.b16 %v1508
        %v4697 = vunpack.c.h.b16 %v1508
        %v4698 = vunpack.c.l.b16 %v1509
        %v4699 = vunpack.c.h.b16 %v1509
        %v4700 = vunpack.c.l.b16 %v1510
        %v4701 = vunpack.c.h.b16 %v1510
        %v4702 = vunpack.c.l.b16 %v1511
        %v4703 = vunpack.c.h.b16 %v1511
        %v4704 = vunpack.c.l.b16 %v1512
        %v4705 = vunpack.c.h.b16 %v1512
        %v4706 = vunpack.c.l.b16 %v1513
        %v4707 = vunpack.c.h.b16 %v1513
        %v4708 = vunpack.c.l.b16 %v1514
        %v4709 = vunpack.c.h.b16 %v1514
        %v4710 = vunpack.c.l.b16 %v1515
        %v4711 = vunpack.c.h.b16 %v1515
        %v4712 = vunpack.c.l.b16 %v1516
        %v4713 = vunpack.c.h.b16 %v1516
        %v4714 = vunpack.c.l.b16 %v1517
        %v4715 = vunpack.c.h.b16 %v1517
        %v4716 = vunpack.c.l.b16 %v1518
        %v4717 = vunpack.c.h.b16 %v1518
        %v4718 = vunpack.c.l.b16 %v1519
        %v4719 = vunpack.c.h.b16 %v1519
        %v4720 = vunpack.c.l.b16 %v1520
        %v4721 = vunpack.c.h.b16 %v1520
        %v4722 = vunpack.c.l.b16 %v1521
        %v4723 = vunpack.c.h.b16 %v1521
        %v4724 = vunpack.c.l.b16 %v1522
        %v4725 = vunpack.c.h.b16 %v1522
        %v4726 = vunpack.c.l.b16 %v1523
        %v4727 = vunpack.c.h.b16 %v1523
        %v4728 = vunpack.c.l.b16 %v1524
        %v4729 = vunpack.c.h.b16 %v1524
        %v4730 = vunpack.c.l.b16 %v1525
        %v4731 = vunpack.c.h.b16 %v1525
        %v4732 = vpack.c.b16 %v2716, %v2684
        %v4733 = vpack.c.b16 %v2717, %v2685
        %v4734 = vpack.c.b16 %v2718, %v2686
        %v4735 = vpack.c.b16 %v2719, %v2687
        %v4736 = vpack.c.b16 %v2720, %v2688
        %v4737 = vpack.c.b16 %v2721, %v2689
        %v4738 = vpack.c.b16 %v2722, %v2690
        %v4739 = vpack.c.b16 %v2723, %v2691
        %v4740 = vpack.c.b16 %v2724, %v2692
        %v4741 = vpack.c.b16 %v2725, %v2693
        %v4742 = vpack.c.b16 %v2726, %v2694
        %v4743 = vpack.c.b16 %v2727, %v2695
        %v4744 = vpack.c.b16 %v2728, %v2696
        %v4745 = vpack.c.b16 %v2729, %v2697
        %v4746 = vpack.c.b16 %v2730, %v2698
        %v4747 = vpack.c.b16 %v2731, %v2699
        %v4748 = vpack.c.b16 %v2732, %v2700
        %v4749 = vpack.c.b16 %v2733, %v2701
        %v4750 = vpack.c.b16 %v2734, %v2702
        %v4751 = vpack.c.b16 %v2735, %v2703
        %v4752 = vpack.c.b16 %v2736, %v2704
        %v4753 = vpack.c.b16 %v2737, %v2705
        %v4754 = vpack.c.b16 %v2738, %v2706
        %v4755 = vpack.c.b16 %v2739, %v2707
        %v4756 = vpack.c.b16 %v2740, %v2708
        %v4757 = vpack.c.b16 %v2741, %v2709
        %v4758 = vpack.c.b16 %v2742, %v2710
        %v4759 = vpack.c.b16 %v2743, %v2711
        %v4760 = vpack.c.b16 %v2744, %v2712
        %v4761 = vpack.c.b16 %v2745, %v2713
        %v4762 = vpack.c.b16 %v2746, %v2714
        %v4763 = vpack.c.b16 %v2747, %v2715
        %v4764 = vpack.c.b16 %v2780, %v2748
        %v4765 = vpack.c.b16 %v2781, %v2749
        %v4766 = vpack.c.b16 %v2782, %v2750
        %v4767 = vpack.c.b16 %v2783, %v2751
        %v4768 = vpack.c.b16 %v2784, %v2752
        %v4769 = vpack.c.b16 %v2785, %v2753
        %v4770 = vpack.c.b16 %v2786, %v2754
        %v4771 = vpack.c.b16 %v2787, %v2755
        %v4772 = vpack.c.b16 %v2788, %v2756
        %v4773 = vpack.c.b16 %v2789, %v2757
        %v4774 = vpack.c.b16 %v2790, %v2758
        %v4775 = vpack.c.b16 %v2791, %v2759
        %v4776 = vpack.c.b16 %v2792, %v2760
        %v4777 = vpack.c.b16 %v2793, %v2761
        %v4778 = vpack.c.b16 %v2794, %v2762
        %v4779 = vpack.c.b16 %v2795, %v2763
        %v4780 = vpack.c.b16 %v2796, %v2764
        %v4781 = vpack.c.b16 %v2797, %v2765
        %v4782 = vpack.c.b16 %v2798, %v2766
        %v4783 = vpack.c.b16 %v2799, %v2767
        %v4784 = vpack.c.b16 %v2800, %v2768
        %v4785 = vpack.c.b16 %v2801, %v2769
        %v4786 = vpack.c.b16 %v2802, %v2770
        %v4787 = vpack.c.b16 %v2803, %v2771
        %v4788 = vpack.c.b16 %v2804, %v2772
        %v4789 = vpack.c.b16 %v2805, %v2773
        %v4790 = vpack.c.b16 %v2806, %v2774
        %v4791 = vpack.c.b16 %v2807, %v2775
        %v4792 = vpack.c.b16 %v2808, %v2776
        %v4793 = vpack.c.b16 %v2809, %v2777
        %v4794 = vpack.c.b16 %v2810, %v2778
        %v4795 = vpack.c.b16 %v2811, %v2779
        %v4796 = vpack.c.b16 %v2844, %v2812
        %v4797 = vpack.c.b16 %v2845, %v2813
        %v4798 = vpack.c.b16 %v2846, %v2814
        %v4799 = vpack.c.b16 %v2847, %v2815
        %v4800 = vpack.c.b16 %v2848, %v2816
        %v4801 = vpack.c.b16 %v2849, %v2817
        %v4802 = vpack.c.b16 %v2850, %v2818
        %v4803 = vpack.c.b16 %v2851, %v2819
        %v4804 = vpack.c.b16 %v2852, %v2820
        %v4805 = vpack.c.b16 %v2853, %v2821
        %v4806 = vpack.c.b16 %v2854, %v2822
        %v4807 = vpack.c.b16 %v2855, %v2823
        %v4808 = vpack.c.b16 %v2856, %v2824
        %v4809 = vpack.c.b16 %v2857, %v2825
        %v4810 = vpack.c.b16 %v2858, %v2826
        %v4811 = vpack.c.b16 %v2859, %v2827
        %v4812 = vpack.c.b16 %v2860, %v2828
        %v4813 = vpack.c.b16 %v2861, %v2829
        %v4814 = vpack.c.b16 %v2862, %v2830
        %v4815 = vpack.c.b16 %v2863, %v2831
        %v4816 = vpack.c.b16 %v2864, %v2832
        %v4817 = vpack.c.b16 %v2865, %v2833
        %v4818 = vpack.c.b16 %v2866, %v2834
        %v4819 = vpack.c.b16 %v2867, %v2835
        %v4820 = vpack.c.b16 %v2868, %v2836
        %v4821 = vpack.c.b16 %v2869, %v2837
        %v4822 = vpack.c.b16 %v2870, %v2838
        %v4823 = vpack.c.b16 %v2871, %v2839
        %v4824 = vpack.c.b16 %v2872, %v2840
        %v4825 = vpack.c.b16 %v2873, %v2841
        %v4826 = vpack.c.b16 %v2874, %v2842
        %v4827 = vpack.c.b16 %v2875, %v2843
        %v4828 = vpack.c.b16 %v2908, %v2876
        %v4829 = vpack.c.b16 %v2909, %v2877
        %v4830 = vpack.c.b16 %v2910, %v2878
        %v4831 = vpack.c.b16 %v2911, %v2879
        %v4832 = vpack.c.b16 %v2912, %v2880
        %v4833 = vpack.c.b16 %v2913, %v2881
        %v4834 = vpack.c.b16 %v2914, %v2882
        %v4835 = vpack.c.b16 %v2915, %v2883
        %v4836 = vpack.c.b16 %v2916, %v2884
        %v4837 = vpack.c.b16 %v2917, %v2885
        %v4838 = vpack.c.b16 %v2918, %v2886
        %v4839 = vpack.c.b16 %v2919, %v2887
        %v4840 = vpack.c.b16 %v2920, %v2888
        %v4841 = vpack.c.b16 %v2921, %v2889
        %v4842 = vpack.c.b16 %v2922, %v2890
        %v4843 = vpack.c.b16 %v2923, %v2891
        %v4844 = vpack.c.b16 %v2924, %v2892
        %v4845 = vpack.c.b16 %v2925, %v2893
        %v4846 = vpack.c.b16 %v2926, %v2894
        %v4847 = vpack.c.b16 %v2927, %v2895
        %v4848 = vpack.c.b16 %v2928, %v2896
        %v4849 = vpack.c.b16 %v2929, %v2897
        %v4850 = vpack.c.b16 %v2930, %v2898
        %v4851 = vpack.c.b16 %v2931, %v2899
        %v4852 = vpack.c.b16 %v2932, %v2900
        %v4853 = vpack.c.b16 %v2933, %v2901
        %v4854 = vpack.c.b16 %v2934, %v2902
        %v4855 = vpack.c.b16 %v2935, %v2903
        %v4856 = vpack.c.b16 %v2936, %v2904
        %v4857 = vpack.c.b16 %v2937, %v2905
        %v4858 = vpack.c.b16 %v2938, %v2906
        %v4859 = vpack.c.b16 %v2939, %v2907
        %v4860 = vpack.c.b16 %v2972, %v2940
        %v4861 = vpack.c.b16 %v2973, %v2941
        %v4862 = vpack.c.b16 %v2974, %v2942
        %v4863 = vpack.c.b16 %v2975, %v2943
        %v4864 = vpack.c.b16 %v2976, %v2944
        %v4865 = vpack.c.b16 %v2977, %v2945
        %v4866 = vpack.c.b16 %v2978, %v2946
        %v4867 = vpack.c.b16 %v2979, %v2947
        %v4868 = vpack.c.b16 %v2980, %v2948
        %v4869 = vpack.c.b16 %v2981, %v2949
        %v4870 = vpack.c.b16 %v2982, %v2950
        %v4871 = vpack.c.b16 %v2983, %v2951
        %v4872 = vpack.c.b16 %v2984, %v2952
        %v4873 = vpack.c.b16 %v2985, %v2953
        %v4874 = vpack.c.b16 %v2986, %v2954
        %v4875 = vpack.c.b16 %v2987, %v2955
        %v4876 = vpack.c.b16 %v2988, %v2956
        %v4877 = vpack.c.b16 %v2989, %v2957
        %v4878 = vpack.c.b16 %v2990, %v2958
        %v4879 = vpack.c.b16 %v2991, %v2959
        %v4880 = vpack.c.b16 %v2992, %v2960
        %v4881 = vpack.c.b16 %v2993, %v2961
        %v4882 = vpack.c.b16 %v2994, %v2962
        %v4883 = vpack.c.b16 %v2995, %v2963
        %v4884 = vpack.c.b16 %v2996, %v2964
        %v4885 = vpack.c.b16 %v2997, %v2965
        %v4886 = vpack.c.b16 %v2998, %v2966
        %v4887 = vpack.c.b16 %v2999, %v2967
        %v4888 = vpack.c.b16 %v3000, %v2968
        %v4889 = vpack.c.b16 %v3001, %v2969
        %v4890 = vpack.c.b16 %v3002, %v2970
        %v4891 = vpack.c.b16 %v3003, %v2971
        %v4892 = vpack.c.b16 %v3036, %v3004
        %v4893 = vpack.c.b16 %v3037, %v3005
        %v4894 = vpack.c.b16 %v3038, %v3006
        %v4895 = vpack.c.b16 %v3039, %v3007
        %v4896 = vpack.c.b16 %v3040, %v3008
        %v4897 = vpack.c.b16 %v3041, %v3009
        %v4898 = vpack.c.b16 %v3042, %v3010
        %v4899 = vpack.c.b16 %v3043, %v3011
        %v4900 = vpack.c.b16 %v3044, %v3012
        %v4901 = vpack.c.b16 %v3045, %v3013
        %v4902 = vpack.c.b16 %v3046, %v3014
        %v4903 = vpack.c.b16 %v3047, %v3015
        %v4904 = vpack.c.b16 %v3048, %v3016
        %v4905 = vpack.c.b16 %v3049, %v3017
        %v4906 = vpack.c.b16 %v3050, %v3018
        %v4907 = vpack.c.b16 %v3051, %v3019
        %v4908 = vpack.c.b16 %v3052, %v3020
        %v4909 = vpack.c.b16 %v3053, %v3021
        %v4910 = vpack.c.b16 %v3054, %v3022
        %v4911 = vpack.c.b16 %v3055, %v3023
        %v4912 = vpack.c.b16 %v3056, %v3024
        %v4913 = vpack.c.b16 %v3057, %v3025
        %v4914 = vpack.c.b16 %v3058, %v3026
        %v4915 = vpack.c.b16 %v3059, %v3027
        %v4916 = vpack.c.b16 %v3060, %v3028
        %v4917 = vpack.c.b16 %v3061, %v3029
        %v4918 = vpack.c.b16 %v3062, %v3030
        %v4919 = vpack.c.b16 %v3063, %v3031
        %v4920 = vpack.c.b16 %v3064, %v3032
        %v4921 = vpack.c.b16 %v3065, %v3033
        %v4922 = vpack.c.b16 %v3066, %v3034
        %v4923 = vpack.c.b16 %v3067, %v3035
        %v4924 = vpack.c.b16 %v3100, %v3068
        %v4925 = vpack.c.b16 %v3101, %v3069
        %v4926 = vpack.c.b16 %v3102, %v3070
        %v4927 = vpack.c.b16 %v3103, %v3071
        %v4928 = vpack.c.b16 %v3104, %v3072
        %v4929 = vpack.c.b16 %v3105, %v3073
        %v4930 = vpack.c.b16 %v3106, %v3074
        %v4931 = vpack.c.b16 %v3107, %v3075
        %v4932 = vpack.c.b16 %v3108, %v3076
        %v4933 = vpack.c.b16 %v3109, %v3077
        %v4934 = vpack.c.b16 %v3110, %v3078
        %v4935 = vpack.c.b16 %v3111, %v3079
        %v4936 = vpack.c.b16 %v3112, %v3080
        %v4937 = vpack.c.b16 %v3113, %v3081
        %v4938 = vpack.c.b16 %v3114, %v3082
        %v4939 = vpack.c.b16 %v3115, %v3083
        %v4940 = vpack.c.b16 %v3116, %v3084
        %v4941 = vpack.c.b16 %v3117, %v3085
        %v4942 = vpack.c.b16 %v3118, %v3086
        %v4943 = vpack.c.b16 %v3119, %v3087
        %v4944 = vpack.c.b16 %v3120, %v3088
        %v4945 = vpack.c.b16 %v3121, %v3089
        %v4946 = vpack.c.b16 %v3122, %v3090
        %v4947 = vpack.c.b16 %v3123, %v3091
        %v4948 = vpack.c.b16 %v3124, %v3092
        %v4949 = vpack.c.b16 %v3125, %v3093
        %v4950 = vpack.c.b16 %v3126, %v3094
        %v4951 = vpack.c.b16 %v3127, %v3095
        %v4952 = vpack.c.b16 %v3128, %v3096
        %v4953 = vpack.c.b16 %v3129, %v3097
        %v4954 = vpack.c.b16 %v3130, %v3098
        %v4955 = vpack.c.b16 %v3131, %v3099
        %v4956 = vpack.c.b16 %v3164, %v3132
        %v4957 = vpack.c.b16 %v3165, %v3133
        %v4958 = vpack.c.b16 %v3166, %v3134
        %v4959 = vpack.c.b16 %v3167, %v3135
        %v4960 = vpack.c.b16 %v3168, %v3136
        %v4961 = vpack.c.b16 %v3169, %v3137
        %v4962 = vpack.c.b16 %v3170, %v3138
        %v4963 = vpack.c.b16 %v3171, %v3139
        %v4964 = vpack.c.b16 %v3172, %v3140
        %v4965 = vpack.c.b16 %v3173, %v3141
        %v4966 = vpack.c.b16 %v3174, %v3142
        %v4967 = vpack.c.b16 %v3175, %v3143
        %v4968 = vpack.c.b16 %v3176, %v3144
        %v4969 = vpack.c.b16 %v3177, %v3145
        %v4970 = vpack.c.b16 %v3178, %v3146
        %v4971 = vpack.c.b16 %v3179, %v3147
        %v4972 = vpack.c.b16 %v3180, %v3148
        %v4973 = vpack.c.b16 %v3181, %v3149
        %v4974 = vpack.c.b16 %v3182, %v3150
        %v4975 = vpack.c.b16 %v3183, %v3151
        %v4976 = vpack.c.b16 %v3184, %v3152
        %v4977 = vpack.c.b16 %v3185, %v3153
        %v4978 = vpack.c.b16 %v3186, %v3154
        %v4979 = vpack.c.b16 %v3187, %v3155
        %v4980 = vpack.c.b16 %v3188, %v3156
        %v4981 = vpack.c.b16 %v3189, %v3157
        %v4982 = vpack.c.b16 %v3190, %v3158
        %v4983 = vpack.c.b16 %v3191, %v3159
        %v4984 = vpack.c.b16 %v3192, %v3160
        %v4985 = vpack.c.b16 %v3193, %v3161
        %v4986 = vpack.c.b16 %v3194, %v3162
        %v4987 = vpack.c.b16 %v3195, %v3163
        %v4988 = vpack.c.b16 %v3228, %v3196
        %v4989 = vpack.c.b16 %v3229, %v3197
        %v4990 = vpack.c.b16 %v3230, %v3198
        %v4991 = vpack.c.b16 %v3231, %v3199
        %v4992 = vpack.c.b16 %v3232, %v3200
        %v4993 = vpack.c.b16 %v3233, %v3201
        %v4994 = vpack.c.b16 %v3234, %v3202
        %v4995 = vpack.c.b16 %v3235, %v3203
        %v4996 = vpack.c.b16 %v3236, %v3204
        %v4997 = vpack.c.b16 %v3237, %v3205
        %v4998 = vpack.c.b16 %v3238, %v3206
        %v4999 = vpack.c.b16 %v3239, %v3207
        %v5000 = vpack.c.b16 %v3240, %v3208
        %v5001 = vpack.c.b16 %v3241, %v3209
        %v5002 = vpack.c.b16 %v3242, %v3210
        %v5003 = vpack.c.b16 %v3243, %v3211
        %v5004 = vpack.c.b16 %v3244, %v3212
        %v5005 = vpack.c.b16 %v3245, %v3213
        %v5006 = vpack.c.b16 %v3246, %v3214
        %v5007 = vpack.c.b16 %v3247, %v3215
        %v5008 = vpack.c.b16 %v3248, %v3216
        %v5009 = vpack.c.b16 %v3249, %v3217
        %v5010 = vpack.c.b16 %v3250, %v3218
        %v5011 = vpack.c.b16 %v3251, %v3219
        %v5012 = vpack.c.b16 %v3252, %v3220
        %v5013 = vpack.c.b16 %v3253, %v3221
        %v5014 = vpack.c.b16 %v3254, %v3222
        %v5015 = vpack.c.b16 %v3255, %v3223
        %v5016 = vpack.c.b16 %v3256, %v3224
        %v5017 = vpack.c.b16 %v3257, %v3225
        %v5018 = vpack.c.b16 %v3258, %v3226
        %v5019 = vpack.c.b16 %v3259, %v3227
        %v5020 = vpack.c.b16 %v3292, %v3260
        %v5021 = vpack.c.b16 %v3293, %v3261
        %v5022 = vpack.c.b16 %v3294, %v3262
        %v5023 = vpack.c.b16 %v3295, %v3263
        %v5024 = vpack.c.b16 %v3296, %v3264
        %v5025 = vpack.c.b16 %v3297, %v3265
        %v5026 = vpack.c.b16 %v3298, %v3266
        %v5027 = vpack.c.b16 %v3299, %v3267
        %v5028 = vpack.c.b16 %v3300, %v3268
        %v5029 = vpack.c.b16 %v3301, %v3269
        %v5030 = vpack.c.b16 %v3302, %v3270
        %v5031 = vpack.c.b16 %v3303, %v3271
        %v5032 = vpack.c.b16 %v3304, %v3272
        %v5033 = vpack.c.b16 %v3305, %v3273
        %v5034 = vpack.c.b16 %v3306, %v3274
        %v5035 = vpack.c.b16 %v3307, %v3275
        %v5036 = vpack.c.b16 %v3308, %v3276
        %v5037 = vpack.c.b16 %v3309, %v3277
        %v5038 = vpack.c.b16 %v3310, %v3278
        %v5039 = vpack.c.b16 %v3311, %v3279
        %v5040 = vpack.c.b16 %v3312, %v3280
        %v5041 = vpack.c.b16 %v3313, %v3281
        %v5042 = vpack.c.b16 %v3314, %v3282
        %v5043 = vpack.c.b16 %v3315, %v3283
        %v5044 = vpack.c.b16 %v3316, %v3284
        %v5045 = vpack.c.b16 %v3317, %v3285
        %v5046 = vpack.c.b16 %v3318, %v3286
        %v5047 = vpack.c.b16 %v3319, %v3287
        %v5048 = vpack.c.b16 %v3320, %v3288
        %v5049 = vpack.c.b16 %v3321, %v3289
        %v5050 = vpack.c.b16 %v3322, %v3290
        %v5051 = vpack.c.b16 %v3323, %v3291
        %v5052 = vpack.c.b16 %v3356, %v3324
        %v5053 = vpack.c.b16 %v3357, %v3325
        %v5054 = vpack.c.b16 %v3358, %v3326
        %v5055 = vpack.c.b16 %v3359, %v3327
        %v5056 = vpack.c.b16 %v3360, %v3328
        %v5057 = vpack.c.b16 %v3361, %v3329
        %v5058 = vpack.c.b16 %v3362, %v3330
        %v5059 = vpack.c.b16 %v3363, %v3331
        %v5060 = vpack.c.b16 %v3364, %v3332
        %v5061 = vpack.c.b16 %v3365, %v3333
        %v5062 = vpack.c.b16 %v3366, %v3334
        %v5063 = vpack.c.b16 %v3367, %v3335
        %v5064 = vpack.c.b16 %v3368, %v3336
        %v5065 = vpack.c.b16 %v3369, %v3337
        %v5066 = vpack.c.b16 %v3370, %v3338
        %v5067 = vpack.c.b16 %v3371, %v3339
        %v5068 = vpack.c.b16 %v3372, %v3340
        %v5069 = vpack.c.b16 %v3373, %v3341
        %v5070 = vpack.c.b16 %v3374, %v3342
        %v5071 = vpack.c.b16 %v3375, %v3343
        %v5072 = vpack.c.b16 %v3376, %v3344
        %v5073 = vpack.c.b16 %v3377, %v3345
        %v5074 = vpack.c.b16 %v3378, %v3346
        %v5075 = vpack.c.b16 %v3379, %v3347
        %v5076 = vpack.c.b16 %v3380, %v3348
        %v5077 = vpack.c.b16 %v3381, %v3349
        %v5078 = vpack.c.b16 %v3382, %v3350
        %v5079 = vpack.c.b16 %v3383, %v3351
        %v5080 = vpack.c.b16 %v3384, %v3352
        %v5081 = vpack.c.b16 %v3385, %v3353
        %v5082 = vpack.c.b16 %v3386, %v3354
        %v5083 = vpack.c.b16 %v3387, %v3355
        %v5084 = vpack.c.b16 %v3420, %v3388
        %v5085 = vpack.c.b16 %v3421, %v3389
        %v5086 = vpack.c.b16 %v3422, %v3390
        %v5087 = vpack.c.b16 %v3423, %v3391
        %v5088 = vpack.c.b16 %v3424, %v3392
        %v5089 = vpack.c.b16 %v3425, %v3393
        %v5090 = vpack.c.b16 %v3426, %v3394
        %v5091 = vpack.c.b16 %v3427, %v3395
        %v5092 = vpack.c.b16 %v3428, %v3396
        %v5093 = vpack.c.b16 %v3429, %v3397
        %v5094 = vpack.c.b16 %v3430, %v3398
        %v5095 = vpack.c.b16 %v3431, %v3399
        %v5096 = vpack.c.b16 %v3432, %v3400
        %v5097 = vpack.c.b16 %v3433, %v3401
        %v5098 = vpack.c.b16 %v3434, %v3402
        %v5099 = vpack.c.b16 %v3435, %v3403
        %v5100 = vpack.c.b16 %v3436, %v3404
        %v5101 = vpack.c.b16 %v3437, %v3405
        %v5102 = vpack.c.b16 %v3438, %v3406
        %v5103 = vpack.c.b16 %v3439, %v3407
        %v5104 = vpack.c.b16 %v3440, %v3408
        %v5105 = vpack.c.b16 %v3441, %v3409
        %v5106 = vpack.c.b16 %v3442, %v3410
        %v5107 = vpack.c.b16 %v3443, %v3411
        %v5108 = vpack.c.b16 %v3444, %v3412
        %v5109 = vpack.c.b16 %v3445, %v3413
        %v5110 = vpack.c.b16 %v3446, %v3414
        %v5111 = vpack.c.b16 %v3447, %v3415
        %v5112 = vpack.c.b16 %v3448, %v3416
        %v5113 = vpack.c.b16 %v3449, %v3417
        %v5114 = vpack.c.b16 %v3450, %v3418
        %v5115 = vpack.c.b16 %v3451, %v3419
        %v5116 = vpack.c.b16 %v3484, %v3452
        %v5117 = vpack.c.b16 %v3485, %v3453
        %v5118 = vpack.c.b16 %v3486, %v3454
        %v5119 = vpack.c.b16 %v3487, %v3455
        %v5120 = vpack.c.b16 %v3488, %v3456
        %v5121 = vpack.c.b16 %v3489, %v3457
        %v5122 = vpack.c.b16 %v3490, %v3458
        %v5123 = vpack.c.b16 %v3491, %v3459
        %v5124 = vpack.c.b16 %v3492, %v3460
        %v5125 = vpack.c.b16 %v3493, %v3461
        %v5126 = vpack.c.b16 %v3494, %v3462
        %v5127 = vpack.c.b16 %v3495, %v3463
        %v5128 = vpack.c.b16 %v3496, %v3464
        %v5129 = vpack.c.b16 %v3497, %v3465
        %v5130 = vpack.c.b16 %v3498, %v3466
        %v5131 = vpack.c.b16 %v3499, %v3467
        %v5132 = vpack.c.b16 %v3500, %v3468
        %v5133 = vpack.c.b16 %v3501, %v3469
        %v5134 = vpack.c.b16 %v3502, %v3470
        %v5135 = vpack.c.b16 %v3503, %v3471
        %v5136 = vpack.c.b16 %v3504, %v3472
        %v5137 = vpack.c.b16 %v3505, %v3473
        %v5138 = vpack.c.b16 %v3506, %v3474
        %v5139 = vpack.c.b16 %v3507, %v3475
        %v5140 = vpack.c.b16 %v3508, %v3476
        %v5141 = vpack.c.b16 %v3509, %v3477
        %v5142 = vpack.c.b16 %v3510, %v3478
        %v5143 = vpack.c.b16 %v3511, %v3479
        %v5144 = vpack.c.b16 %v3512, %v3480
        %v5145 = vpack.c.b16 %v3513, %v3481
        %v5146 = vpack.c.b16 %v3514, %v3482
        %v5147 = vpack.c.b16 %v3515, %v3483
        %v5148 = vpack.c.b16 %v3548, %v3516
        %v5149 = vpack.c.b16 %v3549, %v3517
        %v5150 = vpack.c.b16 %v3550, %v3518
        %v5151 = vpack.c.b16 %v3551, %v3519
        %v5152 = vpack.c.b16 %v3552, %v3520
        %v5153 = vpack.c.b16 %v3553, %v3521
        %v5154 = vpack.c.b16 %v3554, %v3522
        %v5155 = vpack.c.b16 %v3555, %v3523
        %v5156 = vpack.c.b16 %v3556, %v3524
        %v5157 = vpack.c.b16 %v3557, %v3525
        %v5158 = vpack.c.b16 %v3558, %v3526
        %v5159 = vpack.c.b16 %v3559, %v3527
        %v5160 = vpack.c.b16 %v3560, %v3528
        %v5161 = vpack.c.b16 %v3561, %v3529
        %v5162 = vpack.c.b16 %v3562, %v3530
        %v5163 = vpack.c.b16 %v3563, %v3531
        %v5164 = vpack.c.b16 %v3564, %v3532
        %v5165 = vpack.c.b16 %v3565, %v3533
        %v5166 = vpack.c.b16 %v3566, %v3534
        %v5167 = vpack.c.b16 %v3567, %v3535
        %v5168 = vpack.c.b16 %v3568, %v3536
        %v5169 = vpack.c.b16 %v3569, %v3537
        %v5170 = vpack.c.b16 %v3570, %v3538
        %v5171 = vpack.c.b16 %v3571, %v3539
        %v5172 = vpack.c.b16 %v3572, %v3540
        %v5173 = vpack.c.b16 %v3573, %v3541
        %v5174 = vpack.c.b16 %v3574, %v3542
        %v5175 = vpack.c.b16 %v3575, %v3543
        %v5176 = vpack.c.b16 %v3576, %v3544
        %v5177 = vpack.c.b16 %v3577, %v3545
        %v5178 = vpack.c.b16 %v3578, %v3546
        %v5179 = vpack.c.b16 %v3579, %v3547
        %v5180 = vpack.c.b16 %v3612, %v3580
        %v5181 = vpack.c.b16 %v3613, %v3581
        %v5182 = vpack.c.b16 %v3614, %v3582
        %v5183 = vpack.c.b16 %v3615, %v3583
        %v5184 = vpack.c.b16 %v3616, %v3584
        %v5185 = vpack.c.b16 %v3617, %v3585
        %v5186 = vpack.c.b16 %v3618, %v3586
        %v5187 = vpack.c.b16 %v3619, %v3587
        %v5188 = vpack.c.b16 %v3620, %v3588
        %v5189 = vpack.c.b16 %v3621, %v3589
        %v5190 = vpack.c.b16 %v3622, %v3590
        %v5191 = vpack.c.b16 %v3623, %v3591
        %v5192 = vpack.c.b16 %v3624, %v3592
        %v5193 = vpack.c.b16 %v3625, %v3593
        %v5194 = vpack.c.b16 %v3626, %v3594
        %v5195 = vpack.c.b16 %v3627, %v3595
        %v5196 = vpack.c.b16 %v3628, %v3596
        %v5197 = vpack.c.b16 %v3629, %v3597
        %v5198 = vpack.c.b16 %v3630, %v3598
        %v5199 = vpack.c.b16 %v3631, %v3599
        %v5200 = vpack.c.b16 %v3632, %v3600
        %v5201 = vpack.c.b16 %v3633, %v3601
        %v5202 = vpack.c.b16 %v3634, %v3602
        %v5203 = vpack.c.b16 %v3635, %v3603
        %v5204 = vpack.c.b16 %v3636, %v3604
        %v5205 = vpack.c.b16 %v3637, %v3605
        %v5206 = vpack.c.b16 %v3638, %v3606
        %v5207 = vpack.c.b16 %v3639, %v3607
        %v5208 = vpack.c.b16 %v3640, %v3608
        %v5209 = vpack.c.b16 %v3641, %v3609
        %v5210 = vpack.c.b16 %v3642, %v3610
        %v5211 = vpack.c.b16 %v3643, %v3611
        %v5212 = vpack.c.b16 %v3676, %v3644
        %v5213 = vpack.c.b16 %v3677, %v3645
        %v5214 = vpack.c.b16 %v3678, %v3646
        %v5215 = vpack.c.b16 %v3679, %v3647
        %v5216 = vpack.c.b16 %v3680, %v3648
        %v5217 = vpack.c.b16 %v3681, %v3649
        %v5218 = vpack.c.b16 %v3682, %v3650
        %v5219 = vpack.c.b16 %v3683, %v3651
        %v5220 = vpack.c.b16 %v3684, %v3652
        %v5221 = vpack.c.b16 %v3685, %v3653
        %v5222 = vpack.c.b16 %v3686, %v3654
        %v5223 = vpack.c.b16 %v3687, %v3655
        %v5224 = vpack.c.b16 %v3688, %v3656
        %v5225 = vpack.c.b16 %v3689, %v3657
        %v5226 = vpack.c.b16 %v3690, %v3658
        %v5227 = vpack.c.b16 %v3691, %v3659
        %v5228 = vpack.c.b16 %v3692, %v3660
        %v5229 = vpack.c.b16 %v3693, %v3661
        %v5230 = vpack.c.b16 %v3694, %v3662
        %v5231 = vpack.c.b16 %v3695, %v3663
        %v5232 = vpack.c.b16 %v3696, %v3664
        %v5233 = vpack.c.b16 %v3697, %v3665
        %v5234 = vpack.c.b16 %v3698, %v3666
        %v5235 = vpack.c.b16 %v3699, %v3667
        %v5236 = vpack.c.b16 %v3700, %v3668
        %v5237 = vpack.c.b16 %v3701, %v3669
        %v5238 = vpack.c.b16 %v3702, %v3670
        %v5239 = vpack.c.b16 %v3703, %v3671
        %v5240 = vpack.c.b16 %v3704, %v3672
        %v5241 = vpack.c.b16 %v3705, %v3673
        %v5242 = vpack.c.b16 %v3706, %v3674
        %v5243 = vpack.c.b16 %v3707, %v3675
        %v5244 = vpack.c.b16 %v3740, %v3708
        %v5245 = vpack.c.b16 %v3741, %v3709
        %v5246 = vpack.c.b16 %v3742, %v3710
        %v5247 = vpack.c.b16 %v3743, %v3711
        %v5248 = vpack.c.b16 %v3744, %v3712
        %v5249 = vpack.c.b16 %v3745, %v3713
        %v5250 = vpack.c.b16 %v3746, %v3714
        %v5251 = vpack.c.b16 %v3747, %v3715
        %v5252 = vpack.c.b16 %v3748, %v3716
        %v5253 = vpack.c.b16 %v3749, %v3717
        %v5254 = vpack.c.b16 %v3750, %v3718
        %v5255 = vpack.c.b16 %v3751, %v3719
        %v5256 = vpack.c.b16 %v3752, %v3720
        %v5257 = vpack.c.b16 %v3753, %v3721
        %v5258 = vpack.c.b16 %v3754, %v3722
        %v5259 = vpack.c.b16 %v3755, %v3723
        %v5260 = vpack.c.b16 %v3756, %v3724
        %v5261 = vpack.c.b16 %v3757, %v3725
        %v5262 = vpack.c.b16 %v3758, %v3726
        %v5263 = vpack.c.b16 %v3759, %v3727
        %v5264 = vpack.c.b16 %v3760, %v3728
        %v5265 = vpack.c.b16 %v3761, %v3729
        %v5266 = vpack.c.b16 %v3762, %v3730
        %v5267 = vpack.c.b16 %v3763, %v3731
        %v5268 = vpack.c.b16 %v3764, %v3732
        %v5269 = vpack.c.b16 %v3765, %v3733
        %v5270 = vpack.c.b16 %v3766, %v3734
        %v5271 = vpack.c.b16 %v3767, %v3735
        %v5272 = vpack.c.b16 %v3768, %v3736
        %v5273 = vpack.c.b16 %v3769, %v3737
        %v5274 = vpack.c.b16 %v3770, %v3738
        %v5275 = vpack.c.b16 %v3771, %v3739
        %v5276 = vpack.c.b16 %v3804, %v3772
        %v5277 = vpack.c.b16 %v3805, %v3773
        %v5278 = vpack.c.b16 %v3806, %v3774
        %v5279 = vpack.c.b16 %v3807, %v3775
        %v5280 = vpack.c.b16 %v3808, %v3776
        %v5281 = vpack.c.b16 %v3809, %v3777
        %v5282 = vpack.c.b16 %v3810, %v3778
        %v5283 = vpack.c.b16 %v3811, %v3779
        %v5284 = vpack.c.b16 %v3812, %v3780
        %v5285 = vpack.c.b16 %v3813, %v3781
        %v5286 = vpack.c.b16 %v3814, %v3782
        %v5287 = vpack.c.b16 %v3815, %v3783
        %v5288 = vpack.c.b16 %v3816, %v3784
        %v5289 = vpack.c.b16 %v3817, %v3785
        %v5290 = vpack.c.b16 %v3818, %v3786
        %v5291 = vpack.c.b16 %v3819, %v3787
        %v5292 = vpack.c.b16 %v3820, %v3788
        %v5293 = vpack.c.b16 %v3821, %v3789
        %v5294 = vpack.c.b16 %v3822, %v3790
        %v5295 = vpack.c.b16 %v3823, %v3791
        %v5296 = vpack.c.b16 %v3824, %v3792
        %v5297 = vpack.c.b16 %v3825, %v3793
        %v5298 = vpack.c.b16 %v3826, %v3794
        %v5299 = vpack.c.b16 %v3827, %v3795
        %v5300 = vpack.c.b16 %v3828, %v3796
        %v5301 = vpack.c.b16 %v3829, %v3797
        %v5302 = vpack.c.b16 %v3830, %v3798
        %v5303 = vpack.c.b16 %v3831, %v3799
        %v5304 = vpack.c.b16 %v3832, %v3800
        %v5305 = vpack.c.b16 %v3833, %v3801
        %v5306 = vpack.c.b16 %v3834, %v3802
        %v5307 = vpack.c.b16 %v3835, %v3803
        %v5308 = vpack.c.b16 %v3868, %v3836
        %v5309 = vpack.c.b16 %v3869, %v3837
        %v5310 = vpack.c.b16 %v3870, %v3838
        %v5311 = vpack.c.b16 %v3871, %v3839
        %v5312 = vpack.c.b16 %v3872, %v3840
        %v5313 = vpack.c.b16 %v3873, %v3841
        %v5314 = vpack.c.b16 %v3874, %v3842
        %v5315 = vpack.c.b16 %v3875, %v3843
        %v5316 = vpack.c.b16 %v3876, %v3844
        %v5317 = vpack.c.b16 %v3877, %v3845
        %v5318 = vpack.c.b16 %v3878, %v3846
        %v5319 = vpack.c.b16 %v3879, %v3847
        %v5320 = vpack.c.b16 %v3880, %v3848
        %v5321 = vpack.c.b16 %v3881, %v3849
        %v5322 = vpack.c.b16 %v3882, %v3850
        %v5323 = vpack.c.b16 %v3883, %v3851
        %v5324 = vpack.c.b16 %v3884, %v3852
        %v5325 = vpack.c.b16 %v3885, %v3853
        %v5326 = vpack.c.b16 %v3886, %v3854
        %v5327 = vpack.c.b16 %v3887, %v3855
        %v5328 = vpack.c.b16 %v3888, %v3856
        %v5329 = vpack.c.b16 %v3889, %v3857
        %v5330 = vpack.c.b16 %v3890, %v3858
        %v5331 = vpack.c.b16 %v3891, %v3859
        %v5332 = vpack.c.b16 %v3892, %v3860
        %v5333 = vpack.c.b16 %v3893, %v3861
        %v5334 = vpack.c.b16 %v3894, %v3862
        %v5335 = vpack.c.b16 %v3895, %v3863
        %v5336 = vpack.c.b16 %v3896, %v3864
        %v5337 = vpack.c.b16 %v3897, %v3865
        %v5338 = vpack.c.b16 %v3898, %v3866
        %v5339 = vpack.c.b16 %v3899, %v3867
        %v5340 = vpack.c.b16 %v3932, %v3900
        %v5341 = vpack.c.b16 %v3933, %v3901
        %v5342 = vpack.c.b16 %v3934, %v3902
        %v5343 = vpack.c.b16 %v3935, %v3903
        %v5344 = vpack.c.b16 %v3936, %v3904
        %v5345 = vpack.c.b16 %v3937, %v3905
        %v5346 = vpack.c.b16 %v3938, %v3906
        %v5347 = vpack.c.b16 %v3939, %v3907
        %v5348 = vpack.c.b16 %v3940, %v3908
        %v5349 = vpack.c.b16 %v3941, %v3909
        %v5350 = vpack.c.b16 %v3942, %v3910
        %v5351 = vpack.c.b16 %v3943, %v3911
        %v5352 = vpack.c.b16 %v3944, %v3912
        %v5353 = vpack.c.b16 %v3945, %v3913
        %v5354 = vpack.c.b16 %v3946, %v3914
        %v5355 = vpack.c.b16 %v3947, %v3915
        %v5356 = vpack.c.b16 %v3948, %v3916
        %v5357 = vpack.c.b16 %v3949, %v3917
        %v5358 = vpack.c.b16 %v3950, %v3918
        %v5359 = vpack.c.b16 %v3951, %v3919
        %v5360 = vpack.c.b16 %v3952, %v3920
        %v5361 = vpack.c.b16 %v3953, %v3921
        %v5362 = vpack.c.b16 %v3954, %v3922
        %v5363 = vpack.c.b16 %v3955, %v3923
        %v5364 = vpack.c.b16 %v3956, %v3924
        %v5365 = vpack.c.b16 %v3957, %v3925
        %v5366 = vpack.c.b16 %v3958, %v3926
        %v5367 = vpack.c.b16 %v3959, %v3927
        %v5368 = vpack.c.b16 %v3960, %v3928
        %v5369 = vpack.c.b16 %v3961, %v3929
        %v5370 = vpack.c.b16 %v3962, %v3930
        %v5371 = vpack.c.b16 %v3963, %v3931
        %v5372 = vpack.c.b16 %v3996, %v3964
        %v5373 = vpack.c.b16 %v3997, %v3965
        %v5374 = vpack.c.b16 %v3998, %v3966
        %v5375 = vpack.c.b16 %v3999, %v3967
        %v5376 = vpack.c.b16 %v4000, %v3968
        %v5377 = vpack.c.b16 %v4001, %v3969
        %v5378 = vpack.c.b16 %v4002, %v3970
        %v5379 = vpack.c.b16 %v4003, %v3971
        %v5380 = vpack.c.b16 %v4004, %v3972
        %v5381 = vpack.c.b16 %v4005, %v3973
        %v5382 = vpack.c.b16 %v4006, %v3974
        %v5383 = vpack.c.b16 %v4007, %v3975
        %v5384 = vpack.c.b16 %v4008, %v3976
        %v5385 = vpack.c.b16 %v4009, %v3977
        %v5386 = vpack.c.b16 %v4010, %v3978
        %v5387 = vpack.c.b16 %v4011, %v3979
        %v5388 = vpack.c.b16 %v4012, %v3980
        %v5389 = vpack.c.b16 %v4013, %v3981
        %v5390 = vpack.c.b16 %v4014, %v3982
        %v5391 = vpack.c.b16 %v4015, %v3983
        %v5392 = vpack.c.b16 %v4016, %v3984
        %v5393 = vpack.c.b16 %v4017, %v3985
        %v5394 = vpack.c.b16 %v4018, %v3986
        %v5395 = vpack.c.b16 %v4019, %v3987
        %v5396 = vpack.c.b16 %v4020, %v3988
        %v5397 = vpack.c.b16 %v4021, %v3989
        %v5398 = vpack.c.b16 %v4022, %v3990
        %v5399 = vpack.c.b16 %v4023, %v3991
        %v5400 = vpack.c.b16 %v4024, %v3992
        %v5401 = vpack.c.b16 %v4025, %v3993
        %v5402 = vpack.c.b16 %v4026, %v3994
        %v5403 = vpack.c.b16 %v4027, %v3995
        %v5404 = vpack.c.b16 %v4060, %v4028
        %v5405 = vpack.c.b16 %v4061, %v4029
        %v5406 = vpack.c.b16 %v4062, %v4030
        %v5407 = vpack.c.b16 %v4063, %v4031
        %v5408 = vpack.c.b16 %v4064, %v4032
        %v5409 = vpack.c.b16 %v4065, %v4033
        %v5410 = vpack.c.b16 %v4066, %v4034
        %v5411 = vpack.c.b16 %v4067, %v4035
        %v5412 = vpack.c.b16 %v4068, %v4036
        %v5413 = vpack.c.b16 %v4069, %v4037
        %v5414 = vpack.c.b16 %v4070, %v4038
        %v5415 = vpack.c.b16 %v4071, %v4039
        %v5416 = vpack.c.b16 %v4072, %v4040
        %v5417 = vpack.c.b16 %v4073, %v4041
        %v5418 = vpack.c.b16 %v4074, %v4042
        %v5419 = vpack.c.b16 %v4075, %v4043
        %v5420 = vpack.c.b16 %v4076, %v4044
        %v5421 = vpack.c.b16 %v4077, %v4045
        %v5422 = vpack.c.b16 %v4078, %v4046
        %v5423 = vpack.c.b16 %v4079, %v4047
        %v5424 = vpack.c.b16 %v4080, %v4048
        %v5425 = vpack.c.b16 %v4081, %v4049
        %v5426 = vpack.c.b16 %v4082, %v4050
        %v5427 = vpack.c.b16 %v4083, %v4051
        %v5428 = vpack.c.b16 %v4084, %v4052
        %v5429 = vpack.c.b16 %v4085, %v4053
        %v5430 = vpack.c.b16 %v4086, %v4054
        %v5431 = vpack.c.b16 %v4087, %v4055
        %v5432 = vpack.c.b16 %v4088, %v4056
        %v5433 = vpack.c.b16 %v4089, %v4057
        %v5434 = vpack.c.b16 %v4090, %v4058
        %v5435 = vpack.c.b16 %v4091, %v4059
        %v5436 = vpack.c.b16 %v4124, %v4092
        %v5437 = vpack.c.b16 %v4125, %v4093
        %v5438 = vpack.c.b16 %v4126, %v4094
        %v5439 = vpack.c.b16 %v4127, %v4095
        %v5440 = vpack.c.b16 %v4128, %v4096
        %v5441 = vpack.c.b16 %v4129, %v4097
        %v5442 = vpack.c.b16 %v4130, %v4098
        %v5443 = vpack.c.b16 %v4131, %v4099
        %v5444 = vpack.c.b16 %v4132, %v4100
        %v5445 = vpack.c.b16 %v4133, %v4101
        %v5446 = vpack.c.b16 %v4134, %v4102
        %v5447 = vpack.c.b16 %v4135, %v4103
        %v5448 = vpack.c.b16 %v4136, %v4104
        %v5449 = vpack.c.b16 %v4137, %v4105
        %v5450 = vpack.c.b16 %v4138, %v4106
        %v5451 = vpack.c.b16 %v4139, %v4107
        %v5452 = vpack.c.b16 %v4140, %v4108
        %v5453 = vpack.c.b16 %v4141, %v4109
        %v5454 = vpack.c.b16 %v4142, %v4110
        %v5455 = vpack.c.b16 %v4143, %v4111
        %v5456 = vpack.c.b16 %v4144, %v4112
        %v5457 = vpack.c.b16 %v4145, %v4113
        %v5458 = vpack.c.b16 %v4146, %v4114
        %v5459 = vpack.c.b16 %v4147, %v4115
        %v5460 = vpack.c.b16 %v4148, %v4116
        %v5461 = vpack.c.b16 %v4149, %v4117
        %v5462 = vpack.c.b16 %v4150, %v4118
        %v5463 = vpack.c.b16 %v4151, %v4119
        %v5464 = vpack.c.b16 %v4152, %v4120
        %v5465 = vpack.c.b16 %v4153, %v4121
        %v5466 = vpack.c.b16 %v4154, %v4122
        %v5467 = vpack.c.b16 %v4155, %v4123
        %v5468 = vpack.c.b16 %v4188, %v4156
        %v5469 = vpack.c.b16 %v4189, %v4157
        %v5470 = vpack.c.b16 %v4190, %v4158
        %v5471 = vpack.c.b16 %v4191, %v4159
        %v5472 = vpack.c.b16 %v4192, %v4160
        %v5473 = vpack.c.b16 %v4193, %v4161
        %v5474 = vpack.c.b16 %v4194, %v4162
        %v5475 = vpack.c.b16 %v4195, %v4163
        %v5476 = vpack.c.b16 %v4196, %v4164
        %v5477 = vpack.c.b16 %v4197, %v4165
        %v5478 = vpack.c.b16 %v4198, %v4166
        %v5479 = vpack.c.b16 %v4199, %v4167
        %v5480 = vpack.c.b16 %v4200, %v4168
        %v5481 = vpack.c.b16 %v4201, %v4169
        %v5482 = vpack.c.b16 %v4202, %v4170
        %v5483 = vpack.c.b16 %v4203, %v4171
        %v5484 = vpack.c.b16 %v4204, %v4172
        %v5485 = vpack.c.b16 %v4205, %v4173
        %v5486 = vpack.c.b16 %v4206, %v4174
        %v5487 = vpack.c.b16 %v4207, %v4175
        %v5488 = vpack.c.b16 %v4208, %v4176
        %v5489 = vpack.c.b16 %v4209, %v4177
        %v5490 = vpack.c.b16 %v4210, %v4178
        %v5491 = vpack.c.b16 %v4211, %v4179
        %v5492 = vpack.c.b16 %v4212, %v4180
        %v5493 = vpack.c.b16 %v4213, %v4181
        %v5494 = vpack.c.b16 %v4214, %v4182
        %v5495 = vpack.c.b16 %v4215, %v4183
        %v5496 = vpack.c.b16 %v4216, %v4184
        %v5497 = vpack.c.b16 %v4217, %v4185
        %v5498 = vpack.c.b16 %v4218, %v4186
        %v5499 = vpack.c.b16 %v4219, %v4187
        %v5500 = vpack.c.b16 %v4252, %v4220
        %v5501 = vpack.c.b16 %v4253, %v4221
        %v5502 = vpack.c.b16 %v4254, %v4222
        %v5503 = vpack.c.b16 %v4255, %v4223
        %v5504 = vpack.c.b16 %v4256, %v4224
        %v5505 = vpack.c.b16 %v4257, %v4225
        %v5506 = vpack.c.b16 %v4258, %v4226
        %v5507 = vpack.c.b16 %v4259, %v4227
        %v5508 = vpack.c.b16 %v4260, %v4228
        %v5509 = vpack.c.b16 %v4261, %v4229
        %v5510 = vpack.c.b16 %v4262, %v4230
        %v5511 = vpack.c.b16 %v4263, %v4231
        %v5512 = vpack.c.b16 %v4264, %v4232
        %v5513 = vpack.c.b16 %v4265, %v4233
        %v5514 = vpack.c.b16 %v4266, %v4234
        %v5515 = vpack.c.b16 %v4267, %v4235
        %v5516 = vpack.c.b16 %v4268, %v4236
        %v5517 = vpack.c.b16 %v4269, %v4237
        %v5518 = vpack.c.b16 %v4270, %v4238
        %v5519 = vpack.c.b16 %v4271, %v4239
        %v5520 = vpack.c.b16 %v4272, %v4240
        %v5521 = vpack.c.b16 %v4273, %v4241
        %v5522 = vpack.c.b16 %v4274, %v4242
        %v5523 = vpack.c.b16 %v4275, %v4243
        %v5524 = vpack.c.b16 %v4276, %v4244
        %v5525 = vpack.c.b16 %v4277, %v4245
        %v5526 = vpack.c.b16 %v4278, %v4246
        %v5527 = vpack.c.b16 %v4279, %v4247
        %v5528 = vpack.c.b16 %v4280, %v4248
        %v5529 = vpack.c.b16 %v4281, %v4249
        %v5530 = vpack.c.b16 %v4282, %v4250
        %v5531 = vpack.c.b16 %v4283, %v4251
        %v5532 = vpack.c.b16 %v4316, %v4284
        %v5533 = vpack.c.b16 %v4317, %v4285
        %v5534 = vpack.c.b16 %v4318, %v4286
        %v5535 = vpack.c.b16 %v4319, %v4287
        %v5536 = vpack.c.b16 %v4320, %v4288
        %v5537 = vpack.c.b16 %v4321, %v4289
        %v5538 = vpack.c.b16 %v4322, %v4290
        %v5539 = vpack.c.b16 %v4323, %v4291
        %v5540 = vpack.c.b16 %v4324, %v4292
        %v5541 = vpack.c.b16 %v4325, %v4293
        %v5542 = vpack.c.b16 %v4326, %v4294
        %v5543 = vpack.c.b16 %v4327, %v4295
        %v5544 = vpack.c.b16 %v4328, %v4296
        %v5545 = vpack.c.b16 %v4329, %v4297
        %v5546 = vpack.c.b16 %v4330, %v4298
        %v5547 = vpack.c.b16 %v4331, %v4299
        %v5548 = vpack.c.b16 %v4332, %v4300
        %v5549 = vpack.c.b16 %v4333, %v4301
        %v5550 = vpack.c.b16 %v4334, %v4302
        %v5551 = vpack.c.b16 %v4335, %v4303
        %v5552 = vpack.c.b16 %v4336, %v4304
        %v5553 = vpack.c.b16 %v4337, %v4305
        %v5554 = vpack.c.b16 %v4338, %v4306
        %v5555 = vpack.c.b16 %v4339, %v4307
        %v5556 = vpack.c.b16 %v4340, %v4308
        %v5557 = vpack.c.b16 %v4341, %v4309
        %v5558 = vpack.c.b16 %v4342, %v4310
        %v5559 = vpack.c.b16 %v4343, %v4311
        %v5560 = vpack.c.b16 %v4344, %v4312
        %v5561 = vpack.c.b16 %v4345, %v4313
        %v5562 = vpack.c.b16 %v4346, %v4314
        %v5563 = vpack.c.b16 %v4347, %v4315
        %v5564 = vpack.c.b16 %v4380, %v4348
        %v5565 = vpack.c.b16 %v4381, %v4349
        %v5566 = vpack.c.b16 %v4382, %v4350
        %v5567 = vpack.c.b16 %v4383, %v4351
        %v5568 = vpack.c.b16 %v4384, %v4352
        %v5569 = vpack.c.b16 %v4385, %v4353
        %v5570 = vpack.c.b16 %v4386, %v4354
        %v5571 = vpack.c.b16 %v4387, %v4355
        %v5572 = vpack.c.b16 %v4388, %v4356
        %v5573 = vpack.c.b16 %v4389, %v4357
        %v5574 = vpack.c.b16 %v4390, %v4358
        %v5575 = vpack.c.b16 %v4391, %v4359
        %v5576 = vpack.c.b16 %v4392, %v4360
        %v5577 = vpack.c.b16 %v4393, %v4361
        %v5578 = vpack.c.b16 %v4394, %v4362
        %v5579 = vpack.c.b16 %v4395, %v4363
        %v5580 = vpack.c.b16 %v4396, %v4364
        %v5581 = vpack.c.b16 %v4397, %v4365
        %v5582 = vpack.c.b16 %v4398, %v4366
        %v5583 = vpack.c.b16 %v4399, %v4367
        %v5584 = vpack.c.b16 %v4400, %v4368
        %v5585 = vpack.c.b16 %v4401, %v4369
        %v5586 = vpack.c.b16 %v4402, %v4370
        %v5587 = vpack.c.b16 %v4403, %v4371
        %v5588 = vpack.c.b16 %v4404, %v4372
        %v5589 = vpack.c.b16 %v4405, %v4373
        %v5590 = vpack.c.b16 %v4406, %v4374
        %v5591 = vpack.c.b16 %v4407, %v4375
        %v5592 = vpack.c.b16 %v4408, %v4376
        %v5593 = vpack.c.b16 %v4409, %v4377
        %v5594 = vpack.c.b16 %v4410, %v4378
        %v5595 = vpack.c.b16 %v4411, %v4379
        %v5596 = vpack.c.b16 %v4444, %v4412
        %v5597 = vpack.c.b16 %v4445, %v4413
        %v5598 = vpack.c.b16 %v4446, %v4414
        %v5599 = vpack.c.b16 %v4447, %v4415
        %v5600 = vpack.c.b16 %v4448, %v4416
        %v5601 = vpack.c.b16 %v4449, %v4417
        %v5602 = vpack.c.b16 %v4450, %v4418
        %v5603 = vpack.c.b16 %v4451, %v4419
        %v5604 = vpack.c.b16 %v4452, %v4420
        %v5605 = vpack.c.b16 %v4453, %v4421
        %v5606 = vpack.c.b16 %v4454, %v4422
        %v5607 = vpack.c.b16 %v4455, %v4423
        %v5608 = vpack.c.b16 %v4456, %v4424
        %v5609 = vpack.c.b16 %v4457, %v4425
        %v5610 = vpack.c.b16 %v4458, %v4426
        %v5611 = vpack.c.b16 %v4459, %v4427
        %v5612 = vpack.c.b16 %v4460, %v4428
        %v5613 = vpack.c.b16 %v4461, %v4429
        %v5614 = vpack.c.b16 %v4462, %v4430
        %v5615 = vpack.c.b16 %v4463, %v4431
        %v5616 = vpack.c.b16 %v4464, %v4432
        %v5617 = vpack.c.b16 %v4465, %v4433
        %v5618 = vpack.c.b16 %v4466, %v4434
        %v5619 = vpack.c.b16 %v4467, %v4435
        %v5620 = vpack.c.b16 %v4468, %v4436
        %v5621 = vpack.c.b16 %v4469, %v4437
        %v5622 = vpack.c.b16 %v4470, %v4438
        %v5623 = vpack.c.b16 %v4471, %v4439
        %v5624 = vpack.c.b16 %v4472, %v4440
        %v5625 = vpack.c.b16 %v4473, %v4441
        %v5626 = vpack.c.b16 %v4474, %v4442
        %v5627 = vpack.c.b16 %v4475, %v4443
        %v5628 = vpack.c.b16 %v4508, %v4476
        %v5629 = vpack.c.b16 %v4509, %v4477
        %v5630 = vpack.c.b16 %v4510, %v4478
        %v5631 = vpack.c.b16 %v4511, %v4479
        %v5632 = vpack.c.b16 %v4512, %v4480
        %v5633 = vpack.c.b16 %v4513, %v4481
        %v5634 = vpack.c.b16 %v4514, %v4482
        %v5635 = vpack.c.b16 %v4515, %v4483
        %v5636 = vpack.c.b16 %v4516, %v4484
        %v5637 = vpack.c.b16 %v4517, %v4485
        %v5638 = vpack.c.b16 %v4518, %v4486
        %v5639 = vpack.c.b16 %v4519, %v4487
        %v5640 = vpack.c.b16 %v4520, %v4488
        %v5641 = vpack.c.b16 %v4521, %v4489
        %v5642 = vpack.c.b16 %v4522, %v4490
        %v5643 = vpack.c.b16 %v4523, %v4491
        %v5644 = vpack.c.b16 %v4524, %v4492
        %v5645 = vpack.c.b16 %v4525, %v4493
        %v5646 = vpack.c.b16 %v4526, %v4494
        %v5647 = vpack.c.b16 %v4527, %v4495
        %v5648 = vpack.c.b16 %v4528, %v4496
        %v5649 = vpack.c.b16 %v4529, %v4497
        %v5650 = vpack.c.b16 %v4530, %v4498
        %v5651 = vpack.c.b16 %v4531, %v4499
        %v5652 = vpack.c.b16 %v4532, %v4500
        %v5653 = vpack.c.b16 %v4533, %v4501
        %v5654 = vpack.c.b16 %v4534, %v4502
        %v5655 = vpack.c.b16 %v4535, %v4503
        %v5656 = vpack.c.b16 %v4536, %v4504
        %v5657 = vpack.c.b16 %v4537, %v4505
        %v5658 = vpack.c.b16 %v4538, %v4506
        %v5659 = vpack.c.b16 %v4539, %v4507
        %v5660 = vpack.c.b16 %v4572, %v4540
        %v5661 = vpack.c.b16 %v4573, %v4541
        %v5662 = vpack.c.b16 %v4574, %v4542
        %v5663 = vpack.c.b16 %v4575, %v4543
        %v5664 = vpack.c.b16 %v4576, %v4544
        %v5665 = vpack.c.b16 %v4577, %v4545
        %v5666 = vpack.c.b16 %v4578, %v4546
        %v5667 = vpack.c.b16 %v4579, %v4547
        %v5668 = vpack.c.b16 %v4580, %v4548
        %v5669 = vpack.c.b16 %v4581, %v4549
        %v5670 = vpack.c.b16 %v4582, %v4550
        %v5671 = vpack.c.b16 %v4583, %v4551
        %v5672 = vpack.c.b16 %v4584, %v4552
        %v5673 = vpack.c.b16 %v4585, %v4553
        %v5674 = vpack.c.b16 %v4586, %v4554
        %v5675 = vpack.c.b16 %v4587, %v4555
        %v5676 = vpack.c.b16 %v4588, %v4556
        %v5677 = vpack.c.b16 %v4589, %v4557
        %v5678 = vpack.c.b16 %v4590, %v4558
        %v5679 = vpack.c.b16 %v4591, %v4559
        %v5680 = vpack.c.b16 %v4592, %v4560
        %v5681 = vpack.c.b16 %v4593, %v4561
        %v5682 = vpack.c.b16 %v4594, %v4562
        %v5683 = vpack.c.b16 %v4595, %v4563
        %v5684 = vpack.c.b16 %v4596, %v4564
        %v5685 = vpack.c.b16 %v4597, %v4565
        %v5686 = vpack.c.b16 %v4598, %v4566
        %v5687 = vpack.c.b16 %v4599, %v4567
        %v5688 = vpack.c.b16 %v4600, %v4568
        %v5689 = vpack.c.b16 %v4601, %v4569
        %v5690 = vpack.c.b16 %v4602, %v4570
        %v5691 = vpack.c.b16 %v4603, %v4571
        %v5692 = vpack.c.b16 %v4636, %v4604
        %v5693 = vpack.c.b16 %v4637, %v4605
        %v5694 = vpack.c.b16 %v4638, %v4606
        %v5695 = vpack.c.b16 %v4639, %v4607
        %v5696 = vpack.c.b16 %v4640, %v4608
        %v5697 = vpack.c.b16 %v4641, %v4609
        %v5698 = vpack.c.b16 %v4642, %v4610
        %v5699 = vpack.c.b16 %v4643, %v4611
        %v5700 = vpack.c.b16 %v4644, %v4612
        %v5701 = vpack.c.b16 %v4645, %v4613
        %v5702 = vpack.c.b16 %v4646, %v4614
        %v5703 = vpack.c.b16 %v4647, %v4615
        %v5704 = vpack.c.b16 %v4648, %v4616
        %v5705 = vpack.c.b16 %v4649, %v4617
        %v5706 = vpack.c.b16 %v4650, %v4618
        %v5707 = vpack.c.b16 %v4651, %v4619
        %v5708 = vpack.c.b16 %v4652, %v4620
        %v5709 = vpack.c.b16 %v4653, %v4621
        %v5710 = vpack.c.b16 %v4654, %v4622
        %v5711 = vpack.c.b16 %v4655, %v4623
        %v5712 = vpack.c.b16 %v4656, %v4624
        %v5713 = vpack.c.b16 %v4657, %v4625
        %v5714 = vpack.c.b16 %v4658, %v4626
        %v5715 = vpack.c.b16 %v4659, %v4627
        %v5716 = vpack.c.b16 %v4660, %v4628
        %v5717 = vpack.c.b16 %v4661, %v4629
        %v5718 = vpack.c.b16 %v4662, %v4630
        %v5719 = vpack.c.b16 %v4663, %v4631
        %v5720 = vpack.c.b16 %v4664, %v4632
        %v5721 = vpack.c.b16 %v4665, %v4633
        %v5722 = vpack.c.b16 %v4666, %v4634
        %v5723 = vpack.c.b16 %v4667, %v4635
        %v5724 = vpack.c.b16 %v4700, %v4668
        %v5725 = vpack.c.b16 %v4701, %v4669
        %v5726 = vpack.c.b16 %v4702, %v4670
        %v5727 = vpack.c.b16 %v4703, %v4671
        %v5728 = vpack.c.b16 %v4704, %v4672
        %v5729 = vpack.c.b16 %v4705, %v4673
        %v5730 = vpack.c.b16 %v4706, %v4674
        %v5731 = vpack.c.b16 %v4707, %v4675
        %v5732 = vpack.c.b16 %v4708, %v4676
        %v5733 = vpack.c.b16 %v4709, %v4677
        %v5734 = vpack.c.b16 %v4710, %v4678
        %v5735 = vpack.c.b16 %v4711, %v4679
        %v5736 = vpack.c.b16 %v4712, %v4680
        %v5737 = vpack.c.b16 %v4713, %v4681
        %v5738 = vpack.c.b16 %v4714, %v4682
        %v5739 = vpack.c.b16 %v4715, %v4683
        %v5740 = vpack.c.b16 %v4716, %v4684
        %v5741 = vpack.c.b16 %v4717, %v4685
        %v5742 = vpack.c.b16 %v4718, %v4686
        %v5743 = vpack.c.b16 %v4719, %v4687
        %v5744 = vpack.c.b16 %v4720, %v4688
        %v5745 = vpack.c.b16 %v4721, %v4689
        %v5746 = vpack.c.b16 %v4722, %v4690
        %v5747 = vpack.c.b16 %v4723, %v4691
        %v5748 = vpack.c.b16 %v4724, %v4692
        %v5749 = vpack.c.b16 %v4725, %v4693
        %v5750 = vpack.c.b16 %v4726, %v4694
        %v5751 = vpack.c.b16 %v4727, %v4695
        %v5752 = vpack.c.b16 %v4728, %v4696
        %v5753 = vpack.c.b16 %v4729, %v4697
        %v5754 = vpack.c.b16 %v4730, %v4698
        %v5755 = vpack.c.b16 %v4731, %v4699
        %6780 = vmatprep.subr.bf16.mxu0 %v4733
        %6781 = vmatpush1.bf16.xpose.msra.mxu0 %v4732
        %6782 = vmatprep.subr.bf16.mxu0 %v4765
        %6783 = vmatpush1.bf16.xpose.msra.mxu0 %v4764
        %6784 = vmatprep.subr.bf16.mxu0 %v4797
        %6785 = vmatpush1.bf16.xpose.msra.mxu0 %v4796
        %6786 = vmatprep.subr.bf16.mxu0 %v4829
        %6787 = vmatpush1.bf16.xpose.msra.mxu0 %v4828
        %6788 = vmatprep.subr.bf16.mxu0 %v4861
        %6789 = vmatpush1.bf16.xpose.msra.mxu0 %v4860
        %6790 = vmatprep.subr.bf16.mxu0 %v4893
        %6791 = vmatpush1.bf16.xpose.msra.mxu0 %v4892
        %6792 = vmatprep.subr.bf16.mxu0 %v4925
        %6793 = vmatpush1.bf16.xpose.msra.mxu0 %v4924
        %6794 = vmatprep.subr.bf16.mxu0 %v4957
        %6795 = vmatpush1.bf16.xpose.msra.mxu0 %v4956
        %6796 = vmatprep.subr.bf16.mxu0 %v4989
        %6797 = vmatpush1.bf16.xpose.msra.mxu0 %v4988
        %6798 = vmatprep.subr.bf16.mxu0 %v5021
        %6799 = vmatpush1.bf16.xpose.msra.mxu0 %v5020
        %6800 = vmatprep.subr.bf16.mxu0 %v5053
        %6801 = vmatpush1.bf16.xpose.msra.mxu0 %v5052
        %6802 = vmatprep.subr.bf16.mxu0 %v5085
        %6803 = vmatpush1.bf16.xpose.msra.mxu0 %v5084
        %6804 = vmatprep.subr.bf16.mxu0 %v5117
        %6805 = vmatpush1.bf16.xpose.msra.mxu0 %v5116
        %6806 = vmatprep.subr.bf16.mxu0 %v5149
        %6807 = vmatpush1.bf16.xpose.msra.mxu0 %v5148
        %6808 = vmatprep.subr.bf16.mxu0 %v5181
        %6809 = vmatpush1.bf16.xpose.msra.mxu0 %v5180
        %6810 = vmatprep.subr.bf16.mxu0 %v5213
        %6811 = vmatpush1.bf16.xpose.msra.mxu0 %v5212
        %6812 = vmatprep.mubr.bf16.mxu0 %v1597
        %6813 = vmatmul.mubr.bf16.gmra.mrb[0].mxu0 %v1596
        %v6814 = vpop.f32.mrb[0].mxu0
        %v6815 = vadd.f32 %v1531, %v6814
        %v6816 = vpop.f32.mrb[0].mxu0
        %v6817 = vadd.f32 %v1535, %v6816
        %v6818 = vpop.f32.mrb[0].mxu0
        %v6819 = vpop.f32.mrb[0].mxu0
        %6820 = vdwg.mxu0
        %6821 = vmatprep.subr.bf16.mxu0 %v4735
        %6822 = vmatpush1.bf16.xpose.msra.mxu0 %v4734
        %6823 = vmatprep.subr.bf16.mxu0 %v4767
        %6824 = vmatpush1.bf16.xpose.msra.mxu0 %v4766
        %6825 = vmatprep.subr.bf16.mxu0 %v4799
        %6826 = vmatpush1.bf16.xpose.msra.mxu0 %v4798
        %6827 = vmatprep.subr.bf16.mxu0 %v4831
        %6828 = vmatpush1.bf16.xpose.msra.mxu0 %v4830
        %6829 = vmatprep.subr.bf16.mxu0 %v4863
        %6830 = vmatpush1.bf16.xpose.msra.mxu0 %v4862
        %6831 = vmatprep.subr.bf16.mxu0 %v4895
        %6832 = vmatpush1.bf16.xpose.msra.mxu0 %v4894
        %6833 = vmatprep.subr.bf16.mxu0 %v4927
        %6834 = vmatpush1.bf16.xpose.msra.mxu0 %v4926
        %6835 = vmatprep.subr.bf16.mxu0 %v4959
        %6836 = vmatpush1.bf16.xpose.msra.mxu0 %v4958
        %6837 = vmatprep.subr.bf16.mxu0 %v4991
        %6838 = vmatpush1.bf16.xpose.msra.mxu0 %v4990
        %6839 = vmatprep.subr.bf16.mxu0 %v5023
        %6840 = vmatpush1.bf16.xpose.msra.mxu0 %v5022
        %6841 = vmatprep.subr.bf16.mxu0 %v5055
        %6842 = vmatpush1.bf16.xpose.msra.mxu0 %v5054
        %6843 = vmatprep.subr.bf16.mxu0 %v5087
        %6844 = vmatpush1.bf16.xpose.msra.mxu0 %v5086
        %6845 = vmatprep.subr.bf16.mxu0 %v5119
        %6846 = vmatpush1.bf16.xpose.msra.mxu0 %v5118
        %6847 = vmatprep.subr.bf16.mxu0 %v5151
        %6848 = vmatpush1.bf16.xpose.msra.mxu0 %v5150
        %6849 = vmatprep.subr.bf16.mxu0 %v5183
        %6850 = vmatpush1.bf16.xpose.msra.mxu0 %v5182
        %6851 = vmatprep.subr.bf16.mxu0 %v5215
        %6852 = vmatpush1.bf16.xpose.msra.mxu0 %v5214
        %6853 = vmatprep.mubr.bf16.mxu0 %v1599
        %6854 = vmatmul.mubr.bf16.gmra.mrb[0].mxu0 %v1598
        %v6855 = vpop.f32.mrb[0].mxu0
        %v6856 = vadd.f32 %v6815, %v6855
        %v6857 = vpop.f32.mrb[0].mxu0
        %v6858 = vadd.f32 %v6817, %v6857
        %v6859 = vpop.f32.mrb[0].mxu0
        %v6860 = vpop.f32.mrb[0].mxu0
        %6861 = vdwg.mxu0
        %6862 = vmatprep.subr.bf16.mxu0 %v4737
        %6863 = vmatpush1.bf16.xpose.msra.mxu0 %v4736
        %6864 = vmatprep.subr.bf16.mxu0 %v4769
        %6865 = vmatpush1.bf16.xpose.msra.mxu0 %v4768
        %6866 = vmatprep.subr.bf16.mxu0 %v4801
        %6867 = vmatpush1.bf16.xpose.msra.mxu0 %v4800
        %6868 = vmatprep.subr.bf16.mxu0 %v4833
        %6869 = vmatpush1.bf16.xpose.msra.mxu0 %v4832
        %6870 = vmatprep.subr.bf16.mxu0 %v4865
        %6871 = vmatpush1.bf16.xpose.msra.mxu0 %v4864
        %6872 = vmatprep.subr.bf16.mxu0 %v4897
        %6873 = vmatpush1.bf16.xpose.msra.mxu0 %v4896
        %6874 = vmatprep.subr.bf16.mxu0 %v4929
        %6875 = vmatpush1.bf16.xpose.msra.mxu0 %v4928
        %6876 = vmatprep.subr.bf16.mxu0 %v4961
        %6877 = vmatpush1.bf16.xpose.msra.mxu0 %v4960
        %6878 = vmatprep.subr.bf16.mxu0 %v4993
        %6879 = vmatpush1.bf16.xpose.msra.mxu0 %v4992
        %6880 = vmatprep.subr.bf16.mxu0 %v5025
        %6881 = vmatpush1.bf16.xpose.msra.mxu0 %v5024
        %6882 = vmatprep.subr.bf16.mxu0 %v5057
        %6883 = vmatpush1.bf16.xpose.msra.mxu0 %v5056
        %6884 = vmatprep.subr.bf16.mxu0 %v5089
        %6885 = vmatpush1.bf16.xpose.msra.mxu0 %v5088
        %6886 = vmatprep.subr.bf16.mxu0 %v5121
        %6887 = vmatpush1.bf16.xpose.msra.mxu0 %v5120
        %6888 = vmatprep.subr.bf16.mxu0 %v5153
        %6889 = vmatpush1.bf16.xpose.msra.mxu0 %v5152
        %6890 = vmatprep.subr.bf16.mxu0 %v5185
        %6891 = vmatpush1.bf16.xpose.msra.mxu0 %v5184
        %6892 = vmatprep.subr.bf16.mxu0 %v5217
        %6893 = vmatpush1.bf16.xpose.msra.mxu0 %v5216
        %6894 = vmatprep.mubr.bf16.mxu0 %v1601
        %6895 = vmatmul.mubr.bf16.gmra.mrb[0].mxu0 %v1600
        %v6896 = vpop.f32.mrb[0].mxu0
        %v6897 = vadd.f32 %v6856, %v6896
        %v6898 = vpop.f32.mrb[0].mxu0
        %v6899 = vadd.f32 %v6858, %v6898
        %v6900 = vpop.f32.mrb[0].mxu0
        %v6901 = vpop.f32.mrb[0].mxu0
        %6902 = vdwg.mxu0
        %6903 = vmatprep.subr.bf16.mxu0 %v4739
        %6904 = vmatpush1.bf16.xpose.msra.mxu0 %v4738
        %6905 = vmatprep.subr.bf16.mxu0 %v4771
        %6906 = vmatpush1.bf16.xpose.msra.mxu0 %v4770
        %6907 = vmatprep.subr.bf16.mxu0 %v4803
        %6908 = vmatpush1.bf16.xpose.msra.mxu0 %v4802
        %6909 = vmatprep.subr.bf16.mxu0 %v4835
        %6910 = vmatpush1.bf16.xpose.msra.mxu0 %v4834
        %6911 = vmatprep.subr.bf16.mxu0 %v4867
        %6912 = vmatpush1.bf16.xpose.msra.mxu0 %v4866
        %6913 = vmatprep.subr.bf16.mxu0 %v4899
        %6914 = vmatpush1.bf16.xpose.msra.mxu0 %v4898
        %6915 = vmatprep.subr.bf16.mxu0 %v4931
        %6916 = vmatpush1.bf16.xpose.msra.mxu0 %v4930
        %6917 = vmatprep.subr.bf16.mxu0 %v4963
        %6918 = vmatpush1.bf16.xpose.msra.mxu0 %v4962
        %6919 = vmatprep.subr.bf16.mxu0 %v4995
        %6920 = vmatpush1.bf16.xpose.msra.mxu0 %v4994
        %6921 = vmatprep.subr.bf16.mxu0 %v5027
        %6922 = vmatpush1.bf16.xpose.msra.mxu0 %v5026
        %6923 = vmatprep.subr.bf16.mxu0 %v5059
        %6924 = vmatpush1.bf16.xpose.msra.mxu0 %v5058
        %6925 = vmatprep.subr.bf16.mxu0 %v5091
        %6926 = vmatpush1.bf16.xpose.msra.mxu0 %v5090
        %6927 = vmatprep.subr.bf16.mxu0 %v5123
        %6928 = vmatpush1.bf16.xpose.msra.mxu0 %v5122
        %6929 = vmatprep.subr.bf16.mxu0 %v5155
        %6930 = vmatpush1.bf16.xpose.msra.mxu0 %v5154
        %6931 = vmatprep.subr.bf16.mxu0 %v5187
        %6932 = vmatpush1.bf16.xpose.msra.mxu0 %v5186
        %6933 = vmatprep.subr.bf16.mxu0 %v5219
        %6934 = vmatpush1.bf16.xpose.msra.mxu0 %v5218
        %6935 = vmatprep.mubr.bf16.mxu0 %v1603
        %6936 = vmatmul.mubr.bf16.gmra.mrb[0].mxu0 %v1602
        %v6937 = vpop.f32.mrb[0].mxu0
        %v6938 = vadd.f32 %v6897, %v6937
        %v6939 = vpop.f32.mrb[0].mxu0
        %v6940 = vadd.f32 %v6899, %v6939
        %v6941 = vpop.f32.mrb[0].mxu0
        %v6942 = vpop.f32.mrb[0].mxu0
        %6943 = vdwg.mxu0
        %6944 = vmatprep.subr.bf16.mxu0 %v4741
        %6945 = vmatpush1.bf16.xpose.msra.mxu0 %v4740
        %6946 = vmatprep.subr.bf16.mxu0 %v4773
        %6947 = vmatpush1.bf16.xpose.msra.mxu0 %v4772
        %6948 = vmatprep.subr.bf16.mxu0 %v4805
        %6949 = vmatpush1.bf16.xpose.msra.mxu0 %v4804
        %6950 = vmatprep.subr.bf16.mxu0 %v4837
        %6951 = vmatpush1.bf16.xpose.msra.mxu0 %v4836
        %6952 = vmatprep.subr.bf16.mxu0 %v4869
        %6953 = vmatpush1.bf16.xpose.msra.mxu0 %v4868
        %6954 = vmatprep.subr.bf16.mxu0 %v4901
        %6955 = vmatpush1.bf16.xpose.msra.mxu0 %v4900
        %6956 = vmatprep.subr.bf16.mxu0 %v4933
        %6957 = vmatpush1.bf16.xpose.msra.mxu0 %v4932
        %6958 = vmatprep.subr.bf16.mxu0 %v4965
        %6959 = vmatpush1.bf16.xpose.msra.mxu0 %v4964
        %6960 = vmatprep.subr.bf16.mxu0 %v4997
        %6961 = vmatpush1.bf16.xpose.msra.mxu0 %v4996
        %6962 = vmatprep.subr.bf16.mxu0 %v5029
        %6963 = vmatpush1.bf16.xpose.msra.mxu0 %v5028
        %6964 = vmatprep.subr.bf16.mxu0 %v5061
        %6965 = vmatpush1.bf16.xpose.msra.mxu0 %v5060
        %6966 = vmatprep.subr.bf16.mxu0 %v5093
        %6967 = vmatpush1.bf16.xpose.msra.mxu0 %v5092
        %6968 = vmatprep.subr.bf16.mxu0 %v5125
        %6969 = vmatpush1.bf16.xpose.msra.mxu0 %v5124
        %6970 = vmatprep.subr.bf16.mxu0 %v5157
        %6971 = vmatpush1.bf16.xpose.msra.mxu0 %v5156
        %6972 = vmatprep.subr.bf16.mxu0 %v5189
        %6973 = vmatpush1.bf16.xpose.msra.mxu0 %v5188
        %6974 = vmatprep.subr.bf16.mxu0 %v5221
        %6975 = vmatpush1.bf16.xpose.msra.mxu0 %v5220
        %6976 = vmatprep.mubr.bf16.mxu0 %v1605
        %6977 = vmatmul.mubr.bf16.gmra.mrb[0].mxu0 %v1604
        %v6978 = vpop.f32.mrb[0].mxu0
        %v6979 = vadd.f32 %v6938, %v6978
        %v6980 = vpop.f32.mrb[0].mxu0
        %v6981 = vadd.f32 %v6940, %v6980
        %v6982 = vpop.f32.mrb[0].mxu0
        %v6983 = vpop.f32.mrb[0].mxu0
        %6984 = vdwg.mxu0
        %6985 = vmatprep.subr.bf16.mxu0 %v4743
        %6986 = vmatpush1.bf16.xpose.msra.mxu0 %v4742
        %6987 = vmatprep.subr.bf16.mxu0 %v4775
        %6988 = vmatpush1.bf16.xpose.msra.mxu0 %v4774
        %6989 = vmatprep.subr.bf16.mxu0 %v4807
        %6990 = vmatpush1.bf16.xpose.msra.mxu0 %v4806
        %6991 = vmatprep.subr.bf16.mxu0 %v4839
        %6992 = vmatpush1.bf16.xpose.msra.mxu0 %v4838
        %6993 = vmatprep.subr.bf16.mxu0 %v4871
        %6994 = vmatpush1.bf16.xpose.msra.mxu0 %v4870
        %6995 = vmatprep.subr.bf16.mxu0 %v4903
        %6996 = vmatpush1.bf16.xpose.msra.mxu0 %v4902
        %6997 = vmatprep.subr.bf16.mxu0 %v4935
        %6998 = vmatpush1.bf16.xpose.msra.mxu0 %v4934
        %6999 = vmatprep.subr.bf16.mxu0 %v4967
        %7000 = vmatpush1.bf16.xpose.msra.mxu0 %v4966
        %7001 = vmatprep.subr.bf16.mxu0 %v4999
        %7002 = vmatpush1.bf16.xpose.msra.mxu0 %v4998
        %7003 = vmatprep.subr.bf16.mxu0 %v5031
        %7004 = vmatpush1.bf16.xpose.msra.mxu0 %v5030
        %7005 = vmatprep.subr.bf16.mxu0 %v5063
        %7006 = vmatpush1.bf16.xpose.msra.mxu0 %v5062
        %7007 = vmatprep.subr.bf16.mxu0 %v5095
        %7008 = vmatpush1.bf16.xpose.msra.mxu0 %v5094
        %7009 = vmatprep.subr.bf16.mxu0 %v5127
        %7010 = vmatpush1.bf16.xpose.msra.mxu0 %v5126
        %7011 = vmatprep.subr.bf16.mxu0 %v5159
        %7012 = vmatpush1.bf16.xpose.msra.mxu0 %v5158
        %7013 = vmatprep.subr.bf16.mxu0 %v5191
        %7014 = vmatpush1.bf16.xpose.msra.mxu0 %v5190
        %7015 = vmatprep.subr.bf16.mxu0 %v5223
        %7016 = vmatpush1.bf16.xpose.msra.mxu0 %v5222
        %7017 = vmatprep.mubr.bf16.mxu0 %v1607
        %7018 = vmatmul.mubr.bf16.gmra.mrb[0].mxu0 %v1606
        %v7019 = vpop.f32.mrb[0].mxu0
        %v7020 = vadd.f32 %v6979, %v7019
        %v7021 = vpop.f32.mrb[0].mxu0
        %v7022 = vadd.f32 %v6981, %v7021
        %v7023 = vpop.f32.mrb[0].mxu0
        %v7024 = vpop.f32.mrb[0].mxu0
        %7025 = vdwg.mxu0
        %7026 = vmatprep.subr.bf16.mxu0 %v4745
        %7027 = vmatpush1.bf16.xpose.msra.mxu0 %v4744
        %7028 = vmatprep.subr.bf16.mxu0 %v4777
        %7029 = vmatpush1.bf16.xpose.msra.mxu0 %v4776
        %7030 = vmatprep.subr.bf16.mxu0 %v4809
        %7031 = vmatpush1.bf16.xpose.msra.mxu0 %v4808
        %7032 = vmatprep.subr.bf16.mxu0 %v4841
        %7033 = vmatpush1.bf16.xpose.msra.mxu0 %v4840
        %7034 = vmatprep.subr.bf16.mxu0 %v4873
        %7035 = vmatpush1.bf16.xpose.msra.mxu0 %v4872
        %7036 = vmatprep.subr.bf16.mxu0 %v4905
        %7037 = vmatpush1.bf16.xpose.msra.mxu0 %v4904
        %7038 = vmatprep.subr.bf16.mxu0 %v4937
        %7039 = vmatpush1.bf16.xpose.msra.mxu0 %v4936
        %7040 = vmatprep.subr.bf16.mxu0 %v4969
        %7041 = vmatpush1.bf16.xpose.msra.mxu0 %v4968
        %7042 = vmatprep.subr.bf16.mxu0 %v5001
        %7043 = vmatpush1.bf16.xpose.msra.mxu0 %v5000
        %7044 = vmatprep.subr.bf16.mxu0 %v5033
        %7045 = vmatpush1.bf16.xpose.msra.mxu0 %v5032
        %7046 = vmatprep.subr.bf16.mxu0 %v5065
        %7047 = vmatpush1.bf16.xpose.msra.mxu0 %v5064
        %7048 = vmatprep.subr.bf16.mxu0 %v5097
        %7049 = vmatpush1.bf16.xpose.msra.mxu0 %v5096
        %7050 = vmatprep.subr.bf16.mxu0 %v5129
        %7051 = vmatpush1.bf16.xpose.msra.mxu0 %v5128
        %7052 = vmatprep.subr.bf16.mxu0 %v5161
        %7053 = vmatpush1.bf16.xpose.msra.mxu0 %v5160
        %7054 = vmatprep.subr.bf16.mxu0 %v5193
        %7055 = vmatpush1.bf16.xpose.msra.mxu0 %v5192
        %7056 = vmatprep.subr.bf16.mxu0 %v5225
        %7057 = vmatpush1.bf16.xpose.msra.mxu0 %v5224
        %7058 = vmatprep.mubr.bf16.mxu0 %v1609
        %7059 = vmatmul.mubr.bf16.gmra.mrb[0].mxu0 %v1608
        %v7060 = vpop.f32.mrb[0].mxu0
        %v7061 = vadd.f32 %v7020, %v7060
        %v7062 = vpop.f32.mrb[0].mxu0
        %v7063 = vadd.f32 %v7022, %v7062
        %v7064 = vpop.f32.mrb[0].mxu0
        %v7065 = vpop.f32.mrb[0].mxu0
        %7066 = vdwg.mxu0
        %7067 = vmatprep.subr.bf16.mxu0 %v4747
        %7068 = vmatpush1.bf16.xpose.msra.mxu0 %v4746
        %7069 = vmatprep.subr.bf16.mxu0 %v4779
        %7070 = vmatpush1.bf16.xpose.msra.mxu0 %v4778
        %7071 = vmatprep.subr.bf16.mxu0 %v4811
        %7072 = vmatpush1.bf16.xpose.msra.mxu0 %v4810
        %7073 = vmatprep.subr.bf16.mxu0 %v4843
        %7074 = vmatpush1.bf16.xpose.msra.mxu0 %v4842
        %7075 = vmatprep.subr.bf16.mxu0 %v4875
        %7076 = vmatpush1.bf16.xpose.msra.mxu0 %v4874
        %7077 = vmatprep.subr.bf16.mxu0 %v4907
        %7078 = vmatpush1.bf16.xpose.msra.mxu0 %v4906
        %7079 = vmatprep.subr.bf16.mxu0 %v4939
        %7080 = vmatpush1.bf16.xpose.msra.mxu0 %v4938
        %7081 = vmatprep.subr.bf16.mxu0 %v4971
        %7082 = vmatpush1.bf16.xpose.msra.mxu0 %v4970
        %7083 = vmatprep.subr.bf16.mxu0 %v5003
        %7084 = vmatpush1.bf16.xpose.msra.mxu0 %v5002
        %7085 = vmatprep.subr.bf16.mxu0 %v5035
        %7086 = vmatpush1.bf16.xpose.msra.mxu0 %v5034
        %7087 = vmatprep.subr.bf16.mxu0 %v5067
        %7088 = vmatpush1.bf16.xpose.msra.mxu0 %v5066
        %7089 = vmatprep.subr.bf16.mxu0 %v5099
        %7090 = vmatpush1.bf16.xpose.msra.mxu0 %v5098
        %7091 = vmatprep.subr.bf16.mxu0 %v5131
        %7092 = vmatpush1.bf16.xpose.msra.mxu0 %v5130
        %7093 = vmatprep.subr.bf16.mxu0 %v5163
        %7094 = vmatpush1.bf16.xpose.msra.mxu0 %v5162
        %7095 = vmatprep.subr.bf16.mxu0 %v5195
        %7096 = vmatpush1.bf16.xpose.msra.mxu0 %v5194
        %7097 = vmatprep.subr.bf16.mxu0 %v5227
        %7098 = vmatpush1.bf16.xpose.msra.mxu0 %v5226
        %7099 = vmatprep.mubr.bf16.mxu0 %v1611
        %7100 = vmatmul.mubr.bf16.gmra.mrb[0].mxu0 %v1610
        %v7101 = vpop.f32.mrb[0].mxu0
        %v7102 = vadd.f32 %v7061, %v7101
        %v7103 = vpop.f32.mrb[0].mxu0
        %v7104 = vadd.f32 %v7063, %v7103
        %v7105 = vpop.f32.mrb[0].mxu0
        %v7106 = vpop.f32.mrb[0].mxu0
        %7107 = vdwg.mxu0
        %7108 = vmatprep.subr.bf16.mxu0 %v4749
        %7109 = vmatpush1.bf16.xpose.msra.mxu0 %v4748
        %7110 = vmatprep.subr.bf16.mxu0 %v4781
        %7111 = vmatpush1.bf16.xpose.msra.mxu0 %v4780
        %7112 = vmatprep.subr.bf16.mxu0 %v4813
        %7113 = vmatpush1.bf16.xpose.msra.mxu0 %v4812
        %7114 = vmatprep.subr.bf16.mxu0 %v4845
        %7115 = vmatpush1.bf16.xpose.msra.mxu0 %v4844
        %7116 = vmatprep.subr.bf16.mxu0 %v4877
        %7117 = vmatpush1.bf16.xpose.msra.mxu0 %v4876
        %7118 = vmatprep.subr.bf16.mxu0 %v4909
        %7119 = vmatpush1.bf16.xpose.msra.mxu0 %v4908
        %7120 = vmatprep.subr.bf16.mxu0 %v4941
        %7121 = vmatpush1.bf16.xpose.msra.mxu0 %v4940
        %7122 = vmatprep.subr.bf16.mxu0 %v4973
        %7123 = vmatpush1.bf16.xpose.msra.mxu0 %v4972
        %7124 = vmatprep.subr.bf16.mxu0 %v5005
        %7125 = vmatpush1.bf16.xpose.msra.mxu0 %v5004
        %7126 = vmatprep.subr.bf16.mxu0 %v5037
        %7127 = vmatpush1.bf16.xpose.msra.mxu0 %v5036
        %7128 = vmatprep.subr.bf16.mxu0 %v5069
        %7129 = vmatpush1.bf16.xpose.msra.mxu0 %v5068
        %7130 = vmatprep.subr.bf16.mxu0 %v5101
        %7131 = vmatpush1.bf16.xpose.msra.mxu0 %v5100
        %7132 = vmatprep.subr.bf16.mxu0 %v5133
        %7133 = vmatpush1.bf16.xpose.msra.mxu0 %v5132
        %7134 = vmatprep.subr.bf16.mxu0 %v5165
        %7135 = vmatpush1.bf16.xpose.msra.mxu0 %v5164
        %7136 = vmatprep.subr.bf16.mxu0 %v5197
        %7137 = vmatpush1.bf16.xpose.msra.mxu0 %v5196
        %7138 = vmatprep.subr.bf16.mxu0 %v5229
        %7139 = vmatpush1.bf16.xpose.msra.mxu0 %v5228
        %7140 = vmatprep.mubr.bf16.mxu0 %v1613
        %7141 = vmatmul.mubr.bf16.gmra.mrb[0].mxu0 %v1612
        %v7142 = vpop.f32.mrb[0].mxu0
        %v7143 = vadd.f32 %v7102, %v7142
        %v7144 = vpop.f32.mrb[0].mxu0
        %v7145 = vadd.f32 %v7104, %v7144
        %v7146 = vpop.f32.mrb[0].mxu0
        %v7147 = vpop.f32.mrb[0].mxu0
        %7148 = vdwg.mxu0
        %7149 = vmatprep.subr.bf16.mxu0 %v4751
        %7150 = vmatpush1.bf16.xpose.msra.mxu0 %v4750
        %7151 = vmatprep.subr.bf16.mxu0 %v4783
        %7152 = vmatpush1.bf16.xpose.msra.mxu0 %v4782
        %7153 = vmatprep.subr.bf16.mxu0 %v4815
        %7154 = vmatpush1.bf16.xpose.msra.mxu0 %v4814
        %7155 = vmatprep.subr.bf16.mxu0 %v4847
        %7156 = vmatpush1.bf16.xpose.msra.mxu0 %v4846
        %7157 = vmatprep.subr.bf16.mxu0 %v4879
        %7158 = vmatpush1.bf16.xpose.msra.mxu0 %v4878
        %7159 = vmatprep.subr.bf16.mxu0 %v4911
        %7160 = vmatpush1.bf16.xpose.msra.mxu0 %v4910
        %7161 = vmatprep.subr.bf16.mxu0 %v4943
        %7162 = vmatpush1.bf16.xpose.msra.mxu0 %v4942
        %7163 = vmatprep.subr.bf16.mxu0 %v4975
        %7164 = vmatpush1.bf16.xpose.msra.mxu0 %v4974
        %7165 = vmatprep.subr.bf16.mxu0 %v5007
        %7166 = vmatpush1.bf16.xpose.msra.mxu0 %v5006
        %7167 = vmatprep.subr.bf16.mxu0 %v5039
        %7168 = vmatpush1.bf16.xpose.msra.mxu0 %v5038
        %7169 = vmatprep.subr.bf16.mxu0 %v5071
        %7170 = vmatpush1.bf16.xpose.msra.mxu0 %v5070
        %7171 = vmatprep.subr.bf16.mxu0 %v5103
        %7172 = vmatpush1.bf16.xpose.msra.mxu0 %v5102
        %7173 = vmatprep.subr.bf16.mxu0 %v5135
        %7174 = vmatpush1.bf16.xpose.msra.mxu0 %v5134
        %7175 = vmatprep.subr.bf16.mxu0 %v5167
        %7176 = vmatpush1.bf16.xpose.msra.mxu0 %v5166
        %7177 = vmatprep.subr.bf16.mxu0 %v5199
        %7178 = vmatpush1.bf16.xpose.msra.mxu0 %v5198
        %7179 = vmatprep.subr.bf16.mxu0 %v5231
        %7180 = vmatpush1.bf16.xpose.msra.mxu0 %v5230
        %7181 = vmatprep.mubr.bf16.mxu0 %v1615
        %7182 = vmatmul.mubr.bf16.gmra.mrb[0].mxu0 %v1614
        %v7183 = vpop.f32.mrb[0].mxu0
        %v7184 = vadd.f32 %v7143, %v7183
        %v7185 = vpop.f32.mrb[0].mxu0
        %v7186 = vadd.f32 %v7145, %v7185
        %v7187 = vpop.f32.mrb[0].mxu0
        %v7188 = vpop.f32.mrb[0].mxu0
        %7189 = vdwg.mxu0
        %7190 = vmatprep.subr.bf16.mxu0 %v4753
        %7191 = vmatpush1.bf16.xpose.msra.mxu0 %v4752
        %7192 = vmatprep.subr.bf16.mxu0 %v4785
        %7193 = vmatpush1.bf16.xpose.msra.mxu0 %v4784
        %7194 = vmatprep.subr.bf16.mxu0 %v4817
        %7195 = vmatpush1.bf16.xpose.msra.mxu0 %v4816
        %7196 = vmatprep.subr.bf16.mxu0 %v4849
        %7197 = vmatpush1.bf16.xpose.msra.mxu0 %v4848
        %7198 = vmatprep.subr.bf16.mxu0 %v4881
        %7199 = vmatpush1.bf16.xpose.msra.mxu0 %v4880
        %7200 = vmatprep.subr.bf16.mxu0 %v4913
        %7201 = vmatpush1.bf16.xpose.msra.mxu0 %v4912
        %7202 = vmatprep.subr.bf16.mxu0 %v4945
        %7203 = vmatpush1.bf16.xpose.msra.mxu0 %v4944
        %7204 = vmatprep.subr.bf16.mxu0 %v4977
        %7205 = vmatpush1.bf16.xpose.msra.mxu0 %v4976
        %7206 = vmatprep.subr.bf16.mxu0 %v5009
        %7207 = vmatpush1.bf16.xpose.msra.mxu0 %v5008
        %7208 = vmatprep.subr.bf16.mxu0 %v5041
        %7209 = vmatpush1.bf16.xpose.msra.mxu0 %v5040
        %7210 = vmatprep.subr.bf16.mxu0 %v5073
        %7211 = vmatpush1.bf16.xpose.msra.mxu0 %v5072
        %7212 = vmatprep.subr.bf16.mxu0 %v5105
        %7213 = vmatpush1.bf16.xpose.msra.mxu0 %v5104
        %7214 = vmatprep.subr.bf16.mxu0 %v5137
        %7215 = vmatpush1.bf16.xpose.msra.mxu0 %v5136
        %7216 = vmatprep.subr.bf16.mxu0 %v5169
        %7217 = vmatpush1.bf16.xpose.msra.mxu0 %v5168
        %7218 = vmatprep.subr.bf16.mxu0 %v5201
        %7219 = vmatpush1.bf16.xpose.msra.mxu0 %v5200
        %7220 = vmatprep.subr.bf16.mxu0 %v5233
        %7221 = vmatpush1.bf16.xpose.msra.mxu0 %v5232
        %7222 = vmatprep.mubr.bf16.mxu0 %v1617
        %7223 = vmatmul.mubr.bf16.gmra.mrb[0].mxu0 %v1616
        %v7224 = vpop.f32.mrb[0].mxu0
        %v7225 = vadd.f32 %v7184, %v7224
        %v7226 = vpop.f32.mrb[0].mxu0
        %v7227 = vadd.f32 %v7186, %v7226
        %v7228 = vpop.f32.mrb[0].mxu0
        %v7229 = vpop.f32.mrb[0].mxu0
        %7230 = vdwg.mxu0
        %7231 = vmatprep.subr.bf16.mxu0 %v4755
        %7232 = vmatpush1.bf16.xpose.msra.mxu0 %v4754
        %7233 = vmatprep.subr.bf16.mxu0 %v4787
        %7234 = vmatpush1.bf16.xpose.msra.mxu0 %v4786
        %7235 = vmatprep.subr.bf16.mxu0 %v4819
        %7236 = vmatpush1.bf16.xpose.msra.mxu0 %v4818
        %7237 = vmatprep.subr.bf16.mxu0 %v4851
        %7238 = vmatpush1.bf16.xpose.msra.mxu0 %v4850
        %7239 = vmatprep.subr.bf16.mxu0 %v4883
        %7240 = vmatpush1.bf16.xpose.msra.mxu0 %v4882
        %7241 = vmatprep.subr.bf16.mxu0 %v4915
        %7242 = vmatpush1.bf16.xpose.msra.mxu0 %v4914
        %7243 = vmatprep.subr.bf16.mxu0 %v4947
        %7244 = vmatpush1.bf16.xpose.msra.mxu0 %v4946
        %7245 = vmatprep.subr.bf16.mxu0 %v4979
        %7246 = vmatpush1.bf16.xpose.msra.mxu0 %v4978
        %7247 = vmatprep.subr.bf16.mxu0 %v5011
        %7248 = vmatpush1.bf16.xpose.msra.mxu0 %v5010
        %7249 = vmatprep.subr.bf16.mxu0 %v5043
        %7250 = vmatpush1.bf16.xpose.msra.mxu0 %v5042
        %7251 = vmatprep.subr.bf16.mxu0 %v5075
        %7252 = vmatpush1.bf16.xpose.msra.mxu0 %v5074
        %7253 = vmatprep.subr.bf16.mxu0 %v5107
        %7254 = vmatpush1.bf16.xpose.msra.mxu0 %v5106
        %7255 = vmatprep.subr.bf16.mxu0 %v5139
        %7256 = vmatpush1.bf16.xpose.msra.mxu0 %v5138
        %7257 = vmatprep.subr.bf16.mxu0 %v5171
        %7258 = vmatpush1.bf16.xpose.msra.mxu0 %v5170
        %7259 = vmatprep.subr.bf16.mxu0 %v5203
        %7260 = vmatpush1.bf16.xpose.msra.mxu0 %v5202
        %7261 = vmatprep.subr.bf16.mxu0 %v5235
        %7262 = vmatpush1.bf16.xpose.msra.mxu0 %v5234
        %7263 = vmatprep.mubr.bf16.mxu0 %v1619
        %7264 = vmatmul.mubr.bf16.gmra.mrb[0].mxu0 %v1618
        %v7265 = vpop.f32.mrb[0].mxu0
        %v7266 = vadd.f32 %v7225, %v7265
        %v7267 = vpop.f32.mrb[0].mxu0
        %v7268 = vadd.f32 %v7227, %v7267
        %v7269 = vpop.f32.mrb[0].mxu0
        %v7270 = vpop.f32.mrb[0].mxu0
        %7271 = vdwg.mxu0
        %7272 = vmatprep.subr.bf16.mxu0 %v4757
        %7273 = vmatpush1.bf16.xpose.msra.mxu0 %v4756
        %7274 = vmatprep.subr.bf16.mxu0 %v4789
        %7275 = vmatpush1.bf16.xpose.msra.mxu0 %v4788
        %7276 = vmatprep.subr.bf16.mxu0 %v4821
        %7277 = vmatpush1.bf16.xpose.msra.mxu0 %v4820
        %7278 = vmatprep.subr.bf16.mxu0 %v4853
        %7279 = vmatpush1.bf16.xpose.msra.mxu0 %v4852
        %7280 = vmatprep.subr.bf16.mxu0 %v4885
        %7281 = vmatpush1.bf16.xpose.msra.mxu0 %v4884
        %7282 = vmatprep.subr.bf16.mxu0 %v4917
        %7283 = vmatpush1.bf16.xpose.msra.mxu0 %v4916
        %7284 = vmatprep.subr.bf16.mxu0 %v4949
        %7285 = vmatpush1.bf16.xpose.msra.mxu0 %v4948
        %7286 = vmatprep.subr.bf16.mxu0 %v4981
        %7287 = vmatpush1.bf16.xpose.msra.mxu0 %v4980
        %7288 = vmatprep.subr.bf16.mxu0 %v5013
        %7289 = vmatpush1.bf16.xpose.msra.mxu0 %v5012
        %7290 = vmatprep.subr.bf16.mxu0 %v5045
        %7291 = vmatpush1.bf16.xpose.msra.mxu0 %v5044
        %7292 = vmatprep.subr.bf16.mxu0 %v5077
        %7293 = vmatpush1.bf16.xpose.msra.mxu0 %v5076
        %7294 = vmatprep.subr.bf16.mxu0 %v5109
        %7295 = vmatpush1.bf16.xpose.msra.mxu0 %v5108
        %7296 = vmatprep.subr.bf16.mxu0 %v5141
        %7297 = vmatpush1.bf16.xpose.msra.mxu0 %v5140
        %7298 = vmatprep.subr.bf16.mxu0 %v5173
        %7299 = vmatpush1.bf16.xpose.msra.mxu0 %v5172
        %7300 = vmatprep.subr.bf16.mxu0 %v5205
        %7301 = vmatpush1.bf16.xpose.msra.mxu0 %v5204
        %7302 = vmatprep.subr.bf16.mxu0 %v5237
        %7303 = vmatpush1.bf16.xpose.msra.mxu0 %v5236
        %7304 = vmatprep.mubr.bf16.mxu0 %v1621
        %7305 = vmatmul.mubr.bf16.gmra.mrb[0].mxu0 %v1620
        %v7306 = vpop.f32.mrb[0].mxu0
        %v7307 = vadd.f32 %v7266, %v7306
        %v7308 = vpop.f32.mrb[0].mxu0
        %v7309 = vadd.f32 %v7268, %v7308
        %v7310 = vpop.f32.mrb[0].mxu0
        %v7311 = vpop.f32.mrb[0].mxu0
        %7312 = vdwg.mxu0
        %7313 = vmatprep.subr.bf16.mxu0 %v4759
        %7314 = vmatpush1.bf16.xpose.msra.mxu0 %v4758
        %7315 = vmatprep.subr.bf16.mxu0 %v4791
        %7316 = vmatpush1.bf16.xpose.msra.mxu0 %v4790
        %7317 = vmatprep.subr.bf16.mxu0 %v4823
        %7318 = vmatpush1.bf16.xpose.msra.mxu0 %v4822
        %7319 = vmatprep.subr.bf16.mxu0 %v4855
        %7320 = vmatpush1.bf16.xpose.msra.mxu0 %v4854
        %7321 = vmatprep.subr.bf16.mxu0 %v4887
        %7322 = vmatpush1.bf16.xpose.msra.mxu0 %v4886
        %7323 = vmatprep.subr.bf16.mxu0 %v4919
        %7324 = vmatpush1.bf16.xpose.msra.mxu0 %v4918
        %7325 = vmatprep.subr.bf16.mxu0 %v4951
        %7326 = vmatpush1.bf16.xpose.msra.mxu0 %v4950
        %7327 = vmatprep.subr.bf16.mxu0 %v4983
        %7328 = vmatpush1.bf16.xpose.msra.mxu0 %v4982
        %7329 = vmatprep.subr.bf16.mxu0 %v5015
        %7330 = vmatpush1.bf16.xpose.msra.mxu0 %v5014
        %7331 = vmatprep.subr.bf16.mxu0 %v5047
        %7332 = vmatpush1.bf16.xpose.msra.mxu0 %v5046
        %7333 = vmatprep.subr.bf16.mxu0 %v5079
        %7334 = vmatpush1.bf16.xpose.msra.mxu0 %v5078
        %7335 = vmatprep.subr.bf16.mxu0 %v5111
        %7336 = vmatpush1.bf16.xpose.msra.mxu0 %v5110
        %7337 = vmatprep.subr.bf16.mxu0 %v5143
        %7338 = vmatpush1.bf16.xpose.msra.mxu0 %v5142
        %7339 = vmatprep.subr.bf16.mxu0 %v5175
        %7340 = vmatpush1.bf16.xpose.msra.mxu0 %v5174
        %7341 = vmatprep.subr.bf16.mxu0 %v5207
        %7342 = vmatpush1.bf16.xpose.msra.mxu0 %v5206
        %7343 = vmatprep.subr.bf16.mxu0 %v5239
        %7344 = vmatpush1.bf16.xpose.msra.mxu0 %v5238
        %7345 = vmatprep.mubr.bf16.mxu0 %v1623
        %7346 = vmatmul.mubr.bf16.gmra.mrb[0].mxu0 %v1622
        %v7347 = vpop.f32.mrb[0].mxu0
        %v7348 = vadd.f32 %v7307, %v7347
        %v7349 = vpop.f32.mrb[0].mxu0
        %v7350 = vadd.f32 %v7309, %v7349
        %v7351 = vpop.f32.mrb[0].mxu0
        %v7352 = vpop.f32.mrb[0].mxu0
        %7353 = vdwg.mxu0
        %7354 = vmatprep.subr.bf16.mxu0 %v4761
        %7355 = vmatpush1.bf16.xpose.msra.mxu0 %v4760
        %7356 = vmatprep.subr.bf16.mxu0 %v4793
        %7357 = vmatpush1.bf16.xpose.msra.mxu0 %v4792
        %7358 = vmatprep.subr.bf16.mxu0 %v4825
        %7359 = vmatpush1.bf16.xpose.msra.mxu0 %v4824
        %7360 = vmatprep.subr.bf16.mxu0 %v4857
        %7361 = vmatpush1.bf16.xpose.msra.mxu0 %v4856
        %7362 = vmatprep.subr.bf16.mxu0 %v4889
        %7363 = vmatpush1.bf16.xpose.msra.mxu0 %v4888
        %7364 = vmatprep.subr.bf16.mxu0 %v4921
        %7365 = vmatpush1.bf16.xpose.msra.mxu0 %v4920
        %7366 = vmatprep.subr.bf16.mxu0 %v4953
        %7367 = vmatpush1.bf16.xpose.msra.mxu0 %v4952
        %7368 = vmatprep.subr.bf16.mxu0 %v4985
        %7369 = vmatpush1.bf16.xpose.msra.mxu0 %v4984
        %7370 = vmatprep.subr.bf16.mxu0 %v5017
        %7371 = vmatpush1.bf16.xpose.msra.mxu0 %v5016
        %7372 = vmatprep.subr.bf16.mxu0 %v5049
        %7373 = vmatpush1.bf16.xpose.msra.mxu0 %v5048
        %7374 = vmatprep.subr.bf16.mxu0 %v5081
        %7375 = vmatpush1.bf16.xpose.msra.mxu0 %v5080
        %7376 = vmatprep.subr.bf16.mxu0 %v5113
        %7377 = vmatpush1.bf16.xpose.msra.mxu0 %v5112
        %7378 = vmatprep.subr.bf16.mxu0 %v5145
        %7379 = vmatpush1.bf16.xpose.msra.mxu0 %v5144
        %7380 = vmatprep.subr.bf16.mxu0 %v5177
        %7381 = vmatpush1.bf16.xpose.msra.mxu0 %v5176
        %7382 = vmatprep.subr.bf16.mxu0 %v5209
        %7383 = vmatpush1.bf16.xpose.msra.mxu0 %v5208
        %7384 = vmatprep.subr.bf16.mxu0 %v5241
        %7385 = vmatpush1.bf16.xpose.msra.mxu0 %v5240
        %7386 = vmatprep.mubr.bf16.mxu0 %v1625
        %7387 = vmatmul.mubr.bf16.gmra.mrb[0].mxu0 %v1624
        %v7388 = vpop.f32.mrb[0].mxu0
        %v7389 = vadd.f32 %v7348, %v7388
        %v7390 = vpop.f32.mrb[0].mxu0
        %v7391 = vadd.f32 %v7350, %v7390
        %v7392 = vpop.f32.mrb[0].mxu0
        %v7393 = vpop.f32.mrb[0].mxu0
        %7394 = vdwg.mxu0
        %7395 = vmatprep.subr.bf16.mxu0 %v4763
        %7396 = vmatpush1.bf16.xpose.msra.mxu0 %v4762
        %7397 = vmatprep.subr.bf16.mxu0 %v4795
        %7398 = vmatpush1.bf16.xpose.msra.mxu0 %v4794
        %7399 = vmatprep.subr.bf16.mxu0 %v4827
        %7400 = vmatpush1.bf16.xpose.msra.mxu0 %v4826
        %7401 = vmatprep.subr.bf16.mxu0 %v4859
        %7402 = vmatpush1.bf16.xpose.msra.mxu0 %v4858
        %7403 = vmatprep.subr.bf16.mxu0 %v4891
        %7404 = vmatpush1.bf16.xpose.msra.mxu0 %v4890
        %7405 = vmatprep.subr.bf16.mxu0 %v4923
        %7406 = vmatpush1.bf16.xpose.msra.mxu0 %v4922
        %7407 = vmatprep.subr.bf16.mxu0 %v4955
        %7408 = vmatpush1.bf16.xpose.msra.mxu0 %v4954
        %7409 = vmatprep.subr.bf16.mxu0 %v4987
        %7410 = vmatpush1.bf16.xpose.msra.mxu0 %v4986
        %7411 = vmatprep.subr.bf16.mxu0 %v5019
        %7412 = vmatpush1.bf16.xpose.msra.mxu0 %v5018
        %7413 = vmatprep.subr.bf16.mxu0 %v5051
        %7414 = vmatpush1.bf16.xpose.msra.mxu0 %v5050
        %7415 = vmatprep.subr.bf16.mxu0 %v5083
        %7416 = vmatpush1.bf16.xpose.msra.mxu0 %v5082
        %7417 = vmatprep.subr.bf16.mxu0 %v5115
        %7418 = vmatpush1.bf16.xpose.msra.mxu0 %v5114
        %7419 = vmatprep.subr.bf16.mxu0 %v5147
        %7420 = vmatpush1.bf16.xpose.msra.mxu0 %v5146
        %7421 = vmatprep.subr.bf16.mxu0 %v5179
        %7422 = vmatpush1.bf16.xpose.msra.mxu0 %v5178
        %7423 = vmatprep.subr.bf16.mxu0 %v5211
        %7424 = vmatpush1.bf16.xpose.msra.mxu0 %v5210
        %7425 = vmatprep.subr.bf16.mxu0 %v5243
        %7426 = vmatpush1.bf16.xpose.msra.mxu0 %v5242
        %7427 = vmatprep.mubr.bf16.mxu0 %v1627
        %7428 = vmatmul.mubr.bf16.gmra.mrb[0].mxu0 %v1626
        %v7429 = vpop.f32.mrb[0].mxu0
        %v7430 = vadd.f32 %v7389, %v7429
        %v7431 = vpop.f32.mrb[0].mxu0
        %v7432 = vadd.f32 %v7391, %v7431
        %v7433 = vpop.f32.mrb[0].mxu0
        %v7434 = vpop.f32.mrb[0].mxu0
        %7435 = vdwg.mxu0
        %7436 = vmatprep.subr.bf16.mxu0 %v5245
        %7437 = vmatpush1.bf16.xpose.msra.mxu0 %v5244
        %7438 = vmatprep.subr.bf16.mxu0 %v5277
        %7439 = vmatpush1.bf16.xpose.msra.mxu0 %v5276
        %7440 = vmatprep.subr.bf16.mxu0 %v5309
        %7441 = vmatpush1.bf16.xpose.msra.mxu0 %v5308
        %7442 = vmatprep.subr.bf16.mxu0 %v5341
        %7443 = vmatpush1.bf16.xpose.msra.mxu0 %v5340
        %7444 = vmatprep.subr.bf16.mxu0 %v5373
        %7445 = vmatpush1.bf16.xpose.msra.mxu0 %v5372
        %7446 = vmatprep.subr.bf16.mxu0 %v5405
        %7447 = vmatpush1.bf16.xpose.msra.mxu0 %v5404
        %7448 = vmatprep.subr.bf16.mxu0 %v5437
        %7449 = vmatpush1.bf16.xpose.msra.mxu0 %v5436
        %7450 = vmatprep.subr.bf16.mxu0 %v5469
        %7451 = vmatpush1.bf16.xpose.msra.mxu0 %v5468
        %7452 = vmatprep.subr.bf16.mxu0 %v5501
        %7453 = vmatpush1.bf16.xpose.msra.mxu0 %v5500
        %7454 = vmatprep.subr.bf16.mxu0 %v5533
        %7455 = vmatpush1.bf16.xpose.msra.mxu0 %v5532
        %7456 = vmatprep.subr.bf16.mxu0 %v5565
        %7457 = vmatpush1.bf16.xpose.msra.mxu0 %v5564
        %7458 = vmatprep.subr.bf16.mxu0 %v5597
        %7459 = vmatpush1.bf16.xpose.msra.mxu0 %v5596
        %7460 = vmatprep.subr.bf16.mxu0 %v5629
        %7461 = vmatpush1.bf16.xpose.msra.mxu0 %v5628
        %7462 = vmatprep.subr.bf16.mxu0 %v5661
        %7463 = vmatpush1.bf16.xpose.msra.mxu0 %v5660
        %7464 = vmatprep.subr.bf16.mxu0 %v5693
        %7465 = vmatpush1.bf16.xpose.msra.mxu0 %v5692
        %7466 = vmatprep.subr.bf16.mxu0 %v5725
        %7467 = vmatpush1.bf16.xpose.msra.mxu0 %v5724
        %7468 = vmatprep.mubr.bf16.mxu0 %v1597
        %7469 = vmatmul.mubr.bf16.gmra.mrb[0].mxu0 %v1596
        %v7470 = vpop.f32.mrb[0].mxu0
        %v7471 = vadd.f32 %v1539, %v7470
        %v7472 = vpop.f32.mrb[0].mxu0
        %v7473 = vadd.f32 %v1543, %v7472
        %v7474 = vpop.f32.mrb[0].mxu0
        %v7475 = vpop.f32.mrb[0].mxu0
        %7476 = vdwg.mxu0
        %7477 = vmatprep.subr.bf16.mxu0 %v5247
        %7478 = vmatpush1.bf16.xpose.msra.mxu0 %v5246
        %7479 = vmatprep.subr.bf16.mxu0 %v5279
        %7480 = vmatpush1.bf16.xpose.msra.mxu0 %v5278
        %7481 = vmatprep.subr.bf16.mxu0 %v5311
        %7482 = vmatpush1.bf16.xpose.msra.mxu0 %v5310
        %7483 = vmatprep.subr.bf16.mxu0 %v5343
        %7484 = vmatpush1.bf16.xpose.msra.mxu0 %v5342
        %7485 = vmatprep.subr.bf16.mxu0 %v5375
        %7486 = vmatpush1.bf16.xpose.msra.mxu0 %v5374
        %7487 = vmatprep.subr.bf16.mxu0 %v5407
        %7488 = vmatpush1.bf16.xpose.msra.mxu0 %v5406
        %7489 = vmatprep.subr.bf16.mxu0 %v5439
        %7490 = vmatpush1.bf16.xpose.msra.mxu0 %v5438
        %7491 = vmatprep.subr.bf16.mxu0 %v5471
        %7492 = vmatpush1.bf16.xpose.msra.mxu0 %v5470
        %7493 = vmatprep.subr.bf16.mxu0 %v5503
        %7494 = vmatpush1.bf16.xpose.msra.mxu0 %v5502
        %7495 = vmatprep.subr.bf16.mxu0 %v5535
        %7496 = vmatpush1.bf16.xpose.msra.mxu0 %v5534
        %7497 = vmatprep.subr.bf16.mxu0 %v5567
        %7498 = vmatpush1.bf16.xpose.msra.mxu0 %v5566
        %7499 = vmatprep.subr.bf16.mxu0 %v5599
        %7500 = vmatpush1.bf16.xpose.msra.mxu0 %v5598
        %7501 = vmatprep.subr.bf16.mxu0 %v5631
        %7502 = vmatpush1.bf16.xpose.msra.mxu0 %v5630
        %7503 = vmatprep.subr.bf16.mxu0 %v5663
        %7504 = vmatpush1.bf16.xpose.msra.mxu0 %v5662
        %7505 = vmatprep.subr.bf16.mxu0 %v5695
        %7506 = vmatpush1.bf16.xpose.msra.mxu0 %v5694
        %7507 = vmatprep.subr.bf16.mxu0 %v5727
        %7508 = vmatpush1.bf16.xpose.msra.mxu0 %v5726
        %7509 = vmatprep.mubr.bf16.mxu0 %v1599
        %7510 = vmatmul.mubr.bf16.gmra.mrb[0].mxu0 %v1598
        %v7511 = vpop.f32.mrb[0].mxu0
        %v7512 = vadd.f32 %v7471, %v7511
        %v7513 = vpop.f32.mrb[0].mxu0
        %v7514 = vadd.f32 %v7473, %v7513
        %v7515 = vpop.f32.mrb[0].mxu0
        %v7516 = vpop.f32.mrb[0].mxu0
        %7517 = vdwg.mxu0
        %7518 = vmatprep.subr.bf16.mxu0 %v5249
        %7519 = vmatpush1.bf16.xpose.msra.mxu0 %v5248
        %7520 = vmatprep.subr.bf16.mxu0 %v5281
        %7521 = vmatpush1.bf16.xpose.msra.mxu0 %v5280
        %7522 = vmatprep.subr.bf16.mxu0 %v5313
        %7523 = vmatpush1.bf16.xpose.msra.mxu0 %v5312
        %7524 = vmatprep.subr.bf16.mxu0 %v5345
        %7525 = vmatpush1.bf16.xpose.msra.mxu0 %v5344
        %7526 = vmatprep.subr.bf16.mxu0 %v5377
        %7527 = vmatpush1.bf16.xpose.msra.mxu0 %v5376
        %7528 = vmatprep.subr.bf16.mxu0 %v5409
        %7529 = vmatpush1.bf16.xpose.msra.mxu0 %v5408
        %7530 = vmatprep.subr.bf16.mxu0 %v5441
        %7531 = vmatpush1.bf16.xpose.msra.mxu0 %v5440
        %7532 = vmatprep.subr.bf16.mxu0 %v5473
        %7533 = vmatpush1.bf16.xpose.msra.mxu0 %v5472
        %7534 = vmatprep.subr.bf16.mxu0 %v5505
        %7535 = vmatpush1.bf16.xpose.msra.mxu0 %v5504
        %7536 = vmatprep.subr.bf16.mxu0 %v5537
        %7537 = vmatpush1.bf16.xpose.msra.mxu0 %v5536
        %7538 = vmatprep.subr.bf16.mxu0 %v5569
        %7539 = vmatpush1.bf16.xpose.msra.mxu0 %v5568
        %7540 = vmatprep.subr.bf16.mxu0 %v5601
        %7541 = vmatpush1.bf16.xpose.msra.mxu0 %v5600
        %7542 = vmatprep.subr.bf16.mxu0 %v5633
        %7543 = vmatpush1.bf16.xpose.msra.mxu0 %v5632
        %7544 = vmatprep.subr.bf16.mxu0 %v5665
        %7545 = vmatpush1.bf16.xpose.msra.mxu0 %v5664
        %7546 = vmatprep.subr.bf16.mxu0 %v5697
        %7547 = vmatpush1.bf16.xpose.msra.mxu0 %v5696
        %7548 = vmatprep.subr.bf16.mxu0 %v5729
        %7549 = vmatpush1.bf16.xpose.msra.mxu0 %v5728
        %7550 = vmatprep.mubr.bf16.mxu0 %v1601
        %7551 = vmatmul.mubr.bf16.gmra.mrb[0].mxu0 %v1600
        %v7552 = vpop.f32.mrb[0].mxu0
        %v7553 = vadd.f32 %v7512, %v7552
        %v7554 = vpop.f32.mrb[0].mxu0
        %v7555 = vadd.f32 %v7514, %v7554
        %v7556 = vpop.f32.mrb[0].mxu0
        %v7557 = vpop.f32.mrb[0].mxu0
        %7558 = vdwg.mxu0
        %7559 = vmatprep.subr.bf16.mxu0 %v5251
        %7560 = vmatpush1.bf16.xpose.msra.mxu0 %v5250
        %7561 = vmatprep.subr.bf16.mxu0 %v5283
        %7562 = vmatpush1.bf16.xpose.msra.mxu0 %v5282
        %7563 = vmatprep.subr.bf16.mxu0 %v5315
        %7564 = vmatpush1.bf16.xpose.msra.mxu0 %v5314
        %7565 = vmatprep.subr.bf16.mxu0 %v5347
        %7566 = vmatpush1.bf16.xpose.msra.mxu0 %v5346
        %7567 = vmatprep.subr.bf16.mxu0 %v5379
        %7568 = vmatpush1.bf16.xpose.msra.mxu0 %v5378
        %7569 = vmatprep.subr.bf16.mxu0 %v5411
        %7570 = vmatpush1.bf16.xpose.msra.mxu0 %v5410
        %7571 = vmatprep.subr.bf16.mxu0 %v5443
        %7572 = vmatpush1.bf16.xpose.msra.mxu0 %v5442
        %7573 = vmatprep.subr.bf16.mxu0 %v5475
        %7574 = vmatpush1.bf16.xpose.msra.mxu0 %v5474
        %7575 = vmatprep.subr.bf16.mxu0 %v5507
        %7576 = vmatpush1.bf16.xpose.msra.mxu0 %v5506
        %7577 = vmatprep.subr.bf16.mxu0 %v5539
        %7578 = vmatpush1.bf16.xpose.msra.mxu0 %v5538
        %7579 = vmatprep.subr.bf16.mxu0 %v5571
        %7580 = vmatpush1.bf16.xpose.msra.mxu0 %v5570
        %7581 = vmatprep.subr.bf16.mxu0 %v5603
        %7582 = vmatpush1.bf16.xpose.msra.mxu0 %v5602
        %7583 = vmatprep.subr.bf16.mxu0 %v5635
        %7584 = vmatpush1.bf16.xpose.msra.mxu0 %v5634
        %7585 = vmatprep.subr.bf16.mxu0 %v5667
        %7586 = vmatpush1.bf16.xpose.msra.mxu0 %v5666
        %7587 = vmatprep.subr.bf16.mxu0 %v5699
        %7588 = vmatpush1.bf16.xpose.msra.mxu0 %v5698
        %7589 = vmatprep.subr.bf16.mxu0 %v5731
        %7590 = vmatpush1.bf16.xpose.msra.mxu0 %v5730
        %7591 = vmatprep.mubr.bf16.mxu0 %v1603
        %7592 = vmatmul.mubr.bf16.gmra.mrb[0].mxu0 %v1602
        %v7593 = vpop.f32.mrb[0].mxu0
        %v7594 = vadd.f32 %v7553, %v7593
        %v7595 = vpop.f32.mrb[0].mxu0
        %v7596 = vadd.f32 %v7555, %v7595
        %v7597 = vpop.f32.mrb[0].mxu0
        %v7598 = vpop.f32.mrb[0].mxu0
        %7599 = vdwg.mxu0
        %7600 = vmatprep.subr.bf16.mxu0 %v5253
        %7601 = vmatpush1.bf16.xpose.msra.mxu0 %v5252
        %7602 = vmatprep.subr.bf16.mxu0 %v5285
        %7603 = vmatpush1.bf16.xpose.msra.mxu0 %v5284
        %7604 = vmatprep.subr.bf16.mxu0 %v5317
        %7605 = vmatpush1.bf16.xpose.msra.mxu0 %v5316
        %7606 = vmatprep.subr.bf16.mxu0 %v5349
        %7607 = vmatpush1.bf16.xpose.msra.mxu0 %v5348
        %7608 = vmatprep.subr.bf16.mxu0 %v5381
        %7609 = vmatpush1.bf16.xpose.msra.mxu0 %v5380
        %7610 = vmatprep.subr.bf16.mxu0 %v5413
        %7611 = vmatpush1.bf16.xpose.msra.mxu0 %v5412
        %7612 = vmatprep.subr.bf16.mxu0 %v5445
        %7613 = vmatpush1.bf16.xpose.msra.mxu0 %v5444
        %7614 = vmatprep.subr.bf16.mxu0 %v5477
        %7615 = vmatpush1.bf16.xpose.msra.mxu0 %v5476
        %7616 = vmatprep.subr.bf16.mxu0 %v5509
        %7617 = vmatpush1.bf16.xpose.msra.mxu0 %v5508
        %7618 = vmatprep.subr.bf16.mxu0 %v5541
        %7619 = vmatpush1.bf16.xpose.msra.mxu0 %v5540
        %7620 = vmatprep.subr.bf16.mxu0 %v5573
        %7621 = vmatpush1.bf16.xpose.msra.mxu0 %v5572
        %7622 = vmatprep.subr.bf16.mxu0 %v5605
        %7623 = vmatpush1.bf16.xpose.msra.mxu0 %v5604
        %7624 = vmatprep.subr.bf16.mxu0 %v5637
        %7625 = vmatpush1.bf16.xpose.msra.mxu0 %v5636
        %7626 = vmatprep.subr.bf16.mxu0 %v5669
        %7627 = vmatpush1.bf16.xpose.msra.mxu0 %v5668
        %7628 = vmatprep.subr.bf16.mxu0 %v5701
        %7629 = vmatpush1.bf16.xpose.msra.mxu0 %v5700
        %7630 = vmatprep.subr.bf16.mxu0 %v5733
        %7631 = vmatpush1.bf16.xpose.msra.mxu0 %v5732
        %7632 = vmatprep.mubr.bf16.mxu0 %v1605
        %7633 = vmatmul.mubr.bf16.gmra.mrb[0].mxu0 %v1604
        %v7634 = vpop.f32.mrb[0].mxu0
        %v7635 = vadd.f32 %v7594, %v7634
        %v7636 = vpop.f32.mrb[0].mxu0
        %v7637 = vadd.f32 %v7596, %v7636
        %v7638 = vpop.f32.mrb[0].mxu0
        %v7639 = vpop.f32.mrb[0].mxu0
        %7640 = vdwg.mxu0
        %7641 = vmatprep.subr.bf16.mxu0 %v5255
        %7642 = vmatpush1.bf16.xpose.msra.mxu0 %v5254
        %7643 = vmatprep.subr.bf16.mxu0 %v5287
        %7644 = vmatpush1.bf16.xpose.msra.mxu0 %v5286
        %7645 = vmatprep.subr.bf16.mxu0 %v5319
        %7646 = vmatpush1.bf16.xpose.msra.mxu0 %v5318
        %7647 = vmatprep.subr.bf16.mxu0 %v5351
        %7648 = vmatpush1.bf16.xpose.msra.mxu0 %v5350
        %7649 = vmatprep.subr.bf16.mxu0 %v5383
        %7650 = vmatpush1.bf16.xpose.msra.mxu0 %v5382
        %7651 = vmatprep.subr.bf16.mxu0 %v5415
        %7652 = vmatpush1.bf16.xpose.msra.mxu0 %v5414
        %7653 = vmatprep.subr.bf16.mxu0 %v5447
        %7654 = vmatpush1.bf16.xpose.msra.mxu0 %v5446
        %7655 = vmatprep.subr.bf16.mxu0 %v5479
        %7656 = vmatpush1.bf16.xpose.msra.mxu0 %v5478
        %7657 = vmatprep.subr.bf16.mxu0 %v5511
        %7658 = vmatpush1.bf16.xpose.msra.mxu0 %v5510
        %7659 = vmatprep.subr.bf16.mxu0 %v5543
        %7660 = vmatpush1.bf16.xpose.msra.mxu0 %v5542
        %7661 = vmatprep.subr.bf16.mxu0 %v5575
        %7662 = vmatpush1.bf16.xpose.msra.mxu0 %v5574
        %7663 = vmatprep.subr.bf16.mxu0 %v5607
        %7664 = vmatpush1.bf16.xpose.msra.mxu0 %v5606
        %7665 = vmatprep.subr.bf16.mxu0 %v5639
        %7666 = vmatpush1.bf16.xpose.msra.mxu0 %v5638
        %7667 = vmatprep.subr.bf16.mxu0 %v5671
        %7668 = vmatpush1.bf16.xpose.msra.mxu0 %v5670
        %7669 = vmatprep.subr.bf16.mxu0 %v5703
        %7670 = vmatpush1.bf16.xpose.msra.mxu0 %v5702
        %7671 = vmatprep.subr.bf16.mxu0 %v5735
        %7672 = vmatpush1.bf16.xpose.msra.mxu0 %v5734
        %7673 = vmatprep.mubr.bf16.mxu0 %v1607
        %7674 = vmatmul.mubr.bf16.gmra.mrb[0].mxu0 %v1606
        %v7675 = vpop.f32.mrb[0].mxu0
        %v7676 = vadd.f32 %v7635, %v7675
        %v7677 = vpop.f32.mrb[0].mxu0
        %v7678 = vadd.f32 %v7637, %v7677
        %v7679 = vpop.f32.mrb[0].mxu0
        %v7680 = vpop.f32.mrb[0].mxu0
        %7681 = vdwg.mxu0
        %7682 = vmatprep.subr.bf16.mxu0 %v5257
        %7683 = vmatpush1.bf16.xpose.msra.mxu0 %v5256
        %7684 = vmatprep.subr.bf16.mxu0 %v5289
        %7685 = vmatpush1.bf16.xpose.msra.mxu0 %v5288
        %7686 = vmatprep.subr.bf16.mxu0 %v5321
        %7687 = vmatpush1.bf16.xpose.msra.mxu0 %v5320
        %7688 = vmatprep.subr.bf16.mxu0 %v5353
        %7689 = vmatpush1.bf16.xpose.msra.mxu0 %v5352
        %7690 = vmatprep.subr.bf16.mxu0 %v5385
        %7691 = vmatpush1.bf16.xpose.msra.mxu0 %v5384
        %7692 = vmatprep.subr.bf16.mxu0 %v5417
        %7693 = vmatpush1.bf16.xpose.msra.mxu0 %v5416
        %7694 = vmatprep.subr.bf16.mxu0 %v5449
        %7695 = vmatpush1.bf16.xpose.msra.mxu0 %v5448
        %7696 = vmatprep.subr.bf16.mxu0 %v5481
        %7697 = vmatpush1.bf16.xpose.msra.mxu0 %v5480
        %7698 = vmatprep.subr.bf16.mxu0 %v5513
        %7699 = vmatpush1.bf16.xpose.msra.mxu0 %v5512
        %7700 = vmatprep.subr.bf16.mxu0 %v5545
        %7701 = vmatpush1.bf16.xpose.msra.mxu0 %v5544
        %7702 = vmatprep.subr.bf16.mxu0 %v5577
        %7703 = vmatpush1.bf16.xpose.msra.mxu0 %v5576
        %7704 = vmatprep.subr.bf16.mxu0 %v5609
        %7705 = vmatpush1.bf16.xpose.msra.mxu0 %v5608
        %7706 = vmatprep.subr.bf16.mxu0 %v5641
        %7707 = vmatpush1.bf16.xpose.msra.mxu0 %v5640
        %7708 = vmatprep.subr.bf16.mxu0 %v5673
        %7709 = vmatpush1.bf16.xpose.msra.mxu0 %v5672
        %7710 = vmatprep.subr.bf16.mxu0 %v5705
        %7711 = vmatpush1.bf16.xpose.msra.mxu0 %v5704
        %7712 = vmatprep.subr.bf16.mxu0 %v5737
        %7713 = vmatpush1.bf16.xpose.msra.mxu0 %v5736
        %7714 = vmatprep.mubr.bf16.mxu0 %v1609
        %7715 = vmatmul.mubr.bf16.gmra.mrb[0].mxu0 %v1608
        %v7716 = vpop.f32.mrb[0].mxu0
        %v7717 = vadd.f32 %v7676, %v7716
        %v7718 = vpop.f32.mrb[0].mxu0
        %v7719 = vadd.f32 %v7678, %v7718
        %v7720 = vpop.f32.mrb[0].mxu0
        %v7721 = vpop.f32.mrb[0].mxu0
        %7722 = vdwg.mxu0
        %7723 = vmatprep.subr.bf16.mxu0 %v5259
        %7724 = vmatpush1.bf16.xpose.msra.mxu0 %v5258
        %7725 = vmatprep.subr.bf16.mxu0 %v5291
        %7726 = vmatpush1.bf16.xpose.msra.mxu0 %v5290
        %7727 = vmatprep.subr.bf16.mxu0 %v5323
        %7728 = vmatpush1.bf16.xpose.msra.mxu0 %v5322
        %7729 = vmatprep.subr.bf16.mxu0 %v5355
        %7730 = vmatpush1.bf16.xpose.msra.mxu0 %v5354
        %7731 = vmatprep.subr.bf16.mxu0 %v5387
        %7732 = vmatpush1.bf16.xpose.msra.mxu0 %v5386
        %7733 = vmatprep.subr.bf16.mxu0 %v5419
        %7734 = vmatpush1.bf16.xpose.msra.mxu0 %v5418
        %7735 = vmatprep.subr.bf16.mxu0 %v5451
        %7736 = vmatpush1.bf16.xpose.msra.mxu0 %v5450
        %7737 = vmatprep.subr.bf16.mxu0 %v5483
        %7738 = vmatpush1.bf16.xpose.msra.mxu0 %v5482
        %7739 = vmatprep.subr.bf16.mxu0 %v5515
        %7740 = vmatpush1.bf16.xpose.msra.mxu0 %v5514
        %7741 = vmatprep.subr.bf16.mxu0 %v5547
        %7742 = vmatpush1.bf16.xpose.msra.mxu0 %v5546
        %7743 = vmatprep.subr.bf16.mxu0 %v5579
        %7744 = vmatpush1.bf16.xpose.msra.mxu0 %v5578
        %7745 = vmatprep.subr.bf16.mxu0 %v5611
        %7746 = vmatpush1.bf16.xpose.msra.mxu0 %v5610
        %7747 = vmatprep.subr.bf16.mxu0 %v5643
        %7748 = vmatpush1.bf16.xpose.msra.mxu0 %v5642
        %7749 = vmatprep.subr.bf16.mxu0 %v5675
        %7750 = vmatpush1.bf16.xpose.msra.mxu0 %v5674
        %7751 = vmatprep.subr.bf16.mxu0 %v5707
        %7752 = vmatpush1.bf16.xpose.msra.mxu0 %v5706
        %7753 = vmatprep.subr.bf16.mxu0 %v5739
        %7754 = vmatpush1.bf16.xpose.msra.mxu0 %v5738
        %7755 = vmatprep.mubr.bf16.mxu0 %v1611
        %7756 = vmatmul.mubr.bf16.gmra.mrb[0].mxu0 %v1610
        %v7757 = vpop.f32.mrb[0].mxu0
        %v7758 = vadd.f32 %v7717, %v7757
        %v7759 = vpop.f32.mrb[0].mxu0
        %v7760 = vadd.f32 %v7719, %v7759
        %v7761 = vpop.f32.mrb[0].mxu0
        %v7762 = vpop.f32.mrb[0].mxu0
        %7763 = vdwg.mxu0
        %7764 = vmatprep.subr.bf16.mxu0 %v5261
        %7765 = vmatpush1.bf16.xpose.msra.mxu0 %v5260
        %7766 = vmatprep.subr.bf16.mxu0 %v5293
        %7767 = vmatpush1.bf16.xpose.msra.mxu0 %v5292
        %7768 = vmatprep.subr.bf16.mxu0 %v5325
        %7769 = vmatpush1.bf16.xpose.msra.mxu0 %v5324
        %7770 = vmatprep.subr.bf16.mxu0 %v5357
        %7771 = vmatpush1.bf16.xpose.msra.mxu0 %v5356
        %7772 = vmatprep.subr.bf16.mxu0 %v5389
        %7773 = vmatpush1.bf16.xpose.msra.mxu0 %v5388
        %7774 = vmatprep.subr.bf16.mxu0 %v5421
        %7775 = vmatpush1.bf16.xpose.msra.mxu0 %v5420
        %7776 = vmatprep.subr.bf16.mxu0 %v5453
        %7777 = vmatpush1.bf16.xpose.msra.mxu0 %v5452
        %7778 = vmatprep.subr.bf16.mxu0 %v5485
        %7779 = vmatpush1.bf16.xpose.msra.mxu0 %v5484
        %7780 = vmatprep.subr.bf16.mxu0 %v5517
        %7781 = vmatpush1.bf16.xpose.msra.mxu0 %v5516
        %7782 = vmatprep.subr.bf16.mxu0 %v5549
        %7783 = vmatpush1.bf16.xpose.msra.mxu0 %v5548
        %7784 = vmatprep.subr.bf16.mxu0 %v5581
        %7785 = vmatpush1.bf16.xpose.msra.mxu0 %v5580
        %7786 = vmatprep.subr.bf16.mxu0 %v5613
        %7787 = vmatpush1.bf16.xpose.msra.mxu0 %v5612
        %7788 = vmatprep.subr.bf16.mxu0 %v5645
        %7789 = vmatpush1.bf16.xpose.msra.mxu0 %v5644
        %7790 = vmatprep.subr.bf16.mxu0 %v5677
        %7791 = vmatpush1.bf16.xpose.msra.mxu0 %v5676
        %7792 = vmatprep.subr.bf16.mxu0 %v5709
        %7793 = vmatpush1.bf16.xpose.msra.mxu0 %v5708
        %7794 = vmatprep.subr.bf16.mxu0 %v5741
        %7795 = vmatpush1.bf16.xpose.msra.mxu0 %v5740
        %7796 = vmatprep.mubr.bf16.mxu0 %v1613
        %7797 = vmatmul.mubr.bf16.gmra.mrb[0].mxu0 %v1612
        %v7798 = vpop.f32.mrb[0].mxu0
        %v7799 = vadd.f32 %v7758, %v7798
        %v7800 = vpop.f32.mrb[0].mxu0
        %v7801 = vadd.f32 %v7760, %v7800
        %v7802 = vpop.f32.mrb[0].mxu0
        %v7803 = vpop.f32.mrb[0].mxu0
        %7804 = vdwg.mxu0
        %7805 = vmatprep.subr.bf16.mxu0 %v5263
        %7806 = vmatpush1.bf16.xpose.msra.mxu0 %v5262
        %7807 = vmatprep.subr.bf16.mxu0 %v5295
        %7808 = vmatpush1.bf16.xpose.msra.mxu0 %v5294
        %7809 = vmatprep.subr.bf16.mxu0 %v5327
        %7810 = vmatpush1.bf16.xpose.msra.mxu0 %v5326
        %7811 = vmatprep.subr.bf16.mxu0 %v5359
        %7812 = vmatpush1.bf16.xpose.msra.mxu0 %v5358
        %7813 = vmatprep.subr.bf16.mxu0 %v5391
        %7814 = vmatpush1.bf16.xpose.msra.mxu0 %v5390
        %7815 = vmatprep.subr.bf16.mxu0 %v5423
        %7816 = vmatpush1.bf16.xpose.msra.mxu0 %v5422
        %7817 = vmatprep.subr.bf16.mxu0 %v5455
        %7818 = vmatpush1.bf16.xpose.msra.mxu0 %v5454
        %7819 = vmatprep.subr.bf16.mxu0 %v5487
        %7820 = vmatpush1.bf16.xpose.msra.mxu0 %v5486
        %7821 = vmatprep.subr.bf16.mxu0 %v5519
        %7822 = vmatpush1.bf16.xpose.msra.mxu0 %v5518
        %7823 = vmatprep.subr.bf16.mxu0 %v5551
        %7824 = vmatpush1.bf16.xpose.msra.mxu0 %v5550
        %7825 = vmatprep.subr.bf16.mxu0 %v5583
        %7826 = vmatpush1.bf16.xpose.msra.mxu0 %v5582
        %7827 = vmatprep.subr.bf16.mxu0 %v5615
        %7828 = vmatpush1.bf16.xpose.msra.mxu0 %v5614
        %7829 = vmatprep.subr.bf16.mxu0 %v5647
        %7830 = vmatpush1.bf16.xpose.msra.mxu0 %v5646
        %7831 = vmatprep.subr.bf16.mxu0 %v5679
        %7832 = vmatpush1.bf16.xpose.msra.mxu0 %v5678
        %7833 = vmatprep.subr.bf16.mxu0 %v5711
        %7834 = vmatpush1.bf16.xpose.msra.mxu0 %v5710
        %7835 = vmatprep.subr.bf16.mxu0 %v5743
        %7836 = vmatpush1.bf16.xpose.msra.mxu0 %v5742
        %7837 = vmatprep.mubr.bf16.mxu0 %v1615
        %7838 = vmatmul.mubr.bf16.gmra.mrb[0].mxu0 %v1614
        %v7839 = vpop.f32.mrb[0].mxu0
        %v7840 = vadd.f32 %v7799, %v7839
        %v7841 = vpop.f32.mrb[0].mxu0
        %v7842 = vadd.f32 %v7801, %v7841
        %v7843 = vpop.f32.mrb[0].mxu0
        %v7844 = vpop.f32.mrb[0].mxu0
        %7845 = vdwg.mxu0
        %7846 = vmatprep.subr.bf16.mxu0 %v5265
        %7847 = vmatpush1.bf16.xpose.msra.mxu0 %v5264
        %7848 = vmatprep.subr.bf16.mxu0 %v5297
        %7849 = vmatpush1.bf16.xpose.msra.mxu0 %v5296
        %7850 = vmatprep.subr.bf16.mxu0 %v5329
        %7851 = vmatpush1.bf16.xpose.msra.mxu0 %v5328
        %7852 = vmatprep.subr.bf16.mxu0 %v5361
        %7853 = vmatpush1.bf16.xpose.msra.mxu0 %v5360
        %7854 = vmatprep.subr.bf16.mxu0 %v5393
        %7855 = vmatpush1.bf16.xpose.msra.mxu0 %v5392
        %7856 = vmatprep.subr.bf16.mxu0 %v5425
        %7857 = vmatpush1.bf16.xpose.msra.mxu0 %v5424
        %7858 = vmatprep.subr.bf16.mxu0 %v5457
        %7859 = vmatpush1.bf16.xpose.msra.mxu0 %v5456
        %7860 = vmatprep.subr.bf16.mxu0 %v5489
        %7861 = vmatpush1.bf16.xpose.msra.mxu0 %v5488
        %7862 = vmatprep.subr.bf16.mxu0 %v5521
        %7863 = vmatpush1.bf16.xpose.msra.mxu0 %v5520
        %7864 = vmatprep.subr.bf16.mxu0 %v5553
        %7865 = vmatpush1.bf16.xpose.msra.mxu0 %v5552
        %7866 = vmatprep.subr.bf16.mxu0 %v5585
        %7867 = vmatpush1.bf16.xpose.msra.mxu0 %v5584
        %7868 = vmatprep.subr.bf16.mxu0 %v5617
        %7869 = vmatpush1.bf16.xpose.msra.mxu0 %v5616
        %7870 = vmatprep.subr.bf16.mxu0 %v5649
        %7871 = vmatpush1.bf16.xpose.msra.mxu0 %v5648
        %7872 = vmatprep.subr.bf16.mxu0 %v5681
        %7873 = vmatpush1.bf16.xpose.msra.mxu0 %v5680
        %7874 = vmatprep.subr.bf16.mxu0 %v5713
        %7875 = vmatpush1.bf16.xpose.msra.mxu0 %v5712
        %7876 = vmatprep.subr.bf16.mxu0 %v5745
        %7877 = vmatpush1.bf16.xpose.msra.mxu0 %v5744
        %7878 = vmatprep.mubr.bf16.mxu0 %v1617
        %7879 = vmatmul.mubr.bf16.gmra.mrb[0].mxu0 %v1616
        %v7880 = vpop.f32.mrb[0].mxu0
        %v7881 = vadd.f32 %v7840, %v7880
        %v7882 = vpop.f32.mrb[0].mxu0
        %v7883 = vadd.f32 %v7842, %v7882
        %v7884 = vpop.f32.mrb[0].mxu0
        %v7885 = vpop.f32.mrb[0].mxu0
        %7886 = vdwg.mxu0
        %7887 = vmatprep.subr.bf16.mxu0 %v5267
        %7888 = vmatpush1.bf16.xpose.msra.mxu0 %v5266
        %7889 = vmatprep.subr.bf16.mxu0 %v5299
        %7890 = vmatpush1.bf16.xpose.msra.mxu0 %v5298
        %7891 = vmatprep.subr.bf16.mxu0 %v5331
        %7892 = vmatpush1.bf16.xpose.msra.mxu0 %v5330
        %7893 = vmatprep.subr.bf16.mxu0 %v5363
        %7894 = vmatpush1.bf16.xpose.msra.mxu0 %v5362
        %7895 = vmatprep.subr.bf16.mxu0 %v5395
        %7896 = vmatpush1.bf16.xpose.msra.mxu0 %v5394
        %7897 = vmatprep.subr.bf16.mxu0 %v5427
        %7898 = vmatpush1.bf16.xpose.msra.mxu0 %v5426
        %7899 = vmatprep.subr.bf16.mxu0 %v5459
        %7900 = vmatpush1.bf16.xpose.msra.mxu0 %v5458
        %7901 = vmatprep.subr.bf16.mxu0 %v5491
        %7902 = vmatpush1.bf16.xpose.msra.mxu0 %v5490
        %7903 = vmatprep.subr.bf16.mxu0 %v5523
        %7904 = vmatpush1.bf16.xpose.msra.mxu0 %v5522
        %7905 = vmatprep.subr.bf16.mxu0 %v5555
        %7906 = vmatpush1.bf16.xpose.msra.mxu0 %v5554
        %7907 = vmatprep.subr.bf16.mxu0 %v5587
        %7908 = vmatpush1.bf16.xpose.msra.mxu0 %v5586
        %7909 = vmatprep.subr.bf16.mxu0 %v5619
        %7910 = vmatpush1.bf16.xpose.msra.mxu0 %v5618
        %7911 = vmatprep.subr.bf16.mxu0 %v5651
        %7912 = vmatpush1.bf16.xpose.msra.mxu0 %v5650
        %7913 = vmatprep.subr.bf16.mxu0 %v5683
        %7914 = vmatpush1.bf16.xpose.msra.mxu0 %v5682
        %7915 = vmatprep.subr.bf16.mxu0 %v5715
        %7916 = vmatpush1.bf16.xpose.msra.mxu0 %v5714
        %7917 = vmatprep.subr.bf16.mxu0 %v5747
        %7918 = vmatpush1.bf16.xpose.msra.mxu0 %v5746
        %7919 = vmatprep.mubr.bf16.mxu0 %v1619
        %7920 = vmatmul.mubr.bf16.gmra.mrb[0].mxu0 %v1618
        %v7921 = vpop.f32.mrb[0].mxu0
        %v7922 = vadd.f32 %v7881, %v7921
        %v7923 = vpop.f32.mrb[0].mxu0
        %v7924 = vadd.f32 %v7883, %v7923
        %v7925 = vpop.f32.mrb[0].mxu0
        %v7926 = vpop.f32.mrb[0].mxu0
        %7927 = vdwg.mxu0
        %7928 = vmatprep.subr.bf16.mxu0 %v5269
        %7929 = vmatpush1.bf16.xpose.msra.mxu0 %v5268
        %7930 = vmatprep.subr.bf16.mxu0 %v5301
        %7931 = vmatpush1.bf16.xpose.msra.mxu0 %v5300
        %7932 = vmatprep.subr.bf16.mxu0 %v5333
        %7933 = vmatpush1.bf16.xpose.msra.mxu0 %v5332
        %7934 = vmatprep.subr.bf16.mxu0 %v5365
        %7935 = vmatpush1.bf16.xpose.msra.mxu0 %v5364
        %7936 = vmatprep.subr.bf16.mxu0 %v5397
        %7937 = vmatpush1.bf16.xpose.msra.mxu0 %v5396
        %7938 = vmatprep.subr.bf16.mxu0 %v5429
        %7939 = vmatpush1.bf16.xpose.msra.mxu0 %v5428
        %7940 = vmatprep.subr.bf16.mxu0 %v5461
        %7941 = vmatpush1.bf16.xpose.msra.mxu0 %v5460
        %7942 = vmatprep.subr.bf16.mxu0 %v5493
        %7943 = vmatpush1.bf16.xpose.msra.mxu0 %v5492
        %7944 = vmatprep.subr.bf16.mxu0 %v5525
        %7945 = vmatpush1.bf16.xpose.msra.mxu0 %v5524
        %7946 = vmatprep.subr.bf16.mxu0 %v5557
        %7947 = vmatpush1.bf16.xpose.msra.mxu0 %v5556
        %7948 = vmatprep.subr.bf16.mxu0 %v5589
        %7949 = vmatpush1.bf16.xpose.msra.mxu0 %v5588
        %7950 = vmatprep.subr.bf16.mxu0 %v5621
        %7951 = vmatpush1.bf16.xpose.msra.mxu0 %v5620
        %7952 = vmatprep.subr.bf16.mxu0 %v5653
        %7953 = vmatpush1.bf16.xpose.msra.mxu0 %v5652
        %7954 = vmatprep.subr.bf16.mxu0 %v5685
        %7955 = vmatpush1.bf16.xpose.msra.mxu0 %v5684
        %7956 = vmatprep.subr.bf16.mxu0 %v5717
        %7957 = vmatpush1.bf16.xpose.msra.mxu0 %v5716
        %7958 = vmatprep.subr.bf16.mxu0 %v5749
        %7959 = vmatpush1.bf16.xpose.msra.mxu0 %v5748
        %7960 = vmatprep.mubr.bf16.mxu0 %v1621
        %7961 = vmatmul.mubr.bf16.gmra.mrb[0].mxu0 %v1620
        %v7962 = vpop.f32.mrb[0].mxu0
        %v7963 = vadd.f32 %v7922, %v7962
        %v7964 = vpop.f32.mrb[0].mxu0
        %v7965 = vadd.f32 %v7924, %v7964
        %v7966 = vpop.f32.mrb[0].mxu0
        %v7967 = vpop.f32.mrb[0].mxu0
        %7968 = vdwg.mxu0
        %7969 = vmatprep.subr.bf16.mxu0 %v5271
        %7970 = vmatpush1.bf16.xpose.msra.mxu0 %v5270
        %7971 = vmatprep.subr.bf16.mxu0 %v5303
        %7972 = vmatpush1.bf16.xpose.msra.mxu0 %v5302
        %7973 = vmatprep.subr.bf16.mxu0 %v5335
        %7974 = vmatpush1.bf16.xpose.msra.mxu0 %v5334
        %7975 = vmatprep.subr.bf16.mxu0 %v5367
        %7976 = vmatpush1.bf16.xpose.msra.mxu0 %v5366
        %7977 = vmatprep.subr.bf16.mxu0 %v5399
        %7978 = vmatpush1.bf16.xpose.msra.mxu0 %v5398
        %7979 = vmatprep.subr.bf16.mxu0 %v5431
        %7980 = vmatpush1.bf16.xpose.msra.mxu0 %v5430
        %7981 = vmatprep.subr.bf16.mxu0 %v5463
        %7982 = vmatpush1.bf16.xpose.msra.mxu0 %v5462
        %7983 = vmatprep.subr.bf16.mxu0 %v5495
        %7984 = vmatpush1.bf16.xpose.msra.mxu0 %v5494
        %7985 = vmatprep.subr.bf16.mxu0 %v5527
        %7986 = vmatpush1.bf16.xpose.msra.mxu0 %v5526
        %7987 = vmatprep.subr.bf16.mxu0 %v5559
        %7988 = vmatpush1.bf16.xpose.msra.mxu0 %v5558
        %7989 = vmatprep.subr.bf16.mxu0 %v5591
        %7990 = vmatpush1.bf16.xpose.msra.mxu0 %v5590
        %7991 = vmatprep.subr.bf16.mxu0 %v5623
        %7992 = vmatpush1.bf16.xpose.msra.mxu0 %v5622
        %7993 = vmatprep.subr.bf16.mxu0 %v5655
        %7994 = vmatpush1.bf16.xpose.msra.mxu0 %v5654
        %7995 = vmatprep.subr.bf16.mxu0 %v5687
        %7996 = vmatpush1.bf16.xpose.msra.mxu0 %v5686
        %7997 = vmatprep.subr.bf16.mxu0 %v5719
        %7998 = vmatpush1.bf16.xpose.msra.mxu0 %v5718
        %7999 = vmatprep.subr.bf16.mxu0 %v5751
        %8000 = vmatpush1.bf16.xpose.msra.mxu0 %v5750
        %8001 = vmatprep.mubr.bf16.mxu0 %v1623
        %8002 = vmatmul.mubr.bf16.gmra.mrb[0].mxu0 %v1622
        %v8003 = vpop.f32.mrb[0].mxu0
        %v8004 = vadd.f32 %v7963, %v8003
        %v8005 = vpop.f32.mrb[0].mxu0
        %v8006 = vadd.f32 %v7965, %v8005
        %v8007 = vpop.f32.mrb[0].mxu0
        %v8008 = vpop.f32.mrb[0].mxu0
        %8009 = vdwg.mxu0
        %8010 = vmatprep.subr.bf16.mxu0 %v5273
        %8011 = vmatpush1.bf16.xpose.msra.mxu0 %v5272
        %8012 = vmatprep.subr.bf16.mxu0 %v5305
        %8013 = vmatpush1.bf16.xpose.msra.mxu0 %v5304
        %8014 = vmatprep.subr.bf16.mxu0 %v5337
        %8015 = vmatpush1.bf16.xpose.msra.mxu0 %v5336
        %8016 = vmatprep.subr.bf16.mxu0 %v5369
        %8017 = vmatpush1.bf16.xpose.msra.mxu0 %v5368
        %8018 = vmatprep.subr.bf16.mxu0 %v5401
        %8019 = vmatpush1.bf16.xpose.msra.mxu0 %v5400
        %8020 = vmatprep.subr.bf16.mxu0 %v5433
        %8021 = vmatpush1.bf16.xpose.msra.mxu0 %v5432
        %8022 = vmatprep.subr.bf16.mxu0 %v5465
        %8023 = vmatpush1.bf16.xpose.msra.mxu0 %v5464
        %8024 = vmatprep.subr.bf16.mxu0 %v5497
        %8025 = vmatpush1.bf16.xpose.msra.mxu0 %v5496
        %8026 = vmatprep.subr.bf16.mxu0 %v5529
        %8027 = vmatpush1.bf16.xpose.msra.mxu0 %v5528
        %8028 = vmatprep.subr.bf16.mxu0 %v5561
        %8029 = vmatpush1.bf16.xpose.msra.mxu0 %v5560
        %8030 = vmatprep.subr.bf16.mxu0 %v5593
        %8031 = vmatpush1.bf16.xpose.msra.mxu0 %v5592
        %8032 = vmatprep.subr.bf16.mxu0 %v5625
        %8033 = vmatpush1.bf16.xpose.msra.mxu0 %v5624
        %8034 = vmatprep.subr.bf16.mxu0 %v5657
        %8035 = vmatpush1.bf16.xpose.msra.mxu0 %v5656
        %8036 = vmatprep.subr.bf16.mxu0 %v5689
        %8037 = vmatpush1.bf16.xpose.msra.mxu0 %v5688
        %8038 = vmatprep.subr.bf16.mxu0 %v5721
        %8039 = vmatpush1.bf16.xpose.msra.mxu0 %v5720
        %8040 = vmatprep.subr.bf16.mxu0 %v5753
        %8041 = vmatpush1.bf16.xpose.msra.mxu0 %v5752
        %8042 = vmatprep.mubr.bf16.mxu0 %v1625
        %8043 = vmatmul.mubr.bf16.gmra.mrb[0].mxu0 %v1624
        %v8044 = vpop.f32.mrb[0].mxu0
        %v8045 = vadd.f32 %v8004, %v8044
        %v8046 = vpop.f32.mrb[0].mxu0
        %v8047 = vadd.f32 %v8006, %v8046
        %v8048 = vpop.f32.mrb[0].mxu0
        %v8049 = vpop.f32.mrb[0].mxu0
        %8050 = vdwg.mxu0
        %8051 = vmatprep.subr.bf16.mxu0 %v5275
        %8052 = vmatpush1.bf16.xpose.msra.mxu0 %v5274
        %8053 = vmatprep.subr.bf16.mxu0 %v5307
        %8054 = vmatpush1.bf16.xpose.msra.mxu0 %v5306
        %8055 = vmatprep.subr.bf16.mxu0 %v5339
        %8056 = vmatpush1.bf16.xpose.msra.mxu0 %v5338
        %8057 = vmatprep.subr.bf16.mxu0 %v5371
        %8058 = vmatpush1.bf16.xpose.msra.mxu0 %v5370
        %8059 = vmatprep.subr.bf16.mxu0 %v5403
        %8060 = vmatpush1.bf16.xpose.msra.mxu0 %v5402
        %8061 = vmatprep.subr.bf16.mxu0 %v5435
        %8062 = vmatpush1.bf16.xpose.msra.mxu0 %v5434
        %8063 = vmatprep.subr.bf16.mxu0 %v5467
        %8064 = vmatpush1.bf16.xpose.msra.mxu0 %v5466
        %8065 = vmatprep.subr.bf16.mxu0 %v5499
        %8066 = vmatpush1.bf16.xpose.msra.mxu0 %v5498
        %8067 = vmatprep.subr.bf16.mxu0 %v5531
        %8068 = vmatpush1.bf16.xpose.msra.mxu0 %v5530
        %8069 = vmatprep.subr.bf16.mxu0 %v5563
        %8070 = vmatpush1.bf16.xpose.msra.mxu0 %v5562
        %8071 = vmatprep.subr.bf16.mxu0 %v5595
        %8072 = vmatpush1.bf16.xpose.msra.mxu0 %v5594
        %8073 = vmatprep.subr.bf16.mxu0 %v5627
        %8074 = vmatpush1.bf16.xpose.msra.mxu0 %v5626
        %8075 = vmatprep.subr.bf16.mxu0 %v5659
        %8076 = vmatpush1.bf16.xpose.msra.mxu0 %v5658
        %8077 = vmatprep.subr.bf16.mxu0 %v5691
        %8078 = vmatpush1.bf16.xpose.msra.mxu0 %v5690
        %8079 = vmatprep.subr.bf16.mxu0 %v5723
        %8080 = vmatpush1.bf16.xpose.msra.mxu0 %v5722
        %8081 = vmatprep.subr.bf16.mxu0 %v5755
        %8082 = vmatpush1.bf16.xpose.msra.mxu0 %v5754
        %8083 = vmatprep.mubr.bf16.mxu0 %v1627
        %8084 = vmatmul.mubr.bf16.gmra.mrb[0].mxu0 %v1626
        %v8085 = vpop.f32.mrb[0].mxu0
        %v8086 = vadd.f32 %v8045, %v8085
        %v8087 = vpop.f32.mrb[0].mxu0
        %v8088 = vadd.f32 %v8047, %v8087
        %v8089 = vpop.f32.mrb[0].mxu0
        %v8090 = vpop.f32.mrb[0].mxu0
        %8091 = vdwg.mxu0
        %v8092 = vld [vmem:[%s477] sm:$0xff]
        %v8093 = vld [vmem:[%s477 + $0x8] sm:$0xff]
        %v8094 = vunpack.c.l.bf16 %v8092
        %v8095 = vunpack.c.h.bf16 %v8092
        %v8096 = vunpack.c.l.bf16 %v8093
        %v8097 = vunpack.c.h.bf16 %v8093
        %v8098 = vmul.f32 %v7430, %v8094
        %v8099 = vmul.f32 %v7432, %v8095
        %v8100 = vmul.f32 %v8086, %v8096
        %v8101 = vmul.f32 %v8088, %v8097
        %v8102 = vmax.f32 %v8098, 0.0
        %v8103 = vmax.f32 %v8099, 0.0
        %v8104 = vmax.f32 %v8100, 0.0
        %v8105 = vmax.f32 %v8101, 0.0
        %v8106 = vld [vmem:[#allocation2] sm:$0xff]
        %v8107 = vld [vmem:[#allocation2 + $0x8] sm:$0xff]
        %v8108 = vpack.c.bf16 %v8102, %v8102
        %v8109 = vpack.c.bf16 %v8103, %v8103
        %v8110 = vpack.c.bf16 %v8104, %v8104
        %v8111 = vpack.c.bf16 %v8105, %v8105
        %v8112 = vld [vmem:[%s414] sm:$0xff]
        %v8113 = vld [vmem:[%s414 + $0x8] sm:$0xff]
        %v8114 = vld [vmem:[%s414 + $0x10] sm:$0xff]
        %v8115 = vld [vmem:[%s414 + $0x18] sm:$0xff]
        %v8116 = vld [vmem:[%s414 + $0x20] sm:$0xff]
        %v8117 = vld [vmem:[%s414 + $0x28] sm:$0xff]
        %v8118 = vld [vmem:[%s414 + $0x30] sm:$0xff]
        %v8119 = vld [vmem:[%s414 + $0x38] sm:$0xff]
        %v8120 = vld [vmem:[%s414 + $0x40] sm:$0xff]
        %v8121 = vld [vmem:[%s414 + $0x48] sm:$0xff]
        %v8122 = vld [vmem:[%s414 + $0x50] sm:$0xff]
        %v8123 = vld [vmem:[%s414 + $0x58] sm:$0xff]
        %v8124 = vld [vmem:[%s414 + $0x60] sm:$0xff]
        %v8125 = vld [vmem:[%s414 + $0x68] sm:$0xff]
        %v8126 = vld [vmem:[%s414 + $0x70] sm:$0xff]
        %v8127 = vld [vmem:[%s414 + $0x78] sm:$0xff]
        %v8128 = vld [vmem:[%s414 + $0x80] sm:$0xff]
        %v8129 = vld [vmem:[%s414 + $0x88] sm:$0xff]
        %v8130 = vld [vmem:[%s414 + $0x90] sm:$0xff]
        %v8131 = vld [vmem:[%s414 + $0x98] sm:$0xff]
        %v8132 = vld [vmem:[%s414 + $0xa0] sm:$0xff]
        %v8133 = vld [vmem:[%s414 + $0xa8] sm:$0xff]
        %v8134 = vld [vmem:[%s414 + $0xb0] sm:$0xff]
        %v8135 = vld [vmem:[%s414 + $0xb8] sm:$0xff]
        %v8136 = vld [vmem:[%s414 + $0xc0] sm:$0xff]
        %v8137 = vld [vmem:[%s414 + $0xc8] sm:$0xff]
        %v8138 = vld [vmem:[%s414 + $0xd0] sm:$0xff]
        %v8139 = vld [vmem:[%s414 + $0xd8] sm:$0xff]
        %v8140 = vld [vmem:[%s414 + $0xe0] sm:$0xff]
        %v8141 = vld [vmem:[%s414 + $0xe8] sm:$0xff]
        %v8142 = vld [vmem:[%s414 + $0xf0] sm:$0xff]
        %v8143 = vld [vmem:[%s414 + $0xf8] sm:$0xff]
        %v8144 = vld [vmem:[%s414 + $0x100] sm:$0xff]
        %v8145 = vld [vmem:[%s414 + $0x108] sm:$0xff]
        %v8146 = vld [vmem:[%s414 + $0x110] sm:$0xff]
        %v8147 = vld [vmem:[%s414 + $0x118] sm:$0xff]
        %v8148 = vld [vmem:[%s414 + $0x120] sm:$0xff]
        %v8149 = vld [vmem:[%s414 + $0x128] sm:$0xff]
        %v8150 = vld [vmem:[%s414 + $0x130] sm:$0xff]
        %v8151 = vld [vmem:[%s414 + $0x138] sm:$0xff]
        %v8152 = vld [vmem:[%s414 + $0x140] sm:$0xff]
        %v8153 = vld [vmem:[%s414 + $0x148] sm:$0xff]
        %v8154 = vld [vmem:[%s414 + $0x150] sm:$0xff]
        %v8155 = vld [vmem:[%s414 + $0x158] sm:$0xff]
        %v8156 = vld [vmem:[%s414 + $0x160] sm:$0xff]
        %v8157 = vld [vmem:[%s414 + $0x168] sm:$0xff]
        %v8158 = vld [vmem:[%s414 + $0x170] sm:$0xff]
        %v8159 = vld [vmem:[%s414 + $0x178] sm:$0xff]
        %v8160 = vld [vmem:[%s414 + $0x180] sm:$0xff]
        %v8161 = vld [vmem:[%s414 + $0x188] sm:$0xff]
        %v8162 = vld [vmem:[%s414 + $0x190] sm:$0xff]
        %v8163 = vld [vmem:[%s414 + $0x198] sm:$0xff]
        %v8164 = vld [vmem:[%s414 + $0x1a0] sm:$0xff]
        %v8165 = vld [vmem:[%s414 + $0x1a8] sm:$0xff]
        %v8166 = vld [vmem:[%s414 + $0x1b0] sm:$0xff]
        %v8167 = vld [vmem:[%s414 + $0x1b8] sm:$0xff]
        %v8168 = vld [vmem:[%s414 + $0x1c0] sm:$0xff]
        %v8169 = vld [vmem:[%s414 + $0x1c8] sm:$0xff]
        %v8170 = vld [vmem:[%s414 + $0x1d0] sm:$0xff]
        %v8171 = vld [vmem:[%s414 + $0x1d8] sm:$0xff]
        %v8172 = vld [vmem:[%s414 + $0x1e0] sm:$0xff]
        %v8173 = vld [vmem:[%s414 + $0x1e8] sm:$0xff]
        %v8174 = vld [vmem:[%s414 + $0x1f0] sm:$0xff]
        %v8175 = vld [vmem:[%s414 + $0x1f8] sm:$0xff]
        %v8240 = vunpack.c.l.b16 %v8112
        %v8241 = vunpack.c.h.b16 %v8112
        %v8242 = vunpack.c.l.b16 %v8113
        %v8243 = vunpack.c.h.b16 %v8113
        %v8244 = vunpack.c.l.b16 %v8114
        %v8245 = vunpack.c.h.b16 %v8114
        %v8246 = vunpack.c.l.b16 %v8115
        %v8247 = vunpack.c.h.b16 %v8115
        %v8248 = vunpack.c.l.b16 %v8116
        %v8249 = vunpack.c.h.b16 %v8116
        %v8250 = vunpack.c.l.b16 %v8117
        %v8251 = vunpack.c.h.b16 %v8117
        %v8252 = vunpack.c.l.b16 %v8118
        %v8253 = vunpack.c.h.b16 %v8118
        %v8254 = vunpack.c.l.b16 %v8119
        %v8255 = vunpack.c.h.b16 %v8119
        %v8256 = vunpack.c.l.b16 %v8120
        %v8257 = vunpack.c.h.b16 %v8120
        %v8258 = vunpack.c.l.b16 %v8121
        %v8259 = vunpack.c.h.b16 %v8121
        %v8260 = vunpack.c.l.b16 %v8122
        %v8261 = vunpack.c.h.b16 %v8122
        %v8262 = vunpack.c.l.b16 %v8123
        %v8263 = vunpack.c.h.b16 %v8123
        %v8264 = vunpack.c.l.b16 %v8124
        %v8265 = vunpack.c.h.b16 %v8124
        %v8266 = vunpack.c.l.b16 %v8125
        %v8267 = vunpack.c.h.b16 %v8125
        %v8268 = vunpack.c.l.b16 %v8126
        %v8269 = vunpack.c.h.b16 %v8126
        %v8270 = vunpack.c.l.b16 %v8127
        %v8271 = vunpack.c.h.b16 %v8127
        %v8272 = vunpack.c.l.b16 %v8128
        %v8273 = vunpack.c.h.b16 %v8128
        %v8274 = vunpack.c.l.b16 %v8129
        %v8275 = vunpack.c.h.b16 %v8129
        %v8276 = vunpack.c.l.b16 %v8130
        %v8277 = vunpack.c.h.b16 %v8130
        %v8278 = vunpack.c.l.b16 %v8131
        %v8279 = vunpack.c.h.b16 %v8131
        %v8280 = vunpack.c.l.b16 %v8132
        %v8281 = vunpack.c.h.b16 %v8132
        %v8282 = vunpack.c.l.b16 %v8133
        %v8283 = vunpack.c.h.b16 %v8133
        %v8284 = vunpack.c.l.b16 %v8134
        %v8285 = vunpack.c.h.b16 %v8134
        %v8286 = vunpack.c.l.b16 %v8135
        %v8287 = vunpack.c.h.b16 %v8135
        %v8288 = vunpack.c.l.b16 %v8136
        %v8289 = vunpack.c.h.b16 %v8136
        %v8290 = vunpack.c.l.b16 %v8137
        %v8291 = vunpack.c.h.b16 %v8137
        %v8292 = vunpack.c.l.b16 %v8138
        %v8293 = vunpack.c.h.b16 %v8138
        %v8294 = vunpack.c.l.b16 %v8139
        %v8295 = vunpack.c.h.b16 %v8139
        %v8296 = vunpack.c.l.b16 %v8140
        %v8297 = vunpack.c.h.b16 %v8140
        %v8298 = vunpack.c.l.b16 %v8141
        %v8299 = vunpack.c.h.b16 %v8141
        %v8300 = vunpack.c.l.b16 %v8142
        %v8301 = vunpack.c.h.b16 %v8142
        %v8302 = vunpack.c.l.b16 %v8143
        %v8303 = vunpack.c.h.b16 %v8143
        %v8304 = vunpack.c.l.b16 %v8144
        %v8305 = vunpack.c.h.b16 %v8144
        %v8306 = vunpack.c.l.b16 %v8145
        %v8307 = vunpack.c.h.b16 %v8145
        %v8308 = vunpack.c.l.b16 %v8146
        %v8309 = vunpack.c.h.b16 %v8146
        %v8310 = vunpack.c.l.b16 %v8147
        %v8311 = vunpack.c.h.b16 %v8147
        %v8312 = vunpack.c.l.b16 %v8148
        %v8313 = vunpack.c.h.b16 %v8148
        %v8314 = vunpack.c.l.b16 %v8149
        %v8315 = vunpack.c.h.b16 %v8149
        %v8316 = vunpack.c.l.b16 %v8150
        %v8317 = vunpack.c.h.b16 %v8150
        %v8318 = vunpack.c.l.b16 %v8151
        %v8319 = vunpack.c.h.b16 %v8151
        %v8320 = vunpack.c.l.b16 %v8152
        %v8321 = vunpack.c.h.b16 %v8152
        %v8322 = vunpack.c.l.b16 %v8153
        %v8323 = vunpack.c.h.b16 %v8153
        %v8324 = vunpack.c.l.b16 %v8154
        %v8325 = vunpack.c.h.b16 %v8154
        %v8326 = vunpack.c.l.b16 %v8155
        %v8327 = vunpack.c.h.b16 %v8155
        %v8328 = vunpack.c.l.b16 %v8156
        %v8329 = vunpack.c.h.b16 %v8156
        %v8330 = vunpack.c.l.b16 %v8157
        %v8331 = vunpack.c.h.b16 %v8157
        %v8332 = vunpack.c.l.b16 %v8158
        %v8333 = vunpack.c.h.b16 %v8158
        %v8334 = vunpack.c.l.b16 %v8159
        %v8335 = vunpack.c.h.b16 %v8159
        %v8336 = vunpack.c.l.b16 %v8160
        %v8337 = vunpack.c.h.b16 %v8160
        %v8338 = vunpack.c.l.b16 %v8161
        %v8339 = vunpack.c.h.b16 %v8161
        %v8340 = vunpack.c.l.b16 %v8162
        %v8341 = vunpack.c.h.b16 %v8162
        %v8342 = vunpack.c.l.b16 %v8163
        %v8343 = vunpack.c.h.b16 %v8163
        %v8344 = vunpack.c.l.b16 %v8164
        %v8345 = vunpack.c.h.b16 %v8164
        %v8346 = vunpack.c.l.b16 %v8165
        %v8347 = vunpack.c.h.b16 %v8165
        %v8348 = vunpack.c.l.b16 %v8166
        %v8349 = vunpack.c.h.b16 %v8166
        %v8350 = vunpack.c.l.b16 %v8167
        %v8351 = vunpack.c.h.b16 %v8167
        %v8352 = vunpack.c.l.b16 %v8168
        %v8353 = vunpack.c.h.b16 %v8168
        %v8354 = vunpack.c.l.b16 %v8169
        %v8355 = vunpack.c.h.b16 %v8169
        %v8356 = vunpack.c.l.b16 %v8170
        %v8357 = vunpack.c.h.b16 %v8170
        %v8358 = vunpack.c.l.b16 %v8171
        %v8359 = vunpack.c.h.b16 %v8171
        %v8360 = vunpack.c.l.b16 %v8172
        %v8361 = vunpack.c.h.b16 %v8172
        %v8362 = vunpack.c.l.b16 %v8173
        %v8363 = vunpack.c.h.b16 %v8173
        %v8364 = vunpack.c.l.b16 %v8174
        %v8365 = vunpack.c.h.b16 %v8174
        %v8366 = vunpack.c.l.b16 %v8175
        %v8367 = vunpack.c.h.b16 %v8175
        %v8368 = vpack.c.b16 %v8244, %v8240
        %v8369 = vpack.c.b16 %v8245, %v8241
        %v8370 = vpack.c.b16 %v8246, %v8242
        %v8371 = vpack.c.b16 %v8247, %v8243
        %v8372 = vpack.c.b16 %v8252, %v8248
        %v8373 = vpack.c.b16 %v8253, %v8249
        %v8374 = vpack.c.b16 %v8254, %v8250
        %v8375 = vpack.c.b16 %v8255, %v8251
        %v8376 = vpack.c.b16 %v8260, %v8256
        %v8377 = vpack.c.b16 %v8261, %v8257
        %v8378 = vpack.c.b16 %v8262, %v8258
        %v8379 = vpack.c.b16 %v8263, %v8259
        %v8380 = vpack.c.b16 %v8268, %v8264
        %v8381 = vpack.c.b16 %v8269, %v8265
        %v8382 = vpack.c.b16 %v8270, %v8266
        %v8383 = vpack.c.b16 %v8271, %v8267
        %v8384 = vpack.c.b16 %v8276, %v8272
        %v8385 = vpack.c.b16 %v8277, %v8273
        %v8386 = vpack.c.b16 %v8278, %v8274
        %v8387 = vpack.c.b16 %v8279, %v8275
        %v8388 = vpack.c.b16 %v8284, %v8280
        %v8389 = vpack.c.b16 %v8285, %v8281
        %v8390 = vpack.c.b16 %v8286, %v8282
        %v8391 = vpack.c.b16 %v8287, %v8283
        %v8392 = vpack.c.b16 %v8292, %v8288
        %v8393 = vpack.c.b16 %v8293, %v8289
        %v8394 = vpack.c.b16 %v8294, %v8290
        %v8395 = vpack.c.b16 %v8295, %v8291
        %v8396 = vpack.c.b16 %v8300, %v8296
        %v8397 = vpack.c.b16 %v8301, %v8297
        %v8398 = vpack.c.b16 %v8302, %v8298
        %v8399 = vpack.c.b16 %v8303, %v8299
        %v8400 = vpack.c.b16 %v8308, %v8304
        %v8401 = vpack.c.b16 %v8309, %v8305
        %v8402 = vpack.c.b16 %v8310, %v8306
        %v8403 = vpack.c.b16 %v8311, %v8307
        %v8404 = vpack.c.b16 %v8316, %v8312
        %v8405 = vpack.c.b16 %v8317, %v8313
        %v8406 = vpack.c.b16 %v8318, %v8314
        %v8407 = vpack.c.b16 %v8319, %v8315
        %v8408 = vpack.c.b16 %v8324, %v8320
        %v8409 = vpack.c.b16 %v8325, %v8321
        %v8410 = vpack.c.b16 %v8326, %v8322
        %v8411 = vpack.c.b16 %v8327, %v8323
        %v8412 = vpack.c.b16 %v8332, %v8328
        %v8413 = vpack.c.b16 %v8333, %v8329
        %v8414 = vpack.c.b16 %v8334, %v8330
        %v8415 = vpack.c.b16 %v8335, %v8331
        %v8416 = vpack.c.b16 %v8340, %v8336
        %v8417 = vpack.c.b16 %v8341, %v8337
        %v8418 = vpack.c.b16 %v8342, %v8338
        %v8419 = vpack.c.b16 %v8343, %v8339
        %v8420 = vpack.c.b16 %v8348, %v8344
        %v8421 = vpack.c.b16 %v8349, %v8345
        %v8422 = vpack.c.b16 %v8350, %v8346
        %v8423 = vpack.c.b16 %v8351, %v8347
        %v8424 = vpack.c.b16 %v8356, %v8352
        %v8425 = vpack.c.b16 %v8357, %v8353
        %v8426 = vpack.c.b16 %v8358, %v8354
        %v8427 = vpack.c.b16 %v8359, %v8355
        %v8428 = vpack.c.b16 %v8364, %v8360
        %v8429 = vpack.c.b16 %v8365, %v8361
        %v8430 = vpack.c.b16 %v8366, %v8362
        %v8431 = vpack.c.b16 %v8367, %v8363
        %8496 = vmatprep.subr.bf16.mxu0 %v8369
        %8497 = vmatpush1.bf16.xpose.msra.mxu0 %v8368
        %8498 = vmatprep.subr.bf16.mxu0 %v8373
        %8499 = vmatpush1.bf16.xpose.msra.mxu0 %v8372
        %8500 = vmatprep.subr.bf16.mxu0 %v8377
        %8501 = vmatpush1.bf16.xpose.msra.mxu0 %v8376
        %8502 = vmatprep.subr.bf16.mxu0 %v8381
        %8503 = vmatpush1.bf16.xpose.msra.mxu0 %v8380
        %8504 = vmatprep.subr.bf16.mxu0 %v8385
        %8505 = vmatpush1.bf16.xpose.msra.mxu0 %v8384
        %8506 = vmatprep.subr.bf16.mxu0 %v8389
        %8507 = vmatpush1.bf16.xpose.msra.mxu0 %v8388
        %8508 = vmatprep.subr.bf16.mxu0 %v8393
        %8509 = vmatpush1.bf16.xpose.msra.mxu0 %v8392
        %8510 = vmatprep.subr.bf16.mxu0 %v8397
        %8511 = vmatpush1.bf16.xpose.msra.mxu0 %v8396
        %8512 = vmatprep.subr.bf16.mxu0 %v8401
        %8513 = vmatpush1.bf16.xpose.msra.mxu0 %v8400
        %8514 = vmatprep.subr.bf16.mxu0 %v8405
        %8515 = vmatpush1.bf16.xpose.msra.mxu0 %v8404
        %8516 = vmatprep.subr.bf16.mxu0 %v8409
        %8517 = vmatpush1.bf16.xpose.msra.mxu0 %v8408
        %8518 = vmatprep.subr.bf16.mxu0 %v8413
        %8519 = vmatpush1.bf16.xpose.msra.mxu0 %v8412
        %8520 = vmatprep.subr.bf16.mxu0 %v8417
        %8521 = vmatpush1.bf16.xpose.msra.mxu0 %v8416
        %8522 = vmatprep.subr.bf16.mxu0 %v8421
        %8523 = vmatpush1.bf16.xpose.msra.mxu0 %v8420
        %8524 = vmatprep.subr.bf16.mxu0 %v8425
        %8525 = vmatpush1.bf16.xpose.msra.mxu0 %v8424
        %8526 = vmatprep.subr.bf16.mxu0 %v8429
        %8527 = vmatpush1.bf16.xpose.msra.mxu0 %v8428
        %8528 = vmatprep.mubr.bf16.mxu0 %v8109
        %8529 = vmatmul.mubr.bf16.gmra.mrb[0].mxu0 %v8108
        %v8530 = vpop.f32.mrb[0].mxu0
        %v8531 = vadd.f32 0.0, %v8530
        %v8532 = vpop.f32.mrb[0].mxu0
        %v8533 = vadd.f32 0.0, %v8532
        %v8534 = vpop.f32.mrb[0].mxu0
        %v8535 = vpop.f32.mrb[0].mxu0
        %8536 = vdwg.mxu0
        %8537 = vmatprep.subr.bf16.mxu0 %v8371
        %8538 = vmatpush1.bf16.xpose.msra.mxu0 %v8370
        %8539 = vmatprep.subr.bf16.mxu0 %v8375
        %8540 = vmatpush1.bf16.xpose.msra.mxu0 %v8374
        %8541 = vmatprep.subr.bf16.mxu0 %v8379
        %8542 = vmatpush1.bf16.xpose.msra.mxu0 %v8378
        %8543 = vmatprep.subr.bf16.mxu0 %v8383
        %8544 = vmatpush1.bf16.xpose.msra.mxu0 %v8382
        %8545 = vmatprep.subr.bf16.mxu0 %v8387
        %8546 = vmatpush1.bf16.xpose.msra.mxu0 %v8386
        %8547 = vmatprep.subr.bf16.mxu0 %v8391
        %8548 = vmatpush1.bf16.xpose.msra.mxu0 %v8390
        %8549 = vmatprep.subr.bf16.mxu0 %v8395
        %8550 = vmatpush1.bf16.xpose.msra.mxu0 %v8394
        %8551 = vmatprep.subr.bf16.mxu0 %v8399
        %8552 = vmatpush1.bf16.xpose.msra.mxu0 %v8398
        %8553 = vmatprep.subr.bf16.mxu0 %v8403
        %8554 = vmatpush1.bf16.xpose.msra.mxu0 %v8402
        %8555 = vmatprep.subr.bf16.mxu0 %v8407
        %8556 = vmatpush1.bf16.xpose.msra.mxu0 %v8406
        %8557 = vmatprep.subr.bf16.mxu0 %v8411
        %8558 = vmatpush1.bf16.xpose.msra.mxu0 %v8410
        %8559 = vmatprep.subr.bf16.mxu0 %v8415
        %8560 = vmatpush1.bf16.xpose.msra.mxu0 %v8414
        %8561 = vmatprep.subr.bf16.mxu0 %v8419
        %8562 = vmatpush1.bf16.xpose.msra.mxu0 %v8418
        %8563 = vmatprep.subr.bf16.mxu0 %v8423
        %8564 = vmatpush1.bf16.xpose.msra.mxu0 %v8422
        %8565 = vmatprep.subr.bf16.mxu0 %v8427
        %8566 = vmatpush1.bf16.xpose.msra.mxu0 %v8426
        %8567 = vmatprep.subr.bf16.mxu0 %v8431
        %8568 = vmatpush1.bf16.xpose.msra.mxu0 %v8430
        %8569 = vmatprep.mubr.bf16.mxu0 %v8111
        %8570 = vmatmul.mubr.bf16.gmra.mrb[0].mxu0 %v8110
        %v8571 = vpop.f32.mrb[0].mxu0
        %v8572 = vadd.f32 %v8531, %v8571
        %v8573 = vpop.f32.mrb[0].mxu0
        %v8574 = vadd.f32 %v8533, %v8573
        %v8575 = vpop.f32.mrb[0].mxu0
        %v8576 = vpop.f32.mrb[0].mxu0
        %8577 = vdwg.mxu0
        %v8578 = vadd.f32 %v8106, %v8572
        %v8579 = vadd.f32 %v8107, %v8574
        %8580 = vst [vmem:[#allocation2] sm:$0xff] %v8578
        %8581 = vst [vmem:[#allocation2 + $0x8] sm:$0xff] %v8579
        %p8582 = scmp.eq.s32.totalorder %s29, 3
        // Predicated region
        $region85: #{dropout_net.3} parent=55 // pred_check
          %p8583 = pneg %p8582
        $region86: #{dropout_net.3} parent=55 // pred_check_branch
          %8585 = sbr.rel (%p8583) target = $region88
        $region87: #{dropout_net.3} parent=55 // pred_region
          %v8586 = vld [vmem:[#allocation2] sm:$0xff]
          %v8587 = vld [vmem:[#allocation2 + $0x8] sm:$0xff]
          %v8588 = vld [vmem:[#allocation9] sm:$0x3]
          %v8590 = vlaneseq
          %v8591 = vshrl.u32 %v8590, 7
          %v8592 = vsub.s32 0, %v8591
          %v8593 = vrot.slane %v8588, %v8592
          %v8594 = vlaneseq
          %v8595 = vshrl.u32 %v8594, 7
          %v8596 = vsub.s32 1, %v8595
          %v8597 = vrot.slane %v8588, %v8596
          %v8600 = vadd.f32 %v8586, %v8593
          %v8601 = vadd.f32 %v8587, %v8597
          %v8602 = vld [vmem:[%s6] sm:$0xff]
          %v8603 = vunpack.c.l.bf16 %v8602
          %v8604 = vunpack.c.h.bf16 %v8602
          %v8605 = vmul.f32 %v8600, %v8603
          %v8606 = vmul.f32 %v8601, %v8604
          %v8607 = vmax.f32 %v8605, 0.0
          %v8608 = vmax.f32 %v8606, 0.0
          %v8609 = vld [vmem:[#allocation11] sm:$0xff]
          %v8610 = vld [vmem:[#allocation11 + $0x8] sm:$0xff]
          %v8611 = vld [vmem:[#allocation11 + $0x10] sm:$0xff]
          %v8612 = vld [vmem:[#allocation11 + $0x18] sm:$0xff]
          %v8613 = vld [vmem:[#allocation11 + $0x20] sm:$0xff]
          %v8614 = vld [vmem:[#allocation11 + $0x28] sm:$0xff]
          %v8615 = vld [vmem:[#allocation11 + $0x30] sm:$0xff]
          %v8616 = vld [vmem:[#allocation11 + $0x38] sm:$0xff]
          %v8617 = vld [vmem:[#allocation11 + $0x40] sm:$0xff]
          %v8618 = vld [vmem:[#allocation11 + $0x48] sm:$0xff]
          %v8619 = vld [vmem:[#allocation12] sm:$0x1]
          %v8621 = vlaneseq
          %v8622 = vshrl.u32 %v8621, 7
          %v8623 = vsub.s32 0, %v8622
          %v8624 = vrot.slane %v8619, %v8623
          %8626 = vmatprep.subr.mxu0 %v8610
          %8627 = vmatpush1.xpose.msra.mxu0 %v8609
          %8628 = vmatprep.subr.mxu0 %v8612
          %8629 = vmatpush1.xpose.msra.mxu0 %v8611
          %8630 = vmatprep.subr.mxu0 %v8614
          %8631 = vmatpush1.xpose.msra.mxu0 %v8613
          %8632 = vmatprep.subr.mxu0 %v8616
          %8633 = vmatpush1.xpose.msra.mxu0 %v8615
          %8634 = vmatprep.subr.mxu0 %v8618
          %8635 = vmatpush1.xpose.msra.mxu0 %v8617
          %8636 = vmatprep.subr.mxu0 0.0
          %8637 = vmatpush1.xpose.msra.mxu0 0.0
          %8638 = vmatprep.subr.mxu0 0.0
          %8639 = vmatpush1.xpose.msra.mxu0 0.0
          %8640 = vmatprep.subr.mxu0 0.0
          %8641 = vmatpush1.xpose.msra.mxu0 0.0
          %8642 = vmatprep.subr.mxu0 0.0
          %8643 = vmatpush1.xpose.msra.mxu0 0.0
          %8644 = vmatprep.subr.mxu0 0.0
          %8645 = vmatpush1.xpose.msra.mxu0 0.0
          %8646 = vmatprep.subr.mxu0 0.0
          %8647 = vmatpush1.xpose.msra.mxu0 0.0
          %8648 = vmatprep.subr.mxu0 0.0
          %8649 = vmatpush1.xpose.msra.mxu0 0.0
          %8650 = vmatprep.subr.mxu0 0.0
          %8651 = vmatpush1.xpose.msra.mxu0 0.0
          %8652 = vmatprep.subr.mxu0 0.0
          %8653 = vmatpush1.xpose.msra.mxu0 0.0
          %8654 = vmatprep.subr.mxu0 0.0
          %8655 = vmatpush1.xpose.msra.mxu0 0.0
          %8656 = vmatprep.subr.mxu0 0.0
          %8657 = vmatpush1.xpose.msra.mxu0 0.0
          %8658 = vmatprep.subr.mxu0 0.0
          %8659 = vmatpush1.xpose.msra.mxu0 0.0
          %8660 = vmatprep.subr.mxu0 0.0
          %8661 = vmatpush1.xpose.msra.mxu0 0.0
          %8662 = vmatprep.subr.mxu0 0.0
          %8663 = vmatpush1.xpose.msra.mxu0 0.0
          %8664 = vmatprep.subr.mxu0 0.0
          %8665 = vmatpush1.xpose.msra.mxu0 0.0
          %8666 = vmatprep.subr.mxu0 0.0
          %8667 = vmatpush1.xpose.msra.mxu0 0.0
          %8668 = vmatprep.subr.mxu0 0.0
          %8669 = vmatpush1.xpose.msra.mxu0 0.0
          %8670 = vmatprep.subr.mxu0 0.0
          %8671 = vmatpush1.xpose.msra.mxu0 0.0
          %8672 = vmatprep.subr.mxu0 0.0
          %8673 = vmatpush1.xpose.msra.mxu0 0.0
          %8674 = vmatprep.subr.mxu0 0.0
          %8675 = vmatpush1.xpose.msra.mxu0 0.0
          %8676 = vmatprep.subr.mxu0 0.0
          %8677 = vmatpush1.xpose.msra.mxu0 0.0
          %8678 = vmatprep.subr.mxu0 0.0
          %8679 = vmatpush1.xpose.msra.mxu0 0.0
          %8680 = vmatprep.subr.mxu0 0.0
          %8681 = vmatpush1.xpose.msra.mxu0 0.0
          %8682 = vmatprep.subr.mxu0 0.0
          %8683 = vmatpush1.xpose.msra.mxu0 0.0
          %8684 = vmatprep.subr.mxu0 0.0
          %8685 = vmatpush1.xpose.msra.mxu0 0.0
          %8686 = vmatprep.subr.mxu0 0.0
          %8687 = vmatpush1.xpose.msra.mxu0 0.0
          %8688 = vmatprep.subr.mxu0 0.0
          %8689 = vmatpush1.xpose.msra.mxu0 0.0
          %8690 = vmatprep.mubr.f32.mxu0 %v8608
          %8691 = vmatmul.mubr.f32.gmra.mrb[0].mxu0 %v8607
          %v8692 = vpop.f32.mrb[0].mxu0
          %v8693 = vadd.f32 %v8624, %v8692
          %v8694 = vpop.f32.mrb[0].mxu0
          %8695 = vdwg.mxu0
          %vm8696 = vcmask 326656
          %8697 = vst.msk [vmem:[#allocation14] sm:$0xff] %vm8696, %v8693
        $region88: #{dropout_net.3} parent=55 // pred_fallthru
          _
        // Predicated region
        $region89: #{dropout_net.3} parent=55 // pred_check
          %p8698 = pneg %p251
        $region90: #{dropout_net.3} parent=55 // pred_check_branch
          %8700 = sbr.rel (%p8698) target = $region92
        $region91: #{dropout_net.3} parent=55 // pred_region
          %s8702 = ssub.s32 128, 128
          %8703 = vsyncadd [#allocation5], %s8702
          %s8705 = sshll.u32 [#allocation14], 4
          %s8706 = int_to_ptr.vmem [resolvable:$true] %s8705
          %8708 = dma.vmem_to_hbm [thread:$0]  %s8706, 128, %s9, [#allocation5]
        $region92: #{dropout_net.3} parent=55 // pred_fallthru
          _
        // Predicated region
        $region93: #{dropout_net.3} parent=55 // pred_check
          %p8709 = pneg %p251
        $region94: #{dropout_net.3} parent=55 // pred_check_branch
          %8711 = sbr.rel (%p8709) target = $region96
        $region95: #{dropout_net.3} parent=55 // pred_region
          %8712 = dma.done [#allocation5], 128
        $region96: #{dropout_net.3} parent=55 // pred_fallthru
          _
      $region56: #{dropout_net.3} parent=5 // pred_fallthru
        _
      %p8713 = scmp.le.s32.totalorder 2, %s24
      // Predicated region
      $region97: #{dropout_net.3} parent=5 // pred_check
        %p8714 = pneg %p8713
      $region98: #{dropout_net.3} parent=5 // pred_check_branch
        %8716 = sbr.rel (%p8714) target = $region100
      $region99: #{dropout_net.3} parent=5 // pred_region
        %s8717 = ssub.s32 %s24, 2
      $region100: #{dropout_net.3} parent=5 // pred_fallthru
        _
    $region6: #{dropout_net.3} parent=1 // loop_footer
      %s28 = sadd.s32 1, %s24
    $region7: #{dropout_net.3} parent=1 // loop_footer_branch
      %23 = sbr.rel target = $region3
    $region8: #{dropout_net.3} parent=1 // loop_exit
      _
    %8718 = vsyncpa [#allocation4], 1
    %s8719 = scalar_lea.sflag [#allocation4], 1
    %8720 = vsyncpa %s8719, 1
    %8721 = vsyncpa [#allocation7], 1
    %s8722 = scalar_lea.sflag [#allocation7], 1
    %8723 = vsyncpa %s8722, 1
    %8724 = vsyncpa [#allocation10], 1
    %8725 = vsyncpa [#allocation13], 1
    %8726 = vsyncpa [#allocation5], 1
    %s8727 = scalar_lea.sflag [#allocation5], 1
    %8728 = vsyncpa %s8727, 1

</llo_original>
